<compile_context>
chip_gen: v7x
topology: tpu7x:2x2x1
jax: 0.10.0
libtpu: 0.0.40
codegen_flags: <defaults>
</compile_context>

<pallas_src>
import math
import jax
import jax.numpy as jnp
from jax import lax
from jax.experimental import pallas as pl
from jax.experimental.pallas import tpu as pltpu

# ---- tiny ViT-like config (mirrors ImageKDConfig.depth, small dims) ----
DEPTH = 6            # cfg.depth: keep the first 6 blocks
BATCH = 2
IN_CH = 3
IMG = 16
PATCH = 8
N_PATCH = (IMG // PATCH) ** 2          # 4 patches
EMBED = 32
HEADS = 4
HEAD_DIM = EMBED // HEADS
MLP = 4 * EMBED
TOKENS = N_PATCH + 1                   # +1 CLS ("extra token" kept: remove_extra_tokens=False)
CPP = IN_CH * PATCH * PATCH            # flattened patch size
LN_EPS = 1e-6


# ---------------- small numerics helpers (all lower on TPU) ----------------

def _layer_norm(x, g, b):
    # var = E[x^2] - mu^2: the two lane reductions are independent -> they can
    # overlap in the XLU pipeline (vs. mean -> center -> mean(xc^2)).
    mu = jnp.mean(x, axis=-1, keepdims=True)
    ex2 = jnp.mean(x * x, axis=-1, keepdims=True)
    var = ex2 - mu * mu
    return (x - mu) * lax.rsqrt(var + LN_EPS) * g + b


_SQRT1_2 = 1.0 / math.sqrt(2.0)
_ERF_P = 0.3275911
_ERF_A1, _ERF_A2, _ERF_A3, _ERF_A4, _ERF_A5 = (
    0.254829592, -0.284496736, 1.421413741, -1.453152027, 1.061405429)


def _erf_poly(x):
    # Abramowitz & Stegun 7.1.26 rational approximation (|abs err| < 1.5e-7);
    # only exp/reciprocal/mul/add/select so it is safe for Mosaic everywhere.
    # TODO(synk): swap for lax.erf if/when it lowers on Mosaic for this JAX rev.
    sgn = jnp.where(x >= 0.0, 1.0, -1.0)
    a = jnp.abs(x)
    t = pl.reciprocal(1.0 + _ERF_P * a, approx=False)
    poly = t * (_ERF_A1 + t * (_ERF_A2 + t * (_ERF_A3 + t * (_ERF_A4 + t * _ERF_A5))))
    return sgn * (1.0 - poly * jnp.exp(-a * a))


def _gelu_exact(x):
    # nn.GELU() default is the exact erf form (NOT the tanh approximation).
    return 0.5 * x * (1.0 + _erf_poly(x * _SQRT1_2))


# ---------------- single fused Pallas kernel (one image per program) ----------------

def fused_forward_kernel(
        patches_ref,                       # [1, T, CPP] f32 (row 0 = zeros for CLS)
        patch_w_ref,                       # [CPP, D] f32
        addin_ref,                         # [T, D] f32 (pos + conv bias; row0 = cls + pos0)
        ln1g_ref, ln1b_ref,                # [DEPTH, 1, D] f32
        wqkv_ref, bqkv_ref,                # [DEPTH, D, 3D] (1/sqrt(hd) folded into Q), [DEPTH, 1, 3D]
        wo_ref, bo_ref,                    # [DEPTH, D, D], [DEPTH, 1, D]
        ln2g_ref, ln2b_ref,                # [DEPTH, 1, D]
        w1_ref, b1_ref,                    # [DEPTH, D, MLP], [DEPTH, 1, MLP]
        w2_ref, b2_ref,                    # [DEPTH, MLP, D], [DEPTH, 1, D]
        normg_ref, normb_ref,              # [1, D]
        out_ref):                          # [1, T, D] f32
    # ---- patch embedding + [CLS]/positional add in one fused matmul+add ----
    # (Conv2d(kernel=stride=PATCH) == matmul; zero CLS row contributes 0.)
    x = jnp.dot(patches_ref[0], patch_w_ref[...],
                preferred_element_type=jnp.float32) + addin_ref[...]       # [T, D]

    # ---- DEPTH pre-LN transformer blocks, weights VMEM-resident ----
    for d in range(DEPTH):                                                 # static unroll
        # --- multi-head self-attention (per-image: plain TxT scores, no bias) ---
        h = _layer_norm(x, ln1g_ref[d], ln1b_ref[d])
        qkv = jnp.dot(h, wqkv_ref[d],
                      preferred_element_type=jnp.float32) + bqkv_ref[d]    # [T, 3D]

        # all-head scores stacked on a new leading axis -> ONE softmax per block
        s = jnp.stack(
            [lax.dot_general(
                qkv[:, hi * HEAD_DIM:(hi + 1) * HEAD_DIM],
                qkv[:, EMBED + hi * HEAD_DIM:EMBED + (hi + 1) * HEAD_DIM],
                (((1,), (1,)), ((), ())),
                preferred_element_type=jnp.float32)
             for hi in range(HEADS)], axis=0)                              # [H, T, T]
        s = s - jnp.max(s, axis=-1, keepdims=True)
        p = jnp.exp(s)
        p = p * pl.reciprocal(jnp.sum(p, axis=-1, keepdims=True), approx=False)

        # per-head (P @ V) @ Wo_head, accumulated in registers (no VMEM scratch)
        wo_d = wo_ref[d]                                                   # [D, D]
        attn = bo_ref[d]                                                   # [1, D] (bcast)
        for hi in range(HEADS):                                            # static (4 heads)
            c = hi * HEAD_DIM
            vh = qkv[:, 2 * EMBED + c:2 * EMBED + c + HEAD_DIM]            # [T, hd]
            oh = jnp.dot(p[hi], vh, preferred_element_type=jnp.float32)    # [T, hd]
            attn = attn + jnp.dot(oh, wo_d[c:c + HEAD_DIM, :],
                                  preferred_element_type=jnp.float32)      # [T, D]
        x = x + attn

        # --- MLP (pre-LN), exact-erf GELU ---
        h2 = _layer_norm(x, ln2g_ref[d], ln2b_ref[d])
        m = jnp.dot(h2, w1_ref[d], preferred_element_type=jnp.float32) + b1_ref[d]
        m = _gelu_exact(m)
        x = x + jnp.dot(m, w2_ref[d], preferred_element_type=jnp.float32) + b2_ref[d]

    # ---- final LayerNorm ----
    out_ref[0] = _layer_norm(x, normg_ref[...], normb_ref[...])


# ---------------- wrappers ----------------

def extract_patches(img):
    # NCHW -> [B, N, C*P*P] with patches in row-major (gh, gw) order and
    # per-patch flattening in (C, P, P) order (matches Conv2d weight layout).
    B, C, H, W = img.shape
    gh, gw = H // PATCH, W // PATCH
    x = img.reshape(B, C, gh, PATCH, gw, PATCH)
    x = x.transpose(0, 2, 4, 1, 3, 5)
    return x.reshape(B, gh * gw, C * PATCH * PATCH)


def image_kd_forward(image, p):
    """Equivalent of model.extract_features(source=image, remove_extra_tokens=False)."""
    B = image.shape[0]
    patches = extract_patches(image)                                       # [B, N, CPP]
    # zero row at the CLS position so token t == matmul row t (no in-kernel scatter)
    patches_full = jnp.concatenate(
        [jnp.zeros((B, 1, CPP), image.dtype), patches], axis=1)            # [B, T, CPP]

    def shared(shape):
        nd = len(shape)
        return pl.BlockSpec(shape, lambda b: (0,) * nd)

    out = pl.pallas_call(
        fused_forward_kernel,
        grid=(B,),
        in_specs=[
            pl.BlockSpec((1, TOKENS, CPP), lambda b: (b, 0, 0)),
            shared((CPP, EMBED)),
            shared((TOKENS, EMBED)),
            shared((DEPTH, 1, EMBED)), shared((DEPTH, 1, EMBED)),
            shared((DEPTH, EMBED, 3 * EMBED)), shared((DEPTH, 1, 3 * EMBED)),
            shared((DEPTH, EMBED, EMBED)), shared((DEPTH, 1, EMBED)),
            shared((DEPTH, 1, EMBED)), shared((DEPTH, 1, EMBED)),
            shared((DEPTH, EMBED, MLP)), shared((DEPTH, 1, MLP)),
            shared((DEPTH, MLP, EMBED)), shared((DEPTH, 1, EMBED)),
            shared((1, EMBED)), shared((1, EMBED)),
        ],
        out_specs=pl.BlockSpec((1, TOKENS, EMBED), lambda b: (b, 0, 0)),
        out_shape=jax.ShapeDtypeStruct((B, TOKENS, EMBED), jnp.float32),
        compiler_params=pltpu.CompilerParams(
            dimension_semantics=("parallel",)),   # shards images across TCs on v7x
    )(patches_full,
      p["patch_w"], p["addin"],
      p["ln1_g"], p["ln1_b"], p["wqkv"], p["bqkv"], p["wo"], p["bo"],
      p["ln2_g"], p["ln2_b"], p["w1"], p["b1"], p["w2"], p["b2"],
      p["norm_g"], p["norm_b"])

    # extract_features returns a dict; CLS token is kept (remove_extra_tokens=False).
    return {"x": out, "padding_mask": None}


def init_params(key):
    # TODO(synk): the real module loads pretrained Conv2d/ViT weights; if loaded,
    # patch_w must be the Conv2d weight [D, C, P, P] reshaped to [D, C*P*P] and
    # transposed to match the (C, P, P) patch flattening above, and the same
    # 1/sqrt(head_dim) Q-folding in prepare_params must be applied to them.
    keys = iter(jax.random.split(key, 16 + 12 * DEPTH))

    def nrm(shape, scale=0.02):
        return scale * jax.random.normal(next(keys), shape, jnp.float32)

    params = {
        "patch_w": nrm((CPP, EMBED)),
        "patch_b": jnp.zeros((1, EMBED), jnp.float32),
        "cls": nrm((1, 1, EMBED)),
        "pos": nrm((1, TOKENS, EMBED)),
        "norm_g": jnp.ones((1, EMBED), jnp.float32),
        "norm_b": jnp.zeros((1, EMBED), jnp.float32),
        "blocks": [],
    }
    for _ in range(DEPTH):
        params["blocks"].append({
            "ln1_g": jnp.ones((1, EMBED), jnp.float32),
            "ln1_b": jnp.zeros((1, EMBED), jnp.float32),
            "wqkv": nrm((EMBED, 3 * EMBED)),
            "bqkv": jnp.zeros((1, 3 * EMBED), jnp.float32),
            "wo": nrm((EMBED, EMBED)),
            "bo": jnp.zeros((1, EMBED), jnp.float32),
            "ln2_g": jnp.ones((1, EMBED), jnp.float32),
            "ln2_b": jnp.zeros((1, EMBED), jnp.float32),
            "w1": nrm((EMBED, MLP)),
            "b1": jnp.zeros((1, MLP), jnp.float32),
            "w2": nrm((MLP, EMBED)),
            "b2": jnp.zeros((1, EMBED), jnp.float32),
        })
    return params


def prepare_params(params):
    """Stack per-block weights along a [DEPTH] axis, fold the attention scale
    into the Q projection, and precompute the [T, D] additive slab
    (positional embedding + conv bias, row 0 = cls + pos[0])."""
    blocks = params["blocks"]

    def stack(name):
        return jnp.stack([blk[name] for blk in blocks], axis=0)

    scale = 1.0 / math.sqrt(HEAD_DIM)
    wqkv = stack("wqkv")                                  # [DEPTH, D, 3D]
    bqkv = stack("bqkv")                                  # [DEPTH, 1, 3D]
    wqkv = wqkv.at[:, :, :EMBED].multiply(scale)          # fold 1/sqrt(hd) into Q
    bqkv = bqkv.at[:, :, :EMBED].multiply(scale)

    pos = params["pos"].reshape(TOKENS, EMBED)
    cls = params["cls"].reshape(EMBED)
    patch_b = params["patch_b"].reshape(EMBED)
    addin = pos + patch_b[None, :]                        # patch tokens: pos + conv bias
    addin = addin.at[0].set(pos[0] + cls)                 # CLS token: cls + pos[0] (no conv bias)

    return {
        "patch_w": params["patch_w"],
        "addin": addin,
        "norm_g": params["norm_g"], "norm_b": params["norm_b"],
        "ln1_g": stack("ln1_g"), "ln1_b": stack("ln1_b"),
        "wqkv": wqkv, "bqkv": bqkv,
        "wo": stack("wo"), "bo": stack("bo"),
        "ln2_g": stack("ln2_g"), "ln2_b": stack("ln2_b"),
        "w1": stack("w1"), "b1": stack("b1"),
        "w2": stack("w2"), "b2": stack("b2"),
    }


if __name__ == "__main__":
    key = jax.random.PRNGKey(0)
    pkey, ikey = jax.random.split(key)
    params = prepare_params(init_params(pkey))
    image = jax.random.normal(ikey, (BATCH, IN_CH, IMG, IMG), jnp.float32)

    fwd = jax.jit(image_kd_forward)
    out = fwd(image, params)
    jax.block_until_ready(out["x"])
    assert out["x"].shape == (BATCH, TOKENS, EMBED)
    assert bool(jnp.all(jnp.isfinite(out["x"])))
    print("KERNEL_OK")
</pallas_src>

<mosaic_0001>
module attributes {stable_mosaic.version = 11 : i64} {
  func.func @fused_forward_kernel(%arg0: i32, %arg1: memref<1x5x192xf32, #tpu.memory_space<vmem>>, %arg2: memref<192x32xf32, #tpu.memory_space<vmem>>, %arg3: memref<5x32xf32, #tpu.memory_space<vmem>>, %arg4: memref<6x1x32xf32, #tpu.memory_space<vmem>>, %arg5: memref<6x1x32xf32, #tpu.memory_space<vmem>>, %arg6: memref<6x32x96xf32, #tpu.memory_space<vmem>>, %arg7: memref<6x1x96xf32, #tpu.memory_space<vmem>>, %arg8: memref<6x32x32xf32, #tpu.memory_space<vmem>>, %arg9: memref<6x1x32xf32, #tpu.memory_space<vmem>>, %arg10: memref<6x1x32xf32, #tpu.memory_space<vmem>>, %arg11: memref<6x1x32xf32, #tpu.memory_space<vmem>>, %arg12: memref<6x32x128xf32, #tpu.memory_space<vmem>>, %arg13: memref<6x1x128xf32, #tpu.memory_space<vmem>>, %arg14: memref<6x128x32xf32, #tpu.memory_space<vmem>>, %arg15: memref<6x1x32xf32, #tpu.memory_space<vmem>>, %arg16: memref<1x32xf32, #tpu.memory_space<vmem>>, %arg17: memref<1x32xf32, #tpu.memory_space<vmem>>, %arg18: memref<1x5x32xf32, #tpu.memory_space<vmem>>) attributes {dimension_semantics = [#tpu.dimension_semantics<parallel>], iteration_bounds = array<i64: 2>, scalar_prefetch = 0 : i64, scratch_operands = 0 : i64, tpu.core_type = #tpu.core_type<tc>, window_params = [{transform_indices = @transform_0, window_bounds = array<i64: 1, 5, 192>}, {pipeline_mode = #tpu.pipeline_mode<synchronous>, transform_indices = @transform_1, window_bounds = array<i64: 192, 32>}, {pipeline_mode = #tpu.pipeline_mode<synchronous>, transform_indices = @transform_2, window_bounds = array<i64: 5, 32>}, {pipeline_mode = #tpu.pipeline_mode<synchronous>, transform_indices = @transform_3, window_bounds = array<i64: 6, 1, 32>}, {pipeline_mode = #tpu.pipeline_mode<synchronous>, transform_indices = @transform_4, window_bounds = array<i64: 6, 1, 32>}, {pipeline_mode = #tpu.pipeline_mode<synchronous>, transform_indices = @transform_5, window_bounds = array<i64: 6, 32, 96>}, {pipeline_mode = #tpu.pipeline_mode<synchronous>, transform_indices = @transform_6, window_bounds = array<i64: 6, 1, 96>}, {pipeline_mode = #tpu.pipeline_mode<synchronous>, transform_indices = @transform_7, window_bounds = array<i64: 6, 32, 32>}, {pipeline_mode = #tpu.pipeline_mode<synchronous>, transform_indices = @transform_8, window_bounds = array<i64: 6, 1, 32>}, {pipeline_mode = #tpu.pipeline_mode<synchronous>, transform_indices = @transform_9, window_bounds = array<i64: 6, 1, 32>}, {pipeline_mode = #tpu.pipeline_mode<synchronous>, transform_indices = @transform_10, window_bounds = array<i64: 6, 1, 32>}, {pipeline_mode = #tpu.pipeline_mode<synchronous>, transform_indices = @transform_11, window_bounds = array<i64: 6, 32, 128>}, {pipeline_mode = #tpu.pipeline_mode<synchronous>, transform_indices = @transform_12, window_bounds = array<i64: 6, 1, 128>}, {pipeline_mode = #tpu.pipeline_mode<synchronous>, transform_indices = @transform_13, window_bounds = array<i64: 6, 128, 32>}, {pipeline_mode = #tpu.pipeline_mode<synchronous>, transform_indices = @transform_14, window_bounds = array<i64: 6, 1, 32>}, {pipeline_mode = #tpu.pipeline_mode<synchronous>, transform_indices = @transform_15, window_bounds = array<i64: 1, 32>}, {pipeline_mode = #tpu.pipeline_mode<synchronous>, transform_indices = @transform_16, window_bounds = array<i64: 1, 32>}, {transform_indices = @transform_17, window_bounds = array<i64: 1, 5, 32>}]} {
    %c0 = arith.constant 0 : index
    %c0_0 = arith.constant 0 : index
    %c0_1 = arith.constant 0 : index
    %0 = vector.load %arg1[%c0, %c0_0, %c0_1] : memref<1x5x192xf32, #tpu.memory_space<vmem>>, vector<1x5x192xf32>
    %1 = vector.shape_cast %0 : vector<1x5x192xf32> to vector<5x192xf32>
    %c0_2 = arith.constant 0 : index
    %c0_3 = arith.constant 0 : index
    %2 = vector.load %arg2[%c0_2, %c0_3] : memref<192x32xf32, #tpu.memory_space<vmem>>, vector<192x32xf32>
    %cst = arith.constant dense<0.000000e+00> : vector<5x32xf32>
    %3 = tpu.matmul %1, %2, %cst {dimension_numbers = #tpu.dot_dimension_numbers<[1], [0], [0], [1], [0, 0, 1, 1], [], []>} : vector<5x192xf32>, vector<192x32xf32>, vector<5x32xf32> -> vector<5x32xf32>
    %c0_4 = arith.constant 0 : index
    %c0_5 = arith.constant 0 : index
    %4 = vector.load %arg3[%c0_4, %c0_5] : memref<5x32xf32, #tpu.memory_space<vmem>>, vector<5x32xf32>
    %5 = arith.addf %3, %4 : vector<5x32xf32>
    %c0_6 = arith.constant 0 : index
    %c0_7 = arith.constant 0 : index
    %c0_8 = arith.constant 0 : index
    %6 = vector.load %arg4[%c0_6, %c0_7, %c0_8] : memref<6x1x32xf32, #tpu.memory_space<vmem>>, vector<1x1x32xf32>
    %7 = vector.shape_cast %6 : vector<1x1x32xf32> to vector<1x32xf32>
    %c0_9 = arith.constant 0 : index
    %c0_10 = arith.constant 0 : index
    %c0_11 = arith.constant 0 : index
    %8 = vector.load %arg5[%c0_9, %c0_10, %c0_11] : memref<6x1x32xf32, #tpu.memory_space<vmem>>, vector<1x1x32xf32>
    %9 = vector.shape_cast %8 : vector<1x1x32xf32> to vector<1x32xf32>
    %cst_12 = arith.constant dense<0.000000e+00> : vector<5xf32>
    %10 = vector.multi_reduction <add>, %5, %cst_12 [1] : vector<5x32xf32> to vector<5xf32>
    %11 = vector.shape_cast %10 : vector<5xf32> to vector<5x1xf32>
    %cst_13 = arith.constant 3.200000e+01 : f32
    %12 = vector.broadcast %cst_13 : f32 to vector<5x1xf32>
    %13 = arith.divf %11, %12 : vector<5x1xf32>
    %14 = arith.mulf %5, %5 : vector<5x32xf32>
    %cst_14 = arith.constant dense<0.000000e+00> : vector<5xf32>
    %15 = vector.multi_reduction <add>, %14, %cst_14 [1] : vector<5x32xf32> to vector<5xf32>
    %16 = vector.shape_cast %15 : vector<5xf32> to vector<5x1xf32>
    %cst_15 = arith.constant 3.200000e+01 : f32
    %17 = vector.broadcast %cst_15 : f32 to vector<5x1xf32>
    %18 = arith.divf %16, %17 : vector<5x1xf32>
    %19 = arith.mulf %13, %13 : vector<5x1xf32>
    %20 = arith.subf %18, %19 : vector<5x1xf32>
    %21 = vector.broadcast %13 : vector<5x1xf32> to vector<5x32xf32>
    %22 = arith.subf %5, %21 : vector<5x32xf32>
    %cst_16 = arith.constant 9.99999997E-7 : f32
    %23 = vector.broadcast %cst_16 : f32 to vector<5x1xf32>
    %24 = arith.addf %20, %23 : vector<5x1xf32>
    %25 = math.rsqrt %24 : vector<5x1xf32>
    %26 = vector.broadcast %25 : vector<5x1xf32> to vector<5x32xf32>
    %27 = arith.mulf %22, %26 : vector<5x32xf32>
    %28 = vector.broadcast %7 : vector<1x32xf32> to vector<5x32xf32>
    %29 = arith.mulf %27, %28 : vector<5x32xf32>
    %30 = vector.broadcast %9 : vector<1x32xf32> to vector<5x32xf32>
    %31 = arith.addf %29, %30 : vector<5x32xf32>
    %c0_17 = arith.constant 0 : index
    %c0_18 = arith.constant 0 : index
    %c0_19 = arith.constant 0 : index
    %32 = vector.load %arg6[%c0_17, %c0_18, %c0_19] : memref<6x32x96xf32, #tpu.memory_space<vmem>>, vector<1x32x96xf32>
    %33 = vector.shape_cast %32 : vector<1x32x96xf32> to vector<32x96xf32>
    %cst_20 = arith.constant dense<0.000000e+00> : vector<5x96xf32>
    %34 = tpu.matmul %31, %33, %cst_20 {dimension_numbers = #tpu.dot_dimension_numbers<[1], [0], [0], [1], [0, 0, 1, 1], [], []>} : vector<5x32xf32>, vector<32x96xf32>, vector<5x96xf32> -> vector<5x96xf32>
    %c0_21 = arith.constant 0 : index
    %c0_22 = arith.constant 0 : index
    %c0_23 = arith.constant 0 : index
    %35 = vector.load %arg7[%c0_21, %c0_22, %c0_23] : memref<6x1x96xf32, #tpu.memory_space<vmem>>, vector<1x1x96xf32>
    %36 = vector.shape_cast %35 : vector<1x1x96xf32> to vector<1x96xf32>
    %37 = vector.broadcast %36 : vector<1x96xf32> to vector<5x96xf32>
    %38 = arith.addf %34, %37 : vector<5x96xf32>
    %39 = vector.extract_strided_slice %38 {offsets = [0, 0], sizes = [5, 8], strides = [1, 1]} : vector<5x96xf32> to vector<5x8xf32>
    %40 = vector.extract_strided_slice %38 {offsets = [0, 32], sizes = [5, 8], strides = [1, 1]} : vector<5x96xf32> to vector<5x8xf32>
    %cst_24 = arith.constant dense<0.000000e+00> : vector<5x5xf32>
    %41 = tpu.matmul %39, %40, %cst_24 {dimension_numbers = #tpu.dot_dimension_numbers<[1], [1], [0], [0], [0, 0, 1, 0], [], []>} : vector<5x8xf32>, vector<5x8xf32>, vector<5x5xf32> -> vector<5x5xf32>
    %42 = vector.extract_strided_slice %38 {offsets = [0, 8], sizes = [5, 8], strides = [1, 1]} : vector<5x96xf32> to vector<5x8xf32>
    %43 = vector.extract_strided_slice %38 {offsets = [0, 40], sizes = [5, 8], strides = [1, 1]} : vector<5x96xf32> to vector<5x8xf32>
    %cst_25 = arith.constant dense<0.000000e+00> : vector<5x5xf32>
    %44 = tpu.matmul %42, %43, %cst_25 {dimension_numbers = #tpu.dot_dimension_numbers<[1], [1], [0], [0], [0, 0, 1, 0], [], []>} : vector<5x8xf32>, vector<5x8xf32>, vector<5x5xf32> -> vector<5x5xf32>
    %45 = vector.extract_strided_slice %38 {offsets = [0, 16], sizes = [5, 8], strides = [1, 1]} : vector<5x96xf32> to vector<5x8xf32>
    %46 = vector.extract_strided_slice %38 {offsets = [0, 48], sizes = [5, 8], strides = [1, 1]} : vector<5x96xf32> to vector<5x8xf32>
    %cst_26 = arith.constant dense<0.000000e+00> : vector<5x5xf32>
    %47 = tpu.matmul %45, %46, %cst_26 {dimension_numbers = #tpu.dot_dimension_numbers<[1], [1], [0], [0], [0, 0, 1, 0], [], []>} : vector<5x8xf32>, vector<5x8xf32>, vector<5x5xf32> -> vector<5x5xf32>
    %48 = vector.extract_strided_slice %38 {offsets = [0, 24], sizes = [5, 8], strides = [1, 1]} : vector<5x96xf32> to vector<5x8xf32>
    %49 = vector.extract_strided_slice %38 {offsets = [0, 56], sizes = [5, 8], strides = [1, 1]} : vector<5x96xf32> to vector<5x8xf32>
    %cst_27 = arith.constant dense<0.000000e+00> : vector<5x5xf32>
    %50 = tpu.matmul %48, %49, %cst_27 {dimension_numbers = #tpu.dot_dimension_numbers<[1], [1], [0], [0], [0, 0, 1, 0], [], []>} : vector<5x8xf32>, vector<5x8xf32>, vector<5x5xf32> -> vector<5x5xf32>
    %51 = vector.shape_cast %41 : vector<5x5xf32> to vector<1x5x5xf32>
    %52 = vector.shape_cast %44 : vector<5x5xf32> to vector<1x5x5xf32>
    %53 = vector.shape_cast %47 : vector<5x5xf32> to vector<1x5x5xf32>
    %54 = vector.shape_cast %50 : vector<5x5xf32> to vector<1x5x5xf32>
    %55 = tpu.concatenate %51, %52, %53, %54 in 0 : vector<1x5x5xf32>, vector<1x5x5xf32>, vector<1x5x5xf32>, vector<1x5x5xf32> -> vector<4x5x5xf32>
    %cst_28 = arith.constant dense<0xFF800000> : vector<4x5xf32>
    %56 = vector.multi_reduction <maximumf>, %55, %cst_28 [2] : vector<4x5x5xf32> to vector<4x5xf32>
    %57 = vector.shape_cast %56 : vector<4x5xf32> to vector<4x5x1xf32>
    %58 = vector.broadcast %57 : vector<4x5x1xf32> to vector<4x5x5xf32>
    %59 = arith.subf %55, %58 : vector<4x5x5xf32>
    %60 = math.exp %59 : vector<4x5x5xf32>
    %cst_29 = arith.constant dense<0.000000e+00> : vector<4x5xf32>
    %61 = vector.multi_reduction <add>, %60, %cst_29 [2] : vector<4x5x5xf32> to vector<4x5xf32>
    %62 = vector.shape_cast %61 : vector<4x5xf32> to vector<4x5x1xf32>
    %63 = tpu.reciprocal %62 : vector<4x5x1xf32> -> vector<4x5x1xf32>
    %64 = vector.broadcast %63 : vector<4x5x1xf32> to vector<4x5x5xf32>
    %65 = arith.mulf %60, %64 : vector<4x5x5xf32>
    %c0_30 = arith.constant 0 : index
    %c0_31 = arith.constant 0 : index
    %c0_32 = arith.constant 0 : index
    %66 = vector.load %arg8[%c0_30, %c0_31, %c0_32] : memref<6x32x32xf32, #tpu.memory_space<vmem>>, vector<1x32x32xf32>
    %67 = vector.shape_cast %66 : vector<1x32x32xf32> to vector<32x32xf32>
    %c0_33 = arith.constant 0 : index
    %c0_34 = arith.constant 0 : index
    %c0_35 = arith.constant 0 : index
    %68 = vector.load %arg9[%c0_33, %c0_34, %c0_35] : memref<6x1x32xf32, #tpu.memory_space<vmem>>, vector<1x1x32xf32>
    %69 = vector.shape_cast %68 : vector<1x1x32xf32> to vector<1x32xf32>
    %70 = vector.extract_strided_slice %38 {offsets = [0, 64], sizes = [5, 8], strides = [1, 1]} : vector<5x96xf32> to vector<5x8xf32>
    %71 = vector.extract_strided_slice %65 {offsets = [0, 0, 0], sizes = [1, 5, 5], strides = [1, 1, 1]} : vector<4x5x5xf32> to vector<1x5x5xf32>
    %72 = vector.shape_cast %71 : vector<1x5x5xf32> to vector<5x5xf32>
    %cst_36 = arith.constant dense<0.000000e+00> : vector<5x8xf32>
    %73 = tpu.matmul %72, %70, %cst_36 {dimension_numbers = #tpu.dot_dimension_numbers<[1], [0], [0], [1], [0, 0, 1, 1], [], []>} : vector<5x5xf32>, vector<5x8xf32>, vector<5x8xf32> -> vector<5x8xf32>
    %74 = vector.extract_strided_slice %67 {offsets = [0, 0], sizes = [8, 32], strides = [1, 1]} : vector<32x32xf32> to vector<8x32xf32>
    %cst_37 = arith.constant dense<0.000000e+00> : vector<5x32xf32>
    %75 = tpu.matmul %73, %74, %cst_37 {dimension_numbers = #tpu.dot_dimension_numbers<[1], [0], [0], [1], [0, 0, 1, 1], [], []>} : vector<5x8xf32>, vector<8x32xf32>, vector<5x32xf32> -> vector<5x32xf32>
    %76 = vector.broadcast %69 : vector<1x32xf32> to vector<5x32xf32>
    %77 = arith.addf %76, %75 : vector<5x32xf32>
    %78 = vector.extract_strided_slice %38 {offsets = [0, 72], sizes = [5, 8], strides = [1, 1]} : vector<5x96xf32> to vector<5x8xf32>
    %79 = vector.extract_strided_slice %65 {offsets = [1, 0, 0], sizes = [1, 5, 5], strides = [1, 1, 1]} : vector<4x5x5xf32> to vector<1x5x5xf32>
    %80 = vector.shape_cast %79 : vector<1x5x5xf32> to vector<5x5xf32>
    %cst_38 = arith.constant dense<0.000000e+00> : vector<5x8xf32>
    %81 = tpu.matmul %80, %78, %cst_38 {dimension_numbers = #tpu.dot_dimension_numbers<[1], [0], [0], [1], [0, 0, 1, 1], [], []>} : vector<5x5xf32>, vector<5x8xf32>, vector<5x8xf32> -> vector<5x8xf32>
    %82 = vector.extract_strided_slice %67 {offsets = [8, 0], sizes = [8, 32], strides = [1, 1]} : vector<32x32xf32> to vector<8x32xf32>
    %cst_39 = arith.constant dense<0.000000e+00> : vector<5x32xf32>
    %83 = tpu.matmul %81, %82, %cst_39 {dimension_numbers = #tpu.dot_dimension_numbers<[1], [0], [0], [1], [0, 0, 1, 1], [], []>} : vector<5x8xf32>, vector<8x32xf32>, vector<5x32xf32> -> vector<5x32xf32>
    %84 = arith.addf %77, %83 : vector<5x32xf32>
    %85 = vector.extract_strided_slice %38 {offsets = [0, 80], sizes = [5, 8], strides = [1, 1]} : vector<5x96xf32> to vector<5x8xf32>
    %86 = vector.extract_strided_slice %65 {offsets = [2, 0, 0], sizes = [1, 5, 5], strides = [1, 1, 1]} : vector<4x5x5xf32> to vector<1x5x5xf32>
    %87 = vector.shape_cast %86 : vector<1x5x5xf32> to vector<5x5xf32>
    %cst_40 = arith.constant dense<0.000000e+00> : vector<5x8xf32>
    %88 = tpu.matmul %87, %85, %cst_40 {dimension_numbers = #tpu.dot_dimension_numbers<[1], [0], [0], [1], [0, 0, 1, 1], [], []>} : vector<5x5xf32>, vector<5x8xf32>, vector<5x8xf32> -> vector<5x8xf32>
    %89 = vector.extract_strided_slice %67 {offsets = [16, 0], sizes = [8, 32], strides = [1, 1]} : vector<32x32xf32> to vector<8x32xf32>
    %cst_41 = arith.constant dense<0.000000e+00> : vector<5x32xf32>
    %90 = tpu.matmul %88, %89, %cst_41 {dimension_numbers = #tpu.dot_dimension_numbers<[1], [0], [0], [1], [0, 0, 1, 1], [], []>} : vector<5x8xf32>, vector<8x32xf32>, vector<5x32xf32> -> vector<5x32xf32>
    %91 = arith.addf %84, %90 : vector<5x32xf32>
    %92 = vector.extract_strided_slice %38 {offsets = [0, 88], sizes = [5, 8], strides = [1, 1]} : vector<5x96xf32> to vector<5x8xf32>
    %93 = vector.extract_strided_slice %65 {offsets = [3, 0, 0], sizes = [1, 5, 5], strides = [1, 1, 1]} : vector<4x5x5xf32> to vector<1x5x5xf32>
    %94 = vector.shape_cast %93 : vector<1x5x5xf32> to vector<5x5xf32>
    %cst_42 = arith.constant dense<0.000000e+00> : vector<5x8xf32>
    %95 = tpu.matmul %94, %92, %cst_42 {dimension_numbers = #tpu.dot_dimension_numbers<[1], [0], [0], [1], [0, 0, 1, 1], [], []>} : vector<5x5xf32>, vector<5x8xf32>, vector<5x8xf32> -> vector<5x8xf32>
    %96 = vector.extract_strided_slice %67 {offsets = [24, 0], sizes = [8, 32], strides = [1, 1]} : vector<32x32xf32> to vector<8x32xf32>
    %cst_43 = arith.constant dense<0.000000e+00> : vector<5x32xf32>
    %97 = tpu.matmul %95, %96, %cst_43 {dimension_numbers = #tpu.dot_dimension_numbers<[1], [0], [0], [1], [0, 0, 1, 1], [], []>} : vector<5x8xf32>, vector<8x32xf32>, vector<5x32xf32> -> vector<5x32xf32>
    %98 = arith.addf %91, %97 : vector<5x32xf32>
    %99 = arith.addf %5, %98 : vector<5x32xf32>
    %c0_44 = arith.constant 0 : index
    %c0_45 = arith.constant 0 : index
    %c0_46 = arith.constant 0 : index
    %100 = vector.load %arg10[%c0_44, %c0_45, %c0_46] : memref<6x1x32xf32, #tpu.memory_space<vmem>>, vector<1x1x32xf32>
    %101 = vector.shape_cast %100 : vector<1x1x32xf32> to vector<1x32xf32>
    %c0_47 = arith.constant 0 : index
    %c0_48 = arith.constant 0 : index
    %c0_49 = arith.constant 0 : index
    %102 = vector.load %arg11[%c0_47, %c0_48, %c0_49] : memref<6x1x32xf32, #tpu.memory_space<vmem>>, vector<1x1x32xf32>
    %103 = vector.shape_cast %102 : vector<1x1x32xf32> to vector<1x32xf32>
    %cst_50 = arith.constant dense<0.000000e+00> : vector<5xf32>
    %104 = vector.multi_reduction <add>, %99, %cst_50 [1] : vector<5x32xf32> to vector<5xf32>
    %105 = vector.shape_cast %104 : vector<5xf32> to vector<5x1xf32>
    %cst_51 = arith.constant 3.200000e+01 : f32
    %106 = vector.broadcast %cst_51 : f32 to vector<5x1xf32>
    %107 = arith.divf %105, %106 : vector<5x1xf32>
    %108 = arith.mulf %99, %99 : vector<5x32xf32>
    %cst_52 = arith.constant dense<0.000000e+00> : vector<5xf32>
    %109 = vector.multi_reduction <add>, %108, %cst_52 [1] : vector<5x32xf32> to vector<5xf32>
    %110 = vector.shape_cast %109 : vector<5xf32> to vector<5x1xf32>
    %cst_53 = arith.constant 3.200000e+01 : f32
    %111 = vector.broadcast %cst_53 : f32 to vector<5x1xf32>
    %112 = arith.divf %110, %111 : vector<5x1xf32>
    %113 = arith.mulf %107, %107 : vector<5x1xf32>
    %114 = arith.subf %112, %113 : vector<5x1xf32>
    %115 = vector.broadcast %107 : vector<5x1xf32> to vector<5x32xf32>
    %116 = arith.subf %99, %115 : vector<5x32xf32>
    %cst_54 = arith.constant 9.99999997E-7 : f32
    %117 = vector.broadcast %cst_54 : f32 to vector<5x1xf32>
    %118 = arith.addf %114, %117 : vector<5x1xf32>
    %119 = math.rsqrt %118 : vector<5x1xf32>
    %120 = vector.broadcast %119 : vector<5x1xf32> to vector<5x32xf32>
    %121 = arith.mulf %116, %120 : vector<5x32xf32>
    %122 = vector.broadcast %101 : vector<1x32xf32> to vector<5x32xf32>
    %123 = arith.mulf %121, %122 : vector<5x32xf32>
    %124 = vector.broadcast %103 : vector<1x32xf32> to vector<5x32xf32>
    %125 = arith.addf %123, %124 : vector<5x32xf32>
    %c0_55 = arith.constant 0 : index
    %c0_56 = arith.constant 0 : index
    %c0_57 = arith.constant 0 : index
    %126 = vector.load %arg12[%c0_55, %c0_56, %c0_57] : memref<6x32x128xf32, #tpu.memory_space<vmem>>, vector<1x32x128xf32>
    %127 = vector.shape_cast %126 : vector<1x32x128xf32> to vector<32x128xf32>
    %cst_58 = arith.constant dense<0.000000e+00> : vector<5x128xf32>
    %128 = tpu.matmul %125, %127, %cst_58 {dimension_numbers = #tpu.dot_dimension_numbers<[1], [0], [0], [1], [0, 0, 1, 1], [], []>} : vector<5x32xf32>, vector<32x128xf32>, vector<5x128xf32> -> vector<5x128xf32>
    %c0_59 = arith.constant 0 : index
    %c0_60 = arith.constant 0 : index
    %c0_61 = arith.constant 0 : index
    %129 = vector.load %arg13[%c0_59, %c0_60, %c0_61] : memref<6x1x128xf32, #tpu.memory_space<vmem>>, vector<1x1x128xf32>
    %130 = vector.shape_cast %129 : vector<1x1x128xf32> to vector<1x128xf32>
    %131 = vector.broadcast %130 : vector<1x128xf32> to vector<5x128xf32>
    %132 = arith.addf %128, %131 : vector<5x128xf32>
    %cst_62 = arith.constant 5.000000e-01 : f32
    %133 = vector.broadcast %cst_62 : f32 to vector<5x128xf32>
    %134 = arith.mulf %133, %132 : vector<5x128xf32>
    %cst_63 = arith.constant 0.707106769 : f32
    %135 = vector.broadcast %cst_63 : f32 to vector<5x128xf32>
    %136 = arith.mulf %132, %135 : vector<5x128xf32>
    %cst_64 = arith.constant 0.000000e+00 : f32
    %137 = vector.broadcast %cst_64 : f32 to vector<5x128xf32>
    %138 = arith.cmpf oge, %136, %137 : vector<5x128xf32>
    %cst_65 = arith.constant 1.000000e+00 : f32
    %cst_66 = arith.constant -1.000000e+00 : f32
    %139 = vector.broadcast %cst_65 : f32 to vector<5x128xf32>
    %140 = vector.broadcast %cst_66 : f32 to vector<5x128xf32>
    %141 = arith.select %138, %139, %140 : vector<5x128xi1>, vector<5x128xf32>
    %142 = math.absf %136 : vector<5x128xf32>
    %cst_67 = arith.constant 0.327591091 : f32
    %143 = vector.broadcast %cst_67 : f32 to vector<5x128xf32>
    %144 = arith.mulf %143, %142 : vector<5x128xf32>
    %cst_68 = arith.constant 1.000000e+00 : f32
    %145 = vector.broadcast %cst_68 : f32 to vector<5x128xf32>
    %146 = arith.addf %145, %144 : vector<5x128xf32>
    %147 = tpu.reciprocal %146 : vector<5x128xf32> -> vector<5x128xf32>
    %cst_69 = arith.constant 1.06140542 : f32
    %148 = vector.broadcast %cst_69 : f32 to vector<5x128xf32>
    %149 = arith.mulf %147, %148 : vector<5x128xf32>
    %cst_70 = arith.constant -1.45315206 : f32
    %150 = vector.broadcast %cst_70 : f32 to vector<5x128xf32>
    %151 = arith.addf %150, %149 : vector<5x128xf32>
    %152 = arith.mulf %147, %151 : vector<5x128xf32>
    %cst_71 = arith.constant 1.42141378 : f32
    %153 = vector.broadcast %cst_71 : f32 to vector<5x128xf32>
    %154 = arith.addf %153, %152 : vector<5x128xf32>
    %155 = arith.mulf %147, %154 : vector<5x128xf32>
    %cst_72 = arith.constant -0.284496725 : f32
    %156 = vector.broadcast %cst_72 : f32 to vector<5x128xf32>
    %157 = arith.addf %156, %155 : vector<5x128xf32>
    %158 = arith.mulf %147, %157 : vector<5x128xf32>
    %cst_73 = arith.constant 0.254829586 : f32
    %159 = vector.broadcast %cst_73 : f32 to vector<5x128xf32>
    %160 = arith.addf %159, %158 : vector<5x128xf32>
    %161 = arith.mulf %147, %160 : vector<5x128xf32>
    %cst_74 = arith.constant 0.000000e+00 : f32
    %162 = vector.broadcast %cst_74 : f32 to vector<5x128xf32>
    %163 = arith.subf %162, %142 : vector<5x128xf32>
    %164 = arith.mulf %163, %142 : vector<5x128xf32>
    %165 = math.exp %164 : vector<5x128xf32>
    %166 = arith.mulf %161, %165 : vector<5x128xf32>
    %cst_75 = arith.constant 1.000000e+00 : f32
    %167 = vector.broadcast %cst_75 : f32 to vector<5x128xf32>
    %168 = arith.subf %167, %166 : vector<5x128xf32>
    %169 = arith.mulf %141, %168 : vector<5x128xf32>
    %cst_76 = arith.constant 1.000000e+00 : f32
    %170 = vector.broadcast %cst_76 : f32 to vector<5x128xf32>
    %171 = arith.addf %170, %169 : vector<5x128xf32>
    %172 = arith.mulf %134, %171 : vector<5x128xf32>
    %c0_77 = arith.constant 0 : index
    %c0_78 = arith.constant 0 : index
    %c0_79 = arith.constant 0 : index
    %173 = vector.load %arg14[%c0_77, %c0_78, %c0_79] : memref<6x128x32xf32, #tpu.memory_space<vmem>>, vector<1x128x32xf32>
    %174 = vector.shape_cast %173 : vector<1x128x32xf32> to vector<128x32xf32>
    %cst_80 = arith.constant dense<0.000000e+00> : vector<5x32xf32>
    %175 = tpu.matmul %172, %174, %cst_80 {dimension_numbers = #tpu.dot_dimension_numbers<[1], [0], [0], [1], [0, 0, 1, 1], [], []>} : vector<5x128xf32>, vector<128x32xf32>, vector<5x32xf32> -> vector<5x32xf32>
    %176 = arith.addf %99, %175 : vector<5x32xf32>
    %c0_81 = arith.constant 0 : index
    %c0_82 = arith.constant 0 : index
    %c0_83 = arith.constant 0 : index
    %177 = vector.load %arg15[%c0_81, %c0_82, %c0_83] : memref<6x1x32xf32, #tpu.memory_space<vmem>>, vector<1x1x32xf32>
    %178 = vector.shape_cast %177 : vector<1x1x32xf32> to vector<1x32xf32>
    %179 = vector.broadcast %178 : vector<1x32xf32> to vector<5x32xf32>
    %180 = arith.addf %176, %179 : vector<5x32xf32>
    %c1 = arith.constant 1 : index
    %c0_84 = arith.constant 0 : index
    %c0_85 = arith.constant 0 : index
    %181 = vector.load %arg4[%c1, %c0_84, %c0_85] : memref<6x1x32xf32, #tpu.memory_space<vmem>>, vector<1x1x32xf32>
    %182 = vector.shape_cast %181 : vector<1x1x32xf32> to vector<1x32xf32>
    %c1_86 = arith.constant 1 : index
    %c0_87 = arith.constant 0 : index
    %c0_88 = arith.constant 0 : index
    %183 = vector.load %arg5[%c1_86, %c0_87, %c0_88] : memref<6x1x32xf32, #tpu.memory_space<vmem>>, vector<1x1x32xf32>
    %184 = vector.shape_cast %183 : vector<1x1x32xf32> to vector<1x32xf32>
    %cst_89 = arith.constant dense<0.000000e+00> : vector<5xf32>
    %185 = vector.multi_reduction <add>, %180, %cst_89 [1] : vector<5x32xf32> to vector<5xf32>
    %186 = vector.shape_cast %185 : vector<5xf32> to vector<5x1xf32>
    %cst_90 = arith.constant 3.200000e+01 : f32
    %187 = vector.broadcast %cst_90 : f32 to vector<5x1xf32>
    %188 = arith.divf %186, %187 : vector<5x1xf32>
    %189 = arith.mulf %180, %180 : vector<5x32xf32>
    %cst_91 = arith.constant dense<0.000000e+00> : vector<5xf32>
    %190 = vector.multi_reduction <add>, %189, %cst_91 [1] : vector<5x32xf32> to vector<5xf32>
    %191 = vector.shape_cast %190 : vector<5xf32> to vector<5x1xf32>
    %cst_92 = arith.constant 3.200000e+01 : f32
    %192 = vector.broadcast %cst_92 : f32 to vector<5x1xf32>
    %193 = arith.divf %191, %192 : vector<5x1xf32>
    %194 = arith.mulf %188, %188 : vector<5x1xf32>
    %195 = arith.subf %193, %194 : vector<5x1xf32>
    %196 = vector.broadcast %188 : vector<5x1xf32> to vector<5x32xf32>
    %197 = arith.subf %180, %196 : vector<5x32xf32>
    %cst_93 = arith.constant 9.99999997E-7 : f32
    %198 = vector.broadcast %cst_93 : f32 to vector<5x1xf32>
    %199 = arith.addf %195, %198 : vector<5x1xf32>
    %200 = math.rsqrt %199 : vector<5x1xf32>
    %201 = vector.broadcast %200 : vector<5x1xf32> to vector<5x32xf32>
    %202 = arith.mulf %197, %201 : vector<5x32xf32>
    %203 = vector.broadcast %182 : vector<1x32xf32> to vector<5x32xf32>
    %204 = arith.mulf %202, %203 : vector<5x32xf32>
    %205 = vector.broadcast %184 : vector<1x32xf32> to vector<5x32xf32>
    %206 = arith.addf %204, %205 : vector<5x32xf32>
    %c1_94 = arith.constant 1 : index
    %c0_95 = arith.constant 0 : index
    %c0_96 = arith.constant 0 : index
    %207 = vector.load %arg6[%c1_94, %c0_95, %c0_96] : memref<6x32x96xf32, #tpu.memory_space<vmem>>, vector<1x32x96xf32>
    %208 = vector.shape_cast %207 : vector<1x32x96xf32> to vector<32x96xf32>
    %cst_97 = arith.constant dense<0.000000e+00> : vector<5x96xf32>
    %209 = tpu.matmul %206, %208, %cst_97 {dimension_numbers = #tpu.dot_dimension_numbers<[1], [0], [0], [1], [0, 0, 1, 1], [], []>} : vector<5x32xf32>, vector<32x96xf32>, vector<5x96xf32> -> vector<5x96xf32>
    %c1_98 = arith.constant 1 : index
    %c0_99 = arith.constant 0 : index
    %c0_100 = arith.constant 0 : index
    %210 = vector.load %arg7[%c1_98, %c0_99, %c0_100] : memref<6x1x96xf32, #tpu.memory_space<vmem>>, vector<1x1x96xf32>
    %211 = vector.shape_cast %210 : vector<1x1x96xf32> to vector<1x96xf32>
    %212 = vector.broadcast %211 : vector<1x96xf32> to vector<5x96xf32>
    %213 = arith.addf %209, %212 : vector<5x96xf32>
    %214 = vector.extract_strided_slice %213 {offsets = [0, 0], sizes = [5, 8], strides = [1, 1]} : vector<5x96xf32> to vector<5x8xf32>
    %215 = vector.extract_strided_slice %213 {offsets = [0, 32], sizes = [5, 8], strides = [1, 1]} : vector<5x96xf32> to vector<5x8xf32>
    %cst_101 = arith.constant dense<0.000000e+00> : vector<5x5xf32>
    %216 = tpu.matmul %214, %215, %cst_101 {dimension_numbers = #tpu.dot_dimension_numbers<[1], [1], [0], [0], [0, 0, 1, 0], [], []>} : vector<5x8xf32>, vector<5x8xf32>, vector<5x5xf32> -> vector<5x5xf32>
    %217 = vector.extract_strided_slice %213 {offsets = [0, 8], sizes = [5, 8], strides = [1, 1]} : vector<5x96xf32> to vector<5x8xf32>
    %218 = vector.extract_strided_slice %213 {offsets = [0, 40], sizes = [5, 8], strides = [1, 1]} : vector<5x96xf32> to vector<5x8xf32>
    %cst_102 = arith.constant dense<0.000000e+00> : vector<5x5xf32>
    %219 = tpu.matmul %217, %218, %cst_102 {dimension_numbers = #tpu.dot_dimension_numbers<[1], [1], [0], [0], [0, 0, 1, 0], [], []>} : vector<5x8xf32>, vector<5x8xf32>, vector<5x5xf32> -> vector<5x5xf32>
    %220 = vector.extract_strided_slice %213 {offsets = [0, 16], sizes = [5, 8], strides = [1, 1]} : vector<5x96xf32> to vector<5x8xf32>
    %221 = vector.extract_strided_slice %213 {offsets = [0, 48], sizes = [5, 8], strides = [1, 1]} : vector<5x96xf32> to vector<5x8xf32>
    %cst_103 = arith.constant dense<0.000000e+00> : vector<5x5xf32>
    %222 = tpu.matmul %220, %221, %cst_103 {dimension_numbers = #tpu.dot_dimension_numbers<[1], [1], [0], [0], [0, 0, 1, 0], [], []>} : vector<5x8xf32>, vector<5x8xf32>, vector<5x5xf32> -> vector<5x5xf32>
    %223 = vector.extract_strided_slice %213 {offsets = [0, 24], sizes = [5, 8], strides = [1, 1]} : vector<5x96xf32> to vector<5x8xf32>
    %224 = vector.extract_strided_slice %213 {offsets = [0, 56], sizes = [5, 8], strides = [1, 1]} : vector<5x96xf32> to vector<5x8xf32>
    %cst_104 = arith.constant dense<0.000000e+00> : vector<5x5xf32>
    %225 = tpu.matmul %223, %224, %cst_104 {dimension_numbers = #tpu.dot_dimension_numbers<[1], [1], [0], [0], [0, 0, 1, 0], [], []>} : vector<5x8xf32>, vector<5x8xf32>, vector<5x5xf32> -> vector<5x5xf32>
    %226 = vector.shape_cast %216 : vector<5x5xf32> to vector<1x5x5xf32>
    %227 = vector.shape_cast %219 : vector<5x5xf32> to vector<1x5x5xf32>
    %228 = vector.shape_cast %222 : vector<5x5xf32> to vector<1x5x5xf32>
    %229 = vector.shape_cast %225 : vector<5x5xf32> to vector<1x5x5xf32>
    %230 = tpu.concatenate %226, %227, %228, %229 in 0 : vector<1x5x5xf32>, vector<1x5x5xf32>, vector<1x5x5xf32>, vector<1x5x5xf32> -> vector<4x5x5xf32>
    %cst_105 = arith.constant dense<0xFF800000> : vector<4x5xf32>
    %231 = vector.multi_reduction <maximumf>, %230, %cst_105 [2] : vector<4x5x5xf32> to vector<4x5xf32>
    %232 = vector.shape_cast %231 : vector<4x5xf32> to vector<4x5x1xf32>
    %233 = vector.broadcast %232 : vector<4x5x1xf32> to vector<4x5x5xf32>
    %234 = arith.subf %230, %233 : vector<4x5x5xf32>
    %235 = math.exp %234 : vector<4x5x5xf32>
    %cst_106 = arith.constant dense<0.000000e+00> : vector<4x5xf32>
    %236 = vector.multi_reduction <add>, %235, %cst_106 [2] : vector<4x5x5xf32> to vector<4x5xf32>
    %237 = vector.shape_cast %236 : vector<4x5xf32> to vector<4x5x1xf32>
    %238 = tpu.reciprocal %237 : vector<4x5x1xf32> -> vector<4x5x1xf32>
    %239 = vector.broadcast %238 : vector<4x5x1xf32> to vector<4x5x5xf32>
    %240 = arith.mulf %235, %239 : vector<4x5x5xf32>
    %c1_107 = arith.constant 1 : index
    %c0_108 = arith.constant 0 : index
    %c0_109 = arith.constant 0 : index
    %241 = vector.load %arg8[%c1_107, %c0_108, %c0_109] : memref<6x32x32xf32, #tpu.memory_space<vmem>>, vector<1x32x32xf32>
    %242 = vector.shape_cast %241 : vector<1x32x32xf32> to vector<32x32xf32>
    %c1_110 = arith.constant 1 : index
    %c0_111 = arith.constant 0 : index
    %c0_112 = arith.constant 0 : index
    %243 = vector.load %arg9[%c1_110, %c0_111, %c0_112] : memref<6x1x32xf32, #tpu.memory_space<vmem>>, vector<1x1x32xf32>
    %244 = vector.shape_cast %243 : vector<1x1x32xf32> to vector<1x32xf32>
    %245 = vector.extract_strided_slice %213 {offsets = [0, 64], sizes = [5, 8], strides = [1, 1]} : vector<5x96xf32> to vector<5x8xf32>
    %246 = vector.extract_strided_slice %240 {offsets = [0, 0, 0], sizes = [1, 5, 5], strides = [1, 1, 1]} : vector<4x5x5xf32> to vector<1x5x5xf32>
    %247 = vector.shape_cast %246 : vector<1x5x5xf32> to vector<5x5xf32>
    %cst_113 = arith.constant dense<0.000000e+00> : vector<5x8xf32>
    %248 = tpu.matmul %247, %245, %cst_113 {dimension_numbers = #tpu.dot_dimension_numbers<[1], [0], [0], [1], [0, 0, 1, 1], [], []>} : vector<5x5xf32>, vector<5x8xf32>, vector<5x8xf32> -> vector<5x8xf32>
    %249 = vector.extract_strided_slice %242 {offsets = [0, 0], sizes = [8, 32], strides = [1, 1]} : vector<32x32xf32> to vector<8x32xf32>
    %cst_114 = arith.constant dense<0.000000e+00> : vector<5x32xf32>
    %250 = tpu.matmul %248, %249, %cst_114 {dimension_numbers = #tpu.dot_dimension_numbers<[1], [0], [0], [1], [0, 0, 1, 1], [], []>} : vector<5x8xf32>, vector<8x32xf32>, vector<5x32xf32> -> vector<5x32xf32>
    %251 = vector.broadcast %244 : vector<1x32xf32> to vector<5x32xf32>
    %252 = arith.addf %251, %250 : vector<5x32xf32>
    %253 = vector.extract_strided_slice %213 {offsets = [0, 72], sizes = [5, 8], strides = [1, 1]} : vector<5x96xf32> to vector<5x8xf32>
    %254 = vector.extract_strided_slice %240 {offsets = [1, 0, 0], sizes = [1, 5, 5], strides = [1, 1, 1]} : vector<4x5x5xf32> to vector<1x5x5xf32>
    %255 = vector.shape_cast %254 : vector<1x5x5xf32> to vector<5x5xf32>
    %cst_115 = arith.constant dense<0.000000e+00> : vector<5x8xf32>
    %256 = tpu.matmul %255, %253, %cst_115 {dimension_numbers = #tpu.dot_dimension_numbers<[1], [0], [0], [1], [0, 0, 1, 1], [], []>} : vector<5x5xf32>, vector<5x8xf32>, vector<5x8xf32> -> vector<5x8xf32>
    %257 = vector.extract_strided_slice %242 {offsets = [8, 0], sizes = [8, 32], strides = [1, 1]} : vector<32x32xf32> to vector<8x32xf32>
    %cst_116 = arith.constant dense<0.000000e+00> : vector<5x32xf32>
    %258 = tpu.matmul %256, %257, %cst_116 {dimension_numbers = #tpu.dot_dimension_numbers<[1], [0], [0], [1], [0, 0, 1, 1], [], []>} : vector<5x8xf32>, vector<8x32xf32>, vector<5x32xf32> -> vector<5x32xf32>
    %259 = arith.addf %252, %258 : vector<5x32xf32>
    %260 = vector.extract_strided_slice %213 {offsets = [0, 80], sizes = [5, 8], strides = [1, 1]} : vector<5x96xf32> to vector<5x8xf32>
    %261 = vector.extract_strided_slice %240 {offsets = [2, 0, 0], sizes = [1, 5, 5], strides = [1, 1, 1]} : vector<4x5x5xf32> to vector<1x5x5xf32>
    %262 = vector.shape_cast %261 : vector<1x5x5xf32> to vector<5x5xf32>
    %cst_117 = arith.constant dense<0.000000e+00> : vector<5x8xf32>
    %263 = tpu.matmul %262, %260, %cst_117 {dimension_numbers = #tpu.dot_dimension_numbers<[1], [0], [0], [1], [0, 0, 1, 1], [], []>} : vector<5x5xf32>, vector<5x8xf32>, vector<5x8xf32> -> vector<5x8xf32>
    %264 = vector.extract_strided_slice %242 {offsets = [16, 0], sizes = [8, 32], strides = [1, 1]} : vector<32x32xf32> to vector<8x32xf32>
    %cst_118 = arith.constant dense<0.000000e+00> : vector<5x32xf32>
    %265 = tpu.matmul %263, %264, %cst_118 {dimension_numbers = #tpu.dot_dimension_numbers<[1], [0], [0], [1], [0, 0, 1, 1], [], []>} : vector<5x8xf32>, vector<8x32xf32>, vector<5x32xf32> -> vector<5x32xf32>
    %266 = arith.addf %259, %265 : vector<5x32xf32>
    %267 = vector.extract_strided_slice %213 {offsets = [0, 88], sizes = [5, 8], strides = [1, 1]} : vector<5x96xf32> to vector<5x8xf32>
    %268 = vector.extract_strided_slice %240 {offsets = [3, 0, 0], sizes = [1, 5, 5], strides = [1, 1, 1]} : vector<4x5x5xf32> to vector<1x5x5xf32>
    %269 = vector.shape_cast %268 : vector<1x5x5xf32> to vector<5x5xf32>
    %cst_119 = arith.constant dense<0.000000e+00> : vector<5x8xf32>
    %270 = tpu.matmul %269, %267, %cst_119 {dimension_numbers = #tpu.dot_dimension_numbers<[1], [0], [0], [1], [0, 0, 1, 1], [], []>} : vector<5x5xf32>, vector<5x8xf32>, vector<5x8xf32> -> vector<5x8xf32>
    %271 = vector.extract_strided_slice %242 {offsets = [24, 0], sizes = [8, 32], strides = [1, 1]} : vector<32x32xf32> to vector<8x32xf32>
    %cst_120 = arith.constant dense<0.000000e+00> : vector<5x32xf32>
    %272 = tpu.matmul %270, %271, %cst_120 {dimension_numbers = #tpu.dot_dimension_numbers<[1], [0], [0], [1], [0, 0, 1, 1], [], []>} : vector<5x8xf32>, vector<8x32xf32>, vector<5x32xf32> -> vector<5x32xf32>
    %273 = arith.addf %266, %272 : vector<5x32xf32>
    %274 = arith.addf %180, %273 : vector<5x32xf32>
    %c1_121 = arith.constant 1 : index
    %c0_122 = arith.constant 0 : index
    %c0_123 = arith.constant 0 : index
    %275 = vector.load %arg10[%c1_121, %c0_122, %c0_123] : memref<6x1x32xf32, #tpu.memory_space<vmem>>, vector<1x1x32xf32>
    %276 = vector.shape_cast %275 : vector<1x1x32xf32> to vector<1x32xf32>
    %c1_124 = arith.constant 1 : index
    %c0_125 = arith.constant 0 : index
    %c0_126 = arith.constant 0 : index
    %277 = vector.load %arg11[%c1_124, %c0_125, %c0_126] : memref<6x1x32xf32, #tpu.memory_space<vmem>>, vector<1x1x32xf32>
    %278 = vector.shape_cast %277 : vector<1x1x32xf32> to vector<1x32xf32>
    %cst_127 = arith.constant dense<0.000000e+00> : vector<5xf32>
    %279 = vector.multi_reduction <add>, %274, %cst_127 [1] : vector<5x32xf32> to vector<5xf32>
    %280 = vector.shape_cast %279 : vector<5xf32> to vector<5x1xf32>
    %cst_128 = arith.constant 3.200000e+01 : f32
    %281 = vector.broadcast %cst_128 : f32 to vector<5x1xf32>
    %282 = arith.divf %280, %281 : vector<5x1xf32>
    %283 = arith.mulf %274, %274 : vector<5x32xf32>
    %cst_129 = arith.constant dense<0.000000e+00> : vector<5xf32>
    %284 = vector.multi_reduction <add>, %283, %cst_129 [1] : vector<5x32xf32> to vector<5xf32>
    %285 = vector.shape_cast %284 : vector<5xf32> to vector<5x1xf32>
    %cst_130 = arith.constant 3.200000e+01 : f32
    %286 = vector.broadcast %cst_130 : f32 to vector<5x1xf32>
    %287 = arith.divf %285, %286 : vector<5x1xf32>
    %288 = arith.mulf %282, %282 : vector<5x1xf32>
    %289 = arith.subf %287, %288 : vector<5x1xf32>
    %290 = vector.broadcast %282 : vector<5x1xf32> to vector<5x32xf32>
    %291 = arith.subf %274, %290 : vector<5x32xf32>
    %cst_131 = arith.constant 9.99999997E-7 : f32
    %292 = vector.broadcast %cst_131 : f32 to vector<5x1xf32>
    %293 = arith.addf %289, %292 : vector<5x1xf32>
    %294 = math.rsqrt %293 : vector<5x1xf32>
    %295 = vector.broadcast %294 : vector<5x1xf32> to vector<5x32xf32>
    %296 = arith.mulf %291, %295 : vector<5x32xf32>
    %297 = vector.broadcast %276 : vector<1x32xf32> to vector<5x32xf32>
    %298 = arith.mulf %296, %297 : vector<5x32xf32>
    %299 = vector.broadcast %278 : vector<1x32xf32> to vector<5x32xf32>
    %300 = arith.addf %298, %299 : vector<5x32xf32>
    %c1_132 = arith.constant 1 : index
    %c0_133 = arith.constant 0 : index
    %c0_134 = arith.constant 0 : index
    %301 = vector.load %arg12[%c1_132, %c0_133, %c0_134] : memref<6x32x128xf32, #tpu.memory_space<vmem>>, vector<1x32x128xf32>
    %302 = vector.shape_cast %301 : vector<1x32x128xf32> to vector<32x128xf32>
    %cst_135 = arith.constant dense<0.000000e+00> : vector<5x128xf32>
    %303 = tpu.matmul %300, %302, %cst_135 {dimension_numbers = #tpu.dot_dimension_numbers<[1], [0], [0], [1], [0, 0, 1, 1], [], []>} : vector<5x32xf32>, vector<32x128xf32>, vector<5x128xf32> -> vector<5x128xf32>
    %c1_136 = arith.constant 1 : index
    %c0_137 = arith.constant 0 : index
    %c0_138 = arith.constant 0 : index
    %304 = vector.load %arg13[%c1_136, %c0_137, %c0_138] : memref<6x1x128xf32, #tpu.memory_space<vmem>>, vector<1x1x128xf32>
    %305 = vector.shape_cast %304 : vector<1x1x128xf32> to vector<1x128xf32>
    %306 = vector.broadcast %305 : vector<1x128xf32> to vector<5x128xf32>
    %307 = arith.addf %303, %306 : vector<5x128xf32>
    %cst_139 = arith.constant 5.000000e-01 : f32
    %308 = vector.broadcast %cst_139 : f32 to vector<5x128xf32>
    %309 = arith.mulf %308, %307 : vector<5x128xf32>
    %cst_140 = arith.constant 0.707106769 : f32
    %310 = vector.broadcast %cst_140 : f32 to vector<5x128xf32>
    %311 = arith.mulf %307, %310 : vector<5x128xf32>
    %cst_141 = arith.constant 0.000000e+00 : f32
    %312 = vector.broadcast %cst_141 : f32 to vector<5x128xf32>
    %313 = arith.cmpf oge, %311, %312 : vector<5x128xf32>
    %cst_142 = arith.constant 1.000000e+00 : f32
    %cst_143 = arith.constant -1.000000e+00 : f32
    %314 = vector.broadcast %cst_142 : f32 to vector<5x128xf32>
    %315 = vector.broadcast %cst_143 : f32 to vector<5x128xf32>
    %316 = arith.select %313, %314, %315 : vector<5x128xi1>, vector<5x128xf32>
    %317 = math.absf %311 : vector<5x128xf32>
    %cst_144 = arith.constant 0.327591091 : f32
    %318 = vector.broadcast %cst_144 : f32 to vector<5x128xf32>
    %319 = arith.mulf %318, %317 : vector<5x128xf32>
    %cst_145 = arith.constant 1.000000e+00 : f32
    %320 = vector.broadcast %cst_145 : f32 to vector<5x128xf32>
    %321 = arith.addf %320, %319 : vector<5x128xf32>
    %322 = tpu.reciprocal %321 : vector<5x128xf32> -> vector<5x128xf32>
    %cst_146 = arith.constant 1.06140542 : f32
    %323 = vector.broadcast %cst_146 : f32 to vector<5x128xf32>
    %324 = arith.mulf %322, %323 : vector<5x128xf32>
    %cst_147 = arith.constant -1.45315206 : f32
    %325 = vector.broadcast %cst_147 : f32 to vector<5x128xf32>
    %326 = arith.addf %325, %324 : vector<5x128xf32>
    %327 = arith.mulf %322, %326 : vector<5x128xf32>
    %cst_148 = arith.constant 1.42141378 : f32
    %328 = vector.broadcast %cst_148 : f32 to vector<5x128xf32>
    %329 = arith.addf %328, %327 : vector<5x128xf32>
    %330 = arith.mulf %322, %329 : vector<5x128xf32>
    %cst_149 = arith.constant -0.284496725 : f32
    %331 = vector.broadcast %cst_149 : f32 to vector<5x128xf32>
    %332 = arith.addf %331, %330 : vector<5x128xf32>
    %333 = arith.mulf %322, %332 : vector<5x128xf32>
    %cst_150 = arith.constant 0.254829586 : f32
    %334 = vector.broadcast %cst_150 : f32 to vector<5x128xf32>
    %335 = arith.addf %334, %333 : vector<5x128xf32>
    %336 = arith.mulf %322, %335 : vector<5x128xf32>
    %cst_151 = arith.constant 0.000000e+00 : f32
    %337 = vector.broadcast %cst_151 : f32 to vector<5x128xf32>
    %338 = arith.subf %337, %317 : vector<5x128xf32>
    %339 = arith.mulf %338, %317 : vector<5x128xf32>
    %340 = math.exp %339 : vector<5x128xf32>
    %341 = arith.mulf %336, %340 : vector<5x128xf32>
    %cst_152 = arith.constant 1.000000e+00 : f32
    %342 = vector.broadcast %cst_152 : f32 to vector<5x128xf32>
    %343 = arith.subf %342, %341 : vector<5x128xf32>
    %344 = arith.mulf %316, %343 : vector<5x128xf32>
    %cst_153 = arith.constant 1.000000e+00 : f32
    %345 = vector.broadcast %cst_153 : f32 to vector<5x128xf32>
    %346 = arith.addf %345, %344 : vector<5x128xf32>
    %347 = arith.mulf %309, %346 : vector<5x128xf32>
    %c1_154 = arith.constant 1 : index
    %c0_155 = arith.constant 0 : index
    %c0_156 = arith.constant 0 : index
    %348 = vector.load %arg14[%c1_154, %c0_155, %c0_156] : memref<6x128x32xf32, #tpu.memory_space<vmem>>, vector<1x128x32xf32>
    %349 = vector.shape_cast %348 : vector<1x128x32xf32> to vector<128x32xf32>
    %cst_157 = arith.constant dense<0.000000e+00> : vector<5x32xf32>
    %350 = tpu.matmul %347, %349, %cst_157 {dimension_numbers = #tpu.dot_dimension_numbers<[1], [0], [0], [1], [0, 0, 1, 1], [], []>} : vector<5x128xf32>, vector<128x32xf32>, vector<5x32xf32> -> vector<5x32xf32>
    %351 = arith.addf %274, %350 : vector<5x32xf32>
    %c1_158 = arith.constant 1 : index
    %c0_159 = arith.constant 0 : index
    %c0_160 = arith.constant 0 : index
    %352 = vector.load %arg15[%c1_158, %c0_159, %c0_160] : memref<6x1x32xf32, #tpu.memory_space<vmem>>, vector<1x1x32xf32>
    %353 = vector.shape_cast %352 : vector<1x1x32xf32> to vector<1x32xf32>
    %354 = vector.broadcast %353 : vector<1x32xf32> to vector<5x32xf32>
    %355 = arith.addf %351, %354 : vector<5x32xf32>
    %c2 = arith.constant 2 : index
    %c0_161 = arith.constant 0 : index
    %c0_162 = arith.constant 0 : index
    %356 = vector.load %arg4[%c2, %c0_161, %c0_162] : memref<6x1x32xf32, #tpu.memory_space<vmem>>, vector<1x1x32xf32>
    %357 = vector.shape_cast %356 : vector<1x1x32xf32> to vector<1x32xf32>
    %c2_163 = arith.constant 2 : index
    %c0_164 = arith.constant 0 : index
    %c0_165 = arith.constant 0 : index
    %358 = vector.load %arg5[%c2_163, %c0_164, %c0_165] : memref<6x1x32xf32, #tpu.memory_space<vmem>>, vector<1x1x32xf32>
    %359 = vector.shape_cast %358 : vector<1x1x32xf32> to vector<1x32xf32>
    %cst_166 = arith.constant dense<0.000000e+00> : vector<5xf32>
    %360 = vector.multi_reduction <add>, %355, %cst_166 [1] : vector<5x32xf32> to vector<5xf32>
    %361 = vector.shape_cast %360 : vector<5xf32> to vector<5x1xf32>
    %cst_167 = arith.constant 3.200000e+01 : f32
    %362 = vector.broadcast %cst_167 : f32 to vector<5x1xf32>
    %363 = arith.divf %361, %362 : vector<5x1xf32>
    %364 = arith.mulf %355, %355 : vector<5x32xf32>
    %cst_168 = arith.constant dense<0.000000e+00> : vector<5xf32>
    %365 = vector.multi_reduction <add>, %364, %cst_168 [1] : vector<5x32xf32> to vector<5xf32>
    %366 = vector.shape_cast %365 : vector<5xf32> to vector<5x1xf32>
    %cst_169 = arith.constant 3.200000e+01 : f32
    %367 = vector.broadcast %cst_169 : f32 to vector<5x1xf32>
    %368 = arith.divf %366, %367 : vector<5x1xf32>
    %369 = arith.mulf %363, %363 : vector<5x1xf32>
    %370 = arith.subf %368, %369 : vector<5x1xf32>
    %371 = vector.broadcast %363 : vector<5x1xf32> to vector<5x32xf32>
    %372 = arith.subf %355, %371 : vector<5x32xf32>
    %cst_170 = arith.constant 9.99999997E-7 : f32
    %373 = vector.broadcast %cst_170 : f32 to vector<5x1xf32>
    %374 = arith.addf %370, %373 : vector<5x1xf32>
    %375 = math.rsqrt %374 : vector<5x1xf32>
    %376 = vector.broadcast %375 : vector<5x1xf32> to vector<5x32xf32>
    %377 = arith.mulf %372, %376 : vector<5x32xf32>
    %378 = vector.broadcast %357 : vector<1x32xf32> to vector<5x32xf32>
    %379 = arith.mulf %377, %378 : vector<5x32xf32>
    %380 = vector.broadcast %359 : vector<1x32xf32> to vector<5x32xf32>
    %381 = arith.addf %379, %380 : vector<5x32xf32>
    %c2_171 = arith.constant 2 : index
    %c0_172 = arith.constant 0 : index
    %c0_173 = arith.constant 0 : index
    %382 = vector.load %arg6[%c2_171, %c0_172, %c0_173] : memref<6x32x96xf32, #tpu.memory_space<vmem>>, vector<1x32x96xf32>
    %383 = vector.shape_cast %382 : vector<1x32x96xf32> to vector<32x96xf32>
    %cst_174 = arith.constant dense<0.000000e+00> : vector<5x96xf32>
    %384 = tpu.matmul %381, %383, %cst_174 {dimension_numbers = #tpu.dot_dimension_numbers<[1], [0], [0], [1], [0, 0, 1, 1], [], []>} : vector<5x32xf32>, vector<32x96xf32>, vector<5x96xf32> -> vector<5x96xf32>
    %c2_175 = arith.constant 2 : index
    %c0_176 = arith.constant 0 : index
    %c0_177 = arith.constant 0 : index
    %385 = vector.load %arg7[%c2_175, %c0_176, %c0_177] : memref<6x1x96xf32, #tpu.memory_space<vmem>>, vector<1x1x96xf32>
    %386 = vector.shape_cast %385 : vector<1x1x96xf32> to vector<1x96xf32>
    %387 = vector.broadcast %386 : vector<1x96xf32> to vector<5x96xf32>
    %388 = arith.addf %384, %387 : vector<5x96xf32>
    %389 = vector.extract_strided_slice %388 {offsets = [0, 0], sizes = [5, 8], strides = [1, 1]} : vector<5x96xf32> to vector<5x8xf32>
    %390 = vector.extract_strided_slice %388 {offsets = [0, 32], sizes = [5, 8], strides = [1, 1]} : vector<5x96xf32> to vector<5x8xf32>
    %cst_178 = arith.constant dense<0.000000e+00> : vector<5x5xf32>
    %391 = tpu.matmul %389, %390, %cst_178 {dimension_numbers = #tpu.dot_dimension_numbers<[1], [1], [0], [0], [0, 0, 1, 0], [], []>} : vector<5x8xf32>, vector<5x8xf32>, vector<5x5xf32> -> vector<5x5xf32>
    %392 = vector.extract_strided_slice %388 {offsets = [0, 8], sizes = [5, 8], strides = [1, 1]} : vector<5x96xf32> to vector<5x8xf32>
    %393 = vector.extract_strided_slice %388 {offsets = [0, 40], sizes = [5, 8], strides = [1, 1]} : vector<5x96xf32> to vector<5x8xf32>
    %cst_179 = arith.constant dense<0.000000e+00> : vector<5x5xf32>
    %394 = tpu.matmul %392, %393, %cst_179 {dimension_numbers = #tpu.dot_dimension_numbers<[1], [1], [0], [0], [0, 0, 1, 0], [], []>} : vector<5x8xf32>, vector<5x8xf32>, vector<5x5xf32> -> vector<5x5xf32>
    %395 = vector.extract_strided_slice %388 {offsets = [0, 16], sizes = [5, 8], strides = [1, 1]} : vector<5x96xf32> to vector<5x8xf32>
    %396 = vector.extract_strided_slice %388 {offsets = [0, 48], sizes = [5, 8], strides = [1, 1]} : vector<5x96xf32> to vector<5x8xf32>
    %cst_180 = arith.constant dense<0.000000e+00> : vector<5x5xf32>
    %397 = tpu.matmul %395, %396, %cst_180 {dimension_numbers = #tpu.dot_dimension_numbers<[1], [1], [0], [0], [0, 0, 1, 0], [], []>} : vector<5x8xf32>, vector<5x8xf32>, vector<5x5xf32> -> vector<5x5xf32>
    %398 = vector.extract_strided_slice %388 {offsets = [0, 24], sizes = [5, 8], strides = [1, 1]} : vector<5x96xf32> to vector<5x8xf32>
    %399 = vector.extract_strided_slice %388 {offsets = [0, 56], sizes = [5, 8], strides = [1, 1]} : vector<5x96xf32> to vector<5x8xf32>
    %cst_181 = arith.constant dense<0.000000e+00> : vector<5x5xf32>
    %400 = tpu.matmul %398, %399, %cst_181 {dimension_numbers = #tpu.dot_dimension_numbers<[1], [1], [0], [0], [0, 0, 1, 0], [], []>} : vector<5x8xf32>, vector<5x8xf32>, vector<5x5xf32> -> vector<5x5xf32>
    %401 = vector.shape_cast %391 : vector<5x5xf32> to vector<1x5x5xf32>
    %402 = vector.shape_cast %394 : vector<5x5xf32> to vector<1x5x5xf32>
    %403 = vector.shape_cast %397 : vector<5x5xf32> to vector<1x5x5xf32>
    %404 = vector.shape_cast %400 : vector<5x5xf32> to vector<1x5x5xf32>
    %405 = tpu.concatenate %401, %402, %403, %404 in 0 : vector<1x5x5xf32>, vector<1x5x5xf32>, vector<1x5x5xf32>, vector<1x5x5xf32> -> vector<4x5x5xf32>
    %cst_182 = arith.constant dense<0xFF800000> : vector<4x5xf32>
    %406 = vector.multi_reduction <maximumf>, %405, %cst_182 [2] : vector<4x5x5xf32> to vector<4x5xf32>
    %407 = vector.shape_cast %406 : vector<4x5xf32> to vector<4x5x1xf32>
    %408 = vector.broadcast %407 : vector<4x5x1xf32> to vector<4x5x5xf32>
    %409 = arith.subf %405, %408 : vector<4x5x5xf32>
    %410 = math.exp %409 : vector<4x5x5xf32>
    %cst_183 = arith.constant dense<0.000000e+00> : vector<4x5xf32>
    %411 = vector.multi_reduction <add>, %410, %cst_183 [2] : vector<4x5x5xf32> to vector<4x5xf32>
    %412 = vector.shape_cast %411 : vector<4x5xf32> to vector<4x5x1xf32>
    %413 = tpu.reciprocal %412 : vector<4x5x1xf32> -> vector<4x5x1xf32>
    %414 = vector.broadcast %413 : vector<4x5x1xf32> to vector<4x5x5xf32>
    %415 = arith.mulf %410, %414 : vector<4x5x5xf32>
    %c2_184 = arith.constant 2 : index
    %c0_185 = arith.constant 0 : index
    %c0_186 = arith.constant 0 : index
    %416 = vector.load %arg8[%c2_184, %c0_185, %c0_186] : memref<6x32x32xf32, #tpu.memory_space<vmem>>, vector<1x32x32xf32>
    %417 = vector.shape_cast %416 : vector<1x32x32xf32> to vector<32x32xf32>
    %c2_187 = arith.constant 2 : index
    %c0_188 = arith.constant 0 : index
    %c0_189 = arith.constant 0 : index
    %418 = vector.load %arg9[%c2_187, %c0_188, %c0_189] : memref<6x1x32xf32, #tpu.memory_space<vmem>>, vector<1x1x32xf32>
    %419 = vector.shape_cast %418 : vector<1x1x32xf32> to vector<1x32xf32>
    %420 = vector.extract_strided_slice %388 {offsets = [0, 64], sizes = [5, 8], strides = [1, 1]} : vector<5x96xf32> to vector<5x8xf32>
    %421 = vector.extract_strided_slice %415 {offsets = [0, 0, 0], sizes = [1, 5, 5], strides = [1, 1, 1]} : vector<4x5x5xf32> to vector<1x5x5xf32>
    %422 = vector.shape_cast %421 : vector<1x5x5xf32> to vector<5x5xf32>
    %cst_190 = arith.constant dense<0.000000e+00> : vector<5x8xf32>
    %423 = tpu.matmul %422, %420, %cst_190 {dimension_numbers = #tpu.dot_dimension_numbers<[1], [0], [0], [1], [0, 0, 1, 1], [], []>} : vector<5x5xf32>, vector<5x8xf32>, vector<5x8xf32> -> vector<5x8xf32>
    %424 = vector.extract_strided_slice %417 {offsets = [0, 0], sizes = [8, 32], strides = [1, 1]} : vector<32x32xf32> to vector<8x32xf32>
    %cst_191 = arith.constant dense<0.000000e+00> : vector<5x32xf32>
    %425 = tpu.matmul %423, %424, %cst_191 {dimension_numbers = #tpu.dot_dimension_numbers<[1], [0], [0], [1], [0, 0, 1, 1], [], []>} : vector<5x8xf32>, vector<8x32xf32>, vector<5x32xf32> -> vector<5x32xf32>
    %426 = vector.broadcast %419 : vector<1x32xf32> to vector<5x32xf32>
    %427 = arith.addf %426, %425 : vector<5x32xf32>
    %428 = vector.extract_strided_slice %388 {offsets = [0, 72], sizes = [5, 8], strides = [1, 1]} : vector<5x96xf32> to vector<5x8xf32>
    %429 = vector.extract_strided_slice %415 {offsets = [1, 0, 0], sizes = [1, 5, 5], strides = [1, 1, 1]} : vector<4x5x5xf32> to vector<1x5x5xf32>
    %430 = vector.shape_cast %429 : vector<1x5x5xf32> to vector<5x5xf32>
    %cst_192 = arith.constant dense<0.000000e+00> : vector<5x8xf32>
    %431 = tpu.matmul %430, %428, %cst_192 {dimension_numbers = #tpu.dot_dimension_numbers<[1], [0], [0], [1], [0, 0, 1, 1], [], []>} : vector<5x5xf32>, vector<5x8xf32>, vector<5x8xf32> -> vector<5x8xf32>
    %432 = vector.extract_strided_slice %417 {offsets = [8, 0], sizes = [8, 32], strides = [1, 1]} : vector<32x32xf32> to vector<8x32xf32>
    %cst_193 = arith.constant dense<0.000000e+00> : vector<5x32xf32>
    %433 = tpu.matmul %431, %432, %cst_193 {dimension_numbers = #tpu.dot_dimension_numbers<[1], [0], [0], [1], [0, 0, 1, 1], [], []>} : vector<5x8xf32>, vector<8x32xf32>, vector<5x32xf32> -> vector<5x32xf32>
    %434 = arith.addf %427, %433 : vector<5x32xf32>
    %435 = vector.extract_strided_slice %388 {offsets = [0, 80], sizes = [5, 8], strides = [1, 1]} : vector<5x96xf32> to vector<5x8xf32>
    %436 = vector.extract_strided_slice %415 {offsets = [2, 0, 0], sizes = [1, 5, 5], strides = [1, 1, 1]} : vector<4x5x5xf32> to vector<1x5x5xf32>
    %437 = vector.shape_cast %436 : vector<1x5x5xf32> to vector<5x5xf32>
    %cst_194 = arith.constant dense<0.000000e+00> : vector<5x8xf32>
    %438 = tpu.matmul %437, %435, %cst_194 {dimension_numbers = #tpu.dot_dimension_numbers<[1], [0], [0], [1], [0, 0, 1, 1], [], []>} : vector<5x5xf32>, vector<5x8xf32>, vector<5x8xf32> -> vector<5x8xf32>
    %439 = vector.extract_strided_slice %417 {offsets = [16, 0], sizes = [8, 32], strides = [1, 1]} : vector<32x32xf32> to vector<8x32xf32>
    %cst_195 = arith.constant dense<0.000000e+00> : vector<5x32xf32>
    %440 = tpu.matmul %438, %439, %cst_195 {dimension_numbers = #tpu.dot_dimension_numbers<[1], [0], [0], [1], [0, 0, 1, 1], [], []>} : vector<5x8xf32>, vector<8x32xf32>, vector<5x32xf32> -> vector<5x32xf32>
    %441 = arith.addf %434, %440 : vector<5x32xf32>
    %442 = vector.extract_strided_slice %388 {offsets = [0, 88], sizes = [5, 8], strides = [1, 1]} : vector<5x96xf32> to vector<5x8xf32>
    %443 = vector.extract_strided_slice %415 {offsets = [3, 0, 0], sizes = [1, 5, 5], strides = [1, 1, 1]} : vector<4x5x5xf32> to vector<1x5x5xf32>
    %444 = vector.shape_cast %443 : vector<1x5x5xf32> to vector<5x5xf32>
    %cst_196 = arith.constant dense<0.000000e+00> : vector<5x8xf32>
    %445 = tpu.matmul %444, %442, %cst_196 {dimension_numbers = #tpu.dot_dimension_numbers<[1], [0], [0], [1], [0, 0, 1, 1], [], []>} : vector<5x5xf32>, vector<5x8xf32>, vector<5x8xf32> -> vector<5x8xf32>
    %446 = vector.extract_strided_slice %417 {offsets = [24, 0], sizes = [8, 32], strides = [1, 1]} : vector<32x32xf32> to vector<8x32xf32>
    %cst_197 = arith.constant dense<0.000000e+00> : vector<5x32xf32>
    %447 = tpu.matmul %445, %446, %cst_197 {dimension_numbers = #tpu.dot_dimension_numbers<[1], [0], [0], [1], [0, 0, 1, 1], [], []>} : vector<5x8xf32>, vector<8x32xf32>, vector<5x32xf32> -> vector<5x32xf32>
    %448 = arith.addf %441, %447 : vector<5x32xf32>
    %449 = arith.addf %355, %448 : vector<5x32xf32>
    %c2_198 = arith.constant 2 : index
    %c0_199 = arith.constant 0 : index
    %c0_200 = arith.constant 0 : index
    %450 = vector.load %arg10[%c2_198, %c0_199, %c0_200] : memref<6x1x32xf32, #tpu.memory_space<vmem>>, vector<1x1x32xf32>
    %451 = vector.shape_cast %450 : vector<1x1x32xf32> to vector<1x32xf32>
    %c2_201 = arith.constant 2 : index
    %c0_202 = arith.constant 0 : index
    %c0_203 = arith.constant 0 : index
    %452 = vector.load %arg11[%c2_201, %c0_202, %c0_203] : memref<6x1x32xf32, #tpu.memory_space<vmem>>, vector<1x1x32xf32>
    %453 = vector.shape_cast %452 : vector<1x1x32xf32> to vector<1x32xf32>
    %cst_204 = arith.constant dense<0.000000e+00> : vector<5xf32>
    %454 = vector.multi_reduction <add>, %449, %cst_204 [1] : vector<5x32xf32> to vector<5xf32>
    %455 = vector.shape_cast %454 : vector<5xf32> to vector<5x1xf32>
    %cst_205 = arith.constant 3.200000e+01 : f32
    %456 = vector.broadcast %cst_205 : f32 to vector<5x1xf32>
    %457 = arith.divf %455, %456 : vector<5x1xf32>
    %458 = arith.mulf %449, %449 : vector<5x32xf32>
    %cst_206 = arith.constant dense<0.000000e+00> : vector<5xf32>
    %459 = vector.multi_reduction <add>, %458, %cst_206 [1] : vector<5x32xf32> to vector<5xf32>
    %460 = vector.shape_cast %459 : vector<5xf32> to vector<5x1xf32>
    %cst_207 = arith.constant 3.200000e+01 : f32
    %461 = vector.broadcast %cst_207 : f32 to vector<5x1xf32>
    %462 = arith.divf %460, %461 : vector<5x1xf32>
    %463 = arith.mulf %457, %457 : vector<5x1xf32>
    %464 = arith.subf %462, %463 : vector<5x1xf32>
    %465 = vector.broadcast %457 : vector<5x1xf32> to vector<5x32xf32>
    %466 = arith.subf %449, %465 : vector<5x32xf32>
    %cst_208 = arith.constant 9.99999997E-7 : f32
    %467 = vector.broadcast %cst_208 : f32 to vector<5x1xf32>
    %468 = arith.addf %464, %467 : vector<5x1xf32>
    %469 = math.rsqrt %468 : vector<5x1xf32>
    %470 = vector.broadcast %469 : vector<5x1xf32> to vector<5x32xf32>
    %471 = arith.mulf %466, %470 : vector<5x32xf32>
    %472 = vector.broadcast %451 : vector<1x32xf32> to vector<5x32xf32>
    %473 = arith.mulf %471, %472 : vector<5x32xf32>
    %474 = vector.broadcast %453 : vector<1x32xf32> to vector<5x32xf32>
    %475 = arith.addf %473, %474 : vector<5x32xf32>
    %c2_209 = arith.constant 2 : index
    %c0_210 = arith.constant 0 : index
    %c0_211 = arith.constant 0 : index
    %476 = vector.load %arg12[%c2_209, %c0_210, %c0_211] : memref<6x32x128xf32, #tpu.memory_space<vmem>>, vector<1x32x128xf32>
    %477 = vector.shape_cast %476 : vector<1x32x128xf32> to vector<32x128xf32>
    %cst_212 = arith.constant dense<0.000000e+00> : vector<5x128xf32>
    %478 = tpu.matmul %475, %477, %cst_212 {dimension_numbers = #tpu.dot_dimension_numbers<[1], [0], [0], [1], [0, 0, 1, 1], [], []>} : vector<5x32xf32>, vector<32x128xf32>, vector<5x128xf32> -> vector<5x128xf32>
    %c2_213 = arith.constant 2 : index
    %c0_214 = arith.constant 0 : index
    %c0_215 = arith.constant 0 : index
    %479 = vector.load %arg13[%c2_213, %c0_214, %c0_215] : memref<6x1x128xf32, #tpu.memory_space<vmem>>, vector<1x1x128xf32>
    %480 = vector.shape_cast %479 : vector<1x1x128xf32> to vector<1x128xf32>
    %481 = vector.broadcast %480 : vector<1x128xf32> to vector<5x128xf32>
    %482 = arith.addf %478, %481 : vector<5x128xf32>
    %cst_216 = arith.constant 5.000000e-01 : f32
    %483 = vector.broadcast %cst_216 : f32 to vector<5x128xf32>
    %484 = arith.mulf %483, %482 : vector<5x128xf32>
    %cst_217 = arith.constant 0.707106769 : f32
    %485 = vector.broadcast %cst_217 : f32 to vector<5x128xf32>
    %486 = arith.mulf %482, %485 : vector<5x128xf32>
    %cst_218 = arith.constant 0.000000e+00 : f32
    %487 = vector.broadcast %cst_218 : f32 to vector<5x128xf32>
    %488 = arith.cmpf oge, %486, %487 : vector<5x128xf32>
    %cst_219 = arith.constant 1.000000e+00 : f32
    %cst_220 = arith.constant -1.000000e+00 : f32
    %489 = vector.broadcast %cst_219 : f32 to vector<5x128xf32>
    %490 = vector.broadcast %cst_220 : f32 to vector<5x128xf32>
    %491 = arith.select %488, %489, %490 : vector<5x128xi1>, vector<5x128xf32>
    %492 = math.absf %486 : vector<5x128xf32>
    %cst_221 = arith.constant 0.327591091 : f32
    %493 = vector.broadcast %cst_221 : f32 to vector<5x128xf32>
    %494 = arith.mulf %493, %492 : vector<5x128xf32>
    %cst_222 = arith.constant 1.000000e+00 : f32
    %495 = vector.broadcast %cst_222 : f32 to vector<5x128xf32>
    %496 = arith.addf %495, %494 : vector<5x128xf32>
    %497 = tpu.reciprocal %496 : vector<5x128xf32> -> vector<5x128xf32>
    %cst_223 = arith.constant 1.06140542 : f32
    %498 = vector.broadcast %cst_223 : f32 to vector<5x128xf32>
    %499 = arith.mulf %497, %498 : vector<5x128xf32>
    %cst_224 = arith.constant -1.45315206 : f32
    %500 = vector.broadcast %cst_224 : f32 to vector<5x128xf32>
    %501 = arith.addf %500, %499 : vector<5x128xf32>
    %502 = arith.mulf %497, %501 : vector<5x128xf32>
    %cst_225 = arith.constant 1.42141378 : f32
    %503 = vector.broadcast %cst_225 : f32 to vector<5x128xf32>
    %504 = arith.addf %503, %502 : vector<5x128xf32>
    %505 = arith.mulf %497, %504 : vector<5x128xf32>
    %cst_226 = arith.constant -0.284496725 : f32
    %506 = vector.broadcast %cst_226 : f32 to vector<5x128xf32>
    %507 = arith.addf %506, %505 : vector<5x128xf32>
    %508 = arith.mulf %497, %507 : vector<5x128xf32>
    %cst_227 = arith.constant 0.254829586 : f32
    %509 = vector.broadcast %cst_227 : f32 to vector<5x128xf32>
    %510 = arith.addf %509, %508 : vector<5x128xf32>
    %511 = arith.mulf %497, %510 : vector<5x128xf32>
    %cst_228 = arith.constant 0.000000e+00 : f32
    %512 = vector.broadcast %cst_228 : f32 to vector<5x128xf32>
    %513 = arith.subf %512, %492 : vector<5x128xf32>
    %514 = arith.mulf %513, %492 : vector<5x128xf32>
    %515 = math.exp %514 : vector<5x128xf32>
    %516 = arith.mulf %511, %515 : vector<5x128xf32>
    %cst_229 = arith.constant 1.000000e+00 : f32
    %517 = vector.broadcast %cst_229 : f32 to vector<5x128xf32>
    %518 = arith.subf %517, %516 : vector<5x128xf32>
    %519 = arith.mulf %491, %518 : vector<5x128xf32>
    %cst_230 = arith.constant 1.000000e+00 : f32
    %520 = vector.broadcast %cst_230 : f32 to vector<5x128xf32>
    %521 = arith.addf %520, %519 : vector<5x128xf32>
    %522 = arith.mulf %484, %521 : vector<5x128xf32>
    %c2_231 = arith.constant 2 : index
    %c0_232 = arith.constant 0 : index
    %c0_233 = arith.constant 0 : index
    %523 = vector.load %arg14[%c2_231, %c0_232, %c0_233] : memref<6x128x32xf32, #tpu.memory_space<vmem>>, vector<1x128x32xf32>
    %524 = vector.shape_cast %523 : vector<1x128x32xf32> to vector<128x32xf32>
    %cst_234 = arith.constant dense<0.000000e+00> : vector<5x32xf32>
    %525 = tpu.matmul %522, %524, %cst_234 {dimension_numbers = #tpu.dot_dimension_numbers<[1], [0], [0], [1], [0, 0, 1, 1], [], []>} : vector<5x128xf32>, vector<128x32xf32>, vector<5x32xf32> -> vector<5x32xf32>
    %526 = arith.addf %449, %525 : vector<5x32xf32>
    %c2_235 = arith.constant 2 : index
    %c0_236 = arith.constant 0 : index
    %c0_237 = arith.constant 0 : index
    %527 = vector.load %arg15[%c2_235, %c0_236, %c0_237] : memref<6x1x32xf32, #tpu.memory_space<vmem>>, vector<1x1x32xf32>
    %528 = vector.shape_cast %527 : vector<1x1x32xf32> to vector<1x32xf32>
    %529 = vector.broadcast %528 : vector<1x32xf32> to vector<5x32xf32>
    %530 = arith.addf %526, %529 : vector<5x32xf32>
    %c3 = arith.constant 3 : index
    %c0_238 = arith.constant 0 : index
    %c0_239 = arith.constant 0 : index
    %531 = vector.load %arg4[%c3, %c0_238, %c0_239] : memref<6x1x32xf32, #tpu.memory_space<vmem>>, vector<1x1x32xf32>
    %532 = vector.shape_cast %531 : vector<1x1x32xf32> to vector<1x32xf32>
    %c3_240 = arith.constant 3 : index
    %c0_241 = arith.constant 0 : index
    %c0_242 = arith.constant 0 : index
    %533 = vector.load %arg5[%c3_240, %c0_241, %c0_242] : memref<6x1x32xf32, #tpu.memory_space<vmem>>, vector<1x1x32xf32>
    %534 = vector.shape_cast %533 : vector<1x1x32xf32> to vector<1x32xf32>
    %cst_243 = arith.constant dense<0.000000e+00> : vector<5xf32>
    %535 = vector.multi_reduction <add>, %530, %cst_243 [1] : vector<5x32xf32> to vector<5xf32>
    %536 = vector.shape_cast %535 : vector<5xf32> to vector<5x1xf32>
    %cst_244 = arith.constant 3.200000e+01 : f32
    %537 = vector.broadcast %cst_244 : f32 to vector<5x1xf32>
    %538 = arith.divf %536, %537 : vector<5x1xf32>
    %539 = arith.mulf %530, %530 : vector<5x32xf32>
    %cst_245 = arith.constant dense<0.000000e+00> : vector<5xf32>
    %540 = vector.multi_reduction <add>, %539, %cst_245 [1] : vector<5x32xf32> to vector<5xf32>
    %541 = vector.shape_cast %540 : vector<5xf32> to vector<5x1xf32>
    %cst_246 = arith.constant 3.200000e+01 : f32
    %542 = vector.broadcast %cst_246 : f32 to vector<5x1xf32>
    %543 = arith.divf %541, %542 : vector<5x1xf32>
    %544 = arith.mulf %538, %538 : vector<5x1xf32>
    %545 = arith.subf %543, %544 : vector<5x1xf32>
    %546 = vector.broadcast %538 : vector<5x1xf32> to vector<5x32xf32>
    %547 = arith.subf %530, %546 : vector<5x32xf32>
    %cst_247 = arith.constant 9.99999997E-7 : f32
    %548 = vector.broadcast %cst_247 : f32 to vector<5x1xf32>
    %549 = arith.addf %545, %548 : vector<5x1xf32>
    %550 = math.rsqrt %549 : vector<5x1xf32>
    %551 = vector.broadcast %550 : vector<5x1xf32> to vector<5x32xf32>
    %552 = arith.mulf %547, %551 : vector<5x32xf32>
    %553 = vector.broadcast %532 : vector<1x32xf32> to vector<5x32xf32>
    %554 = arith.mulf %552, %553 : vector<5x32xf32>
    %555 = vector.broadcast %534 : vector<1x32xf32> to vector<5x32xf32>
    %556 = arith.addf %554, %555 : vector<5x32xf32>
    %c3_248 = arith.constant 3 : index
    %c0_249 = arith.constant 0 : index
    %c0_250 = arith.constant 0 : index
    %557 = vector.load %arg6[%c3_248, %c0_249, %c0_250] : memref<6x32x96xf32, #tpu.memory_space<vmem>>, vector<1x32x96xf32>
    %558 = vector.shape_cast %557 : vector<1x32x96xf32> to vector<32x96xf32>
    %cst_251 = arith.constant dense<0.000000e+00> : vector<5x96xf32>
    %559 = tpu.matmul %556, %558, %cst_251 {dimension_numbers = #tpu.dot_dimension_numbers<[1], [0], [0], [1], [0, 0, 1, 1], [], []>} : vector<5x32xf32>, vector<32x96xf32>, vector<5x96xf32> -> vector<5x96xf32>
    %c3_252 = arith.constant 3 : index
    %c0_253 = arith.constant 0 : index
    %c0_254 = arith.constant 0 : index
    %560 = vector.load %arg7[%c3_252, %c0_253, %c0_254] : memref<6x1x96xf32, #tpu.memory_space<vmem>>, vector<1x1x96xf32>
    %561 = vector.shape_cast %560 : vector<1x1x96xf32> to vector<1x96xf32>
    %562 = vector.broadcast %561 : vector<1x96xf32> to vector<5x96xf32>
    %563 = arith.addf %559, %562 : vector<5x96xf32>
    %564 = vector.extract_strided_slice %563 {offsets = [0, 0], sizes = [5, 8], strides = [1, 1]} : vector<5x96xf32> to vector<5x8xf32>
    %565 = vector.extract_strided_slice %563 {offsets = [0, 32], sizes = [5, 8], strides = [1, 1]} : vector<5x96xf32> to vector<5x8xf32>
    %cst_255 = arith.constant dense<0.000000e+00> : vector<5x5xf32>
    %566 = tpu.matmul %564, %565, %cst_255 {dimension_numbers = #tpu.dot_dimension_numbers<[1], [1], [0], [0], [0, 0, 1, 0], [], []>} : vector<5x8xf32>, vector<5x8xf32>, vector<5x5xf32> -> vector<5x5xf32>
    %567 = vector.extract_strided_slice %563 {offsets = [0, 8], sizes = [5, 8], strides = [1, 1]} : vector<5x96xf32> to vector<5x8xf32>
    %568 = vector.extract_strided_slice %563 {offsets = [0, 40], sizes = [5, 8], strides = [1, 1]} : vector<5x96xf32> to vector<5x8xf32>
    %cst_256 = arith.constant dense<0.000000e+00> : vector<5x5xf32>
    %569 = tpu.matmul %567, %568, %cst_256 {dimension_numbers = #tpu.dot_dimension_numbers<[1], [1], [0], [0], [0, 0, 1, 0], [], []>} : vector<5x8xf32>, vector<5x8xf32>, vector<5x5xf32> -> vector<5x5xf32>
    %570 = vector.extract_strided_slice %563 {offsets = [0, 16], sizes = [5, 8], strides = [1, 1]} : vector<5x96xf32> to vector<5x8xf32>
    %571 = vector.extract_strided_slice %563 {offsets = [0, 48], sizes = [5, 8], strides = [1, 1]} : vector<5x96xf32> to vector<5x8xf32>
    %cst_257 = arith.constant dense<0.000000e+00> : vector<5x5xf32>
    %572 = tpu.matmul %570, %571, %cst_257 {dimension_numbers = #tpu.dot_dimension_numbers<[1], [1], [0], [0], [0, 0, 1, 0], [], []>} : vector<5x8xf32>, vector<5x8xf32>, vector<5x5xf32> -> vector<5x5xf32>
    %573 = vector.extract_strided_slice %563 {offsets = [0, 24], sizes = [5, 8], strides = [1, 1]} : vector<5x96xf32> to vector<5x8xf32>
    %574 = vector.extract_strided_slice %563 {offsets = [0, 56], sizes = [5, 8], strides = [1, 1]} : vector<5x96xf32> to vector<5x8xf32>
    %cst_258 = arith.constant dense<0.000000e+00> : vector<5x5xf32>
    %575 = tpu.matmul %573, %574, %cst_258 {dimension_numbers = #tpu.dot_dimension_numbers<[1], [1], [0], [0], [0, 0, 1, 0], [], []>} : vector<5x8xf32>, vector<5x8xf32>, vector<5x5xf32> -> vector<5x5xf32>
    %576 = vector.shape_cast %566 : vector<5x5xf32> to vector<1x5x5xf32>
    %577 = vector.shape_cast %569 : vector<5x5xf32> to vector<1x5x5xf32>
    %578 = vector.shape_cast %572 : vector<5x5xf32> to vector<1x5x5xf32>
    %579 = vector.shape_cast %575 : vector<5x5xf32> to vector<1x5x5xf32>
    %580 = tpu.concatenate %576, %577, %578, %579 in 0 : vector<1x5x5xf32>, vector<1x5x5xf32>, vector<1x5x5xf32>, vector<1x5x5xf32> -> vector<4x5x5xf32>
    %cst_259 = arith.constant dense<0xFF800000> : vector<4x5xf32>
    %581 = vector.multi_reduction <maximumf>, %580, %cst_259 [2] : vector<4x5x5xf32> to vector<4x5xf32>
    %582 = vector.shape_cast %581 : vector<4x5xf32> to vector<4x5x1xf32>
    %583 = vector.broadcast %582 : vector<4x5x1xf32> to vector<4x5x5xf32>
    %584 = arith.subf %580, %583 : vector<4x5x5xf32>
    %585 = math.exp %584 : vector<4x5x5xf32>
    %cst_260 = arith.constant dense<0.000000e+00> : vector<4x5xf32>
    %586 = vector.multi_reduction <add>, %585, %cst_260 [2] : vector<4x5x5xf32> to vector<4x5xf32>
    %587 = vector.shape_cast %586 : vector<4x5xf32> to vector<4x5x1xf32>
    %588 = tpu.reciprocal %587 : vector<4x5x1xf32> -> vector<4x5x1xf32>
    %589 = vector.broadcast %588 : vector<4x5x1xf32> to vector<4x5x5xf32>
    %590 = arith.mulf %585, %589 : vector<4x5x5xf32>
    %c3_261 = arith.constant 3 : index
    %c0_262 = arith.constant 0 : index
    %c0_263 = arith.constant 0 : index
    %591 = vector.load %arg8[%c3_261, %c0_262, %c0_263] : memref<6x32x32xf32, #tpu.memory_space<vmem>>, vector<1x32x32xf32>
    %592 = vector.shape_cast %591 : vector<1x32x32xf32> to vector<32x32xf32>
    %c3_264 = arith.constant 3 : index
    %c0_265 = arith.constant 0 : index
    %c0_266 = arith.constant 0 : index
    %593 = vector.load %arg9[%c3_264, %c0_265, %c0_266] : memref<6x1x32xf32, #tpu.memory_space<vmem>>, vector<1x1x32xf32>
    %594 = vector.shape_cast %593 : vector<1x1x32xf32> to vector<1x32xf32>
    %595 = vector.extract_strided_slice %563 {offsets = [0, 64], sizes = [5, 8], strides = [1, 1]} : vector<5x96xf32> to vector<5x8xf32>
    %596 = vector.extract_strided_slice %590 {offsets = [0, 0, 0], sizes = [1, 5, 5], strides = [1, 1, 1]} : vector<4x5x5xf32> to vector<1x5x5xf32>
    %597 = vector.shape_cast %596 : vector<1x5x5xf32> to vector<5x5xf32>
    %cst_267 = arith.constant dense<0.000000e+00> : vector<5x8xf32>
    %598 = tpu.matmul %597, %595, %cst_267 {dimension_numbers = #tpu.dot_dimension_numbers<[1], [0], [0], [1], [0, 0, 1, 1], [], []>} : vector<5x5xf32>, vector<5x8xf32>, vector<5x8xf32> -> vector<5x8xf32>
    %599 = vector.extract_strided_slice %592 {offsets = [0, 0], sizes = [8, 32], strides = [1, 1]} : vector<32x32xf32> to vector<8x32xf32>
    %cst_268 = arith.constant dense<0.000000e+00> : vector<5x32xf32>
    %600 = tpu.matmul %598, %599, %cst_268 {dimension_numbers = #tpu.dot_dimension_numbers<[1], [0], [0], [1], [0, 0, 1, 1], [], []>} : vector<5x8xf32>, vector<8x32xf32>, vector<5x32xf32> -> vector<5x32xf32>
    %601 = vector.broadcast %594 : vector<1x32xf32> to vector<5x32xf32>
    %602 = arith.addf %601, %600 : vector<5x32xf32>
    %603 = vector.extract_strided_slice %563 {offsets = [0, 72], sizes = [5, 8], strides = [1, 1]} : vector<5x96xf32> to vector<5x8xf32>
    %604 = vector.extract_strided_slice %590 {offsets = [1, 0, 0], sizes = [1, 5, 5], strides = [1, 1, 1]} : vector<4x5x5xf32> to vector<1x5x5xf32>
    %605 = vector.shape_cast %604 : vector<1x5x5xf32> to vector<5x5xf32>
    %cst_269 = arith.constant dense<0.000000e+00> : vector<5x8xf32>
    %606 = tpu.matmul %605, %603, %cst_269 {dimension_numbers = #tpu.dot_dimension_numbers<[1], [0], [0], [1], [0, 0, 1, 1], [], []>} : vector<5x5xf32>, vector<5x8xf32>, vector<5x8xf32> -> vector<5x8xf32>
    %607 = vector.extract_strided_slice %592 {offsets = [8, 0], sizes = [8, 32], strides = [1, 1]} : vector<32x32xf32> to vector<8x32xf32>
    %cst_270 = arith.constant dense<0.000000e+00> : vector<5x32xf32>
    %608 = tpu.matmul %606, %607, %cst_270 {dimension_numbers = #tpu.dot_dimension_numbers<[1], [0], [0], [1], [0, 0, 1, 1], [], []>} : vector<5x8xf32>, vector<8x32xf32>, vector<5x32xf32> -> vector<5x32xf32>
    %609 = arith.addf %602, %608 : vector<5x32xf32>
    %610 = vector.extract_strided_slice %563 {offsets = [0, 80], sizes = [5, 8], strides = [1, 1]} : vector<5x96xf32> to vector<5x8xf32>
    %611 = vector.extract_strided_slice %590 {offsets = [2, 0, 0], sizes = [1, 5, 5], strides = [1, 1, 1]} : vector<4x5x5xf32> to vector<1x5x5xf32>
    %612 = vector.shape_cast %611 : vector<1x5x5xf32> to vector<5x5xf32>
    %cst_271 = arith.constant dense<0.000000e+00> : vector<5x8xf32>
    %613 = tpu.matmul %612, %610, %cst_271 {dimension_numbers = #tpu.dot_dimension_numbers<[1], [0], [0], [1], [0, 0, 1, 1], [], []>} : vector<5x5xf32>, vector<5x8xf32>, vector<5x8xf32> -> vector<5x8xf32>
    %614 = vector.extract_strided_slice %592 {offsets = [16, 0], sizes = [8, 32], strides = [1, 1]} : vector<32x32xf32> to vector<8x32xf32>
    %cst_272 = arith.constant dense<0.000000e+00> : vector<5x32xf32>
    %615 = tpu.matmul %613, %614, %cst_272 {dimension_numbers = #tpu.dot_dimension_numbers<[1], [0], [0], [1], [0, 0, 1, 1], [], []>} : vector<5x8xf32>, vector<8x32xf32>, vector<5x32xf32> -> vector<5x32xf32>
    %616 = arith.addf %609, %615 : vector<5x32xf32>
    %617 = vector.extract_strided_slice %563 {offsets = [0, 88], sizes = [5, 8], strides = [1, 1]} : vector<5x96xf32> to vector<5x8xf32>
    %618 = vector.extract_strided_slice %590 {offsets = [3, 0, 0], sizes = [1, 5, 5], strides = [1, 1, 1]} : vector<4x5x5xf32> to vector<1x5x5xf32>
    %619 = vector.shape_cast %618 : vector<1x5x5xf32> to vector<5x5xf32>
    %cst_273 = arith.constant dense<0.000000e+00> : vector<5x8xf32>
    %620 = tpu.matmul %619, %617, %cst_273 {dimension_numbers = #tpu.dot_dimension_numbers<[1], [0], [0], [1], [0, 0, 1, 1], [], []>} : vector<5x5xf32>, vector<5x8xf32>, vector<5x8xf32> -> vector<5x8xf32>
    %621 = vector.extract_strided_slice %592 {offsets = [24, 0], sizes = [8, 32], strides = [1, 1]} : vector<32x32xf32> to vector<8x32xf32>
    %cst_274 = arith.constant dense<0.000000e+00> : vector<5x32xf32>
    %622 = tpu.matmul %620, %621, %cst_274 {dimension_numbers = #tpu.dot_dimension_numbers<[1], [0], [0], [1], [0, 0, 1, 1], [], []>} : vector<5x8xf32>, vector<8x32xf32>, vector<5x32xf32> -> vector<5x32xf32>
    %623 = arith.addf %616, %622 : vector<5x32xf32>
    %624 = arith.addf %530, %623 : vector<5x32xf32>
    %c3_275 = arith.constant 3 : index
    %c0_276 = arith.constant 0 : index
    %c0_277 = arith.constant 0 : index
    %625 = vector.load %arg10[%c3_275, %c0_276, %c0_277] : memref<6x1x32xf32, #tpu.memory_space<vmem>>, vector<1x1x32xf32>
    %626 = vector.shape_cast %625 : vector<1x1x32xf32> to vector<1x32xf32>
    %c3_278 = arith.constant 3 : index
    %c0_279 = arith.constant 0 : index
    %c0_280 = arith.constant 0 : index
    %627 = vector.load %arg11[%c3_278, %c0_279, %c0_280] : memref<6x1x32xf32, #tpu.memory_space<vmem>>, vector<1x1x32xf32>
    %628 = vector.shape_cast %627 : vector<1x1x32xf32> to vector<1x32xf32>
    %cst_281 = arith.constant dense<0.000000e+00> : vector<5xf32>
    %629 = vector.multi_reduction <add>, %624, %cst_281 [1] : vector<5x32xf32> to vector<5xf32>
    %630 = vector.shape_cast %629 : vector<5xf32> to vector<5x1xf32>
    %cst_282 = arith.constant 3.200000e+01 : f32
    %631 = vector.broadcast %cst_282 : f32 to vector<5x1xf32>
    %632 = arith.divf %630, %631 : vector<5x1xf32>
    %633 = arith.mulf %624, %624 : vector<5x32xf32>
    %cst_283 = arith.constant dense<0.000000e+00> : vector<5xf32>
    %634 = vector.multi_reduction <add>, %633, %cst_283 [1] : vector<5x32xf32> to vector<5xf32>
    %635 = vector.shape_cast %634 : vector<5xf32> to vector<5x1xf32>
    %cst_284 = arith.constant 3.200000e+01 : f32
    %636 = vector.broadcast %cst_284 : f32 to vector<5x1xf32>
    %637 = arith.divf %635, %636 : vector<5x1xf32>
    %638 = arith.mulf %632, %632 : vector<5x1xf32>
    %639 = arith.subf %637, %638 : vector<5x1xf32>
    %640 = vector.broadcast %632 : vector<5x1xf32> to vector<5x32xf32>
    %641 = arith.subf %624, %640 : vector<5x32xf32>
    %cst_285 = arith.constant 9.99999997E-7 : f32
    %642 = vector.broadcast %cst_285 : f32 to vector<5x1xf32>
    %643 = arith.addf %639, %642 : vector<5x1xf32>
    %644 = math.rsqrt %643 : vector<5x1xf32>
    %645 = vector.broadcast %644 : vector<5x1xf32> to vector<5x32xf32>
    %646 = arith.mulf %641, %645 : vector<5x32xf32>
    %647 = vector.broadcast %626 : vector<1x32xf32> to vector<5x32xf32>
    %648 = arith.mulf %646, %647 : vector<5x32xf32>
    %649 = vector.broadcast %628 : vector<1x32xf32> to vector<5x32xf32>
    %650 = arith.addf %648, %649 : vector<5x32xf32>
    %c3_286 = arith.constant 3 : index
    %c0_287 = arith.constant 0 : index
    %c0_288 = arith.constant 0 : index
    %651 = vector.load %arg12[%c3_286, %c0_287, %c0_288] : memref<6x32x128xf32, #tpu.memory_space<vmem>>, vector<1x32x128xf32>
    %652 = vector.shape_cast %651 : vector<1x32x128xf32> to vector<32x128xf32>
    %cst_289 = arith.constant dense<0.000000e+00> : vector<5x128xf32>
    %653 = tpu.matmul %650, %652, %cst_289 {dimension_numbers = #tpu.dot_dimension_numbers<[1], [0], [0], [1], [0, 0, 1, 1], [], []>} : vector<5x32xf32>, vector<32x128xf32>, vector<5x128xf32> -> vector<5x128xf32>
    %c3_290 = arith.constant 3 : index
    %c0_291 = arith.constant 0 : index
    %c0_292 = arith.constant 0 : index
    %654 = vector.load %arg13[%c3_290, %c0_291, %c0_292] : memref<6x1x128xf32, #tpu.memory_space<vmem>>, vector<1x1x128xf32>
    %655 = vector.shape_cast %654 : vector<1x1x128xf32> to vector<1x128xf32>
    %656 = vector.broadcast %655 : vector<1x128xf32> to vector<5x128xf32>
    %657 = arith.addf %653, %656 : vector<5x128xf32>
    %cst_293 = arith.constant 5.000000e-01 : f32
    %658 = vector.broadcast %cst_293 : f32 to vector<5x128xf32>
    %659 = arith.mulf %658, %657 : vector<5x128xf32>
    %cst_294 = arith.constant 0.707106769 : f32
    %660 = vector.broadcast %cst_294 : f32 to vector<5x128xf32>
    %661 = arith.mulf %657, %660 : vector<5x128xf32>
    %cst_295 = arith.constant 0.000000e+00 : f32
    %662 = vector.broadcast %cst_295 : f32 to vector<5x128xf32>
    %663 = arith.cmpf oge, %661, %662 : vector<5x128xf32>
    %cst_296 = arith.constant 1.000000e+00 : f32
    %cst_297 = arith.constant -1.000000e+00 : f32
    %664 = vector.broadcast %cst_296 : f32 to vector<5x128xf32>
    %665 = vector.broadcast %cst_297 : f32 to vector<5x128xf32>
    %666 = arith.select %663, %664, %665 : vector<5x128xi1>, vector<5x128xf32>
    %667 = math.absf %661 : vector<5x128xf32>
    %cst_298 = arith.constant 0.327591091 : f32
    %668 = vector.broadcast %cst_298 : f32 to vector<5x128xf32>
    %669 = arith.mulf %668, %667 : vector<5x128xf32>
    %cst_299 = arith.constant 1.000000e+00 : f32
    %670 = vector.broadcast %cst_299 : f32 to vector<5x128xf32>
    %671 = arith.addf %670, %669 : vector<5x128xf32>
    %672 = tpu.reciprocal %671 : vector<5x128xf32> -> vector<5x128xf32>
    %cst_300 = arith.constant 1.06140542 : f32
    %673 = vector.broadcast %cst_300 : f32 to vector<5x128xf32>
    %674 = arith.mulf %672, %673 : vector<5x128xf32>
    %cst_301 = arith.constant -1.45315206 : f32
    %675 = vector.broadcast %cst_301 : f32 to vector<5x128xf32>
    %676 = arith.addf %675, %674 : vector<5x128xf32>
    %677 = arith.mulf %672, %676 : vector<5x128xf32>
    %cst_302 = arith.constant 1.42141378 : f32
    %678 = vector.broadcast %cst_302 : f32 to vector<5x128xf32>
    %679 = arith.addf %678, %677 : vector<5x128xf32>
    %680 = arith.mulf %672, %679 : vector<5x128xf32>
    %cst_303 = arith.constant -0.284496725 : f32
    %681 = vector.broadcast %cst_303 : f32 to vector<5x128xf32>
    %682 = arith.addf %681, %680 : vector<5x128xf32>
    %683 = arith.mulf %672, %682 : vector<5x128xf32>
    %cst_304 = arith.constant 0.254829586 : f32
    %684 = vector.broadcast %cst_304 : f32 to vector<5x128xf32>
    %685 = arith.addf %684, %683 : vector<5x128xf32>
    %686 = arith.mulf %672, %685 : vector<5x128xf32>
    %cst_305 = arith.constant 0.000000e+00 : f32
    %687 = vector.broadcast %cst_305 : f32 to vector<5x128xf32>
    %688 = arith.subf %687, %667 : vector<5x128xf32>
    %689 = arith.mulf %688, %667 : vector<5x128xf32>
    %690 = math.exp %689 : vector<5x128xf32>
    %691 = arith.mulf %686, %690 : vector<5x128xf32>
    %cst_306 = arith.constant 1.000000e+00 : f32
    %692 = vector.broadcast %cst_306 : f32 to vector<5x128xf32>
    %693 = arith.subf %692, %691 : vector<5x128xf32>
    %694 = arith.mulf %666, %693 : vector<5x128xf32>
    %cst_307 = arith.constant 1.000000e+00 : f32
    %695 = vector.broadcast %cst_307 : f32 to vector<5x128xf32>
    %696 = arith.addf %695, %694 : vector<5x128xf32>
    %697 = arith.mulf %659, %696 : vector<5x128xf32>
    %c3_308 = arith.constant 3 : index
    %c0_309 = arith.constant 0 : index
    %c0_310 = arith.constant 0 : index
    %698 = vector.load %arg14[%c3_308, %c0_309, %c0_310] : memref<6x128x32xf32, #tpu.memory_space<vmem>>, vector<1x128x32xf32>
    %699 = vector.shape_cast %698 : vector<1x128x32xf32> to vector<128x32xf32>
    %cst_311 = arith.constant dense<0.000000e+00> : vector<5x32xf32>
    %700 = tpu.matmul %697, %699, %cst_311 {dimension_numbers = #tpu.dot_dimension_numbers<[1], [0], [0], [1], [0, 0, 1, 1], [], []>} : vector<5x128xf32>, vector<128x32xf32>, vector<5x32xf32> -> vector<5x32xf32>
    %701 = arith.addf %624, %700 : vector<5x32xf32>
    %c3_312 = arith.constant 3 : index
    %c0_313 = arith.constant 0 : index
    %c0_314 = arith.constant 0 : index
    %702 = vector.load %arg15[%c3_312, %c0_313, %c0_314] : memref<6x1x32xf32, #tpu.memory_space<vmem>>, vector<1x1x32xf32>
    %703 = vector.shape_cast %702 : vector<1x1x32xf32> to vector<1x32xf32>
    %704 = vector.broadcast %703 : vector<1x32xf32> to vector<5x32xf32>
    %705 = arith.addf %701, %704 : vector<5x32xf32>
    %c4 = arith.constant 4 : index
    %c0_315 = arith.constant 0 : index
    %c0_316 = arith.constant 0 : index
    %706 = vector.load %arg4[%c4, %c0_315, %c0_316] : memref<6x1x32xf32, #tpu.memory_space<vmem>>, vector<1x1x32xf32>
    %707 = vector.shape_cast %706 : vector<1x1x32xf32> to vector<1x32xf32>
    %c4_317 = arith.constant 4 : index
    %c0_318 = arith.constant 0 : index
    %c0_319 = arith.constant 0 : index
    %708 = vector.load %arg5[%c4_317, %c0_318, %c0_319] : memref<6x1x32xf32, #tpu.memory_space<vmem>>, vector<1x1x32xf32>
    %709 = vector.shape_cast %708 : vector<1x1x32xf32> to vector<1x32xf32>
    %cst_320 = arith.constant dense<0.000000e+00> : vector<5xf32>
    %710 = vector.multi_reduction <add>, %705, %cst_320 [1] : vector<5x32xf32> to vector<5xf32>
    %711 = vector.shape_cast %710 : vector<5xf32> to vector<5x1xf32>
    %cst_321 = arith.constant 3.200000e+01 : f32
    %712 = vector.broadcast %cst_321 : f32 to vector<5x1xf32>
    %713 = arith.divf %711, %712 : vector<5x1xf32>
    %714 = arith.mulf %705, %705 : vector<5x32xf32>
    %cst_322 = arith.constant dense<0.000000e+00> : vector<5xf32>
    %715 = vector.multi_reduction <add>, %714, %cst_322 [1] : vector<5x32xf32> to vector<5xf32>
    %716 = vector.shape_cast %715 : vector<5xf32> to vector<5x1xf32>
    %cst_323 = arith.constant 3.200000e+01 : f32
    %717 = vector.broadcast %cst_323 : f32 to vector<5x1xf32>
    %718 = arith.divf %716, %717 : vector<5x1xf32>
    %719 = arith.mulf %713, %713 : vector<5x1xf32>
    %720 = arith.subf %718, %719 : vector<5x1xf32>
    %721 = vector.broadcast %713 : vector<5x1xf32> to vector<5x32xf32>
    %722 = arith.subf %705, %721 : vector<5x32xf32>
    %cst_324 = arith.constant 9.99999997E-7 : f32
    %723 = vector.broadcast %cst_324 : f32 to vector<5x1xf32>
    %724 = arith.addf %720, %723 : vector<5x1xf32>
    %725 = math.rsqrt %724 : vector<5x1xf32>
    %726 = vector.broadcast %725 : vector<5x1xf32> to vector<5x32xf32>
    %727 = arith.mulf %722, %726 : vector<5x32xf32>
    %728 = vector.broadcast %707 : vector<1x32xf32> to vector<5x32xf32>
    %729 = arith.mulf %727, %728 : vector<5x32xf32>
    %730 = vector.broadcast %709 : vector<1x32xf32> to vector<5x32xf32>
    %731 = arith.addf %729, %730 : vector<5x32xf32>
    %c4_325 = arith.constant 4 : index
    %c0_326 = arith.constant 0 : index
    %c0_327 = arith.constant 0 : index
    %732 = vector.load %arg6[%c4_325, %c0_326, %c0_327] : memref<6x32x96xf32, #tpu.memory_space<vmem>>, vector<1x32x96xf32>
    %733 = vector.shape_cast %732 : vector<1x32x96xf32> to vector<32x96xf32>
    %cst_328 = arith.constant dense<0.000000e+00> : vector<5x96xf32>
    %734 = tpu.matmul %731, %733, %cst_328 {dimension_numbers = #tpu.dot_dimension_numbers<[1], [0], [0], [1], [0, 0, 1, 1], [], []>} : vector<5x32xf32>, vector<32x96xf32>, vector<5x96xf32> -> vector<5x96xf32>
    %c4_329 = arith.constant 4 : index
    %c0_330 = arith.constant 0 : index
    %c0_331 = arith.constant 0 : index
    %735 = vector.load %arg7[%c4_329, %c0_330, %c0_331] : memref<6x1x96xf32, #tpu.memory_space<vmem>>, vector<1x1x96xf32>
    %736 = vector.shape_cast %735 : vector<1x1x96xf32> to vector<1x96xf32>
    %737 = vector.broadcast %736 : vector<1x96xf32> to vector<5x96xf32>
    %738 = arith.addf %734, %737 : vector<5x96xf32>
    %739 = vector.extract_strided_slice %738 {offsets = [0, 0], sizes = [5, 8], strides = [1, 1]} : vector<5x96xf32> to vector<5x8xf32>
    %740 = vector.extract_strided_slice %738 {offsets = [0, 32], sizes = [5, 8], strides = [1, 1]} : vector<5x96xf32> to vector<5x8xf32>
    %cst_332 = arith.constant dense<0.000000e+00> : vector<5x5xf32>
    %741 = tpu.matmul %739, %740, %cst_332 {dimension_numbers = #tpu.dot_dimension_numbers<[1], [1], [0], [0], [0, 0, 1, 0], [], []>} : vector<5x8xf32>, vector<5x8xf32>, vector<5x5xf32> -> vector<5x5xf32>
    %742 = vector.extract_strided_slice %738 {offsets = [0, 8], sizes = [5, 8], strides = [1, 1]} : vector<5x96xf32> to vector<5x8xf32>
    %743 = vector.extract_strided_slice %738 {offsets = [0, 40], sizes = [5, 8], strides = [1, 1]} : vector<5x96xf32> to vector<5x8xf32>
    %cst_333 = arith.constant dense<0.000000e+00> : vector<5x5xf32>
    %744 = tpu.matmul %742, %743, %cst_333 {dimension_numbers = #tpu.dot_dimension_numbers<[1], [1], [0], [0], [0, 0, 1, 0], [], []>} : vector<5x8xf32>, vector<5x8xf32>, vector<5x5xf32> -> vector<5x5xf32>
    %745 = vector.extract_strided_slice %738 {offsets = [0, 16], sizes = [5, 8], strides = [1, 1]} : vector<5x96xf32> to vector<5x8xf32>
    %746 = vector.extract_strided_slice %738 {offsets = [0, 48], sizes = [5, 8], strides = [1, 1]} : vector<5x96xf32> to vector<5x8xf32>
    %cst_334 = arith.constant dense<0.000000e+00> : vector<5x5xf32>
    %747 = tpu.matmul %745, %746, %cst_334 {dimension_numbers = #tpu.dot_dimension_numbers<[1], [1], [0], [0], [0, 0, 1, 0], [], []>} : vector<5x8xf32>, vector<5x8xf32>, vector<5x5xf32> -> vector<5x5xf32>
    %748 = vector.extract_strided_slice %738 {offsets = [0, 24], sizes = [5, 8], strides = [1, 1]} : vector<5x96xf32> to vector<5x8xf32>
    %749 = vector.extract_strided_slice %738 {offsets = [0, 56], sizes = [5, 8], strides = [1, 1]} : vector<5x96xf32> to vector<5x8xf32>
    %cst_335 = arith.constant dense<0.000000e+00> : vector<5x5xf32>
    %750 = tpu.matmul %748, %749, %cst_335 {dimension_numbers = #tpu.dot_dimension_numbers<[1], [1], [0], [0], [0, 0, 1, 0], [], []>} : vector<5x8xf32>, vector<5x8xf32>, vector<5x5xf32> -> vector<5x5xf32>
    %751 = vector.shape_cast %741 : vector<5x5xf32> to vector<1x5x5xf32>
    %752 = vector.shape_cast %744 : vector<5x5xf32> to vector<1x5x5xf32>
    %753 = vector.shape_cast %747 : vector<5x5xf32> to vector<1x5x5xf32>
    %754 = vector.shape_cast %750 : vector<5x5xf32> to vector<1x5x5xf32>
    %755 = tpu.concatenate %751, %752, %753, %754 in 0 : vector<1x5x5xf32>, vector<1x5x5xf32>, vector<1x5x5xf32>, vector<1x5x5xf32> -> vector<4x5x5xf32>
    %cst_336 = arith.constant dense<0xFF800000> : vector<4x5xf32>
    %756 = vector.multi_reduction <maximumf>, %755, %cst_336 [2] : vector<4x5x5xf32> to vector<4x5xf32>
    %757 = vector.shape_cast %756 : vector<4x5xf32> to vector<4x5x1xf32>
    %758 = vector.broadcast %757 : vector<4x5x1xf32> to vector<4x5x5xf32>
    %759 = arith.subf %755, %758 : vector<4x5x5xf32>
    %760 = math.exp %759 : vector<4x5x5xf32>
    %cst_337 = arith.constant dense<0.000000e+00> : vector<4x5xf32>
    %761 = vector.multi_reduction <add>, %760, %cst_337 [2] : vector<4x5x5xf32> to vector<4x5xf32>
    %762 = vector.shape_cast %761 : vector<4x5xf32> to vector<4x5x1xf32>
    %763 = tpu.reciprocal %762 : vector<4x5x1xf32> -> vector<4x5x1xf32>
    %764 = vector.broadcast %763 : vector<4x5x1xf32> to vector<4x5x5xf32>
    %765 = arith.mulf %760, %764 : vector<4x5x5xf32>
    %c4_338 = arith.constant 4 : index
    %c0_339 = arith.constant 0 : index
    %c0_340 = arith.constant 0 : index
    %766 = vector.load %arg8[%c4_338, %c0_339, %c0_340] : memref<6x32x32xf32, #tpu.memory_space<vmem>>, vector<1x32x32xf32>
    %767 = vector.shape_cast %766 : vector<1x32x32xf32> to vector<32x32xf32>
    %c4_341 = arith.constant 4 : index
    %c0_342 = arith.constant 0 : index
    %c0_343 = arith.constant 0 : index
    %768 = vector.load %arg9[%c4_341, %c0_342, %c0_343] : memref<6x1x32xf32, #tpu.memory_space<vmem>>, vector<1x1x32xf32>
    %769 = vector.shape_cast %768 : vector<1x1x32xf32> to vector<1x32xf32>
    %770 = vector.extract_strided_slice %738 {offsets = [0, 64], sizes = [5, 8], strides = [1, 1]} : vector<5x96xf32> to vector<5x8xf32>
    %771 = vector.extract_strided_slice %765 {offsets = [0, 0, 0], sizes = [1, 5, 5], strides = [1, 1, 1]} : vector<4x5x5xf32> to vector<1x5x5xf32>
    %772 = vector.shape_cast %771 : vector<1x5x5xf32> to vector<5x5xf32>
    %cst_344 = arith.constant dense<0.000000e+00> : vector<5x8xf32>
    %773 = tpu.matmul %772, %770, %cst_344 {dimension_numbers = #tpu.dot_dimension_numbers<[1], [0], [0], [1], [0, 0, 1, 1], [], []>} : vector<5x5xf32>, vector<5x8xf32>, vector<5x8xf32> -> vector<5x8xf32>
    %774 = vector.extract_strided_slice %767 {offsets = [0, 0], sizes = [8, 32], strides = [1, 1]} : vector<32x32xf32> to vector<8x32xf32>
    %cst_345 = arith.constant dense<0.000000e+00> : vector<5x32xf32>
    %775 = tpu.matmul %773, %774, %cst_345 {dimension_numbers = #tpu.dot_dimension_numbers<[1], [0], [0], [1], [0, 0, 1, 1], [], []>} : vector<5x8xf32>, vector<8x32xf32>, vector<5x32xf32> -> vector<5x32xf32>
    %776 = vector.broadcast %769 : vector<1x32xf32> to vector<5x32xf32>
    %777 = arith.addf %776, %775 : vector<5x32xf32>
    %778 = vector.extract_strided_slice %738 {offsets = [0, 72], sizes = [5, 8], strides = [1, 1]} : vector<5x96xf32> to vector<5x8xf32>
    %779 = vector.extract_strided_slice %765 {offsets = [1, 0, 0], sizes = [1, 5, 5], strides = [1, 1, 1]} : vector<4x5x5xf32> to vector<1x5x5xf32>
    %780 = vector.shape_cast %779 : vector<1x5x5xf32> to vector<5x5xf32>
    %cst_346 = arith.constant dense<0.000000e+00> : vector<5x8xf32>
    %781 = tpu.matmul %780, %778, %cst_346 {dimension_numbers = #tpu.dot_dimension_numbers<[1], [0], [0], [1], [0, 0, 1, 1], [], []>} : vector<5x5xf32>, vector<5x8xf32>, vector<5x8xf32> -> vector<5x8xf32>
    %782 = vector.extract_strided_slice %767 {offsets = [8, 0], sizes = [8, 32], strides = [1, 1]} : vector<32x32xf32> to vector<8x32xf32>
    %cst_347 = arith.constant dense<0.000000e+00> : vector<5x32xf32>
    %783 = tpu.matmul %781, %782, %cst_347 {dimension_numbers = #tpu.dot_dimension_numbers<[1], [0], [0], [1], [0, 0, 1, 1], [], []>} : vector<5x8xf32>, vector<8x32xf32>, vector<5x32xf32> -> vector<5x32xf32>
    %784 = arith.addf %777, %783 : vector<5x32xf32>
    %785 = vector.extract_strided_slice %738 {offsets = [0, 80], sizes = [5, 8], strides = [1, 1]} : vector<5x96xf32> to vector<5x8xf32>
    %786 = vector.extract_strided_slice %765 {offsets = [2, 0, 0], sizes = [1, 5, 5], strides = [1, 1, 1]} : vector<4x5x5xf32> to vector<1x5x5xf32>
    %787 = vector.shape_cast %786 : vector<1x5x5xf32> to vector<5x5xf32>
    %cst_348 = arith.constant dense<0.000000e+00> : vector<5x8xf32>
    %788 = tpu.matmul %787, %785, %cst_348 {dimension_numbers = #tpu.dot_dimension_numbers<[1], [0], [0], [1], [0, 0, 1, 1], [], []>} : vector<5x5xf32>, vector<5x8xf32>, vector<5x8xf32> -> vector<5x8xf32>
    %789 = vector.extract_strided_slice %767 {offsets = [16, 0], sizes = [8, 32], strides = [1, 1]} : vector<32x32xf32> to vector<8x32xf32>
    %cst_349 = arith.constant dense<0.000000e+00> : vector<5x32xf32>
    %790 = tpu.matmul %788, %789, %cst_349 {dimension_numbers = #tpu.dot_dimension_numbers<[1], [0], [0], [1], [0, 0, 1, 1], [], []>} : vector<5x8xf32>, vector<8x32xf32>, vector<5x32xf32> -> vector<5x32xf32>
    %791 = arith.addf %784, %790 : vector<5x32xf32>
    %792 = vector.extract_strided_slice %738 {offsets = [0, 88], sizes = [5, 8], strides = [1, 1]} : vector<5x96xf32> to vector<5x8xf32>
    %793 = vector.extract_strided_slice %765 {offsets = [3, 0, 0], sizes = [1, 5, 5], strides = [1, 1, 1]} : vector<4x5x5xf32> to vector<1x5x5xf32>
    %794 = vector.shape_cast %793 : vector<1x5x5xf32> to vector<5x5xf32>
    %cst_350 = arith.constant dense<0.000000e+00> : vector<5x8xf32>
    %795 = tpu.matmul %794, %792, %cst_350 {dimension_numbers = #tpu.dot_dimension_numbers<[1], [0], [0], [1], [0, 0, 1, 1], [], []>} : vector<5x5xf32>, vector<5x8xf32>, vector<5x8xf32> -> vector<5x8xf32>
    %796 = vector.extract_strided_slice %767 {offsets = [24, 0], sizes = [8, 32], strides = [1, 1]} : vector<32x32xf32> to vector<8x32xf32>
    %cst_351 = arith.constant dense<0.000000e+00> : vector<5x32xf32>
    %797 = tpu.matmul %795, %796, %cst_351 {dimension_numbers = #tpu.dot_dimension_numbers<[1], [0], [0], [1], [0, 0, 1, 1], [], []>} : vector<5x8xf32>, vector<8x32xf32>, vector<5x32xf32> -> vector<5x32xf32>
    %798 = arith.addf %791, %797 : vector<5x32xf32>
    %799 = arith.addf %705, %798 : vector<5x32xf32>
    %c4_352 = arith.constant 4 : index
    %c0_353 = arith.constant 0 : index
    %c0_354 = arith.constant 0 : index
    %800 = vector.load %arg10[%c4_352, %c0_353, %c0_354] : memref<6x1x32xf32, #tpu.memory_space<vmem>>, vector<1x1x32xf32>
    %801 = vector.shape_cast %800 : vector<1x1x32xf32> to vector<1x32xf32>
    %c4_355 = arith.constant 4 : index
    %c0_356 = arith.constant 0 : index
    %c0_357 = arith.constant 0 : index
    %802 = vector.load %arg11[%c4_355, %c0_356, %c0_357] : memref<6x1x32xf32, #tpu.memory_space<vmem>>, vector<1x1x32xf32>
    %803 = vector.shape_cast %802 : vector<1x1x32xf32> to vector<1x32xf32>
    %cst_358 = arith.constant dense<0.000000e+00> : vector<5xf32>
    %804 = vector.multi_reduction <add>, %799, %cst_358 [1] : vector<5x32xf32> to vector<5xf32>
    %805 = vector.shape_cast %804 : vector<5xf32> to vector<5x1xf32>
    %cst_359 = arith.constant 3.200000e+01 : f32
    %806 = vector.broadcast %cst_359 : f32 to vector<5x1xf32>
    %807 = arith.divf %805, %806 : vector<5x1xf32>
    %808 = arith.mulf %799, %799 : vector<5x32xf32>
    %cst_360 = arith.constant dense<0.000000e+00> : vector<5xf32>
    %809 = vector.multi_reduction <add>, %808, %cst_360 [1] : vector<5x32xf32> to vector<5xf32>
    %810 = vector.shape_cast %809 : vector<5xf32> to vector<5x1xf32>
    %cst_361 = arith.constant 3.200000e+01 : f32
    %811 = vector.broadcast %cst_361 : f32 to vector<5x1xf32>
    %812 = arith.divf %810, %811 : vector<5x1xf32>
    %813 = arith.mulf %807, %807 : vector<5x1xf32>
    %814 = arith.subf %812, %813 : vector<5x1xf32>
    %815 = vector.broadcast %807 : vector<5x1xf32> to vector<5x32xf32>
    %816 = arith.subf %799, %815 : vector<5x32xf32>
    %cst_362 = arith.constant 9.99999997E-7 : f32
    %817 = vector.broadcast %cst_362 : f32 to vector<5x1xf32>
    %818 = arith.addf %814, %817 : vector<5x1xf32>
    %819 = math.rsqrt %818 : vector<5x1xf32>
    %820 = vector.broadcast %819 : vector<5x1xf32> to vector<5x32xf32>
    %821 = arith.mulf %816, %820 : vector<5x32xf32>
    %822 = vector.broadcast %801 : vector<1x32xf32> to vector<5x32xf32>
    %823 = arith.mulf %821, %822 : vector<5x32xf32>
    %824 = vector.broadcast %803 : vector<1x32xf32> to vector<5x32xf32>
    %825 = arith.addf %823, %824 : vector<5x32xf32>
    %c4_363 = arith.constant 4 : index
    %c0_364 = arith.constant 0 : index
    %c0_365 = arith.constant 0 : index
    %826 = vector.load %arg12[%c4_363, %c0_364, %c0_365] : memref<6x32x128xf32, #tpu.memory_space<vmem>>, vector<1x32x128xf32>
    %827 = vector.shape_cast %826 : vector<1x32x128xf32> to vector<32x128xf32>
    %cst_366 = arith.constant dense<0.000000e+00> : vector<5x128xf32>
    %828 = tpu.matmul %825, %827, %cst_366 {dimension_numbers = #tpu.dot_dimension_numbers<[1], [0], [0], [1], [0, 0, 1, 1], [], []>} : vector<5x32xf32>, vector<32x128xf32>, vector<5x128xf32> -> vector<5x128xf32>
    %c4_367 = arith.constant 4 : index
    %c0_368 = arith.constant 0 : index
    %c0_369 = arith.constant 0 : index
    %829 = vector.load %arg13[%c4_367, %c0_368, %c0_369] : memref<6x1x128xf32, #tpu.memory_space<vmem>>, vector<1x1x128xf32>
    %830 = vector.shape_cast %829 : vector<1x1x128xf32> to vector<1x128xf32>
    %831 = vector.broadcast %830 : vector<1x128xf32> to vector<5x128xf32>
    %832 = arith.addf %828, %831 : vector<5x128xf32>
    %cst_370 = arith.constant 5.000000e-01 : f32
    %833 = vector.broadcast %cst_370 : f32 to vector<5x128xf32>
    %834 = arith.mulf %833, %832 : vector<5x128xf32>
    %cst_371 = arith.constant 0.707106769 : f32
    %835 = vector.broadcast %cst_371 : f32 to vector<5x128xf32>
    %836 = arith.mulf %832, %835 : vector<5x128xf32>
    %cst_372 = arith.constant 0.000000e+00 : f32
    %837 = vector.broadcast %cst_372 : f32 to vector<5x128xf32>
    %838 = arith.cmpf oge, %836, %837 : vector<5x128xf32>
    %cst_373 = arith.constant 1.000000e+00 : f32
    %cst_374 = arith.constant -1.000000e+00 : f32
    %839 = vector.broadcast %cst_373 : f32 to vector<5x128xf32>
    %840 = vector.broadcast %cst_374 : f32 to vector<5x128xf32>
    %841 = arith.select %838, %839, %840 : vector<5x128xi1>, vector<5x128xf32>
    %842 = math.absf %836 : vector<5x128xf32>
    %cst_375 = arith.constant 0.327591091 : f32
    %843 = vector.broadcast %cst_375 : f32 to vector<5x128xf32>
    %844 = arith.mulf %843, %842 : vector<5x128xf32>
    %cst_376 = arith.constant 1.000000e+00 : f32
    %845 = vector.broadcast %cst_376 : f32 to vector<5x128xf32>
    %846 = arith.addf %845, %844 : vector<5x128xf32>
    %847 = tpu.reciprocal %846 : vector<5x128xf32> -> vector<5x128xf32>
    %cst_377 = arith.constant 1.06140542 : f32
    %848 = vector.broadcast %cst_377 : f32 to vector<5x128xf32>
    %849 = arith.mulf %847, %848 : vector<5x128xf32>
    %cst_378 = arith.constant -1.45315206 : f32
    %850 = vector.broadcast %cst_378 : f32 to vector<5x128xf32>
    %851 = arith.addf %850, %849 : vector<5x128xf32>
    %852 = arith.mulf %847, %851 : vector<5x128xf32>
    %cst_379 = arith.constant 1.42141378 : f32
    %853 = vector.broadcast %cst_379 : f32 to vector<5x128xf32>
    %854 = arith.addf %853, %852 : vector<5x128xf32>
    %855 = arith.mulf %847, %854 : vector<5x128xf32>
    %cst_380 = arith.constant -0.284496725 : f32
    %856 = vector.broadcast %cst_380 : f32 to vector<5x128xf32>
    %857 = arith.addf %856, %855 : vector<5x128xf32>
    %858 = arith.mulf %847, %857 : vector<5x128xf32>
    %cst_381 = arith.constant 0.254829586 : f32
    %859 = vector.broadcast %cst_381 : f32 to vector<5x128xf32>
    %860 = arith.addf %859, %858 : vector<5x128xf32>
    %861 = arith.mulf %847, %860 : vector<5x128xf32>
    %cst_382 = arith.constant 0.000000e+00 : f32
    %862 = vector.broadcast %cst_382 : f32 to vector<5x128xf32>
    %863 = arith.subf %862, %842 : vector<5x128xf32>
    %864 = arith.mulf %863, %842 : vector<5x128xf32>
    %865 = math.exp %864 : vector<5x128xf32>
    %866 = arith.mulf %861, %865 : vector<5x128xf32>
    %cst_383 = arith.constant 1.000000e+00 : f32
    %867 = vector.broadcast %cst_383 : f32 to vector<5x128xf32>
    %868 = arith.subf %867, %866 : vector<5x128xf32>
    %869 = arith.mulf %841, %868 : vector<5x128xf32>
    %cst_384 = arith.constant 1.000000e+00 : f32
    %870 = vector.broadcast %cst_384 : f32 to vector<5x128xf32>
    %871 = arith.addf %870, %869 : vector<5x128xf32>
    %872 = arith.mulf %834, %871 : vector<5x128xf32>
    %c4_385 = arith.constant 4 : index
    %c0_386 = arith.constant 0 : index
    %c0_387 = arith.constant 0 : index
    %873 = vector.load %arg14[%c4_385, %c0_386, %c0_387] : memref<6x128x32xf32, #tpu.memory_space<vmem>>, vector<1x128x32xf32>
    %874 = vector.shape_cast %873 : vector<1x128x32xf32> to vector<128x32xf32>
    %cst_388 = arith.constant dense<0.000000e+00> : vector<5x32xf32>
    %875 = tpu.matmul %872, %874, %cst_388 {dimension_numbers = #tpu.dot_dimension_numbers<[1], [0], [0], [1], [0, 0, 1, 1], [], []>} : vector<5x128xf32>, vector<128x32xf32>, vector<5x32xf32> -> vector<5x32xf32>
    %876 = arith.addf %799, %875 : vector<5x32xf32>
    %c4_389 = arith.constant 4 : index
    %c0_390 = arith.constant 0 : index
    %c0_391 = arith.constant 0 : index
    %877 = vector.load %arg15[%c4_389, %c0_390, %c0_391] : memref<6x1x32xf32, #tpu.memory_space<vmem>>, vector<1x1x32xf32>
    %878 = vector.shape_cast %877 : vector<1x1x32xf32> to vector<1x32xf32>
    %879 = vector.broadcast %878 : vector<1x32xf32> to vector<5x32xf32>
    %880 = arith.addf %876, %879 : vector<5x32xf32>
    %c5 = arith.constant 5 : index
    %c0_392 = arith.constant 0 : index
    %c0_393 = arith.constant 0 : index
    %881 = vector.load %arg4[%c5, %c0_392, %c0_393] : memref<6x1x32xf32, #tpu.memory_space<vmem>>, vector<1x1x32xf32>
    %882 = vector.shape_cast %881 : vector<1x1x32xf32> to vector<1x32xf32>
    %c5_394 = arith.constant 5 : index
    %c0_395 = arith.constant 0 : index
    %c0_396 = arith.constant 0 : index
    %883 = vector.load %arg5[%c5_394, %c0_395, %c0_396] : memref<6x1x32xf32, #tpu.memory_space<vmem>>, vector<1x1x32xf32>
    %884 = vector.shape_cast %883 : vector<1x1x32xf32> to vector<1x32xf32>
    %cst_397 = arith.constant dense<0.000000e+00> : vector<5xf32>
    %885 = vector.multi_reduction <add>, %880, %cst_397 [1] : vector<5x32xf32> to vector<5xf32>
    %886 = vector.shape_cast %885 : vector<5xf32> to vector<5x1xf32>
    %cst_398 = arith.constant 3.200000e+01 : f32
    %887 = vector.broadcast %cst_398 : f32 to vector<5x1xf32>
    %888 = arith.divf %886, %887 : vector<5x1xf32>
    %889 = arith.mulf %880, %880 : vector<5x32xf32>
    %cst_399 = arith.constant dense<0.000000e+00> : vector<5xf32>
    %890 = vector.multi_reduction <add>, %889, %cst_399 [1] : vector<5x32xf32> to vector<5xf32>
    %891 = vector.shape_cast %890 : vector<5xf32> to vector<5x1xf32>
    %cst_400 = arith.constant 3.200000e+01 : f32
    %892 = vector.broadcast %cst_400 : f32 to vector<5x1xf32>
    %893 = arith.divf %891, %892 : vector<5x1xf32>
    %894 = arith.mulf %888, %888 : vector<5x1xf32>
    %895 = arith.subf %893, %894 : vector<5x1xf32>
    %896 = vector.broadcast %888 : vector<5x1xf32> to vector<5x32xf32>
    %897 = arith.subf %880, %896 : vector<5x32xf32>
    %cst_401 = arith.constant 9.99999997E-7 : f32
    %898 = vector.broadcast %cst_401 : f32 to vector<5x1xf32>
    %899 = arith.addf %895, %898 : vector<5x1xf32>
    %900 = math.rsqrt %899 : vector<5x1xf32>
    %901 = vector.broadcast %900 : vector<5x1xf32> to vector<5x32xf32>
    %902 = arith.mulf %897, %901 : vector<5x32xf32>
    %903 = vector.broadcast %882 : vector<1x32xf32> to vector<5x32xf32>
    %904 = arith.mulf %902, %903 : vector<5x32xf32>
    %905 = vector.broadcast %884 : vector<1x32xf32> to vector<5x32xf32>
    %906 = arith.addf %904, %905 : vector<5x32xf32>
    %c5_402 = arith.constant 5 : index
    %c0_403 = arith.constant 0 : index
    %c0_404 = arith.constant 0 : index
    %907 = vector.load %arg6[%c5_402, %c0_403, %c0_404] : memref<6x32x96xf32, #tpu.memory_space<vmem>>, vector<1x32x96xf32>
    %908 = vector.shape_cast %907 : vector<1x32x96xf32> to vector<32x96xf32>
    %cst_405 = arith.constant dense<0.000000e+00> : vector<5x96xf32>
    %909 = tpu.matmul %906, %908, %cst_405 {dimension_numbers = #tpu.dot_dimension_numbers<[1], [0], [0], [1], [0, 0, 1, 1], [], []>} : vector<5x32xf32>, vector<32x96xf32>, vector<5x96xf32> -> vector<5x96xf32>
    %c5_406 = arith.constant 5 : index
    %c0_407 = arith.constant 0 : index
    %c0_408 = arith.constant 0 : index
    %910 = vector.load %arg7[%c5_406, %c0_407, %c0_408] : memref<6x1x96xf32, #tpu.memory_space<vmem>>, vector<1x1x96xf32>
    %911 = vector.shape_cast %910 : vector<1x1x96xf32> to vector<1x96xf32>
    %912 = vector.broadcast %911 : vector<1x96xf32> to vector<5x96xf32>
    %913 = arith.addf %909, %912 : vector<5x96xf32>
    %914 = vector.extract_strided_slice %913 {offsets = [0, 0], sizes = [5, 8], strides = [1, 1]} : vector<5x96xf32> to vector<5x8xf32>
    %915 = vector.extract_strided_slice %913 {offsets = [0, 32], sizes = [5, 8], strides = [1, 1]} : vector<5x96xf32> to vector<5x8xf32>
    %cst_409 = arith.constant dense<0.000000e+00> : vector<5x5xf32>
    %916 = tpu.matmul %914, %915, %cst_409 {dimension_numbers = #tpu.dot_dimension_numbers<[1], [1], [0], [0], [0, 0, 1, 0], [], []>} : vector<5x8xf32>, vector<5x8xf32>, vector<5x5xf32> -> vector<5x5xf32>
    %917 = vector.extract_strided_slice %913 {offsets = [0, 8], sizes = [5, 8], strides = [1, 1]} : vector<5x96xf32> to vector<5x8xf32>
    %918 = vector.extract_strided_slice %913 {offsets = [0, 40], sizes = [5, 8], strides = [1, 1]} : vector<5x96xf32> to vector<5x8xf32>
    %cst_410 = arith.constant dense<0.000000e+00> : vector<5x5xf32>
    %919 = tpu.matmul %917, %918, %cst_410 {dimension_numbers = #tpu.dot_dimension_numbers<[1], [1], [0], [0], [0, 0, 1, 0], [], []>} : vector<5x8xf32>, vector<5x8xf32>, vector<5x5xf32> -> vector<5x5xf32>
    %920 = vector.extract_strided_slice %913 {offsets = [0, 16], sizes = [5, 8], strides = [1, 1]} : vector<5x96xf32> to vector<5x8xf32>
    %921 = vector.extract_strided_slice %913 {offsets = [0, 48], sizes = [5, 8], strides = [1, 1]} : vector<5x96xf32> to vector<5x8xf32>
    %cst_411 = arith.constant dense<0.000000e+00> : vector<5x5xf32>
    %922 = tpu.matmul %920, %921, %cst_411 {dimension_numbers = #tpu.dot_dimension_numbers<[1], [1], [0], [0], [0, 0, 1, 0], [], []>} : vector<5x8xf32>, vector<5x8xf32>, vector<5x5xf32> -> vector<5x5xf32>
    %923 = vector.extract_strided_slice %913 {offsets = [0, 24], sizes = [5, 8], strides = [1, 1]} : vector<5x96xf32> to vector<5x8xf32>
    %924 = vector.extract_strided_slice %913 {offsets = [0, 56], sizes = [5, 8], strides = [1, 1]} : vector<5x96xf32> to vector<5x8xf32>
    %cst_412 = arith.constant dense<0.000000e+00> : vector<5x5xf32>
    %925 = tpu.matmul %923, %924, %cst_412 {dimension_numbers = #tpu.dot_dimension_numbers<[1], [1], [0], [0], [0, 0, 1, 0], [], []>} : vector<5x8xf32>, vector<5x8xf32>, vector<5x5xf32> -> vector<5x5xf32>
    %926 = vector.shape_cast %916 : vector<5x5xf32> to vector<1x5x5xf32>
    %927 = vector.shape_cast %919 : vector<5x5xf32> to vector<1x5x5xf32>
    %928 = vector.shape_cast %922 : vector<5x5xf32> to vector<1x5x5xf32>
    %929 = vector.shape_cast %925 : vector<5x5xf32> to vector<1x5x5xf32>
    %930 = tpu.concatenate %926, %927, %928, %929 in 0 : vector<1x5x5xf32>, vector<1x5x5xf32>, vector<1x5x5xf32>, vector<1x5x5xf32> -> vector<4x5x5xf32>
    %cst_413 = arith.constant dense<0xFF800000> : vector<4x5xf32>
    %931 = vector.multi_reduction <maximumf>, %930, %cst_413 [2] : vector<4x5x5xf32> to vector<4x5xf32>
    %932 = vector.shape_cast %931 : vector<4x5xf32> to vector<4x5x1xf32>
    %933 = vector.broadcast %932 : vector<4x5x1xf32> to vector<4x5x5xf32>
    %934 = arith.subf %930, %933 : vector<4x5x5xf32>
    %935 = math.exp %934 : vector<4x5x5xf32>
    %cst_414 = arith.constant dense<0.000000e+00> : vector<4x5xf32>
    %936 = vector.multi_reduction <add>, %935, %cst_414 [2] : vector<4x5x5xf32> to vector<4x5xf32>
    %937 = vector.shape_cast %936 : vector<4x5xf32> to vector<4x5x1xf32>
    %938 = tpu.reciprocal %937 : vector<4x5x1xf32> -> vector<4x5x1xf32>
    %939 = vector.broadcast %938 : vector<4x5x1xf32> to vector<4x5x5xf32>
    %940 = arith.mulf %935, %939 : vector<4x5x5xf32>
    %c5_415 = arith.constant 5 : index
    %c0_416 = arith.constant 0 : index
    %c0_417 = arith.constant 0 : index
    %941 = vector.load %arg8[%c5_415, %c0_416, %c0_417] : memref<6x32x32xf32, #tpu.memory_space<vmem>>, vector<1x32x32xf32>
    %942 = vector.shape_cast %941 : vector<1x32x32xf32> to vector<32x32xf32>
    %c5_418 = arith.constant 5 : index
    %c0_419 = arith.constant 0 : index
    %c0_420 = arith.constant 0 : index
    %943 = vector.load %arg9[%c5_418, %c0_419, %c0_420] : memref<6x1x32xf32, #tpu.memory_space<vmem>>, vector<1x1x32xf32>
    %944 = vector.shape_cast %943 : vector<1x1x32xf32> to vector<1x32xf32>
    %945 = vector.extract_strided_slice %913 {offsets = [0, 64], sizes = [5, 8], strides = [1, 1]} : vector<5x96xf32> to vector<5x8xf32>
    %946 = vector.extract_strided_slice %940 {offsets = [0, 0, 0], sizes = [1, 5, 5], strides = [1, 1, 1]} : vector<4x5x5xf32> to vector<1x5x5xf32>
    %947 = vector.shape_cast %946 : vector<1x5x5xf32> to vector<5x5xf32>
    %cst_421 = arith.constant dense<0.000000e+00> : vector<5x8xf32>
    %948 = tpu.matmul %947, %945, %cst_421 {dimension_numbers = #tpu.dot_dimension_numbers<[1], [0], [0], [1], [0, 0, 1, 1], [], []>} : vector<5x5xf32>, vector<5x8xf32>, vector<5x8xf32> -> vector<5x8xf32>
    %949 = vector.extract_strided_slice %942 {offsets = [0, 0], sizes = [8, 32], strides = [1, 1]} : vector<32x32xf32> to vector<8x32xf32>
    %cst_422 = arith.constant dense<0.000000e+00> : vector<5x32xf32>
    %950 = tpu.matmul %948, %949, %cst_422 {dimension_numbers = #tpu.dot_dimension_numbers<[1], [0], [0], [1], [0, 0, 1, 1], [], []>} : vector<5x8xf32>, vector<8x32xf32>, vector<5x32xf32> -> vector<5x32xf32>
    %951 = vector.broadcast %944 : vector<1x32xf32> to vector<5x32xf32>
    %952 = arith.addf %951, %950 : vector<5x32xf32>
    %953 = vector.extract_strided_slice %913 {offsets = [0, 72], sizes = [5, 8], strides = [1, 1]} : vector<5x96xf32> to vector<5x8xf32>
    %954 = vector.extract_strided_slice %940 {offsets = [1, 0, 0], sizes = [1, 5, 5], strides = [1, 1, 1]} : vector<4x5x5xf32> to vector<1x5x5xf32>
    %955 = vector.shape_cast %954 : vector<1x5x5xf32> to vector<5x5xf32>
    %cst_423 = arith.constant dense<0.000000e+00> : vector<5x8xf32>
    %956 = tpu.matmul %955, %953, %cst_423 {dimension_numbers = #tpu.dot_dimension_numbers<[1], [0], [0], [1], [0, 0, 1, 1], [], []>} : vector<5x5xf32>, vector<5x8xf32>, vector<5x8xf32> -> vector<5x8xf32>
    %957 = vector.extract_strided_slice %942 {offsets = [8, 0], sizes = [8, 32], strides = [1, 1]} : vector<32x32xf32> to vector<8x32xf32>
    %cst_424 = arith.constant dense<0.000000e+00> : vector<5x32xf32>
    %958 = tpu.matmul %956, %957, %cst_424 {dimension_numbers = #tpu.dot_dimension_numbers<[1], [0], [0], [1], [0, 0, 1, 1], [], []>} : vector<5x8xf32>, vector<8x32xf32>, vector<5x32xf32> -> vector<5x32xf32>
    %959 = arith.addf %952, %958 : vector<5x32xf32>
    %960 = vector.extract_strided_slice %913 {offsets = [0, 80], sizes = [5, 8], strides = [1, 1]} : vector<5x96xf32> to vector<5x8xf32>
    %961 = vector.extract_strided_slice %940 {offsets = [2, 0, 0], sizes = [1, 5, 5], strides = [1, 1, 1]} : vector<4x5x5xf32> to vector<1x5x5xf32>
    %962 = vector.shape_cast %961 : vector<1x5x5xf32> to vector<5x5xf32>
    %cst_425 = arith.constant dense<0.000000e+00> : vector<5x8xf32>
    %963 = tpu.matmul %962, %960, %cst_425 {dimension_numbers = #tpu.dot_dimension_numbers<[1], [0], [0], [1], [0, 0, 1, 1], [], []>} : vector<5x5xf32>, vector<5x8xf32>, vector<5x8xf32> -> vector<5x8xf32>
    %964 = vector.extract_strided_slice %942 {offsets = [16, 0], sizes = [8, 32], strides = [1, 1]} : vector<32x32xf32> to vector<8x32xf32>
    %cst_426 = arith.constant dense<0.000000e+00> : vector<5x32xf32>
    %965 = tpu.matmul %963, %964, %cst_426 {dimension_numbers = #tpu.dot_dimension_numbers<[1], [0], [0], [1], [0, 0, 1, 1], [], []>} : vector<5x8xf32>, vector<8x32xf32>, vector<5x32xf32> -> vector<5x32xf32>
    %966 = arith.addf %959, %965 : vector<5x32xf32>
    %967 = vector.extract_strided_slice %913 {offsets = [0, 88], sizes = [5, 8], strides = [1, 1]} : vector<5x96xf32> to vector<5x8xf32>
    %968 = vector.extract_strided_slice %940 {offsets = [3, 0, 0], sizes = [1, 5, 5], strides = [1, 1, 1]} : vector<4x5x5xf32> to vector<1x5x5xf32>
    %969 = vector.shape_cast %968 : vector<1x5x5xf32> to vector<5x5xf32>
    %cst_427 = arith.constant dense<0.000000e+00> : vector<5x8xf32>
    %970 = tpu.matmul %969, %967, %cst_427 {dimension_numbers = #tpu.dot_dimension_numbers<[1], [0], [0], [1], [0, 0, 1, 1], [], []>} : vector<5x5xf32>, vector<5x8xf32>, vector<5x8xf32> -> vector<5x8xf32>
    %971 = vector.extract_strided_slice %942 {offsets = [24, 0], sizes = [8, 32], strides = [1, 1]} : vector<32x32xf32> to vector<8x32xf32>
    %cst_428 = arith.constant dense<0.000000e+00> : vector<5x32xf32>
    %972 = tpu.matmul %970, %971, %cst_428 {dimension_numbers = #tpu.dot_dimension_numbers<[1], [0], [0], [1], [0, 0, 1, 1], [], []>} : vector<5x8xf32>, vector<8x32xf32>, vector<5x32xf32> -> vector<5x32xf32>
    %973 = arith.addf %966, %972 : vector<5x32xf32>
    %974 = arith.addf %880, %973 : vector<5x32xf32>
    %c5_429 = arith.constant 5 : index
    %c0_430 = arith.constant 0 : index
    %c0_431 = arith.constant 0 : index
    %975 = vector.load %arg10[%c5_429, %c0_430, %c0_431] : memref<6x1x32xf32, #tpu.memory_space<vmem>>, vector<1x1x32xf32>
    %976 = vector.shape_cast %975 : vector<1x1x32xf32> to vector<1x32xf32>
    %c5_432 = arith.constant 5 : index
    %c0_433 = arith.constant 0 : index
    %c0_434 = arith.constant 0 : index
    %977 = vector.load %arg11[%c5_432, %c0_433, %c0_434] : memref<6x1x32xf32, #tpu.memory_space<vmem>>, vector<1x1x32xf32>
    %978 = vector.shape_cast %977 : vector<1x1x32xf32> to vector<1x32xf32>
    %cst_435 = arith.constant dense<0.000000e+00> : vector<5xf32>
    %979 = vector.multi_reduction <add>, %974, %cst_435 [1] : vector<5x32xf32> to vector<5xf32>
    %980 = vector.shape_cast %979 : vector<5xf32> to vector<5x1xf32>
    %cst_436 = arith.constant 3.200000e+01 : f32
    %981 = vector.broadcast %cst_436 : f32 to vector<5x1xf32>
    %982 = arith.divf %980, %981 : vector<5x1xf32>
    %983 = arith.mulf %974, %974 : vector<5x32xf32>
    %cst_437 = arith.constant dense<0.000000e+00> : vector<5xf32>
    %984 = vector.multi_reduction <add>, %983, %cst_437 [1] : vector<5x32xf32> to vector<5xf32>
    %985 = vector.shape_cast %984 : vector<5xf32> to vector<5x1xf32>
    %cst_438 = arith.constant 3.200000e+01 : f32
    %986 = vector.broadcast %cst_438 : f32 to vector<5x1xf32>
    %987 = arith.divf %985, %986 : vector<5x1xf32>
    %988 = arith.mulf %982, %982 : vector<5x1xf32>
    %989 = arith.subf %987, %988 : vector<5x1xf32>
    %990 = vector.broadcast %982 : vector<5x1xf32> to vector<5x32xf32>
    %991 = arith.subf %974, %990 : vector<5x32xf32>
    %cst_439 = arith.constant 9.99999997E-7 : f32
    %992 = vector.broadcast %cst_439 : f32 to vector<5x1xf32>
    %993 = arith.addf %989, %992 : vector<5x1xf32>
    %994 = math.rsqrt %993 : vector<5x1xf32>
    %995 = vector.broadcast %994 : vector<5x1xf32> to vector<5x32xf32>
    %996 = arith.mulf %991, %995 : vector<5x32xf32>
    %997 = vector.broadcast %976 : vector<1x32xf32> to vector<5x32xf32>
    %998 = arith.mulf %996, %997 : vector<5x32xf32>
    %999 = vector.broadcast %978 : vector<1x32xf32> to vector<5x32xf32>
    %1000 = arith.addf %998, %999 : vector<5x32xf32>
    %c5_440 = arith.constant 5 : index
    %c0_441 = arith.constant 0 : index
    %c0_442 = arith.constant 0 : index
    %1001 = vector.load %arg12[%c5_440, %c0_441, %c0_442] : memref<6x32x128xf32, #tpu.memory_space<vmem>>, vector<1x32x128xf32>
    %1002 = vector.shape_cast %1001 : vector<1x32x128xf32> to vector<32x128xf32>
    %cst_443 = arith.constant dense<0.000000e+00> : vector<5x128xf32>
    %1003 = tpu.matmul %1000, %1002, %cst_443 {dimension_numbers = #tpu.dot_dimension_numbers<[1], [0], [0], [1], [0, 0, 1, 1], [], []>} : vector<5x32xf32>, vector<32x128xf32>, vector<5x128xf32> -> vector<5x128xf32>
    %c5_444 = arith.constant 5 : index
    %c0_445 = arith.constant 0 : index
    %c0_446 = arith.constant 0 : index
    %1004 = vector.load %arg13[%c5_444, %c0_445, %c0_446] : memref<6x1x128xf32, #tpu.memory_space<vmem>>, vector<1x1x128xf32>
    %1005 = vector.shape_cast %1004 : vector<1x1x128xf32> to vector<1x128xf32>
    %1006 = vector.broadcast %1005 : vector<1x128xf32> to vector<5x128xf32>
    %1007 = arith.addf %1003, %1006 : vector<5x128xf32>
    %cst_447 = arith.constant 5.000000e-01 : f32
    %1008 = vector.broadcast %cst_447 : f32 to vector<5x128xf32>
    %1009 = arith.mulf %1008, %1007 : vector<5x128xf32>
    %cst_448 = arith.constant 0.707106769 : f32
    %1010 = vector.broadcast %cst_448 : f32 to vector<5x128xf32>
    %1011 = arith.mulf %1007, %1010 : vector<5x128xf32>
    %cst_449 = arith.constant 0.000000e+00 : f32
    %1012 = vector.broadcast %cst_449 : f32 to vector<5x128xf32>
    %1013 = arith.cmpf oge, %1011, %1012 : vector<5x128xf32>
    %cst_450 = arith.constant 1.000000e+00 : f32
    %cst_451 = arith.constant -1.000000e+00 : f32
    %1014 = vector.broadcast %cst_450 : f32 to vector<5x128xf32>
    %1015 = vector.broadcast %cst_451 : f32 to vector<5x128xf32>
    %1016 = arith.select %1013, %1014, %1015 : vector<5x128xi1>, vector<5x128xf32>
    %1017 = math.absf %1011 : vector<5x128xf32>
    %cst_452 = arith.constant 0.327591091 : f32
    %1018 = vector.broadcast %cst_452 : f32 to vector<5x128xf32>
    %1019 = arith.mulf %1018, %1017 : vector<5x128xf32>
    %cst_453 = arith.constant 1.000000e+00 : f32
    %1020 = vector.broadcast %cst_453 : f32 to vector<5x128xf32>
    %1021 = arith.addf %1020, %1019 : vector<5x128xf32>
    %1022 = tpu.reciprocal %1021 : vector<5x128xf32> -> vector<5x128xf32>
    %cst_454 = arith.constant 1.06140542 : f32
    %1023 = vector.broadcast %cst_454 : f32 to vector<5x128xf32>
    %1024 = arith.mulf %1022, %1023 : vector<5x128xf32>
    %cst_455 = arith.constant -1.45315206 : f32
    %1025 = vector.broadcast %cst_455 : f32 to vector<5x128xf32>
    %1026 = arith.addf %1025, %1024 : vector<5x128xf32>
    %1027 = arith.mulf %1022, %1026 : vector<5x128xf32>
    %cst_456 = arith.constant 1.42141378 : f32
    %1028 = vector.broadcast %cst_456 : f32 to vector<5x128xf32>
    %1029 = arith.addf %1028, %1027 : vector<5x128xf32>
    %1030 = arith.mulf %1022, %1029 : vector<5x128xf32>
    %cst_457 = arith.constant -0.284496725 : f32
    %1031 = vector.broadcast %cst_457 : f32 to vector<5x128xf32>
    %1032 = arith.addf %1031, %1030 : vector<5x128xf32>
    %1033 = arith.mulf %1022, %1032 : vector<5x128xf32>
    %cst_458 = arith.constant 0.254829586 : f32
    %1034 = vector.broadcast %cst_458 : f32 to vector<5x128xf32>
    %1035 = arith.addf %1034, %1033 : vector<5x128xf32>
    %1036 = arith.mulf %1022, %1035 : vector<5x128xf32>
    %cst_459 = arith.constant 0.000000e+00 : f32
    %1037 = vector.broadcast %cst_459 : f32 to vector<5x128xf32>
    %1038 = arith.subf %1037, %1017 : vector<5x128xf32>
    %1039 = arith.mulf %1038, %1017 : vector<5x128xf32>
    %1040 = math.exp %1039 : vector<5x128xf32>
    %1041 = arith.mulf %1036, %1040 : vector<5x128xf32>
    %cst_460 = arith.constant 1.000000e+00 : f32
    %1042 = vector.broadcast %cst_460 : f32 to vector<5x128xf32>
    %1043 = arith.subf %1042, %1041 : vector<5x128xf32>
    %1044 = arith.mulf %1016, %1043 : vector<5x128xf32>
    %cst_461 = arith.constant 1.000000e+00 : f32
    %1045 = vector.broadcast %cst_461 : f32 to vector<5x128xf32>
    %1046 = arith.addf %1045, %1044 : vector<5x128xf32>
    %1047 = arith.mulf %1009, %1046 : vector<5x128xf32>
    %c5_462 = arith.constant 5 : index
    %c0_463 = arith.constant 0 : index
    %c0_464 = arith.constant 0 : index
    %1048 = vector.load %arg14[%c5_462, %c0_463, %c0_464] : memref<6x128x32xf32, #tpu.memory_space<vmem>>, vector<1x128x32xf32>
    %1049 = vector.shape_cast %1048 : vector<1x128x32xf32> to vector<128x32xf32>
    %cst_465 = arith.constant dense<0.000000e+00> : vector<5x32xf32>
    %1050 = tpu.matmul %1047, %1049, %cst_465 {dimension_numbers = #tpu.dot_dimension_numbers<[1], [0], [0], [1], [0, 0, 1, 1], [], []>} : vector<5x128xf32>, vector<128x32xf32>, vector<5x32xf32> -> vector<5x32xf32>
    %1051 = arith.addf %974, %1050 : vector<5x32xf32>
    %c5_466 = arith.constant 5 : index
    %c0_467 = arith.constant 0 : index
    %c0_468 = arith.constant 0 : index
    %1052 = vector.load %arg15[%c5_466, %c0_467, %c0_468] : memref<6x1x32xf32, #tpu.memory_space<vmem>>, vector<1x1x32xf32>
    %1053 = vector.shape_cast %1052 : vector<1x1x32xf32> to vector<1x32xf32>
    %1054 = vector.broadcast %1053 : vector<1x32xf32> to vector<5x32xf32>
    %1055 = arith.addf %1051, %1054 : vector<5x32xf32>
    %c0_469 = arith.constant 0 : index
    %c0_470 = arith.constant 0 : index
    %1056 = vector.load %arg16[%c0_469, %c0_470] : memref<1x32xf32, #tpu.memory_space<vmem>>, vector<1x32xf32>
    %c0_471 = arith.constant 0 : index
    %c0_472 = arith.constant 0 : index
    %1057 = vector.load %arg17[%c0_471, %c0_472] : memref<1x32xf32, #tpu.memory_space<vmem>>, vector<1x32xf32>
    %cst_473 = arith.constant dense<0.000000e+00> : vector<5xf32>
    %1058 = vector.multi_reduction <add>, %1055, %cst_473 [1] : vector<5x32xf32> to vector<5xf32>
    %1059 = vector.shape_cast %1058 : vector<5xf32> to vector<5x1xf32>
    %cst_474 = arith.constant 3.200000e+01 : f32
    %1060 = vector.broadcast %cst_474 : f32 to vector<5x1xf32>
    %1061 = arith.divf %1059, %1060 : vector<5x1xf32>
    %1062 = arith.mulf %1055, %1055 : vector<5x32xf32>
    %cst_475 = arith.constant dense<0.000000e+00> : vector<5xf32>
    %1063 = vector.multi_reduction <add>, %1062, %cst_475 [1] : vector<5x32xf32> to vector<5xf32>
    %1064 = vector.shape_cast %1063 : vector<5xf32> to vector<5x1xf32>
    %cst_476 = arith.constant 3.200000e+01 : f32
    %1065 = vector.broadcast %cst_476 : f32 to vector<5x1xf32>
    %1066 = arith.divf %1064, %1065 : vector<5x1xf32>
    %1067 = arith.mulf %1061, %1061 : vector<5x1xf32>
    %1068 = arith.subf %1066, %1067 : vector<5x1xf32>
    %1069 = vector.broadcast %1061 : vector<5x1xf32> to vector<5x32xf32>
    %1070 = arith.subf %1055, %1069 : vector<5x32xf32>
    %cst_477 = arith.constant 9.99999997E-7 : f32
    %1071 = vector.broadcast %cst_477 : f32 to vector<5x1xf32>
    %1072 = arith.addf %1068, %1071 : vector<5x1xf32>
    %1073 = math.rsqrt %1072 : vector<5x1xf32>
    %1074 = vector.broadcast %1073 : vector<5x1xf32> to vector<5x32xf32>
    %1075 = arith.mulf %1070, %1074 : vector<5x32xf32>
    %1076 = vector.broadcast %1056 : vector<1x32xf32> to vector<5x32xf32>
    %1077 = arith.mulf %1075, %1076 : vector<5x32xf32>
    %1078 = vector.broadcast %1057 : vector<1x32xf32> to vector<5x32xf32>
    %1079 = arith.addf %1077, %1078 : vector<5x32xf32>
    %c0_478 = arith.constant 0 : index
    %c0_479 = arith.constant 0 : index
    %c0_480 = arith.constant 0 : index
    %1080 = vector.load %arg18[%c0_478, %c0_479, %c0_480] : memref<1x5x32xf32, #tpu.memory_space<vmem>>, vector<1x5x32xf32>
    %1081 = vector.shape_cast %1080 : vector<1x5x32xf32> to vector<5x32xf32>
    %1082 = vector.shape_cast %1079 : vector<5x32xf32> to vector<1x5x32xf32>
    tpu.vector_store %arg18[%c0_478, %c0_479, %c0_480], %1082 {strides = array<i32>} : memref<1x5x32xf32, #tpu.memory_space<vmem>>, vector<1x5x32xf32>,
    return
  }
  func.func @transform_0(%arg0: i32) -> (i32, i32, i32) {
    %c0_i32 = arith.constant 0 : i32
    %c0_i32_0 = arith.constant 0 : i32
    %c0_i32_1 = arith.constant 0 : i32
    return %arg0, %c0_i32, %c0_i32_0 : i32, i32, i32
  }
  func.func @transform_1(%arg0: i32) -> (i32, i32) {
    %c0_i32 = arith.constant 0 : i32
    %c0_i32_0 = arith.constant 0 : i32
    %c0_i32_1 = arith.constant 0 : i32
    return %c0_i32, %c0_i32_0 : i32, i32
  }
  func.func @transform_2(%arg0: i32) -> (i32, i32) {
    %c0_i32 = arith.constant 0 : i32
    %c0_i32_0 = arith.constant 0 : i32
    %c0_i32_1 = arith.constant 0 : i32
    return %c0_i32, %c0_i32_0 : i32, i32
  }
  func.func @transform_3(%arg0: i32) -> (i32, i32, i32) {
    %c0_i32 = arith.constant 0 : i32
    %c0_i32_0 = arith.constant 0 : i32
    %c0_i32_1 = arith.constant 0 : i32
    %c0_i32_2 = arith.constant 0 : i32
    return %c0_i32, %c0_i32_0, %c0_i32_1 : i32, i32, i32
  }
  func.func @transform_4(%arg0: i32) -> (i32, i32, i32) {
    %c0_i32 = arith.constant 0 : i32
    %c0_i32_0 = arith.constant 0 : i32
    %c0_i32_1 = arith.constant 0 : i32
    %c0_i32_2 = arith.constant 0 : i32
    return %c0_i32, %c0_i32_0, %c0_i32_1 : i32, i32, i32
  }
  func.func @transform_5(%arg0: i32) -> (i32, i32, i32) {
    %c0_i32 = arith.constant 0 : i32
    %c0_i32_0 = arith.constant 0 : i32
    %c0_i32_1 = arith.constant 0 : i32
    %c0_i32_2 = arith.constant 0 : i32
    return %c0_i32, %c0_i32_0, %c0_i32_1 : i32, i32, i32
  }
  func.func @transform_6(%arg0: i32) -> (i32, i32, i32) {
    %c0_i32 = arith.constant 0 : i32
    %c0_i32_0 = arith.constant 0 : i32
    %c0_i32_1 = arith.constant 0 : i32
    %c0_i32_2 = arith.constant 0 : i32
    return %c0_i32, %c0_i32_0, %c0_i32_1 : i32, i32, i32
  }
  func.func @transform_7(%arg0: i32) -> (i32, i32, i32) {
    %c0_i32 = arith.constant 0 : i32
    %c0_i32_0 = arith.constant 0 : i32
    %c0_i32_1 = arith.constant 0 : i32
    %c0_i32_2 = arith.constant 0 : i32
    return %c0_i32, %c0_i32_0, %c0_i32_1 : i32, i32, i32
  }
  func.func @transform_8(%arg0: i32) -> (i32, i32, i32) {
    %c0_i32 = arith.constant 0 : i32
    %c0_i32_0 = arith.constant 0 : i32
    %c0_i32_1 = arith.constant 0 : i32
    %c0_i32_2 = arith.constant 0 : i32
    return %c0_i32, %c0_i32_0, %c0_i32_1 : i32, i32, i32
  }
  func.func @transform_9(%arg0: i32) -> (i32, i32, i32) {
    %c0_i32 = arith.constant 0 : i32
    %c0_i32_0 = arith.constant 0 : i32
    %c0_i32_1 = arith.constant 0 : i32
    %c0_i32_2 = arith.constant 0 : i32
    return %c0_i32, %c0_i32_0, %c0_i32_1 : i32, i32, i32
  }
  func.func @transform_10(%arg0: i32) -> (i32, i32, i32) {
    %c0_i32 = arith.constant 0 : i32
    %c0_i32_0 = arith.constant 0 : i32
    %c0_i32_1 = arith.constant 0 : i32
    %c0_i32_2 = arith.constant 0 : i32
    return %c0_i32, %c0_i32_0, %c0_i32_1 : i32, i32, i32
  }
  func.func @transform_11(%arg0: i32) -> (i32, i32, i32) {
    %c0_i32 = arith.constant 0 : i32
    %c0_i32_0 = arith.constant 0 : i32
    %c0_i32_1 = arith.constant 0 : i32
    %c0_i32_2 = arith.constant 0 : i32
    return %c0_i32, %c0_i32_0, %c0_i32_1 : i32, i32, i32
  }
  func.func @transform_12(%arg0: i32) -> (i32, i32, i32) {
    %c0_i32 = arith.constant 0 : i32
    %c0_i32_0 = arith.constant 0 : i32
    %c0_i32_1 = arith.constant 0 : i32
    %c0_i32_2 = arith.constant 0 : i32
    return %c0_i32, %c0_i32_0, %c0_i32_1 : i32, i32, i32
  }
  func.func @transform_13(%arg0: i32) -> (i32, i32, i32) {
    %c0_i32 = arith.constant 0 : i32
    %c0_i32_0 = arith.constant 0 : i32
    %c0_i32_1 = arith.constant 0 : i32
    %c0_i32_2 = arith.constant 0 : i32
    return %c0_i32, %c0_i32_0, %c0_i32_1 : i32, i32, i32
  }
  func.func @transform_14(%arg0: i32) -> (i32, i32, i32) {
    %c0_i32 = arith.constant 0 : i32
    %c0_i32_0 = arith.constant 0 : i32
    %c0_i32_1 = arith.constant 0 : i32
    %c0_i32_2 = arith.constant 0 : i32
    return %c0_i32, %c0_i32_0, %c0_i32_1 : i32, i32, i32
  }
  func.func @transform_15(%arg0: i32) -> (i32, i32) {
    %c0_i32 = arith.constant 0 : i32
    %c0_i32_0 = arith.constant 0 : i32
    %c0_i32_1 = arith.constant 0 : i32
    return %c0_i32, %c0_i32_0 : i32, i32
  }
  func.func @transform_16(%arg0: i32) -> (i32, i32) {
    %c0_i32 = arith.constant 0 : i32
    %c0_i32_0 = arith.constant 0 : i32
    %c0_i32_1 = arith.constant 0 : i32
    return %c0_i32, %c0_i32_0 : i32, i32
  }
  func.func @transform_17(%arg0: i32) -> (i32, i32, i32) {
    %c0_i32 = arith.constant 0 : i32
    %c0_i32_0 = arith.constant 0 : i32
    %c0_i32_1 = arith.constant 0 : i32
    return %arg0, %c0_i32, %c0_i32_0 : i32, i32, i32
  }
}

</mosaic_0001>

<llo_original>
// kernel: image_kd_forward.1
$region0: #{image_kd_forward.1}
  #allocation0 [shape = 'u32[]', space=smem, size = 0x4, offset = 0x4, fixed_abs, tag = 'smem constant byte address 0x4 - core index']
  #allocation1 [shape = 'u32[144,128]{1,0:T(1,128)}', space=vmem, size = 0x12000, scoped, tag = 'internal scratch']
  %s0 = inlined_call_operand.vmem [shape: f32[2,5,192], index: 0, kind: input, shape index: {}]
  %s1 = inlined_call_operand.vmem [shape: f32[192,32], index: 1, kind: input, shape index: {}]
  %s2 = inlined_call_operand.vmem [shape: f32[5,32], index: 2, kind: input, shape index: {}]
  %s3 = inlined_call_operand.vmem [shape: f32[6,1,32], index: 3, kind: input, shape index: {}]
  %s4 = inlined_call_operand.vmem [shape: f32[6,1,32], index: 4, kind: input, shape index: {}]
  %s5 = inlined_call_operand.vmem [shape: f32[6,32,96], index: 5, kind: input, shape index: {}]
  %s6 = inlined_call_operand.vmem [shape: f32[6,1,96], index: 6, kind: input, shape index: {}]
  %s7 = inlined_call_operand.vmem [shape: f32[6,32,32], index: 7, kind: input, shape index: {}]
  %s8 = inlined_call_operand.vmem [shape: f32[6,1,32], index: 8, kind: input, shape index: {}]
  %s9 = inlined_call_operand.vmem [shape: f32[6,1,32], index: 9, kind: input, shape index: {}]
  %s10 = inlined_call_operand.vmem [shape: f32[6,1,32], index: 10, kind: input, shape index: {}]
  %s11 = inlined_call_operand.vmem [shape: f32[6,32,128], index: 11, kind: input, shape index: {}]
  %s12 = inlined_call_operand.vmem [shape: f32[6,1,128], index: 12, kind: input, shape index: {}]
  %s13 = inlined_call_operand.vmem [shape: f32[6,128,32], index: 13, kind: input, shape index: {}]
  %s14 = inlined_call_operand.vmem [shape: f32[6,1,32], index: 14, kind: input, shape index: {}]
  %s15 = inlined_call_operand.vmem [shape: f32[1,32], index: 15, kind: input, shape index: {}]
  %s16 = inlined_call_operand.vmem [shape: f32[1,32], index: 16, kind: input, shape index: {}]
  %s17 = inlined_call_operand.vmem [shape: f32[2,5,32], index: 17, kind: output, shape index: {}]
  %s18 = sld [smem:[#allocation0]]
  $region101: #{image_kd_forward.1} parent=0
    _
  %s20 = ssub.s32 1, %s18
  %s21 = scalar_select 0, %s20, %s18
  loop: start=0, step=1, limit=4
  $region2: #{image_kd_forward.1} parent=0 // loop_pre_header
    _
  $region3: #{image_kd_forward.1} parent=0 // loop_header
    %s23 = sphi 0, %s27
    %p24 = scmp.ge.s32.totalorder %s23, 4
    %s33 = sphi 0, %s35
    %s36 = sphi 0, %s33
    %s37 = sphi 0, %s36
    %s53 = sphi 0, %s37
    %s57 = sphi 0, %s57
    %s59 = sphi 0, %s57
    %s60 = sphi 0, %s59
    %s74 = sphi 0, %s60
    %s78 = sphi 0, %s78
    %s80 = sphi 0, %s78
    %s81 = sphi 0, %s80
    %s95 = sphi 0, %s81
    %s99 = sphi 0, %s99
    %s101 = sphi 0, %s99
    %s102 = sphi 0, %s101
    %s116 = sphi 0, %s102
    %s120 = sphi 0, %s120
    %s122 = sphi 0, %s120
    %s123 = sphi 0, %s122
    %s137 = sphi 0, %s123
    %s141 = sphi 0, %s141
    %s143 = sphi 0, %s141
    %s144 = sphi 0, %s143
    %s158 = sphi 0, %s144
    %s162 = sphi 0, %s162
    %s164 = sphi 0, %s162
    %s165 = sphi 0, %s164
    %s179 = sphi 0, %s165
    %s183 = sphi 0, %s183
    %s185 = sphi 0, %s183
    %s186 = sphi 0, %s185
    %s200 = sphi 0, %s186
    %s204 = sphi 0, %s204
    %s206 = sphi 0, %s204
    %s207 = sphi 0, %s206
    %s221 = sphi 0, %s207
    %s225 = sphi 0, %s225
    %s227 = sphi 0, %s225
    %s228 = sphi 0, %s227
    %s242 = sphi 0, %s228
    %s246 = sphi 0, %s246
    %s248 = sphi 0, %s246
    %s249 = sphi 0, %s248
    %s263 = sphi 0, %s249
    %s267 = sphi 0, %s267
    %s269 = sphi 0, %s267
    %s270 = sphi 0, %s269
    %s284 = sphi 0, %s270
    %s288 = sphi 0, %s288
    %s290 = sphi 0, %s288
    %s291 = sphi 0, %s290
    %s305 = sphi 0, %s291
    %s309 = sphi 0, %s309
    %s311 = sphi 0, %s309
    %s312 = sphi 0, %s311
    %s326 = sphi 0, %s312
    %s330 = sphi 0, %s330
    %s332 = sphi 0, %s330
    %s333 = sphi 0, %s332
    %s347 = sphi 0, %s333
    %s351 = sphi 0, %s351
    %s353 = sphi 0, %s351
    %s354 = sphi 0, %s353
    %s368 = sphi 0, %s354
    %s372 = sphi 0, %s372
    %s374 = sphi 0, %s372
    %s375 = sphi 0, %s374
    %s389 = sphi 0, %s375
    %s395 = sphi 0, %s397
    %s398 = sphi 0, %s395
    %s399 = sphi 0, %s398
    %s415 = sphi 0, %s399
  $region4: #{image_kd_forward.1} parent=0 // loop_header_branch
    %26 = sbr.rel (%p24) target = $region8
  $region5: #{image_kd_forward.1} parent=0 // loop_body
    %s28 = ssub.s32 %s23, 1
    %s29 = ssub.s32 %s23, 2
    %s30 = sadd.s32 %s23, 1
    %s31 = ssub.s32 %s23, %s30
    %p32 = scmp.eq.s32.totalorder %s31, 0
    %s34 = sadd.s32 %s33, 1
    %s35 = scalar_select %p32, %s33, %s34
    %p38 = pneg %p32
    %p39 = scmp.eq.s32.totalorder %s23, 1
    %p40 = por %p38, %p39
    %p41 = scmp.ne.s32.totalorder %s33, %s36
    %p42 = scmp.eq.s32.totalorder %s23, 0
    %p43 = por %p41, %p42
    %p44 = scmp.ne.s32.totalorder %s33, %s36
    %p45 = scmp.eq.s32.totalorder %s28, 1
    %p46 = por %p44, %p45
    %p47 = scmp.ne.s32.totalorder %s36, %s37
    %p48 = scmp.eq.s32.totalorder %s28, 0
    %p49 = por %p47, %p48
    %p50 = scmp.ne.s32.totalorder %s36, %s37
    %p51 = scmp.eq.s32.totalorder %s29, 1
    %p52 = por %p50, %p51
    %p54 = scmp.ne.s32.totalorder %s37, %s53
    %p55 = scmp.eq.s32.totalorder %s29, 0
    %p56 = por %p54, %p55
    %s58 = sadd.s32 %s57, 1
    %p61 = scmp.eq.s32.totalorder %s23, 1
    %p62 = scmp.ne.s32.totalorder %s57, %s59
    %p63 = scmp.eq.s32.totalorder %s23, 0
    %p64 = por %p62, %p63
    %p65 = scmp.ne.s32.totalorder %s57, %s59
    %p66 = scmp.eq.s32.totalorder %s28, 1
    %p67 = por %p65, %p66
    %p68 = scmp.ne.s32.totalorder %s59, %s60
    %p69 = scmp.eq.s32.totalorder %s28, 0
    %p70 = por %p68, %p69
    %p71 = scmp.ne.s32.totalorder %s59, %s60
    %p72 = scmp.eq.s32.totalorder %s29, 1
    %p73 = por %p71, %p72
    %p75 = scmp.ne.s32.totalorder %s60, %s74
    %p76 = scmp.eq.s32.totalorder %s29, 0
    %p77 = por %p75, %p76
    %s79 = sadd.s32 %s78, 1
    %p82 = scmp.eq.s32.totalorder %s23, 1
    %p83 = scmp.ne.s32.totalorder %s78, %s80
    %p84 = scmp.eq.s32.totalorder %s23, 0
    %p85 = por %p83, %p84
    %p86 = scmp.ne.s32.totalorder %s78, %s80
    %p87 = scmp.eq.s32.totalorder %s28, 1
    %p88 = por %p86, %p87
    %p89 = scmp.ne.s32.totalorder %s80, %s81
    %p90 = scmp.eq.s32.totalorder %s28, 0
    %p91 = por %p89, %p90
    %p92 = scmp.ne.s32.totalorder %s80, %s81
    %p93 = scmp.eq.s32.totalorder %s29, 1
    %p94 = por %p92, %p93
    %p96 = scmp.ne.s32.totalorder %s81, %s95
    %p97 = scmp.eq.s32.totalorder %s29, 0
    %p98 = por %p96, %p97
    %s100 = sadd.s32 %s99, 1
    %p103 = scmp.eq.s32.totalorder %s23, 1
    %p104 = scmp.ne.s32.totalorder %s99, %s101
    %p105 = scmp.eq.s32.totalorder %s23, 0
    %p106 = por %p104, %p105
    %p107 = scmp.ne.s32.totalorder %s99, %s101
    %p108 = scmp.eq.s32.totalorder %s28, 1
    %p109 = por %p107, %p108
    %p110 = scmp.ne.s32.totalorder %s101, %s102
    %p111 = scmp.eq.s32.totalorder %s28, 0
    %p112 = por %p110, %p111
    %p113 = scmp.ne.s32.totalorder %s101, %s102
    %p114 = scmp.eq.s32.totalorder %s29, 1
    %p115 = por %p113, %p114
    %p117 = scmp.ne.s32.totalorder %s102, %s116
    %p118 = scmp.eq.s32.totalorder %s29, 0
    %p119 = por %p117, %p118
    %s121 = sadd.s32 %s120, 1
    %p124 = scmp.eq.s32.totalorder %s23, 1
    %p125 = scmp.ne.s32.totalorder %s120, %s122
    %p126 = scmp.eq.s32.totalorder %s23, 0
    %p127 = por %p125, %p126
    %p128 = scmp.ne.s32.totalorder %s120, %s122
    %p129 = scmp.eq.s32.totalorder %s28, 1
    %p130 = por %p128, %p129
    %p131 = scmp.ne.s32.totalorder %s122, %s123
    %p132 = scmp.eq.s32.totalorder %s28, 0
    %p133 = por %p131, %p132
    %p134 = scmp.ne.s32.totalorder %s122, %s123
    %p135 = scmp.eq.s32.totalorder %s29, 1
    %p136 = por %p134, %p135
    %p138 = scmp.ne.s32.totalorder %s123, %s137
    %p139 = scmp.eq.s32.totalorder %s29, 0
    %p140 = por %p138, %p139
    %s142 = sadd.s32 %s141, 1
    %p145 = scmp.eq.s32.totalorder %s23, 1
    %p146 = scmp.ne.s32.totalorder %s141, %s143
    %p147 = scmp.eq.s32.totalorder %s23, 0
    %p148 = por %p146, %p147
    %p149 = scmp.ne.s32.totalorder %s141, %s143
    %p150 = scmp.eq.s32.totalorder %s28, 1
    %p151 = por %p149, %p150
    %p152 = scmp.ne.s32.totalorder %s143, %s144
    %p153 = scmp.eq.s32.totalorder %s28, 0
    %p154 = por %p152, %p153
    %p155 = scmp.ne.s32.totalorder %s143, %s144
    %p156 = scmp.eq.s32.totalorder %s29, 1
    %p157 = por %p155, %p156
    %p159 = scmp.ne.s32.totalorder %s144, %s158
    %p160 = scmp.eq.s32.totalorder %s29, 0
    %p161 = por %p159, %p160
    %s163 = sadd.s32 %s162, 1
    %p166 = scmp.eq.s32.totalorder %s23, 1
    %p167 = scmp.ne.s32.totalorder %s162, %s164
    %p168 = scmp.eq.s32.totalorder %s23, 0
    %p169 = por %p167, %p168
    %p170 = scmp.ne.s32.totalorder %s162, %s164
    %p171 = scmp.eq.s32.totalorder %s28, 1
    %p172 = por %p170, %p171
    %p173 = scmp.ne.s32.totalorder %s164, %s165
    %p174 = scmp.eq.s32.totalorder %s28, 0
    %p175 = por %p173, %p174
    %p176 = scmp.ne.s32.totalorder %s164, %s165
    %p177 = scmp.eq.s32.totalorder %s29, 1
    %p178 = por %p176, %p177
    %p180 = scmp.ne.s32.totalorder %s165, %s179
    %p181 = scmp.eq.s32.totalorder %s29, 0
    %p182 = por %p180, %p181
    %s184 = sadd.s32 %s183, 1
    %p187 = scmp.eq.s32.totalorder %s23, 1
    %p188 = scmp.ne.s32.totalorder %s183, %s185
    %p189 = scmp.eq.s32.totalorder %s23, 0
    %p190 = por %p188, %p189
    %p191 = scmp.ne.s32.totalorder %s183, %s185
    %p192 = scmp.eq.s32.totalorder %s28, 1
    %p193 = por %p191, %p192
    %p194 = scmp.ne.s32.totalorder %s185, %s186
    %p195 = scmp.eq.s32.totalorder %s28, 0
    %p196 = por %p194, %p195
    %p197 = scmp.ne.s32.totalorder %s185, %s186
    %p198 = scmp.eq.s32.totalorder %s29, 1
    %p199 = por %p197, %p198
    %p201 = scmp.ne.s32.totalorder %s186, %s200
    %p202 = scmp.eq.s32.totalorder %s29, 0
    %p203 = por %p201, %p202
    %s205 = sadd.s32 %s204, 1
    %p208 = scmp.eq.s32.totalorder %s23, 1
    %p209 = scmp.ne.s32.totalorder %s204, %s206
    %p210 = scmp.eq.s32.totalorder %s23, 0
    %p211 = por %p209, %p210
    %p212 = scmp.ne.s32.totalorder %s204, %s206
    %p213 = scmp.eq.s32.totalorder %s28, 1
    %p214 = por %p212, %p213
    %p215 = scmp.ne.s32.totalorder %s206, %s207
    %p216 = scmp.eq.s32.totalorder %s28, 0
    %p217 = por %p215, %p216
    %p218 = scmp.ne.s32.totalorder %s206, %s207
    %p219 = scmp.eq.s32.totalorder %s29, 1
    %p220 = por %p218, %p219
    %p222 = scmp.ne.s32.totalorder %s207, %s221
    %p223 = scmp.eq.s32.totalorder %s29, 0
    %p224 = por %p222, %p223
    %s226 = sadd.s32 %s225, 1
    %p229 = scmp.eq.s32.totalorder %s23, 1
    %p230 = scmp.ne.s32.totalorder %s225, %s227
    %p231 = scmp.eq.s32.totalorder %s23, 0
    %p232 = por %p230, %p231
    %p233 = scmp.ne.s32.totalorder %s225, %s227
    %p234 = scmp.eq.s32.totalorder %s28, 1
    %p235 = por %p233, %p234
    %p236 = scmp.ne.s32.totalorder %s227, %s228
    %p237 = scmp.eq.s32.totalorder %s28, 0
    %p238 = por %p236, %p237
    %p239 = scmp.ne.s32.totalorder %s227, %s228
    %p240 = scmp.eq.s32.totalorder %s29, 1
    %p241 = por %p239, %p240
    %p243 = scmp.ne.s32.totalorder %s228, %s242
    %p244 = scmp.eq.s32.totalorder %s29, 0
    %p245 = por %p243, %p244
    %s247 = sadd.s32 %s246, 1
    %p250 = scmp.eq.s32.totalorder %s23, 1
    %p251 = scmp.ne.s32.totalorder %s246, %s248
    %p252 = scmp.eq.s32.totalorder %s23, 0
    %p253 = por %p251, %p252
    %p254 = scmp.ne.s32.totalorder %s246, %s248
    %p255 = scmp.eq.s32.totalorder %s28, 1
    %p256 = por %p254, %p255
    %p257 = scmp.ne.s32.totalorder %s248, %s249
    %p258 = scmp.eq.s32.totalorder %s28, 0
    %p259 = por %p257, %p258
    %p260 = scmp.ne.s32.totalorder %s248, %s249
    %p261 = scmp.eq.s32.totalorder %s29, 1
    %p262 = por %p260, %p261
    %p264 = scmp.ne.s32.totalorder %s249, %s263
    %p265 = scmp.eq.s32.totalorder %s29, 0
    %p266 = por %p264, %p265
    %s268 = sadd.s32 %s267, 1
    %p271 = scmp.eq.s32.totalorder %s23, 1
    %p272 = scmp.ne.s32.totalorder %s267, %s269
    %p273 = scmp.eq.s32.totalorder %s23, 0
    %p274 = por %p272, %p273
    %p275 = scmp.ne.s32.totalorder %s267, %s269
    %p276 = scmp.eq.s32.totalorder %s28, 1
    %p277 = por %p275, %p276
    %p278 = scmp.ne.s32.totalorder %s269, %s270
    %p279 = scmp.eq.s32.totalorder %s28, 0
    %p280 = por %p278, %p279
    %p281 = scmp.ne.s32.totalorder %s269, %s270
    %p282 = scmp.eq.s32.totalorder %s29, 1
    %p283 = por %p281, %p282
    %p285 = scmp.ne.s32.totalorder %s270, %s284
    %p286 = scmp.eq.s32.totalorder %s29, 0
    %p287 = por %p285, %p286
    %s289 = sadd.s32 %s288, 1
    %p292 = scmp.eq.s32.totalorder %s23, 1
    %p293 = scmp.ne.s32.totalorder %s288, %s290
    %p294 = scmp.eq.s32.totalorder %s23, 0
    %p295 = por %p293, %p294
    %p296 = scmp.ne.s32.totalorder %s288, %s290
    %p297 = scmp.eq.s32.totalorder %s28, 1
    %p298 = por %p296, %p297
    %p299 = scmp.ne.s32.totalorder %s290, %s291
    %p300 = scmp.eq.s32.totalorder %s28, 0
    %p301 = por %p299, %p300
    %p302 = scmp.ne.s32.totalorder %s290, %s291
    %p303 = scmp.eq.s32.totalorder %s29, 1
    %p304 = por %p302, %p303
    %p306 = scmp.ne.s32.totalorder %s291, %s305
    %p307 = scmp.eq.s32.totalorder %s29, 0
    %p308 = por %p306, %p307
    %s310 = sadd.s32 %s309, 1
    %p313 = scmp.eq.s32.totalorder %s23, 1
    %p314 = scmp.ne.s32.totalorder %s309, %s311
    %p315 = scmp.eq.s32.totalorder %s23, 0
    %p316 = por %p314, %p315
    %p317 = scmp.ne.s32.totalorder %s309, %s311
    %p318 = scmp.eq.s32.totalorder %s28, 1
    %p319 = por %p317, %p318
    %p320 = scmp.ne.s32.totalorder %s311, %s312
    %p321 = scmp.eq.s32.totalorder %s28, 0
    %p322 = por %p320, %p321
    %p323 = scmp.ne.s32.totalorder %s311, %s312
    %p324 = scmp.eq.s32.totalorder %s29, 1
    %p325 = por %p323, %p324
    %p327 = scmp.ne.s32.totalorder %s312, %s326
    %p328 = scmp.eq.s32.totalorder %s29, 0
    %p329 = por %p327, %p328
    %s331 = sadd.s32 %s330, 1
    %p334 = scmp.eq.s32.totalorder %s23, 1
    %p335 = scmp.ne.s32.totalorder %s330, %s332
    %p336 = scmp.eq.s32.totalorder %s23, 0
    %p337 = por %p335, %p336
    %p338 = scmp.ne.s32.totalorder %s330, %s332
    %p339 = scmp.eq.s32.totalorder %s28, 1
    %p340 = por %p338, %p339
    %p341 = scmp.ne.s32.totalorder %s332, %s333
    %p342 = scmp.eq.s32.totalorder %s28, 0
    %p343 = por %p341, %p342
    %p344 = scmp.ne.s32.totalorder %s332, %s333
    %p345 = scmp.eq.s32.totalorder %s29, 1
    %p346 = por %p344, %p345
    %p348 = scmp.ne.s32.totalorder %s333, %s347
    %p349 = scmp.eq.s32.totalorder %s29, 0
    %p350 = por %p348, %p349
    %s352 = sadd.s32 %s351, 1
    %p355 = scmp.eq.s32.totalorder %s23, 1
    %p356 = scmp.ne.s32.totalorder %s351, %s353
    %p357 = scmp.eq.s32.totalorder %s23, 0
    %p358 = por %p356, %p357
    %p359 = scmp.ne.s32.totalorder %s351, %s353
    %p360 = scmp.eq.s32.totalorder %s28, 1
    %p361 = por %p359, %p360
    %p362 = scmp.ne.s32.totalorder %s353, %s354
    %p363 = scmp.eq.s32.totalorder %s28, 0
    %p364 = por %p362, %p363
    %p365 = scmp.ne.s32.totalorder %s353, %s354
    %p366 = scmp.eq.s32.totalorder %s29, 1
    %p367 = por %p365, %p366
    %p369 = scmp.ne.s32.totalorder %s354, %s368
    %p370 = scmp.eq.s32.totalorder %s29, 0
    %p371 = por %p369, %p370
    %s373 = sadd.s32 %s372, 1
    %p376 = scmp.eq.s32.totalorder %s23, 1
    %p377 = scmp.ne.s32.totalorder %s372, %s374
    %p378 = scmp.eq.s32.totalorder %s23, 0
    %p379 = por %p377, %p378
    %p380 = scmp.ne.s32.totalorder %s372, %s374
    %p381 = scmp.eq.s32.totalorder %s28, 1
    %p382 = por %p380, %p381
    %p383 = scmp.ne.s32.totalorder %s374, %s375
    %p384 = scmp.eq.s32.totalorder %s28, 0
    %p385 = por %p383, %p384
    %p386 = scmp.ne.s32.totalorder %s374, %s375
    %p387 = scmp.eq.s32.totalorder %s29, 1
    %p388 = por %p386, %p387
    %p390 = scmp.ne.s32.totalorder %s375, %s389
    %p391 = scmp.eq.s32.totalorder %s29, 0
    %p392 = por %p390, %p391
    %s393 = ssub.s32 %s23, %s30
    %p394 = scmp.eq.s32.totalorder %s393, 0
    %s396 = sadd.s32 %s395, 1
    %s397 = scalar_select %p394, %s395, %s396
    %p400 = pneg %p394
    %p401 = scmp.eq.s32.totalorder %s23, 1
    %p402 = por %p400, %p401
    %p403 = scmp.ne.s32.totalorder %s395, %s398
    %p404 = scmp.eq.s32.totalorder %s23, 0
    %p405 = por %p403, %p404
    %p406 = scmp.ne.s32.totalorder %s395, %s398
    %p407 = scmp.eq.s32.totalorder %s28, 1
    %p408 = por %p406, %p407
    %p409 = scmp.ne.s32.totalorder %s398, %s399
    %p410 = scmp.eq.s32.totalorder %s28, 0
    %p411 = por %p409, %p410
    %p412 = scmp.ne.s32.totalorder %s398, %s399
    %p413 = scmp.eq.s32.totalorder %s29, 1
    %p414 = por %p412, %p413
    %p416 = scmp.ne.s32.totalorder %s399, %s415
    %p417 = scmp.eq.s32.totalorder %s29, 0
    %p418 = por %p416, %p417
    %p419 = scmp.le.s32.totalorder 1, %s23
    %p420 = scmp.lt.s32.totalorder %s23, 3
    %p421 = pnand %p419, %p420
    %p422 = pneg %p421
    // Predicated region
    $region9: #{image_kd_forward.1} parent=5 // pred_check
      _
    $region10: #{image_kd_forward.1} parent=5 // pred_check_branch
      %424 = sbr.rel (%p421) target = $region12
    $region11: #{image_kd_forward.1} parent=5 // pred_region
      %s425 = ssub.s32 %s23, 1
      // Predicated region
      $region13: #{image_kd_forward.1} parent=11 // pred_check
        %p426 = pneg %p70
      $region14: #{image_kd_forward.1} parent=11 // pred_check_branch
        %428 = sbr.rel (%p426) target = $region16
      $region15: #{image_kd_forward.1} parent=11 // pred_region
        _
      $region16: #{image_kd_forward.1} parent=11 // pred_fallthru
        _
      // Predicated region
      $region17: #{image_kd_forward.1} parent=11 // pred_check
        %p429 = pneg %p91
      $region18: #{image_kd_forward.1} parent=11 // pred_check_branch
        %431 = sbr.rel (%p429) target = $region20
      $region19: #{image_kd_forward.1} parent=11 // pred_region
        _
      $region20: #{image_kd_forward.1} parent=11 // pred_fallthru
        _
      // Predicated region
      $region21: #{image_kd_forward.1} parent=11 // pred_check
        %p432 = pneg %p112
      $region22: #{image_kd_forward.1} parent=11 // pred_check_branch
        %434 = sbr.rel (%p432) target = $region24
      $region23: #{image_kd_forward.1} parent=11 // pred_region
        _
      $region24: #{image_kd_forward.1} parent=11 // pred_fallthru
        _
      // Predicated region
      $region25: #{image_kd_forward.1} parent=11 // pred_check
        %p435 = pneg %p133
      $region26: #{image_kd_forward.1} parent=11 // pred_check_branch
        %437 = sbr.rel (%p435) target = $region28
      $region27: #{image_kd_forward.1} parent=11 // pred_region
        _
      $region28: #{image_kd_forward.1} parent=11 // pred_fallthru
        _
      // Predicated region
      $region29: #{image_kd_forward.1} parent=11 // pred_check
        %p438 = pneg %p154
      $region30: #{image_kd_forward.1} parent=11 // pred_check_branch
        %440 = sbr.rel (%p438) target = $region32
      $region31: #{image_kd_forward.1} parent=11 // pred_region
        _
      $region32: #{image_kd_forward.1} parent=11 // pred_fallthru
        _
      // Predicated region
      $region33: #{image_kd_forward.1} parent=11 // pred_check
        %p441 = pneg %p175
      $region34: #{image_kd_forward.1} parent=11 // pred_check_branch
        %443 = sbr.rel (%p441) target = $region36
      $region35: #{image_kd_forward.1} parent=11 // pred_region
        _
      $region36: #{image_kd_forward.1} parent=11 // pred_fallthru
        _
      // Predicated region
      $region37: #{image_kd_forward.1} parent=11 // pred_check
        %p444 = pneg %p196
      $region38: #{image_kd_forward.1} parent=11 // pred_check_branch
        %446 = sbr.rel (%p444) target = $region40
      $region39: #{image_kd_forward.1} parent=11 // pred_region
        _
      $region40: #{image_kd_forward.1} parent=11 // pred_fallthru
        _
      // Predicated region
      $region41: #{image_kd_forward.1} parent=11 // pred_check
        %p447 = pneg %p217
      $region42: #{image_kd_forward.1} parent=11 // pred_check_branch
        %449 = sbr.rel (%p447) target = $region44
      $region43: #{image_kd_forward.1} parent=11 // pred_region
        _
      $region44: #{image_kd_forward.1} parent=11 // pred_fallthru
        _
      // Predicated region
      $region45: #{image_kd_forward.1} parent=11 // pred_check
        %p450 = pneg %p238
      $region46: #{image_kd_forward.1} parent=11 // pred_check_branch
        %452 = sbr.rel (%p450) target = $region48
      $region47: #{image_kd_forward.1} parent=11 // pred_region
        _
      $region48: #{image_kd_forward.1} parent=11 // pred_fallthru
        _
      // Predicated region
      $region49: #{image_kd_forward.1} parent=11 // pred_check
        %p453 = pneg %p259
      $region50: #{image_kd_forward.1} parent=11 // pred_check_branch
        %455 = sbr.rel (%p453) target = $region52
      $region51: #{image_kd_forward.1} parent=11 // pred_region
        _
      $region52: #{image_kd_forward.1} parent=11 // pred_fallthru
        _
      // Predicated region
      $region53: #{image_kd_forward.1} parent=11 // pred_check
        %p456 = pneg %p280
      $region54: #{image_kd_forward.1} parent=11 // pred_check_branch
        %458 = sbr.rel (%p456) target = $region56
      $region55: #{image_kd_forward.1} parent=11 // pred_region
        _
      $region56: #{image_kd_forward.1} parent=11 // pred_fallthru
        _
      // Predicated region
      $region57: #{image_kd_forward.1} parent=11 // pred_check
        %p459 = pneg %p301
      $region58: #{image_kd_forward.1} parent=11 // pred_check_branch
        %461 = sbr.rel (%p459) target = $region60
      $region59: #{image_kd_forward.1} parent=11 // pred_region
        _
      $region60: #{image_kd_forward.1} parent=11 // pred_fallthru
        _
      // Predicated region
      $region61: #{image_kd_forward.1} parent=11 // pred_check
        %p462 = pneg %p322
      $region62: #{image_kd_forward.1} parent=11 // pred_check_branch
        %464 = sbr.rel (%p462) target = $region64
      $region63: #{image_kd_forward.1} parent=11 // pred_region
        _
      $region64: #{image_kd_forward.1} parent=11 // pred_fallthru
        _
      // Predicated region
      $region65: #{image_kd_forward.1} parent=11 // pred_check
        %p465 = pneg %p343
      $region66: #{image_kd_forward.1} parent=11 // pred_check_branch
        %467 = sbr.rel (%p465) target = $region68
      $region67: #{image_kd_forward.1} parent=11 // pred_region
        _
      $region68: #{image_kd_forward.1} parent=11 // pred_fallthru
        _
      // Predicated region
      $region69: #{image_kd_forward.1} parent=11 // pred_check
        %p468 = pneg %p364
      $region70: #{image_kd_forward.1} parent=11 // pred_check_branch
        %470 = sbr.rel (%p468) target = $region72
      $region71: #{image_kd_forward.1} parent=11 // pred_region
        _
      $region72: #{image_kd_forward.1} parent=11 // pred_fallthru
        _
      // Predicated region
      $region73: #{image_kd_forward.1} parent=11 // pred_check
        %p471 = pneg %p385
      $region74: #{image_kd_forward.1} parent=11 // pred_check_branch
        %473 = sbr.rel (%p471) target = $region76
      $region75: #{image_kd_forward.1} parent=11 // pred_region
        _
      $region76: #{image_kd_forward.1} parent=11 // pred_fallthru
        _
    $region12: #{image_kd_forward.1} parent=5 // pred_fallthru
      _
    %p474 = scmp.lt.s32.totalorder %s23, 2
    // Predicated region
    $region77: #{image_kd_forward.1} parent=5 // pred_check
      %p475 = pneg %p474
    $region78: #{image_kd_forward.1} parent=5 // pred_check_branch
      %477 = sbr.rel (%p475) target = $region80
    $region79: #{image_kd_forward.1} parent=5 // pred_region
      // Predicated region
      $region81: #{image_kd_forward.1} parent=79 // pred_check
        %p478 = pneg %p43
      $region82: #{image_kd_forward.1} parent=79 // pred_check_branch
        %480 = sbr.rel (%p478) target = $region84
      $region83: #{image_kd_forward.1} parent=79 // pred_region
        %p481 = scmp.lt.s32.totalorder %s23, 1
        %s482 = scalar_select %p481, %s23, 1
        %s483 = smul.addr %s482, 2
        %s484 = smul.addr %s483, 8
        %s485 = scalar_lea.vmem %s0, %s484
      $region84: #{image_kd_forward.1} parent=79 // pred_fallthru
        _
    $region80: #{image_kd_forward.1} parent=5 // pred_fallthru
      _
    %p486 = scmp.le.s32.totalorder 1, %s23
    %p487 = scmp.lt.s32.totalorder %s23, 3
    %p488 = pnand %p486, %p487
    %p489 = pneg %p488
    // Predicated region
    $region85: #{image_kd_forward.1} parent=5 // pred_check
      _
    $region86: #{image_kd_forward.1} parent=5 // pred_check_branch
      %491 = sbr.rel (%p488) target = $region88
    $region87: #{image_kd_forward.1} parent=5 // pred_region
      %s492 = ssub.s32 %s23, 1
      %p493 = scmp.lt.s32.totalorder %s28, 1
      %s494 = scalar_select %p493, %s28, 1
      %s495 = smul.addr %s494, 2
      %s496 = smul.addr %s495, 8
      %s497 = scalar_lea.vmem %s0, %s496
      %p498 = pneg %p49
      %p499 = pneg %p46
      %p500 = pneg %p70
      %p501 = pneg %p67
      %p502 = pneg %p91
      %p503 = pneg %p88
      %p504 = pneg %p112
      %p505 = pneg %p109
      %p506 = pneg %p133
      %p507 = pneg %p130
      %p508 = pneg %p154
      %p509 = pneg %p151
      %p510 = pneg %p175
      %p511 = pneg %p172
      %p512 = pneg %p196
      %p513 = pneg %p193
      %p514 = pneg %p217
      %p515 = pneg %p214
      %p516 = pneg %p238
      %p517 = pneg %p235
      %p518 = pneg %p259
      %p519 = pneg %p256
      %p520 = pneg %p280
      %p521 = pneg %p277
      %p522 = pneg %p301
      %p523 = pneg %p298
      %p524 = pneg %p322
      %p525 = pneg %p319
      %p526 = pneg %p343
      %p527 = pneg %p340
      %p528 = pneg %p364
      %p529 = pneg %p361
      %p530 = pneg %p385
      %p531 = pneg %p382
      %p532 = pneg %p411
      %p533 = pneg %p408
      %p534 = scmp.lt.s32.totalorder %s28, 1
      %s535 = scalar_select %p534, %s28, 1
      %s536 = smul.addr %s535, 8
      %s537 = scalar_lea.vmem %s17, %s536
      %p538 = scmp.lt.s32.totalorder %s28, 1
      %s539 = scalar_select %p538, %s28, 1
      %s540 = smul.addr %s539, 2
      %s541 = smul.addr %s540, 8
      %s542 = scalar_lea.vmem %s0, %s541
      %p543 = scmp.lt.s32.totalorder %s28, 1
      %s544 = scalar_select %p543, %s28, 1
      %s545 = smul.addr %s544, 8
      %s546 = scalar_lea.vmem %s17, %s545
      %v547 = vld [vmem:[%s542] sm:$0x1f]
      %v548 = vld [vmem:[%s542 + $0x8] sm:$0x1f]
      %v549 = vld [vmem:[%s1] sm:$0xff]
      %v550 = vld [vmem:[%s1 + $0x8] sm:$0xff]
      %v551 = vld [vmem:[%s1 + $0x10] sm:$0xff]
      %v552 = vld [vmem:[%s1 + $0x18] sm:$0xff]
      %v553 = vld [vmem:[%s1 + $0x20] sm:$0xff]
      %v554 = vld [vmem:[%s1 + $0x28] sm:$0xff]
      %v555 = vld [vmem:[%s1 + $0x30] sm:$0xff]
      %v556 = vld [vmem:[%s1 + $0x38] sm:$0xff]
      %v557 = vld [vmem:[%s1 + $0x40] sm:$0xff]
      %v558 = vld [vmem:[%s1 + $0x48] sm:$0xff]
      %v559 = vld [vmem:[%s1 + $0x50] sm:$0xff]
      %v560 = vld [vmem:[%s1 + $0x58] sm:$0xff]
      %v561 = vld [vmem:[%s1 + $0x60] sm:$0xff]
      %v562 = vld [vmem:[%s1 + $0x68] sm:$0xff]
      %v563 = vld [vmem:[%s1 + $0x70] sm:$0xff]
      %v564 = vld [vmem:[%s1 + $0x78] sm:$0xff]
      %v565 = vld [vmem:[%s1 + $0x80] sm:$0xff]
      %v566 = vld [vmem:[%s1 + $0x88] sm:$0xff]
      %v567 = vld [vmem:[%s1 + $0x90] sm:$0xff]
      %v568 = vld [vmem:[%s1 + $0x98] sm:$0xff]
      %v569 = vld [vmem:[%s1 + $0xa0] sm:$0xff]
      %v570 = vld [vmem:[%s1 + $0xa8] sm:$0xff]
      %v571 = vld [vmem:[%s1 + $0xb0] sm:$0xff]
      %v572 = vld [vmem:[%s1 + $0xb8] sm:$0xff]
      %v573 = vld [vmem:[%s2] sm:$0x1f]
      %vm574 = vcmask 523264
      %v576 = vsel %vm574, %v548, 0
      %578 = vmatprep.subr.mxu0 0.0
      %579 = vmatpush1.msra.mxu0 %v549
      %580 = vmatprep.subr.mxu0 0.0
      %581 = vmatpush1.msra.mxu0 %v550
      %582 = vmatprep.subr.mxu0 0.0
      %583 = vmatpush1.msra.mxu0 %v551
      %584 = vmatprep.subr.mxu0 0.0
      %585 = vmatpush1.msra.mxu0 %v552
      %586 = vmatprep.subr.mxu0 0.0
      %587 = vmatpush1.msra.mxu0 %v553
      %588 = vmatprep.subr.mxu0 0.0
      %589 = vmatpush1.msra.mxu0 %v554
      %590 = vmatprep.subr.mxu0 0.0
      %591 = vmatpush1.msra.mxu0 %v555
      %592 = vmatprep.subr.mxu0 0.0
      %593 = vmatpush1.msra.mxu0 %v556
      %594 = vmatprep.subr.mxu0 0.0
      %595 = vmatpush1.msra.mxu0 %v557
      %596 = vmatprep.subr.mxu0 0.0
      %597 = vmatpush1.msra.mxu0 %v558
      %598 = vmatprep.subr.mxu0 0.0
      %599 = vmatpush1.msra.mxu0 %v559
      %600 = vmatprep.subr.mxu0 0.0
      %601 = vmatpush1.msra.mxu0 %v560
      %602 = vmatprep.subr.mxu0 0.0
      %603 = vmatpush1.msra.mxu0 %v561
      %604 = vmatprep.subr.mxu0 0.0
      %605 = vmatpush1.msra.mxu0 %v562
      %606 = vmatprep.subr.mxu0 0.0
      %607 = vmatpush1.msra.mxu0 %v563
      %608 = vmatprep.subr.mxu0 0.0
      %609 = vmatpush1.msra.mxu0 %v564
      %610 = vmatprep.subr.mxu0 0.0
      %611 = vmatpush1.msra.mxu0 %v565
      %612 = vmatprep.subr.mxu0 0.0
      %613 = vmatpush1.msra.mxu0 %v566
      %614 = vmatprep.subr.mxu0 0.0
      %615 = vmatpush1.msra.mxu0 %v567
      %616 = vmatprep.subr.mxu0 0.0
      %617 = vmatpush1.msra.mxu0 %v568
      %618 = vmatprep.subr.mxu0 0.0
      %619 = vmatpush1.msra.mxu0 %v569
      %620 = vmatprep.subr.mxu0 0.0
      %621 = vmatpush1.msra.mxu0 %v570
      %622 = vmatprep.subr.mxu0 0.0
      %623 = vmatpush1.msra.mxu0 %v571
      %624 = vmatprep.subr.mxu0 0.0
      %625 = vmatpush1.msra.mxu0 %v572
      %626 = vmatprep.subr.mxu0 0.0
      %627 = vmatpush1.msra.mxu0 0.0
      %628 = vmatprep.subr.mxu0 0.0
      %629 = vmatpush1.msra.mxu0 0.0
      %630 = vmatprep.subr.mxu0 0.0
      %631 = vmatpush1.msra.mxu0 0.0
      %632 = vmatprep.subr.mxu0 0.0
      %633 = vmatpush1.msra.mxu0 0.0
      %634 = vmatprep.subr.mxu0 0.0
      %635 = vmatpush1.msra.mxu0 0.0
      %636 = vmatprep.subr.mxu0 0.0
      %637 = vmatpush1.msra.mxu0 0.0
      %638 = vmatprep.subr.mxu0 0.0
      %639 = vmatpush1.msra.mxu0 0.0
      %640 = vmatprep.subr.mxu0 0.0
      %641 = vmatpush1.msra.mxu0 0.0
      %642 = vmatprep.mubr.f32.mxu0 %v576
      %643 = vmatmul.mubr.f32.gmra.mrb[0].mxu0 %v547
      %v644 = vpop.f32.mrb[0].mxu0
      %v645 = vadd.f32 %v573, %v644
      %v646 = vpop.f32.mrb[0].mxu0
      %647 = vdwg.mxu0
      %v648 = vld [vmem:[%s3] sm:$0x1]
      %v649 = vld [vmem:[%s4] sm:$0x1]
      %vm650 = vcmask 258048
      %v651 = vsel %vm650, %v645, 0.0
      %652 = vadd.xlane.f32.xlu0 %v651
      %v653 = vpop.xlane.xlu0 %652
      %v654 = vrcp.pop 32.0
      %v655 = vmul.f32 %v653, %v654
      %v656 = vmul.f32 %v645, %v645
      %v657 = vsel %vm650, %v656, 0.0
      %658 = vadd.xlane.f32.xlu0 %v657
      %v659 = vpop.xlane.xlu0 %658
      %v660 = vmul.f32 %v659, %v654
      %v661 = vmul.f32 %v655, %v655
      %v662 = vsub.f32 %v660, %v661
      %v663 = vsub.f32 %v645, %v655
      %v664 = vadd.f32 %v662, 1e-06
      %v665 = vrsqrt.pop %v664
      %v666 = vmul.f32 %v663, %v665
      %v668 = vlaneseq
      %v669 = vshrl.u32 %v668, 7
      %v670 = vsub.s32 0, %v669
      %v671 = vrot.slane %v648, %v670
      %v673 = vmul.f32 %v666, %v671
      %v675 = vlaneseq
      %v676 = vshrl.u32 %v675, 7
      %v677 = vsub.s32 0, %v676
      %v678 = vrot.slane %v649, %v677
      %v680 = vadd.f32 %v673, %v678
      %v681 = vld [vmem:[%s5] sm:$0xff]
      %v682 = vld [vmem:[%s5 + $0x8] sm:$0xff]
      %v683 = vld [vmem:[%s5 + $0x10] sm:$0xff]
      %v684 = vld [vmem:[%s5 + $0x18] sm:$0xff]
      %v685 = vld [vmem:[%s6] sm:$0x1]
      %v687 = vlaneseq
      %v688 = vshrl.u32 %v687, 7
      %v689 = vsub.s32 0, %v688
      %v690 = vrot.slane %v685, %v689
      %vm692 = vcmask 261120
      %v694 = vsel %vm692, %v680, 0
      %696 = vmatprep.subr.mxu0 0.0
      %697 = vmatpush1.msra.mxu0 %v681
      %698 = vmatprep.subr.mxu0 0.0
      %699 = vmatpush1.msra.mxu0 %v682
      %700 = vmatprep.subr.mxu0 0.0
      %701 = vmatpush1.msra.mxu0 %v683
      %702 = vmatprep.subr.mxu0 0.0
      %703 = vmatpush1.msra.mxu0 %v684
      %704 = vmatprep.subr.mxu0 0.0
      %705 = vmatpush1.msra.mxu0 0.0
      %706 = vmatprep.subr.mxu0 0.0
      %707 = vmatpush1.msra.mxu0 0.0
      %708 = vmatprep.subr.mxu0 0.0
      %709 = vmatpush1.msra.mxu0 0.0
      %710 = vmatprep.subr.mxu0 0.0
      %711 = vmatpush1.msra.mxu0 0.0
      %712 = vmatprep.subr.mxu0 0.0
      %713 = vmatpush1.msra.mxu0 0.0
      %714 = vmatprep.subr.mxu0 0.0
      %715 = vmatpush1.msra.mxu0 0.0
      %716 = vmatprep.subr.mxu0 0.0
      %717 = vmatpush1.msra.mxu0 0.0
      %718 = vmatprep.subr.mxu0 0.0
      %719 = vmatpush1.msra.mxu0 0.0
      %720 = vmatprep.subr.mxu0 0.0
      %721 = vmatpush1.msra.mxu0 0.0
      %722 = vmatprep.subr.mxu0 0.0
      %723 = vmatpush1.msra.mxu0 0.0
      %724 = vmatprep.subr.mxu0 0.0
      %725 = vmatpush1.msra.mxu0 0.0
      %726 = vmatprep.subr.mxu0 0.0
      %727 = vmatpush1.msra.mxu0 0.0
      %728 = vmatprep.subr.mxu0 0.0
      %729 = vmatpush1.msra.mxu0 0.0
      %730 = vmatprep.subr.mxu0 0.0
      %731 = vmatpush1.msra.mxu0 0.0
      %732 = vmatprep.subr.mxu0 0.0
      %733 = vmatpush1.msra.mxu0 0.0
      %734 = vmatprep.subr.mxu0 0.0
      %735 = vmatpush1.msra.mxu0 0.0
      %736 = vmatprep.subr.mxu0 0.0
      %737 = vmatpush1.msra.mxu0 0.0
      %738 = vmatprep.subr.mxu0 0.0
      %739 = vmatpush1.msra.mxu0 0.0
      %740 = vmatprep.subr.mxu0 0.0
      %741 = vmatpush1.msra.mxu0 0.0
      %742 = vmatprep.subr.mxu0 0.0
      %743 = vmatpush1.msra.mxu0 0.0
      %744 = vmatprep.subr.mxu0 0.0
      %745 = vmatpush1.msra.mxu0 0.0
      %746 = vmatprep.subr.mxu0 0.0
      %747 = vmatpush1.msra.mxu0 0.0
      %748 = vmatprep.subr.mxu0 0.0
      %749 = vmatpush1.msra.mxu0 0.0
      %750 = vmatprep.subr.mxu0 0.0
      %751 = vmatpush1.msra.mxu0 0.0
      %752 = vmatprep.subr.mxu0 0.0
      %753 = vmatpush1.msra.mxu0 0.0
      %754 = vmatprep.subr.mxu0 0.0
      %755 = vmatpush1.msra.mxu0 0.0
      %756 = vmatprep.subr.mxu0 0.0
      %757 = vmatpush1.msra.mxu0 0.0
      %758 = vmatprep.subr.mxu0 0.0
      %759 = vmatpush1.msra.mxu0 0.0
      %760 = vmatprep.mubr.f32.mxu0 0.0
      %761 = vmatmul.mubr.f32.gmra.mrb[0].mxu0 %v694
      %v762 = vpop.f32.mrb[0].mxu0
      %v763 = vadd.f32 %v690, %v762
      %v764 = vpop.f32.mrb[0].mxu0
      %765 = vdwg.mxu0
      %767 = vrot.lane.b32.xlu0 %v763, 96
      %v768 = vpop.permute.xlu0 %767
      %vm769 = vcmask 64512
      %v770 = vsel %vm769, %v763, 0
      %v772 = vsel %vm769, %v768, 0
      %774 = vmatprep.subr.mxu0 0.0
      %775 = vmatpush1.xpose.msra.mxu0 %v772
      %776 = vmatprep.subr.mxu0 0.0
      %777 = vmatpush1.xpose.msra.mxu0 0.0
      %778 = vmatprep.subr.mxu0 0.0
      %779 = vmatpush1.xpose.msra.mxu0 0.0
      %780 = vmatprep.subr.mxu0 0.0
      %781 = vmatpush1.xpose.msra.mxu0 0.0
      %782 = vmatprep.subr.mxu0 0.0
      %783 = vmatpush1.xpose.msra.mxu0 0.0
      %784 = vmatprep.subr.mxu0 0.0
      %785 = vmatpush1.xpose.msra.mxu0 0.0
      %786 = vmatprep.subr.mxu0 0.0
      %787 = vmatpush1.xpose.msra.mxu0 0.0
      %788 = vmatprep.subr.mxu0 0.0
      %789 = vmatpush1.xpose.msra.mxu0 0.0
      %790 = vmatprep.subr.mxu0 0.0
      %791 = vmatpush1.xpose.msra.mxu0 0.0
      %792 = vmatprep.subr.mxu0 0.0
      %793 = vmatpush1.xpose.msra.mxu0 0.0
      %794 = vmatprep.subr.mxu0 0.0
      %795 = vmatpush1.xpose.msra.mxu0 0.0
      %796 = vmatprep.subr.mxu0 0.0
      %797 = vmatpush1.xpose.msra.mxu0 0.0
      %798 = vmatprep.subr.mxu0 0.0
      %799 = vmatpush1.xpose.msra.mxu0 0.0
      %800 = vmatprep.subr.mxu0 0.0
      %801 = vmatpush1.xpose.msra.mxu0 0.0
      %802 = vmatprep.subr.mxu0 0.0
      %803 = vmatpush1.xpose.msra.mxu0 0.0
      %804 = vmatprep.subr.mxu0 0.0
      %805 = vmatpush1.xpose.msra.mxu0 0.0
      %806 = vmatprep.subr.mxu0 0.0
      %807 = vmatpush1.xpose.msra.mxu0 0.0
      %808 = vmatprep.subr.mxu0 0.0
      %809 = vmatpush1.xpose.msra.mxu0 0.0
      %810 = vmatprep.subr.mxu0 0.0
      %811 = vmatpush1.xpose.msra.mxu0 0.0
      %812 = vmatprep.subr.mxu0 0.0
      %813 = vmatpush1.xpose.msra.mxu0 0.0
      %814 = vmatprep.subr.mxu0 0.0
      %815 = vmatpush1.xpose.msra.mxu0 0.0
      %816 = vmatprep.subr.mxu0 0.0
      %817 = vmatpush1.xpose.msra.mxu0 0.0
      %818 = vmatprep.subr.mxu0 0.0
      %819 = vmatpush1.xpose.msra.mxu0 0.0
      %820 = vmatprep.subr.mxu0 0.0
      %821 = vmatpush1.xpose.msra.mxu0 0.0
      %822 = vmatprep.subr.mxu0 0.0
      %823 = vmatpush1.xpose.msra.mxu0 0.0
      %824 = vmatprep.subr.mxu0 0.0
      %825 = vmatpush1.xpose.msra.mxu0 0.0
      %826 = vmatprep.subr.mxu0 0.0
      %827 = vmatpush1.xpose.msra.mxu0 0.0
      %828 = vmatprep.subr.mxu0 0.0
      %829 = vmatpush1.xpose.msra.mxu0 0.0
      %830 = vmatprep.subr.mxu0 0.0
      %831 = vmatpush1.xpose.msra.mxu0 0.0
      %832 = vmatprep.subr.mxu0 0.0
      %833 = vmatpush1.xpose.msra.mxu0 0.0
      %834 = vmatprep.subr.mxu0 0.0
      %835 = vmatpush1.xpose.msra.mxu0 0.0
      %836 = vmatprep.subr.mxu0 0.0
      %837 = vmatpush1.xpose.msra.mxu0 0.0
      %838 = vmatprep.mubr.f32.mxu0 0.0
      %839 = vmatmul.mubr.f32.gmra.mrb[0].mxu0 %v770
      %v840 = vpop.f32.mrb[0].mxu0
      %v841 = vadd.f32 0.0, %v840
      %v842 = vpop.f32.mrb[0].mxu0
      %843 = vdwg.mxu0
      %844 = vrot.lane.b32.xlu0 %v763, 120
      %v845 = vpop.permute.xlu0 %844
      %846 = vrot.lane.b32.xlu0 %v763, 88
      %v847 = vpop.permute.xlu0 %846
      %v848 = vsel %vm769, %v845, 0
      %v850 = vsel %vm769, %v847, 0
      %852 = vmatprep.subr.mxu0 0.0
      %853 = vmatpush1.xpose.msra.mxu0 %v850
      %854 = vmatprep.subr.mxu0 0.0
      %855 = vmatpush1.xpose.msra.mxu0 0.0
      %856 = vmatprep.subr.mxu0 0.0
      %857 = vmatpush1.xpose.msra.mxu0 0.0
      %858 = vmatprep.subr.mxu0 0.0
      %859 = vmatpush1.xpose.msra.mxu0 0.0
      %860 = vmatprep.subr.mxu0 0.0
      %861 = vmatpush1.xpose.msra.mxu0 0.0
      %862 = vmatprep.subr.mxu0 0.0
      %863 = vmatpush1.xpose.msra.mxu0 0.0
      %864 = vmatprep.subr.mxu0 0.0
      %865 = vmatpush1.xpose.msra.mxu0 0.0
      %866 = vmatprep.subr.mxu0 0.0
      %867 = vmatpush1.xpose.msra.mxu0 0.0
      %868 = vmatprep.subr.mxu0 0.0
      %869 = vmatpush1.xpose.msra.mxu0 0.0
      %870 = vmatprep.subr.mxu0 0.0
      %871 = vmatpush1.xpose.msra.mxu0 0.0
      %872 = vmatprep.subr.mxu0 0.0
      %873 = vmatpush1.xpose.msra.mxu0 0.0
      %874 = vmatprep.subr.mxu0 0.0
      %875 = vmatpush1.xpose.msra.mxu0 0.0
      %876 = vmatprep.subr.mxu0 0.0
      %877 = vmatpush1.xpose.msra.mxu0 0.0
      %878 = vmatprep.subr.mxu0 0.0
      %879 = vmatpush1.xpose.msra.mxu0 0.0
      %880 = vmatprep.subr.mxu0 0.0
      %881 = vmatpush1.xpose.msra.mxu0 0.0
      %882 = vmatprep.subr.mxu0 0.0
      %883 = vmatpush1.xpose.msra.mxu0 0.0
      %884 = vmatprep.subr.mxu0 0.0
      %885 = vmatpush1.xpose.msra.mxu0 0.0
      %886 = vmatprep.subr.mxu0 0.0
      %887 = vmatpush1.xpose.msra.mxu0 0.0
      %888 = vmatprep.subr.mxu0 0.0
      %889 = vmatpush1.xpose.msra.mxu0 0.0
      %890 = vmatprep.subr.mxu0 0.0
      %891 = vmatpush1.xpose.msra.mxu0 0.0
      %892 = vmatprep.subr.mxu0 0.0
      %893 = vmatpush1.xpose.msra.mxu0 0.0
      %894 = vmatprep.subr.mxu0 0.0
      %895 = vmatpush1.xpose.msra.mxu0 0.0
      %896 = vmatprep.subr.mxu0 0.0
      %897 = vmatpush1.xpose.msra.mxu0 0.0
      %898 = vmatprep.subr.mxu0 0.0
      %899 = vmatpush1.xpose.msra.mxu0 0.0
      %900 = vmatprep.subr.mxu0 0.0
      %901 = vmatpush1.xpose.msra.mxu0 0.0
      %902 = vmatprep.subr.mxu0 0.0
      %903 = vmatpush1.xpose.msra.mxu0 0.0
      %904 = vmatprep.subr.mxu0 0.0
      %905 = vmatpush1.xpose.msra.mxu0 0.0
      %906 = vmatprep.subr.mxu0 0.0
      %907 = vmatpush1.xpose.msra.mxu0 0.0
      %908 = vmatprep.subr.mxu0 0.0
      %909 = vmatpush1.xpose.msra.mxu0 0.0
      %910 = vmatprep.subr.mxu0 0.0
      %911 = vmatpush1.xpose.msra.mxu0 0.0
      %912 = vmatprep.subr.mxu0 0.0
      %913 = vmatpush1.xpose.msra.mxu0 0.0
      %914 = vmatprep.subr.mxu0 0.0
      %915 = vmatpush1.xpose.msra.mxu0 0.0
      %916 = vmatprep.mubr.f32.mxu0 0.0
      %917 = vmatmul.mubr.f32.gmra.mrb[0].mxu0 %v848
      %v918 = vpop.f32.mrb[0].mxu0
      %v919 = vadd.f32 0.0, %v918
      %v920 = vpop.f32.mrb[0].mxu0
      %921 = vdwg.mxu0
      %922 = vrot.lane.b32.xlu0 %v763, 112
      %v923 = vpop.permute.xlu0 %922
      %924 = vrot.lane.b32.xlu0 %v763, 80
      %v925 = vpop.permute.xlu0 %924
      %v926 = vsel %vm769, %v923, 0
      %v928 = vsel %vm769, %v925, 0
      %930 = vmatprep.subr.mxu0 0.0
      %931 = vmatpush1.xpose.msra.mxu0 %v928
      %932 = vmatprep.subr.mxu0 0.0
      %933 = vmatpush1.xpose.msra.mxu0 0.0
      %934 = vmatprep.subr.mxu0 0.0
      %935 = vmatpush1.xpose.msra.mxu0 0.0
      %936 = vmatprep.subr.mxu0 0.0
      %937 = vmatpush1.xpose.msra.mxu0 0.0
      %938 = vmatprep.subr.mxu0 0.0
      %939 = vmatpush1.xpose.msra.mxu0 0.0
      %940 = vmatprep.subr.mxu0 0.0
      %941 = vmatpush1.xpose.msra.mxu0 0.0
      %942 = vmatprep.subr.mxu0 0.0
      %943 = vmatpush1.xpose.msra.mxu0 0.0
      %944 = vmatprep.subr.mxu0 0.0
      %945 = vmatpush1.xpose.msra.mxu0 0.0
      %946 = vmatprep.subr.mxu0 0.0
      %947 = vmatpush1.xpose.msra.mxu0 0.0
      %948 = vmatprep.subr.mxu0 0.0
      %949 = vmatpush1.xpose.msra.mxu0 0.0
      %950 = vmatprep.subr.mxu0 0.0
      %951 = vmatpush1.xpose.msra.mxu0 0.0
      %952 = vmatprep.subr.mxu0 0.0
      %953 = vmatpush1.xpose.msra.mxu0 0.0
      %954 = vmatprep.subr.mxu0 0.0
      %955 = vmatpush1.xpose.msra.mxu0 0.0
      %956 = vmatprep.subr.mxu0 0.0
      %957 = vmatpush1.xpose.msra.mxu0 0.0
      %958 = vmatprep.subr.mxu0 0.0
      %959 = vmatpush1.xpose.msra.mxu0 0.0
      %960 = vmatprep.subr.mxu0 0.0
      %961 = vmatpush1.xpose.msra.mxu0 0.0
      %962 = vmatprep.subr.mxu0 0.0
      %963 = vmatpush1.xpose.msra.mxu0 0.0
      %964 = vmatprep.subr.mxu0 0.0
      %965 = vmatpush1.xpose.msra.mxu0 0.0
      %966 = vmatprep.subr.mxu0 0.0
      %967 = vmatpush1.xpose.msra.mxu0 0.0
      %968 = vmatprep.subr.mxu0 0.0
      %969 = vmatpush1.xpose.msra.mxu0 0.0
      %970 = vmatprep.subr.mxu0 0.0
      %971 = vmatpush1.xpose.msra.mxu0 0.0
      %972 = vmatprep.subr.mxu0 0.0
      %973 = vmatpush1.xpose.msra.mxu0 0.0
      %974 = vmatprep.subr.mxu0 0.0
      %975 = vmatpush1.xpose.msra.mxu0 0.0
      %976 = vmatprep.subr.mxu0 0.0
      %977 = vmatpush1.xpose.msra.mxu0 0.0
      %978 = vmatprep.subr.mxu0 0.0
      %979 = vmatpush1.xpose.msra.mxu0 0.0
      %980 = vmatprep.subr.mxu0 0.0
      %981 = vmatpush1.xpose.msra.mxu0 0.0
      %982 = vmatprep.subr.mxu0 0.0
      %983 = vmatpush1.xpose.msra.mxu0 0.0
      %984 = vmatprep.subr.mxu0 0.0
      %985 = vmatpush1.xpose.msra.mxu0 0.0
      %986 = vmatprep.subr.mxu0 0.0
      %987 = vmatpush1.xpose.msra.mxu0 0.0
      %988 = vmatprep.subr.mxu0 0.0
      %989 = vmatpush1.xpose.msra.mxu0 0.0
      %990 = vmatprep.subr.mxu0 0.0
      %991 = vmatpush1.xpose.msra.mxu0 0.0
      %992 = vmatprep.subr.mxu0 0.0
      %993 = vmatpush1.xpose.msra.mxu0 0.0
      %994 = vmatprep.mubr.f32.mxu0 0.0
      %995 = vmatmul.mubr.f32.gmra.mrb[0].mxu0 %v926
      %v996 = vpop.f32.mrb[0].mxu0
      %v997 = vadd.f32 0.0, %v996
      %v998 = vpop.f32.mrb[0].mxu0
      %999 = vdwg.mxu0
      %1000 = vrot.lane.b32.xlu0 %v763, 104
      %v1001 = vpop.permute.xlu0 %1000
      %1002 = vrot.lane.b32.xlu0 %v763, 72
      %v1003 = vpop.permute.xlu0 %1002
      %v1004 = vsel %vm769, %v1001, 0
      %v1006 = vsel %vm769, %v1003, 0
      %1008 = vmatprep.subr.mxu0 0.0
      %1009 = vmatpush1.xpose.msra.mxu0 %v1006
      %1010 = vmatprep.subr.mxu0 0.0
      %1011 = vmatpush1.xpose.msra.mxu0 0.0
      %1012 = vmatprep.subr.mxu0 0.0
      %1013 = vmatpush1.xpose.msra.mxu0 0.0
      %1014 = vmatprep.subr.mxu0 0.0
      %1015 = vmatpush1.xpose.msra.mxu0 0.0
      %1016 = vmatprep.subr.mxu0 0.0
      %1017 = vmatpush1.xpose.msra.mxu0 0.0
      %1018 = vmatprep.subr.mxu0 0.0
      %1019 = vmatpush1.xpose.msra.mxu0 0.0
      %1020 = vmatprep.subr.mxu0 0.0
      %1021 = vmatpush1.xpose.msra.mxu0 0.0
      %1022 = vmatprep.subr.mxu0 0.0
      %1023 = vmatpush1.xpose.msra.mxu0 0.0
      %1024 = vmatprep.subr.mxu0 0.0
      %1025 = vmatpush1.xpose.msra.mxu0 0.0
      %1026 = vmatprep.subr.mxu0 0.0
      %1027 = vmatpush1.xpose.msra.mxu0 0.0
      %1028 = vmatprep.subr.mxu0 0.0
      %1029 = vmatpush1.xpose.msra.mxu0 0.0
      %1030 = vmatprep.subr.mxu0 0.0
      %1031 = vmatpush1.xpose.msra.mxu0 0.0
      %1032 = vmatprep.subr.mxu0 0.0
      %1033 = vmatpush1.xpose.msra.mxu0 0.0
      %1034 = vmatprep.subr.mxu0 0.0
      %1035 = vmatpush1.xpose.msra.mxu0 0.0
      %1036 = vmatprep.subr.mxu0 0.0
      %1037 = vmatpush1.xpose.msra.mxu0 0.0
      %1038 = vmatprep.subr.mxu0 0.0
      %1039 = vmatpush1.xpose.msra.mxu0 0.0
      %1040 = vmatprep.subr.mxu0 0.0
      %1041 = vmatpush1.xpose.msra.mxu0 0.0
      %1042 = vmatprep.subr.mxu0 0.0
      %1043 = vmatpush1.xpose.msra.mxu0 0.0
      %1044 = vmatprep.subr.mxu0 0.0
      %1045 = vmatpush1.xpose.msra.mxu0 0.0
      %1046 = vmatprep.subr.mxu0 0.0
      %1047 = vmatpush1.xpose.msra.mxu0 0.0
      %1048 = vmatprep.subr.mxu0 0.0
      %1049 = vmatpush1.xpose.msra.mxu0 0.0
      %1050 = vmatprep.subr.mxu0 0.0
      %1051 = vmatpush1.xpose.msra.mxu0 0.0
      %1052 = vmatprep.subr.mxu0 0.0
      %1053 = vmatpush1.xpose.msra.mxu0 0.0
      %1054 = vmatprep.subr.mxu0 0.0
      %1055 = vmatpush1.xpose.msra.mxu0 0.0
      %1056 = vmatprep.subr.mxu0 0.0
      %1057 = vmatpush1.xpose.msra.mxu0 0.0
      %1058 = vmatprep.subr.mxu0 0.0
      %1059 = vmatpush1.xpose.msra.mxu0 0.0
      %1060 = vmatprep.subr.mxu0 0.0
      %1061 = vmatpush1.xpose.msra.mxu0 0.0
      %1062 = vmatprep.subr.mxu0 0.0
      %1063 = vmatpush1.xpose.msra.mxu0 0.0
      %1064 = vmatprep.subr.mxu0 0.0
      %1065 = vmatpush1.xpose.msra.mxu0 0.0
      %1066 = vmatprep.subr.mxu0 0.0
      %1067 = vmatpush1.xpose.msra.mxu0 0.0
      %1068 = vmatprep.subr.mxu0 0.0
      %1069 = vmatpush1.xpose.msra.mxu0 0.0
      %1070 = vmatprep.subr.mxu0 0.0
      %1071 = vmatpush1.xpose.msra.mxu0 0.0
      %1072 = vmatprep.mubr.f32.mxu0 0.0
      %1073 = vmatmul.mubr.f32.gmra.mrb[0].mxu0 %v1004
      %v1074 = vpop.f32.mrb[0].mxu0
      %v1075 = vadd.f32 0.0, %v1074
      %v1076 = vpop.f32.mrb[0].mxu0
      %1077 = vdwg.mxu0
      %vm1078 = vcmask 36864
      %v1079 = vsel %vm1078, %v841, -inf
      %1080 = vmax.xlane.f32.xlu0 %v1079
      %v1081 = vpop.xlane.xlu0 %1080
      %v1082 = vsel %vm1078, %v919, -inf
      %1083 = vmax.xlane.f32.xlu0 %v1082
      %v1084 = vpop.xlane.xlu0 %1083
      %v1085 = vsel %vm1078, %v997, -inf
      %1086 = vmax.xlane.f32.xlu0 %v1085
      %v1087 = vpop.xlane.xlu0 %1086
      %v1088 = vsel %vm1078, %v1075, -inf
      %1089 = vmax.xlane.f32.xlu0 %v1088
      %v1090 = vpop.xlane.xlu0 %1089
      %v1091 = vsub.f32 %v841, %v1081
      %v1092 = vsub.f32 %v919, %v1084
      %v1093 = vsub.f32 %v997, %v1087
      %v1094 = vsub.f32 %v1075, %v1090
      %v1095 = vmul.f32 %v1091, 1.442695
      %v1096 = vpow.pop %v1095
      %v1097 = vmul.f32 %v1092, 1.442695
      %v1098 = vpow.pop %v1097
      %v1099 = vmul.f32 %v1093, 1.442695
      %v1100 = vpow.pop %v1099
      %v1101 = vmul.f32 %v1094, 1.442695
      %v1102 = vpow.pop %v1101
      %v1103 = vsel %vm1078, %v1096, 0.0
      %1104 = vadd.xlane.f32.xlu0 %v1103
      %v1105 = vpop.xlane.xlu0 %1104
      %v1106 = vsel %vm1078, %v1098, 0.0
      %1107 = vadd.xlane.f32.xlu0 %v1106
      %v1108 = vpop.xlane.xlu0 %1107
      %v1109 = vsel %vm1078, %v1100, 0.0
      %1110 = vadd.xlane.f32.xlu0 %v1109
      %v1111 = vpop.xlane.xlu0 %1110
      %v1112 = vsel %vm1078, %v1102, 0.0
      %1113 = vadd.xlane.f32.xlu0 %v1112
      %v1114 = vpop.xlane.xlu0 %1113
      %v1115 = vrcp.pop %v1105
      %v1116 = vrcp.pop %v1108
      %v1117 = vrcp.pop %v1111
      %v1118 = vrcp.pop %v1114
      %v1119 = vmul.f32 %v1096, %v1115
      %v1120 = vmul.f32 %v1098, %v1116
      %v1121 = vmul.f32 %v1100, %v1117
      %v1122 = vmul.f32 %v1102, %v1118
      %v1123 = vld [vmem:[%s7] sm:$0xff]
      %v1124 = vld [vmem:[%s7 + $0x8] sm:$0xff]
      %v1125 = vld [vmem:[%s7 + $0x10] sm:$0xff]
      %v1126 = vld [vmem:[%s7 + $0x18] sm:$0xff]
      %v1127 = vld [vmem:[%s8] sm:$0x1]
      %1128 = vrot.lane.b32.xlu0 %v763, 64
      %v1129 = vpop.permute.xlu0 %1128
      %vm1130 = vcmask 39936
      %v1132 = vsel %vm1130, %v1119, 0
      %vm1134 = vcmask 1044480
      %v1135 = vsel %vm1134, %v1129, 0
      %1137 = vmatprep.subr.mxu0 0.0
      %1138 = vmatpush1.msra.mxu0 %v1135
      %1139 = vmatprep.subr.mxu0 0.0
      %1140 = vmatpush1.msra.mxu0 0.0
      %1141 = vmatprep.subr.mxu0 0.0
      %1142 = vmatpush1.msra.mxu0 0.0
      %1143 = vmatprep.subr.mxu0 0.0
      %1144 = vmatpush1.msra.mxu0 0.0
      %1145 = vmatprep.subr.mxu0 0.0
      %1146 = vmatpush1.msra.mxu0 0.0
      %1147 = vmatprep.subr.mxu0 0.0
      %1148 = vmatpush1.msra.mxu0 0.0
      %1149 = vmatprep.subr.mxu0 0.0
      %1150 = vmatpush1.msra.mxu0 0.0
      %1151 = vmatprep.subr.mxu0 0.0
      %1152 = vmatpush1.msra.mxu0 0.0
      %1153 = vmatprep.subr.mxu0 0.0
      %1154 = vmatpush1.msra.mxu0 0.0
      %1155 = vmatprep.subr.mxu0 0.0
      %1156 = vmatpush1.msra.mxu0 0.0
      %1157 = vmatprep.subr.mxu0 0.0
      %1158 = vmatpush1.msra.mxu0 0.0
      %1159 = vmatprep.subr.mxu0 0.0
      %1160 = vmatpush1.msra.mxu0 0.0
      %1161 = vmatprep.subr.mxu0 0.0
      %1162 = vmatpush1.msra.mxu0 0.0
      %1163 = vmatprep.subr.mxu0 0.0
      %1164 = vmatpush1.msra.mxu0 0.0
      %1165 = vmatprep.subr.mxu0 0.0
      %1166 = vmatpush1.msra.mxu0 0.0
      %1167 = vmatprep.subr.mxu0 0.0
      %1168 = vmatpush1.msra.mxu0 0.0
      %1169 = vmatprep.subr.mxu0 0.0
      %1170 = vmatpush1.msra.mxu0 0.0
      %1171 = vmatprep.subr.mxu0 0.0
      %1172 = vmatpush1.msra.mxu0 0.0
      %1173 = vmatprep.subr.mxu0 0.0
      %1174 = vmatpush1.msra.mxu0 0.0
      %1175 = vmatprep.subr.mxu0 0.0
      %1176 = vmatpush1.msra.mxu0 0.0
      %1177 = vmatprep.subr.mxu0 0.0
      %1178 = vmatpush1.msra.mxu0 0.0
      %1179 = vmatprep.subr.mxu0 0.0
      %1180 = vmatpush1.msra.mxu0 0.0
      %1181 = vmatprep.subr.mxu0 0.0
      %1182 = vmatpush1.msra.mxu0 0.0
      %1183 = vmatprep.subr.mxu0 0.0
      %1184 = vmatpush1.msra.mxu0 0.0
      %1185 = vmatprep.subr.mxu0 0.0
      %1186 = vmatpush1.msra.mxu0 0.0
      %1187 = vmatprep.subr.mxu0 0.0
      %1188 = vmatpush1.msra.mxu0 0.0
      %1189 = vmatprep.subr.mxu0 0.0
      %1190 = vmatpush1.msra.mxu0 0.0
      %1191 = vmatprep.subr.mxu0 0.0
      %1192 = vmatpush1.msra.mxu0 0.0
      %1193 = vmatprep.subr.mxu0 0.0
      %1194 = vmatpush1.msra.mxu0 0.0
      %1195 = vmatprep.subr.mxu0 0.0
      %1196 = vmatpush1.msra.mxu0 0.0
      %1197 = vmatprep.subr.mxu0 0.0
      %1198 = vmatpush1.msra.mxu0 0.0
      %1199 = vmatprep.subr.mxu0 0.0
      %1200 = vmatpush1.msra.mxu0 0.0
      %1201 = vmatprep.mubr.f32.mxu0 0.0
      %1202 = vmatmul.mubr.f32.gmra.mrb[0].mxu0 %v1132
      %v1203 = vpop.f32.mrb[0].mxu0
      %v1204 = vadd.f32 0.0, %v1203
      %v1205 = vpop.f32.mrb[0].mxu0
      %1206 = vdwg.mxu0
      %v1208 = vsel %vm769, %v1204, 0
      %1210 = vmatprep.subr.mxu0 0.0
      %1211 = vmatpush1.msra.mxu0 %v1123
      %1212 = vmatprep.subr.mxu0 0.0
      %1213 = vmatpush1.msra.mxu0 0.0
      %1214 = vmatprep.subr.mxu0 0.0
      %1215 = vmatpush1.msra.mxu0 0.0
      %1216 = vmatprep.subr.mxu0 0.0
      %1217 = vmatpush1.msra.mxu0 0.0
      %1218 = vmatprep.subr.mxu0 0.0
      %1219 = vmatpush1.msra.mxu0 0.0
      %1220 = vmatprep.subr.mxu0 0.0
      %1221 = vmatpush1.msra.mxu0 0.0
      %1222 = vmatprep.subr.mxu0 0.0
      %1223 = vmatpush1.msra.mxu0 0.0
      %1224 = vmatprep.subr.mxu0 0.0
      %1225 = vmatpush1.msra.mxu0 0.0
      %1226 = vmatprep.subr.mxu0 0.0
      %1227 = vmatpush1.msra.mxu0 0.0
      %1228 = vmatprep.subr.mxu0 0.0
      %1229 = vmatpush1.msra.mxu0 0.0
      %1230 = vmatprep.subr.mxu0 0.0
      %1231 = vmatpush1.msra.mxu0 0.0
      %1232 = vmatprep.subr.mxu0 0.0
      %1233 = vmatpush1.msra.mxu0 0.0
      %1234 = vmatprep.subr.mxu0 0.0
      %1235 = vmatpush1.msra.mxu0 0.0
      %1236 = vmatprep.subr.mxu0 0.0
      %1237 = vmatpush1.msra.mxu0 0.0
      %1238 = vmatprep.subr.mxu0 0.0
      %1239 = vmatpush1.msra.mxu0 0.0
      %1240 = vmatprep.subr.mxu0 0.0
      %1241 = vmatpush1.msra.mxu0 0.0
      %1242 = vmatprep.subr.mxu0 0.0
      %1243 = vmatpush1.msra.mxu0 0.0
      %1244 = vmatprep.subr.mxu0 0.0
      %1245 = vmatpush1.msra.mxu0 0.0
      %1246 = vmatprep.subr.mxu0 0.0
      %1247 = vmatpush1.msra.mxu0 0.0
      %1248 = vmatprep.subr.mxu0 0.0
      %1249 = vmatpush1.msra.mxu0 0.0
      %1250 = vmatprep.subr.mxu0 0.0
      %1251 = vmatpush1.msra.mxu0 0.0
      %1252 = vmatprep.subr.mxu0 0.0
      %1253 = vmatpush1.msra.mxu0 0.0
      %1254 = vmatprep.subr.mxu0 0.0
      %1255 = vmatpush1.msra.mxu0 0.0
      %1256 = vmatprep.subr.mxu0 0.0
      %1257 = vmatpush1.msra.mxu0 0.0
      %1258 = vmatprep.subr.mxu0 0.0
      %1259 = vmatpush1.msra.mxu0 0.0
      %1260 = vmatprep.subr.mxu0 0.0
      %1261 = vmatpush1.msra.mxu0 0.0
      %1262 = vmatprep.subr.mxu0 0.0
      %1263 = vmatpush1.msra.mxu0 0.0
      %1264 = vmatprep.subr.mxu0 0.0
      %1265 = vmatpush1.msra.mxu0 0.0
      %1266 = vmatprep.subr.mxu0 0.0
      %1267 = vmatpush1.msra.mxu0 0.0
      %1268 = vmatprep.subr.mxu0 0.0
      %1269 = vmatpush1.msra.mxu0 0.0
      %1270 = vmatprep.subr.mxu0 0.0
      %1271 = vmatpush1.msra.mxu0 0.0
      %1272 = vmatprep.subr.mxu0 0.0
      %1273 = vmatpush1.msra.mxu0 0.0
      %1274 = vmatprep.mubr.f32.mxu0 0.0
      %1275 = vmatmul.mubr.f32.gmra.mrb[0].mxu0 %v1208
      %v1276 = vpop.f32.mrb[0].mxu0
      %v1277 = vadd.f32 0.0, %v1276
      %v1278 = vpop.f32.mrb[0].mxu0
      %1279 = vdwg.mxu0
      %v1281 = vlaneseq
      %v1282 = vshrl.u32 %v1281, 7
      %v1283 = vsub.s32 0, %v1282
      %v1284 = vrot.slane %v1127, %v1283
      %v1286 = vadd.f32 %v1284, %v1277
      %1287 = vrot.lane.b32.xlu0 %v763, 56
      %v1288 = vpop.permute.xlu0 %1287
      %v1290 = vsel %vm1130, %v1120, 0
      %v1292 = vsel %vm1134, %v1288, 0
      %1294 = vmatprep.subr.mxu0 0.0
      %1295 = vmatpush1.msra.mxu0 %v1292
      %1296 = vmatprep.subr.mxu0 0.0
      %1297 = vmatpush1.msra.mxu0 0.0
      %1298 = vmatprep.subr.mxu0 0.0
      %1299 = vmatpush1.msra.mxu0 0.0
      %1300 = vmatprep.subr.mxu0 0.0
      %1301 = vmatpush1.msra.mxu0 0.0
      %1302 = vmatprep.subr.mxu0 0.0
      %1303 = vmatpush1.msra.mxu0 0.0
      %1304 = vmatprep.subr.mxu0 0.0
      %1305 = vmatpush1.msra.mxu0 0.0
      %1306 = vmatprep.subr.mxu0 0.0
      %1307 = vmatpush1.msra.mxu0 0.0
      %1308 = vmatprep.subr.mxu0 0.0
      %1309 = vmatpush1.msra.mxu0 0.0
      %1310 = vmatprep.subr.mxu0 0.0
      %1311 = vmatpush1.msra.mxu0 0.0
      %1312 = vmatprep.subr.mxu0 0.0
      %1313 = vmatpush1.msra.mxu0 0.0
      %1314 = vmatprep.subr.mxu0 0.0
      %1315 = vmatpush1.msra.mxu0 0.0
      %1316 = vmatprep.subr.mxu0 0.0
      %1317 = vmatpush1.msra.mxu0 0.0
      %1318 = vmatprep.subr.mxu0 0.0
      %1319 = vmatpush1.msra.mxu0 0.0
      %1320 = vmatprep.subr.mxu0 0.0
      %1321 = vmatpush1.msra.mxu0 0.0
      %1322 = vmatprep.subr.mxu0 0.0
      %1323 = vmatpush1.msra.mxu0 0.0
      %1324 = vmatprep.subr.mxu0 0.0
      %1325 = vmatpush1.msra.mxu0 0.0
      %1326 = vmatprep.subr.mxu0 0.0
      %1327 = vmatpush1.msra.mxu0 0.0
      %1328 = vmatprep.subr.mxu0 0.0
      %1329 = vmatpush1.msra.mxu0 0.0
      %1330 = vmatprep.subr.mxu0 0.0
      %1331 = vmatpush1.msra.mxu0 0.0
      %1332 = vmatprep.subr.mxu0 0.0
      %1333 = vmatpush1.msra.mxu0 0.0
      %1334 = vmatprep.subr.mxu0 0.0
      %1335 = vmatpush1.msra.mxu0 0.0
      %1336 = vmatprep.subr.mxu0 0.0
      %1337 = vmatpush1.msra.mxu0 0.0
      %1338 = vmatprep.subr.mxu0 0.0
      %1339 = vmatpush1.msra.mxu0 0.0
      %1340 = vmatprep.subr.mxu0 0.0
      %1341 = vmatpush1.msra.mxu0 0.0
      %1342 = vmatprep.subr.mxu0 0.0
      %1343 = vmatpush1.msra.mxu0 0.0
      %1344 = vmatprep.subr.mxu0 0.0
      %1345 = vmatpush1.msra.mxu0 0.0
      %1346 = vmatprep.subr.mxu0 0.0
      %1347 = vmatpush1.msra.mxu0 0.0
      %1348 = vmatprep.subr.mxu0 0.0
      %1349 = vmatpush1.msra.mxu0 0.0
      %1350 = vmatprep.subr.mxu0 0.0
      %1351 = vmatpush1.msra.mxu0 0.0
      %1352 = vmatprep.subr.mxu0 0.0
      %1353 = vmatpush1.msra.mxu0 0.0
      %1354 = vmatprep.subr.mxu0 0.0
      %1355 = vmatpush1.msra.mxu0 0.0
      %1356 = vmatprep.subr.mxu0 0.0
      %1357 = vmatpush1.msra.mxu0 0.0
      %1358 = vmatprep.mubr.f32.mxu0 0.0
      %1359 = vmatmul.mubr.f32.gmra.mrb[0].mxu0 %v1290
      %v1360 = vpop.f32.mrb[0].mxu0
      %v1361 = vadd.f32 0.0, %v1360
      %v1362 = vpop.f32.mrb[0].mxu0
      %1363 = vdwg.mxu0
      %v1365 = vsel %vm769, %v1361, 0
      %1367 = vmatprep.subr.mxu0 0.0
      %1368 = vmatpush1.msra.mxu0 %v1124
      %1369 = vmatprep.subr.mxu0 0.0
      %1370 = vmatpush1.msra.mxu0 0.0
      %1371 = vmatprep.subr.mxu0 0.0
      %1372 = vmatpush1.msra.mxu0 0.0
      %1373 = vmatprep.subr.mxu0 0.0
      %1374 = vmatpush1.msra.mxu0 0.0
      %1375 = vmatprep.subr.mxu0 0.0
      %1376 = vmatpush1.msra.mxu0 0.0
      %1377 = vmatprep.subr.mxu0 0.0
      %1378 = vmatpush1.msra.mxu0 0.0
      %1379 = vmatprep.subr.mxu0 0.0
      %1380 = vmatpush1.msra.mxu0 0.0
      %1381 = vmatprep.subr.mxu0 0.0
      %1382 = vmatpush1.msra.mxu0 0.0
      %1383 = vmatprep.subr.mxu0 0.0
      %1384 = vmatpush1.msra.mxu0 0.0
      %1385 = vmatprep.subr.mxu0 0.0
      %1386 = vmatpush1.msra.mxu0 0.0
      %1387 = vmatprep.subr.mxu0 0.0
      %1388 = vmatpush1.msra.mxu0 0.0
      %1389 = vmatprep.subr.mxu0 0.0
      %1390 = vmatpush1.msra.mxu0 0.0
      %1391 = vmatprep.subr.mxu0 0.0
      %1392 = vmatpush1.msra.mxu0 0.0
      %1393 = vmatprep.subr.mxu0 0.0
      %1394 = vmatpush1.msra.mxu0 0.0
      %1395 = vmatprep.subr.mxu0 0.0
      %1396 = vmatpush1.msra.mxu0 0.0
      %1397 = vmatprep.subr.mxu0 0.0
      %1398 = vmatpush1.msra.mxu0 0.0
      %1399 = vmatprep.subr.mxu0 0.0
      %1400 = vmatpush1.msra.mxu0 0.0
      %1401 = vmatprep.subr.mxu0 0.0
      %1402 = vmatpush1.msra.mxu0 0.0
      %1403 = vmatprep.subr.mxu0 0.0
      %1404 = vmatpush1.msra.mxu0 0.0
      %1405 = vmatprep.subr.mxu0 0.0
      %1406 = vmatpush1.msra.mxu0 0.0
      %1407 = vmatprep.subr.mxu0 0.0
      %1408 = vmatpush1.msra.mxu0 0.0
      %1409 = vmatprep.subr.mxu0 0.0
      %1410 = vmatpush1.msra.mxu0 0.0
      %1411 = vmatprep.subr.mxu0 0.0
      %1412 = vmatpush1.msra.mxu0 0.0
      %1413 = vmatprep.subr.mxu0 0.0
      %1414 = vmatpush1.msra.mxu0 0.0
      %1415 = vmatprep.subr.mxu0 0.0
      %1416 = vmatpush1.msra.mxu0 0.0
      %1417 = vmatprep.subr.mxu0 0.0
      %1418 = vmatpush1.msra.mxu0 0.0
      %1419 = vmatprep.subr.mxu0 0.0
      %1420 = vmatpush1.msra.mxu0 0.0
      %1421 = vmatprep.subr.mxu0 0.0
      %1422 = vmatpush1.msra.mxu0 0.0
      %1423 = vmatprep.subr.mxu0 0.0
      %1424 = vmatpush1.msra.mxu0 0.0
      %1425 = vmatprep.subr.mxu0 0.0
      %1426 = vmatpush1.msra.mxu0 0.0
      %1427 = vmatprep.subr.mxu0 0.0
      %1428 = vmatpush1.msra.mxu0 0.0
      %1429 = vmatprep.subr.mxu0 0.0
      %1430 = vmatpush1.msra.mxu0 0.0
      %1431 = vmatprep.mubr.f32.mxu0 0.0
      %1432 = vmatmul.mubr.f32.gmra.mrb[0].mxu0 %v1365
      %v1433 = vpop.f32.mrb[0].mxu0
      %v1434 = vadd.f32 0.0, %v1433
      %v1435 = vpop.f32.mrb[0].mxu0
      %1436 = vdwg.mxu0
      %v1437 = vadd.f32 %v1286, %v1434
      %1438 = vrot.lane.b32.xlu0 %v763, 48
      %v1439 = vpop.permute.xlu0 %1438
      %v1441 = vsel %vm1130, %v1121, 0
      %v1443 = vsel %vm1134, %v1439, 0
      %1445 = vmatprep.subr.mxu0 0.0
      %1446 = vmatpush1.msra.mxu0 %v1443
      %1447 = vmatprep.subr.mxu0 0.0
      %1448 = vmatpush1.msra.mxu0 0.0
      %1449 = vmatprep.subr.mxu0 0.0
      %1450 = vmatpush1.msra.mxu0 0.0
      %1451 = vmatprep.subr.mxu0 0.0
      %1452 = vmatpush1.msra.mxu0 0.0
      %1453 = vmatprep.subr.mxu0 0.0
      %1454 = vmatpush1.msra.mxu0 0.0
      %1455 = vmatprep.subr.mxu0 0.0
      %1456 = vmatpush1.msra.mxu0 0.0
      %1457 = vmatprep.subr.mxu0 0.0
      %1458 = vmatpush1.msra.mxu0 0.0
      %1459 = vmatprep.subr.mxu0 0.0
      %1460 = vmatpush1.msra.mxu0 0.0
      %1461 = vmatprep.subr.mxu0 0.0
      %1462 = vmatpush1.msra.mxu0 0.0
      %1463 = vmatprep.subr.mxu0 0.0
      %1464 = vmatpush1.msra.mxu0 0.0
      %1465 = vmatprep.subr.mxu0 0.0
      %1466 = vmatpush1.msra.mxu0 0.0
      %1467 = vmatprep.subr.mxu0 0.0
      %1468 = vmatpush1.msra.mxu0 0.0
      %1469 = vmatprep.subr.mxu0 0.0
      %1470 = vmatpush1.msra.mxu0 0.0
      %1471 = vmatprep.subr.mxu0 0.0
      %1472 = vmatpush1.msra.mxu0 0.0
      %1473 = vmatprep.subr.mxu0 0.0
      %1474 = vmatpush1.msra.mxu0 0.0
      %1475 = vmatprep.subr.mxu0 0.0
      %1476 = vmatpush1.msra.mxu0 0.0
      %1477 = vmatprep.subr.mxu0 0.0
      %1478 = vmatpush1.msra.mxu0 0.0
      %1479 = vmatprep.subr.mxu0 0.0
      %1480 = vmatpush1.msra.mxu0 0.0
      %1481 = vmatprep.subr.mxu0 0.0
      %1482 = vmatpush1.msra.mxu0 0.0
      %1483 = vmatprep.subr.mxu0 0.0
      %1484 = vmatpush1.msra.mxu0 0.0
      %1485 = vmatprep.subr.mxu0 0.0
      %1486 = vmatpush1.msra.mxu0 0.0
      %1487 = vmatprep.subr.mxu0 0.0
      %1488 = vmatpush1.msra.mxu0 0.0
      %1489 = vmatprep.subr.mxu0 0.0
      %1490 = vmatpush1.msra.mxu0 0.0
      %1491 = vmatprep.subr.mxu0 0.0
      %1492 = vmatpush1.msra.mxu0 0.0
      %1493 = vmatprep.subr.mxu0 0.0
      %1494 = vmatpush1.msra.mxu0 0.0
      %1495 = vmatprep.subr.mxu0 0.0
      %1496 = vmatpush1.msra.mxu0 0.0
      %1497 = vmatprep.subr.mxu0 0.0
      %1498 = vmatpush1.msra.mxu0 0.0
      %1499 = vmatprep.subr.mxu0 0.0
      %1500 = vmatpush1.msra.mxu0 0.0
      %1501 = vmatprep.subr.mxu0 0.0
      %1502 = vmatpush1.msra.mxu0 0.0
      %1503 = vmatprep.subr.mxu0 0.0
      %1504 = vmatpush1.msra.mxu0 0.0
      %1505 = vmatprep.subr.mxu0 0.0
      %1506 = vmatpush1.msra.mxu0 0.0
      %1507 = vmatprep.subr.mxu0 0.0
      %1508 = vmatpush1.msra.mxu0 0.0
      %1509 = vmatprep.mubr.f32.mxu0 0.0
      %1510 = vmatmul.mubr.f32.gmra.mrb[0].mxu0 %v1441
      %v1511 = vpop.f32.mrb[0].mxu0
      %v1512 = vadd.f32 0.0, %v1511
      %v1513 = vpop.f32.mrb[0].mxu0
      %1514 = vdwg.mxu0
      %v1516 = vsel %vm769, %v1512, 0
      %1518 = vmatprep.subr.mxu0 0.0
      %1519 = vmatpush1.msra.mxu0 %v1125
      %1520 = vmatprep.subr.mxu0 0.0
      %1521 = vmatpush1.msra.mxu0 0.0
      %1522 = vmatprep.subr.mxu0 0.0
      %1523 = vmatpush1.msra.mxu0 0.0
      %1524 = vmatprep.subr.mxu0 0.0
      %1525 = vmatpush1.msra.mxu0 0.0
      %1526 = vmatprep.subr.mxu0 0.0
      %1527 = vmatpush1.msra.mxu0 0.0
      %1528 = vmatprep.subr.mxu0 0.0
      %1529 = vmatpush1.msra.mxu0 0.0
      %1530 = vmatprep.subr.mxu0 0.0
      %1531 = vmatpush1.msra.mxu0 0.0
      %1532 = vmatprep.subr.mxu0 0.0
      %1533 = vmatpush1.msra.mxu0 0.0
      %1534 = vmatprep.subr.mxu0 0.0
      %1535 = vmatpush1.msra.mxu0 0.0
      %1536 = vmatprep.subr.mxu0 0.0
      %1537 = vmatpush1.msra.mxu0 0.0
      %1538 = vmatprep.subr.mxu0 0.0
      %1539 = vmatpush1.msra.mxu0 0.0
      %1540 = vmatprep.subr.mxu0 0.0
      %1541 = vmatpush1.msra.mxu0 0.0
      %1542 = vmatprep.subr.mxu0 0.0
      %1543 = vmatpush1.msra.mxu0 0.0
      %1544 = vmatprep.subr.mxu0 0.0
      %1545 = vmatpush1.msra.mxu0 0.0
      %1546 = vmatprep.subr.mxu0 0.0
      %1547 = vmatpush1.msra.mxu0 0.0
      %1548 = vmatprep.subr.mxu0 0.0
      %1549 = vmatpush1.msra.mxu0 0.0
      %1550 = vmatprep.subr.mxu0 0.0
      %1551 = vmatpush1.msra.mxu0 0.0
      %1552 = vmatprep.subr.mxu0 0.0
      %1553 = vmatpush1.msra.mxu0 0.0
      %1554 = vmatprep.subr.mxu0 0.0
      %1555 = vmatpush1.msra.mxu0 0.0
      %1556 = vmatprep.subr.mxu0 0.0
      %1557 = vmatpush1.msra.mxu0 0.0
      %1558 = vmatprep.subr.mxu0 0.0
      %1559 = vmatpush1.msra.mxu0 0.0
      %1560 = vmatprep.subr.mxu0 0.0
      %1561 = vmatpush1.msra.mxu0 0.0
      %1562 = vmatprep.subr.mxu0 0.0
      %1563 = vmatpush1.msra.mxu0 0.0
      %1564 = vmatprep.subr.mxu0 0.0
      %1565 = vmatpush1.msra.mxu0 0.0
      %1566 = vmatprep.subr.mxu0 0.0
      %1567 = vmatpush1.msra.mxu0 0.0
      %1568 = vmatprep.subr.mxu0 0.0
      %1569 = vmatpush1.msra.mxu0 0.0
      %1570 = vmatprep.subr.mxu0 0.0
      %1571 = vmatpush1.msra.mxu0 0.0
      %1572 = vmatprep.subr.mxu0 0.0
      %1573 = vmatpush1.msra.mxu0 0.0
      %1574 = vmatprep.subr.mxu0 0.0
      %1575 = vmatpush1.msra.mxu0 0.0
      %1576 = vmatprep.subr.mxu0 0.0
      %1577 = vmatpush1.msra.mxu0 0.0
      %1578 = vmatprep.subr.mxu0 0.0
      %1579 = vmatpush1.msra.mxu0 0.0
      %1580 = vmatprep.subr.mxu0 0.0
      %1581 = vmatpush1.msra.mxu0 0.0
      %1582 = vmatprep.mubr.f32.mxu0 0.0
      %1583 = vmatmul.mubr.f32.gmra.mrb[0].mxu0 %v1516
      %v1584 = vpop.f32.mrb[0].mxu0
      %v1585 = vadd.f32 0.0, %v1584
      %v1586 = vpop.f32.mrb[0].mxu0
      %1587 = vdwg.mxu0
      %v1588 = vadd.f32 %v1437, %v1585
      %1589 = vrot.lane.b32.xlu0 %v763, 40
      %v1590 = vpop.permute.xlu0 %1589
      %v1592 = vsel %vm1130, %v1122, 0
      %v1594 = vsel %vm1134, %v1590, 0
      %1596 = vmatprep.subr.mxu0 0.0
      %1597 = vmatpush1.msra.mxu0 %v1594
      %1598 = vmatprep.subr.mxu0 0.0
      %1599 = vmatpush1.msra.mxu0 0.0
      %1600 = vmatprep.subr.mxu0 0.0
      %1601 = vmatpush1.msra.mxu0 0.0
      %1602 = vmatprep.subr.mxu0 0.0
      %1603 = vmatpush1.msra.mxu0 0.0
      %1604 = vmatprep.subr.mxu0 0.0
      %1605 = vmatpush1.msra.mxu0 0.0
      %1606 = vmatprep.subr.mxu0 0.0
      %1607 = vmatpush1.msra.mxu0 0.0
      %1608 = vmatprep.subr.mxu0 0.0
      %1609 = vmatpush1.msra.mxu0 0.0
      %1610 = vmatprep.subr.mxu0 0.0
      %1611 = vmatpush1.msra.mxu0 0.0
      %1612 = vmatprep.subr.mxu0 0.0
      %1613 = vmatpush1.msra.mxu0 0.0
      %1614 = vmatprep.subr.mxu0 0.0
      %1615 = vmatpush1.msra.mxu0 0.0
      %1616 = vmatprep.subr.mxu0 0.0
      %1617 = vmatpush1.msra.mxu0 0.0
      %1618 = vmatprep.subr.mxu0 0.0
      %1619 = vmatpush1.msra.mxu0 0.0
      %1620 = vmatprep.subr.mxu0 0.0
      %1621 = vmatpush1.msra.mxu0 0.0
      %1622 = vmatprep.subr.mxu0 0.0
      %1623 = vmatpush1.msra.mxu0 0.0
      %1624 = vmatprep.subr.mxu0 0.0
      %1625 = vmatpush1.msra.mxu0 0.0
      %1626 = vmatprep.subr.mxu0 0.0
      %1627 = vmatpush1.msra.mxu0 0.0
      %1628 = vmatprep.subr.mxu0 0.0
      %1629 = vmatpush1.msra.mxu0 0.0
      %1630 = vmatprep.subr.mxu0 0.0
      %1631 = vmatpush1.msra.mxu0 0.0
      %1632 = vmatprep.subr.mxu0 0.0
      %1633 = vmatpush1.msra.mxu0 0.0
      %1634 = vmatprep.subr.mxu0 0.0
      %1635 = vmatpush1.msra.mxu0 0.0
      %1636 = vmatprep.subr.mxu0 0.0
      %1637 = vmatpush1.msra.mxu0 0.0
      %1638 = vmatprep.subr.mxu0 0.0
      %1639 = vmatpush1.msra.mxu0 0.0
      %1640 = vmatprep.subr.mxu0 0.0
      %1641 = vmatpush1.msra.mxu0 0.0
      %1642 = vmatprep.subr.mxu0 0.0
      %1643 = vmatpush1.msra.mxu0 0.0
      %1644 = vmatprep.subr.mxu0 0.0
      %1645 = vmatpush1.msra.mxu0 0.0
      %1646 = vmatprep.subr.mxu0 0.0
      %1647 = vmatpush1.msra.mxu0 0.0
      %1648 = vmatprep.subr.mxu0 0.0
      %1649 = vmatpush1.msra.mxu0 0.0
      %1650 = vmatprep.subr.mxu0 0.0
      %1651 = vmatpush1.msra.mxu0 0.0
      %1652 = vmatprep.subr.mxu0 0.0
      %1653 = vmatpush1.msra.mxu0 0.0
      %1654 = vmatprep.subr.mxu0 0.0
      %1655 = vmatpush1.msra.mxu0 0.0
      %1656 = vmatprep.subr.mxu0 0.0
      %1657 = vmatpush1.msra.mxu0 0.0
      %1658 = vmatprep.subr.mxu0 0.0
      %1659 = vmatpush1.msra.mxu0 0.0
      %1660 = vmatprep.mubr.f32.mxu0 0.0
      %1661 = vmatmul.mubr.f32.gmra.mrb[0].mxu0 %v1592
      %v1662 = vpop.f32.mrb[0].mxu0
      %v1663 = vadd.f32 0.0, %v1662
      %v1664 = vpop.f32.mrb[0].mxu0
      %1665 = vdwg.mxu0
      %v1667 = vsel %vm769, %v1663, 0
      %1669 = vmatprep.subr.mxu0 0.0
      %1670 = vmatpush1.msra.mxu0 %v1126
      %1671 = vmatprep.subr.mxu0 0.0
      %1672 = vmatpush1.msra.mxu0 0.0
      %1673 = vmatprep.subr.mxu0 0.0
      %1674 = vmatpush1.msra.mxu0 0.0
      %1675 = vmatprep.subr.mxu0 0.0
      %1676 = vmatpush1.msra.mxu0 0.0
      %1677 = vmatprep.subr.mxu0 0.0
      %1678 = vmatpush1.msra.mxu0 0.0
      %1679 = vmatprep.subr.mxu0 0.0
      %1680 = vmatpush1.msra.mxu0 0.0
      %1681 = vmatprep.subr.mxu0 0.0
      %1682 = vmatpush1.msra.mxu0 0.0
      %1683 = vmatprep.subr.mxu0 0.0
      %1684 = vmatpush1.msra.mxu0 0.0
      %1685 = vmatprep.subr.mxu0 0.0
      %1686 = vmatpush1.msra.mxu0 0.0
      %1687 = vmatprep.subr.mxu0 0.0
      %1688 = vmatpush1.msra.mxu0 0.0
      %1689 = vmatprep.subr.mxu0 0.0
      %1690 = vmatpush1.msra.mxu0 0.0
      %1691 = vmatprep.subr.mxu0 0.0
      %1692 = vmatpush1.msra.mxu0 0.0
      %1693 = vmatprep.subr.mxu0 0.0
      %1694 = vmatpush1.msra.mxu0 0.0
      %1695 = vmatprep.subr.mxu0 0.0
      %1696 = vmatpush1.msra.mxu0 0.0
      %1697 = vmatprep.subr.mxu0 0.0
      %1698 = vmatpush1.msra.mxu0 0.0
      %1699 = vmatprep.subr.mxu0 0.0
      %1700 = vmatpush1.msra.mxu0 0.0
      %1701 = vmatprep.subr.mxu0 0.0
      %1702 = vmatpush1.msra.mxu0 0.0
      %1703 = vmatprep.subr.mxu0 0.0
      %1704 = vmatpush1.msra.mxu0 0.0
      %1705 = vmatprep.subr.mxu0 0.0
      %1706 = vmatpush1.msra.mxu0 0.0
      %1707 = vmatprep.subr.mxu0 0.0
      %1708 = vmatpush1.msra.mxu0 0.0
      %1709 = vmatprep.subr.mxu0 0.0
      %1710 = vmatpush1.msra.mxu0 0.0
      %1711 = vmatprep.subr.mxu0 0.0
      %1712 = vmatpush1.msra.mxu0 0.0
      %1713 = vmatprep.subr.mxu0 0.0
      %1714 = vmatpush1.msra.mxu0 0.0
      %1715 = vmatprep.subr.mxu0 0.0
      %1716 = vmatpush1.msra.mxu0 0.0
      %1717 = vmatprep.subr.mxu0 0.0
      %1718 = vmatpush1.msra.mxu0 0.0
      %1719 = vmatprep.subr.mxu0 0.0
      %1720 = vmatpush1.msra.mxu0 0.0
      %1721 = vmatprep.subr.mxu0 0.0
      %1722 = vmatpush1.msra.mxu0 0.0
      %1723 = vmatprep.subr.mxu0 0.0
      %1724 = vmatpush1.msra.mxu0 0.0
      %1725 = vmatprep.subr.mxu0 0.0
      %1726 = vmatpush1.msra.mxu0 0.0
      %1727 = vmatprep.subr.mxu0 0.0
      %1728 = vmatpush1.msra.mxu0 0.0
      %1729 = vmatprep.subr.mxu0 0.0
      %1730 = vmatpush1.msra.mxu0 0.0
      %1731 = vmatprep.subr.mxu0 0.0
      %1732 = vmatpush1.msra.mxu0 0.0
      %1733 = vmatprep.mubr.f32.mxu0 0.0
      %1734 = vmatmul.mubr.f32.gmra.mrb[0].mxu0 %v1667
      %v1735 = vpop.f32.mrb[0].mxu0
      %v1736 = vadd.f32 0.0, %v1735
      %v1737 = vpop.f32.mrb[0].mxu0
      %1738 = vdwg.mxu0
      %v1739 = vadd.f32 %v1588, %v1736
      %v1740 = vadd.f32 %v645, %v1739
      %v1741 = vld [vmem:[%s9] sm:$0x1]
      %v1742 = vld [vmem:[%s10] sm:$0x1]
      %v1743 = vsel %vm650, %v1740, 0.0
      %1744 = vadd.xlane.f32.xlu0 %v1743
      %v1745 = vpop.xlane.xlu0 %1744
      %v1746 = vmul.f32 %v1745, %v654
      %v1747 = vmul.f32 %v1740, %v1740
      %v1748 = vsel %vm650, %v1747, 0.0
      %1749 = vadd.xlane.f32.xlu0 %v1748
      %v1750 = vpop.xlane.xlu0 %1749
      %v1751 = vmul.f32 %v1750, %v654
      %v1752 = vmul.f32 %v1746, %v1746
      %v1753 = vsub.f32 %v1751, %v1752
      %v1754 = vsub.f32 %v1740, %v1746
      %v1755 = vadd.f32 %v1753, 1e-06
      %v1756 = vrsqrt.pop %v1755
      %v1757 = vmul.f32 %v1754, %v1756
      %v1759 = vlaneseq
      %v1760 = vshrl.u32 %v1759, 7
      %v1761 = vsub.s32 0, %v1760
      %v1762 = vrot.slane %v1741, %v1761
      %v1764 = vmul.f32 %v1757, %v1762
      %v1766 = vlaneseq
      %v1767 = vshrl.u32 %v1766, 7
      %v1768 = vsub.s32 0, %v1767
      %v1769 = vrot.slane %v1742, %v1768
      %v1771 = vadd.f32 %v1764, %v1769
      %v1772 = vld [vmem:[%s11] sm:$0xff]
      %v1773 = vld [vmem:[%s11 + $0x8] sm:$0xff]
      %v1774 = vld [vmem:[%s11 + $0x10] sm:$0xff]
      %v1775 = vld [vmem:[%s11 + $0x18] sm:$0xff]
      %v1776 = vld [vmem:[%s12] sm:$0x1]
      %v1778 = vlaneseq
      %v1779 = vshrl.u32 %v1778, 7
      %v1780 = vsub.s32 0, %v1779
      %v1781 = vrot.slane %v1776, %v1780
      %v1784 = vsel %vm692, %v1771, 0
      %1786 = vmatprep.subr.mxu0 0.0
      %1787 = vmatpush1.msra.mxu0 %v1772
      %1788 = vmatprep.subr.mxu0 0.0
      %1789 = vmatpush1.msra.mxu0 %v1773
      %1790 = vmatprep.subr.mxu0 0.0
      %1791 = vmatpush1.msra.mxu0 %v1774
      %1792 = vmatprep.subr.mxu0 0.0
      %1793 = vmatpush1.msra.mxu0 %v1775
      %1794 = vmatprep.subr.mxu0 0.0
      %1795 = vmatpush1.msra.mxu0 0.0
      %1796 = vmatprep.subr.mxu0 0.0
      %1797 = vmatpush1.msra.mxu0 0.0
      %1798 = vmatprep.subr.mxu0 0.0
      %1799 = vmatpush1.msra.mxu0 0.0
      %1800 = vmatprep.subr.mxu0 0.0
      %1801 = vmatpush1.msra.mxu0 0.0
      %1802 = vmatprep.subr.mxu0 0.0
      %1803 = vmatpush1.msra.mxu0 0.0
      %1804 = vmatprep.subr.mxu0 0.0
      %1805 = vmatpush1.msra.mxu0 0.0
      %1806 = vmatprep.subr.mxu0 0.0
      %1807 = vmatpush1.msra.mxu0 0.0
      %1808 = vmatprep.subr.mxu0 0.0
      %1809 = vmatpush1.msra.mxu0 0.0
      %1810 = vmatprep.subr.mxu0 0.0
      %1811 = vmatpush1.msra.mxu0 0.0
      %1812 = vmatprep.subr.mxu0 0.0
      %1813 = vmatpush1.msra.mxu0 0.0
      %1814 = vmatprep.subr.mxu0 0.0
      %1815 = vmatpush1.msra.mxu0 0.0
      %1816 = vmatprep.subr.mxu0 0.0
      %1817 = vmatpush1.msra.mxu0 0.0
      %1818 = vmatprep.subr.mxu0 0.0
      %1819 = vmatpush1.msra.mxu0 0.0
      %1820 = vmatprep.subr.mxu0 0.0
      %1821 = vmatpush1.msra.mxu0 0.0
      %1822 = vmatprep.subr.mxu0 0.0
      %1823 = vmatpush1.msra.mxu0 0.0
      %1824 = vmatprep.subr.mxu0 0.0
      %1825 = vmatpush1.msra.mxu0 0.0
      %1826 = vmatprep.subr.mxu0 0.0
      %1827 = vmatpush1.msra.mxu0 0.0
      %1828 = vmatprep.subr.mxu0 0.0
      %1829 = vmatpush1.msra.mxu0 0.0
      %1830 = vmatprep.subr.mxu0 0.0
      %1831 = vmatpush1.msra.mxu0 0.0
      %1832 = vmatprep.subr.mxu0 0.0
      %1833 = vmatpush1.msra.mxu0 0.0
      %1834 = vmatprep.subr.mxu0 0.0
      %1835 = vmatpush1.msra.mxu0 0.0
      %1836 = vmatprep.subr.mxu0 0.0
      %1837 = vmatpush1.msra.mxu0 0.0
      %1838 = vmatprep.subr.mxu0 0.0
      %1839 = vmatpush1.msra.mxu0 0.0
      %1840 = vmatprep.subr.mxu0 0.0
      %1841 = vmatpush1.msra.mxu0 0.0
      %1842 = vmatprep.subr.mxu0 0.0
      %1843 = vmatpush1.msra.mxu0 0.0
      %1844 = vmatprep.subr.mxu0 0.0
      %1845 = vmatpush1.msra.mxu0 0.0
      %1846 = vmatprep.subr.mxu0 0.0
      %1847 = vmatpush1.msra.mxu0 0.0
      %1848 = vmatprep.subr.mxu0 0.0
      %1849 = vmatpush1.msra.mxu0 0.0
      %1850 = vmatprep.mubr.f32.mxu0 0.0
      %1851 = vmatmul.mubr.f32.gmra.mrb[0].mxu0 %v1784
      %v1852 = vpop.f32.mrb[0].mxu0
      %v1853 = vadd.f32 %v1781, %v1852
      %v1854 = vpop.f32.mrb[0].mxu0
      %1855 = vdwg.mxu0
      %v1856 = vmul.f32 %v1853, 0.5
      %v1857 = vmul.f32 %v1853, 0.70710677
      %vm1858 = vcmp.ge.f32.partialorder %v1857, 0.0
      %v1859 = vsel %vm1858, 1.0, -1.0
      %v1860 = vand.u32 2147483647, %v1857
      %v1861 = vmul.f32 %v1860, 0.3275911
      %v1862 = vadd.f32 %v1861, 1.0
      %v1863 = vrcp.pop %v1862
      %v1864 = vmul.f32 %v1863, 1.0614054
      %v1865 = vadd.f32 %v1864, -1.4531521
      %v1866 = vmul.f32 %v1863, %v1865
      %v1867 = vadd.f32 %v1866, 1.4214138
      %v1868 = vmul.f32 %v1863, %v1867
      %v1869 = vadd.f32 %v1868, -0.28449672
      %v1870 = vmul.f32 %v1863, %v1869
      %v1871 = vadd.f32 %v1870, 0.2548296
      %v1872 = vmul.f32 %v1863, %v1871
      %v1873 = vsub.f32 0.0, %v1860
      %v1874 = vmul.f32 %v1873, %v1860
      %v1875 = vmul.f32 %v1874, 1.442695
      %v1876 = vpow.pop %v1875
      %v1877 = vmul.f32 %v1872, %v1876
      %v1878 = vsub.f32 1.0, %v1877
      %v1879 = vmul.f32 %v1859, %v1878
      %v1880 = vadd.f32 %v1879, 1.0
      %v1881 = vmul.f32 %v1856, %v1880
      %v1882 = vld [vmem:[%s13] sm:$0xff]
      %v1883 = vld [vmem:[%s13 + $0x8] sm:$0xff]
      %v1884 = vld [vmem:[%s13 + $0x10] sm:$0xff]
      %v1885 = vld [vmem:[%s13 + $0x18] sm:$0xff]
      %v1886 = vld [vmem:[%s13 + $0x20] sm:$0xff]
      %v1887 = vld [vmem:[%s13 + $0x28] sm:$0xff]
      %v1888 = vld [vmem:[%s13 + $0x30] sm:$0xff]
      %v1889 = vld [vmem:[%s13 + $0x38] sm:$0xff]
      %v1890 = vld [vmem:[%s13 + $0x40] sm:$0xff]
      %v1891 = vld [vmem:[%s13 + $0x48] sm:$0xff]
      %v1892 = vld [vmem:[%s13 + $0x50] sm:$0xff]
      %v1893 = vld [vmem:[%s13 + $0x58] sm:$0xff]
      %v1894 = vld [vmem:[%s13 + $0x60] sm:$0xff]
      %v1895 = vld [vmem:[%s13 + $0x68] sm:$0xff]
      %v1896 = vld [vmem:[%s13 + $0x70] sm:$0xff]
      %v1897 = vld [vmem:[%s13 + $0x78] sm:$0xff]
      %1898 = vmatprep.subr.mxu0 0.0
      %1899 = vmatpush1.msra.mxu0 %v1882
      %1900 = vmatprep.subr.mxu0 0.0
      %1901 = vmatpush1.msra.mxu0 %v1883
      %1902 = vmatprep.subr.mxu0 0.0
      %1903 = vmatpush1.msra.mxu0 %v1884
      %1904 = vmatprep.subr.mxu0 0.0
      %1905 = vmatpush1.msra.mxu0 %v1885
      %1906 = vmatprep.subr.mxu0 0.0
      %1907 = vmatpush1.msra.mxu0 %v1886
      %1908 = vmatprep.subr.mxu0 0.0
      %1909 = vmatpush1.msra.mxu0 %v1887
      %1910 = vmatprep.subr.mxu0 0.0
      %1911 = vmatpush1.msra.mxu0 %v1888
      %1912 = vmatprep.subr.mxu0 0.0
      %1913 = vmatpush1.msra.mxu0 %v1889
      %1914 = vmatprep.subr.mxu0 0.0
      %1915 = vmatpush1.msra.mxu0 %v1890
      %1916 = vmatprep.subr.mxu0 0.0
      %1917 = vmatpush1.msra.mxu0 %v1891
      %1918 = vmatprep.subr.mxu0 0.0
      %1919 = vmatpush1.msra.mxu0 %v1892
      %1920 = vmatprep.subr.mxu0 0.0
      %1921 = vmatpush1.msra.mxu0 %v1893
      %1922 = vmatprep.subr.mxu0 0.0
      %1923 = vmatpush1.msra.mxu0 %v1894
      %1924 = vmatprep.subr.mxu0 0.0
      %1925 = vmatpush1.msra.mxu0 %v1895
      %1926 = vmatprep.subr.mxu0 0.0
      %1927 = vmatpush1.msra.mxu0 %v1896
      %1928 = vmatprep.subr.mxu0 0.0
      %1929 = vmatpush1.msra.mxu0 %v1897
      %1930 = vmatprep.subr.mxu0 0.0
      %1931 = vmatpush1.msra.mxu0 0.0
      %1932 = vmatprep.subr.mxu0 0.0
      %1933 = vmatpush1.msra.mxu0 0.0
      %1934 = vmatprep.subr.mxu0 0.0
      %1935 = vmatpush1.msra.mxu0 0.0
      %1936 = vmatprep.subr.mxu0 0.0
      %1937 = vmatpush1.msra.mxu0 0.0
      %1938 = vmatprep.subr.mxu0 0.0
      %1939 = vmatpush1.msra.mxu0 0.0
      %1940 = vmatprep.subr.mxu0 0.0
      %1941 = vmatpush1.msra.mxu0 0.0
      %1942 = vmatprep.subr.mxu0 0.0
      %1943 = vmatpush1.msra.mxu0 0.0
      %1944 = vmatprep.subr.mxu0 0.0
      %1945 = vmatpush1.msra.mxu0 0.0
      %1946 = vmatprep.subr.mxu0 0.0
      %1947 = vmatpush1.msra.mxu0 0.0
      %1948 = vmatprep.subr.mxu0 0.0
      %1949 = vmatpush1.msra.mxu0 0.0
      %1950 = vmatprep.subr.mxu0 0.0
      %1951 = vmatpush1.msra.mxu0 0.0
      %1952 = vmatprep.subr.mxu0 0.0
      %1953 = vmatpush1.msra.mxu0 0.0
      %1954 = vmatprep.subr.mxu0 0.0
      %1955 = vmatpush1.msra.mxu0 0.0
      %1956 = vmatprep.subr.mxu0 0.0
      %1957 = vmatpush1.msra.mxu0 0.0
      %1958 = vmatprep.subr.mxu0 0.0
      %1959 = vmatpush1.msra.mxu0 0.0
      %1960 = vmatprep.subr.mxu0 0.0
      %1961 = vmatpush1.msra.mxu0 0.0
      %1962 = vmatprep.mubr.f32.mxu0 0.0
      %1963 = vmatmul.mubr.f32.gmra.mrb[0].mxu0 %v1881
      %v1964 = vpop.f32.mrb[0].mxu0
      %v1965 = vadd.f32 0.0, %v1964
      %v1966 = vpop.f32.mrb[0].mxu0
      %1967 = vdwg.mxu0
      %v1968 = vadd.f32 %v1740, %v1965
      %v1969 = vld [vmem:[%s14] sm:$0x1]
      %v1971 = vlaneseq
      %v1972 = vshrl.u32 %v1971, 7
      %v1973 = vsub.s32 0, %v1972
      %v1974 = vrot.slane %v1969, %v1973
      %v1976 = vadd.f32 %v1968, %v1974
      %s1977 = scalar_lea.vmem %s3, 1
      %v1978 = vld [vmem:[%s1977] sm:$0x1]
      %s1979 = scalar_lea.vmem %s4, 1
      %v1980 = vld [vmem:[%s1979] sm:$0x1]
      %v1981 = vsel %vm650, %v1976, 0.0
      %1982 = vadd.xlane.f32.xlu0 %v1981
      %v1983 = vpop.xlane.xlu0 %1982
      %v1984 = vmul.f32 %v1983, %v654
      %v1985 = vmul.f32 %v1976, %v1976
      %v1986 = vsel %vm650, %v1985, 0.0
      %1987 = vadd.xlane.f32.xlu0 %v1986
      %v1988 = vpop.xlane.xlu0 %1987
      %v1989 = vmul.f32 %v1988, %v654
      %v1990 = vmul.f32 %v1984, %v1984
      %v1991 = vsub.f32 %v1989, %v1990
      %v1992 = vsub.f32 %v1976, %v1984
      %v1993 = vadd.f32 %v1991, 1e-06
      %v1994 = vrsqrt.pop %v1993
      %v1995 = vmul.f32 %v1992, %v1994
      %v1997 = vlaneseq
      %v1998 = vshrl.u32 %v1997, 7
      %v1999 = vsub.s32 0, %v1998
      %v2000 = vrot.slane %v1978, %v1999
      %v2002 = vmul.f32 %v1995, %v2000
      %v2004 = vlaneseq
      %v2005 = vshrl.u32 %v2004, 7
      %v2006 = vsub.s32 0, %v2005
      %v2007 = vrot.slane %v1980, %v2006
      %v2009 = vadd.f32 %v2002, %v2007
      %s2010 = scalar_lea.vmem %s5, 32
      %v2011 = vld [vmem:[%s2010] sm:$0xff]
      %v2012 = vld [vmem:[%s2010 + $0x8] sm:$0xff]
      %v2013 = vld [vmem:[%s2010 + $0x10] sm:$0xff]
      %v2014 = vld [vmem:[%s2010 + $0x18] sm:$0xff]
      %s2015 = scalar_lea.vmem %s6, 1
      %v2016 = vld [vmem:[%s2015] sm:$0x1]
      %v2018 = vlaneseq
      %v2019 = vshrl.u32 %v2018, 7
      %v2020 = vsub.s32 0, %v2019
      %v2021 = vrot.slane %v2016, %v2020
      %v2024 = vsel %vm692, %v2009, 0
      %2026 = vmatprep.subr.mxu0 0.0
      %2027 = vmatpush1.msra.mxu0 %v2011
      %2028 = vmatprep.subr.mxu0 0.0
      %2029 = vmatpush1.msra.mxu0 %v2012
      %2030 = vmatprep.subr.mxu0 0.0
      %2031 = vmatpush1.msra.mxu0 %v2013
      %2032 = vmatprep.subr.mxu0 0.0
      %2033 = vmatpush1.msra.mxu0 %v2014
      %2034 = vmatprep.subr.mxu0 0.0
      %2035 = vmatpush1.msra.mxu0 0.0
      %2036 = vmatprep.subr.mxu0 0.0
      %2037 = vmatpush1.msra.mxu0 0.0
      %2038 = vmatprep.subr.mxu0 0.0
      %2039 = vmatpush1.msra.mxu0 0.0
      %2040 = vmatprep.subr.mxu0 0.0
      %2041 = vmatpush1.msra.mxu0 0.0
      %2042 = vmatprep.subr.mxu0 0.0
      %2043 = vmatpush1.msra.mxu0 0.0
      %2044 = vmatprep.subr.mxu0 0.0
      %2045 = vmatpush1.msra.mxu0 0.0
      %2046 = vmatprep.subr.mxu0 0.0
      %2047 = vmatpush1.msra.mxu0 0.0
      %2048 = vmatprep.subr.mxu0 0.0
      %2049 = vmatpush1.msra.mxu0 0.0
      %2050 = vmatprep.subr.mxu0 0.0
      %2051 = vmatpush1.msra.mxu0 0.0
      %2052 = vmatprep.subr.mxu0 0.0
      %2053 = vmatpush1.msra.mxu0 0.0
      %2054 = vmatprep.subr.mxu0 0.0
      %2055 = vmatpush1.msra.mxu0 0.0
      %2056 = vmatprep.subr.mxu0 0.0
      %2057 = vmatpush1.msra.mxu0 0.0
      %2058 = vmatprep.subr.mxu0 0.0
      %2059 = vmatpush1.msra.mxu0 0.0
      %2060 = vmatprep.subr.mxu0 0.0
      %2061 = vmatpush1.msra.mxu0 0.0
      %2062 = vmatprep.subr.mxu0 0.0
      %2063 = vmatpush1.msra.mxu0 0.0
      %2064 = vmatprep.subr.mxu0 0.0
      %2065 = vmatpush1.msra.mxu0 0.0
      %2066 = vmatprep.subr.mxu0 0.0
      %2067 = vmatpush1.msra.mxu0 0.0
      %2068 = vmatprep.subr.mxu0 0.0
      %2069 = vmatpush1.msra.mxu0 0.0
      %2070 = vmatprep.subr.mxu0 0.0
      %2071 = vmatpush1.msra.mxu0 0.0
      %2072 = vmatprep.subr.mxu0 0.0
      %2073 = vmatpush1.msra.mxu0 0.0
      %2074 = vmatprep.subr.mxu0 0.0
      %2075 = vmatpush1.msra.mxu0 0.0
      %2076 = vmatprep.subr.mxu0 0.0
      %2077 = vmatpush1.msra.mxu0 0.0
      %2078 = vmatprep.subr.mxu0 0.0
      %2079 = vmatpush1.msra.mxu0 0.0
      %2080 = vmatprep.subr.mxu0 0.0
      %2081 = vmatpush1.msra.mxu0 0.0
      %2082 = vmatprep.subr.mxu0 0.0
      %2083 = vmatpush1.msra.mxu0 0.0
      %2084 = vmatprep.subr.mxu0 0.0
      %2085 = vmatpush1.msra.mxu0 0.0
      %2086 = vmatprep.subr.mxu0 0.0
      %2087 = vmatpush1.msra.mxu0 0.0
      %2088 = vmatprep.subr.mxu0 0.0
      %2089 = vmatpush1.msra.mxu0 0.0
      %2090 = vmatprep.mubr.f32.mxu0 0.0
      %2091 = vmatmul.mubr.f32.gmra.mrb[0].mxu0 %v2024
      %v2092 = vpop.f32.mrb[0].mxu0
      %v2093 = vadd.f32 %v2021, %v2092
      %v2094 = vpop.f32.mrb[0].mxu0
      %2095 = vdwg.mxu0
      %2097 = vrot.lane.b32.xlu0 %v2093, 96
      %v2098 = vpop.permute.xlu0 %2097
      %v2099 = vsel %vm769, %v2093, 0
      %v2101 = vsel %vm769, %v2098, 0
      %2103 = vmatprep.subr.mxu0 0.0
      %2104 = vmatpush1.xpose.msra.mxu0 %v2101
      %2105 = vmatprep.subr.mxu0 0.0
      %2106 = vmatpush1.xpose.msra.mxu0 0.0
      %2107 = vmatprep.subr.mxu0 0.0
      %2108 = vmatpush1.xpose.msra.mxu0 0.0
      %2109 = vmatprep.subr.mxu0 0.0
      %2110 = vmatpush1.xpose.msra.mxu0 0.0
      %2111 = vmatprep.subr.mxu0 0.0
      %2112 = vmatpush1.xpose.msra.mxu0 0.0
      %2113 = vmatprep.subr.mxu0 0.0
      %2114 = vmatpush1.xpose.msra.mxu0 0.0
      %2115 = vmatprep.subr.mxu0 0.0
      %2116 = vmatpush1.xpose.msra.mxu0 0.0
      %2117 = vmatprep.subr.mxu0 0.0
      %2118 = vmatpush1.xpose.msra.mxu0 0.0
      %2119 = vmatprep.subr.mxu0 0.0
      %2120 = vmatpush1.xpose.msra.mxu0 0.0
      %2121 = vmatprep.subr.mxu0 0.0
      %2122 = vmatpush1.xpose.msra.mxu0 0.0
      %2123 = vmatprep.subr.mxu0 0.0
      %2124 = vmatpush1.xpose.msra.mxu0 0.0
      %2125 = vmatprep.subr.mxu0 0.0
      %2126 = vmatpush1.xpose.msra.mxu0 0.0
      %2127 = vmatprep.subr.mxu0 0.0
      %2128 = vmatpush1.xpose.msra.mxu0 0.0
      %2129 = vmatprep.subr.mxu0 0.0
      %2130 = vmatpush1.xpose.msra.mxu0 0.0
      %2131 = vmatprep.subr.mxu0 0.0
      %2132 = vmatpush1.xpose.msra.mxu0 0.0
      %2133 = vmatprep.subr.mxu0 0.0
      %2134 = vmatpush1.xpose.msra.mxu0 0.0
      %2135 = vmatprep.subr.mxu0 0.0
      %2136 = vmatpush1.xpose.msra.mxu0 0.0
      %2137 = vmatprep.subr.mxu0 0.0
      %2138 = vmatpush1.xpose.msra.mxu0 0.0
      %2139 = vmatprep.subr.mxu0 0.0
      %2140 = vmatpush1.xpose.msra.mxu0 0.0
      %2141 = vmatprep.subr.mxu0 0.0
      %2142 = vmatpush1.xpose.msra.mxu0 0.0
      %2143 = vmatprep.subr.mxu0 0.0
      %2144 = vmatpush1.xpose.msra.mxu0 0.0
      %2145 = vmatprep.subr.mxu0 0.0
      %2146 = vmatpush1.xpose.msra.mxu0 0.0
      %2147 = vmatprep.subr.mxu0 0.0
      %2148 = vmatpush1.xpose.msra.mxu0 0.0
      %2149 = vmatprep.subr.mxu0 0.0
      %2150 = vmatpush1.xpose.msra.mxu0 0.0
      %2151 = vmatprep.subr.mxu0 0.0
      %2152 = vmatpush1.xpose.msra.mxu0 0.0
      %2153 = vmatprep.subr.mxu0 0.0
      %2154 = vmatpush1.xpose.msra.mxu0 0.0
      %2155 = vmatprep.subr.mxu0 0.0
      %2156 = vmatpush1.xpose.msra.mxu0 0.0
      %2157 = vmatprep.subr.mxu0 0.0
      %2158 = vmatpush1.xpose.msra.mxu0 0.0
      %2159 = vmatprep.subr.mxu0 0.0
      %2160 = vmatpush1.xpose.msra.mxu0 0.0
      %2161 = vmatprep.subr.mxu0 0.0
      %2162 = vmatpush1.xpose.msra.mxu0 0.0
      %2163 = vmatprep.subr.mxu0 0.0
      %2164 = vmatpush1.xpose.msra.mxu0 0.0
      %2165 = vmatprep.subr.mxu0 0.0
      %2166 = vmatpush1.xpose.msra.mxu0 0.0
      %2167 = vmatprep.mubr.f32.mxu0 0.0
      %2168 = vmatmul.mubr.f32.gmra.mrb[0].mxu0 %v2099
      %v2169 = vpop.f32.mrb[0].mxu0
      %v2170 = vadd.f32 0.0, %v2169
      %v2171 = vpop.f32.mrb[0].mxu0
      %2172 = vdwg.mxu0
      %2173 = vrot.lane.b32.xlu0 %v2093, 120
      %v2174 = vpop.permute.xlu0 %2173
      %2175 = vrot.lane.b32.xlu0 %v2093, 88
      %v2176 = vpop.permute.xlu0 %2175
      %v2177 = vsel %vm769, %v2174, 0
      %v2179 = vsel %vm769, %v2176, 0
      %2181 = vmatprep.subr.mxu0 0.0
      %2182 = vmatpush1.xpose.msra.mxu0 %v2179
      %2183 = vmatprep.subr.mxu0 0.0
      %2184 = vmatpush1.xpose.msra.mxu0 0.0
      %2185 = vmatprep.subr.mxu0 0.0
      %2186 = vmatpush1.xpose.msra.mxu0 0.0
      %2187 = vmatprep.subr.mxu0 0.0
      %2188 = vmatpush1.xpose.msra.mxu0 0.0
      %2189 = vmatprep.subr.mxu0 0.0
      %2190 = vmatpush1.xpose.msra.mxu0 0.0
      %2191 = vmatprep.subr.mxu0 0.0
      %2192 = vmatpush1.xpose.msra.mxu0 0.0
      %2193 = vmatprep.subr.mxu0 0.0
      %2194 = vmatpush1.xpose.msra.mxu0 0.0
      %2195 = vmatprep.subr.mxu0 0.0
      %2196 = vmatpush1.xpose.msra.mxu0 0.0
      %2197 = vmatprep.subr.mxu0 0.0
      %2198 = vmatpush1.xpose.msra.mxu0 0.0
      %2199 = vmatprep.subr.mxu0 0.0
      %2200 = vmatpush1.xpose.msra.mxu0 0.0
      %2201 = vmatprep.subr.mxu0 0.0
      %2202 = vmatpush1.xpose.msra.mxu0 0.0
      %2203 = vmatprep.subr.mxu0 0.0
      %2204 = vmatpush1.xpose.msra.mxu0 0.0
      %2205 = vmatprep.subr.mxu0 0.0
      %2206 = vmatpush1.xpose.msra.mxu0 0.0
      %2207 = vmatprep.subr.mxu0 0.0
      %2208 = vmatpush1.xpose.msra.mxu0 0.0
      %2209 = vmatprep.subr.mxu0 0.0
      %2210 = vmatpush1.xpose.msra.mxu0 0.0
      %2211 = vmatprep.subr.mxu0 0.0
      %2212 = vmatpush1.xpose.msra.mxu0 0.0
      %2213 = vmatprep.subr.mxu0 0.0
      %2214 = vmatpush1.xpose.msra.mxu0 0.0
      %2215 = vmatprep.subr.mxu0 0.0
      %2216 = vmatpush1.xpose.msra.mxu0 0.0
      %2217 = vmatprep.subr.mxu0 0.0
      %2218 = vmatpush1.xpose.msra.mxu0 0.0
      %2219 = vmatprep.subr.mxu0 0.0
      %2220 = vmatpush1.xpose.msra.mxu0 0.0
      %2221 = vmatprep.subr.mxu0 0.0
      %2222 = vmatpush1.xpose.msra.mxu0 0.0
      %2223 = vmatprep.subr.mxu0 0.0
      %2224 = vmatpush1.xpose.msra.mxu0 0.0
      %2225 = vmatprep.subr.mxu0 0.0
      %2226 = vmatpush1.xpose.msra.mxu0 0.0
      %2227 = vmatprep.subr.mxu0 0.0
      %2228 = vmatpush1.xpose.msra.mxu0 0.0
      %2229 = vmatprep.subr.mxu0 0.0
      %2230 = vmatpush1.xpose.msra.mxu0 0.0
      %2231 = vmatprep.subr.mxu0 0.0
      %2232 = vmatpush1.xpose.msra.mxu0 0.0
      %2233 = vmatprep.subr.mxu0 0.0
      %2234 = vmatpush1.xpose.msra.mxu0 0.0
      %2235 = vmatprep.subr.mxu0 0.0
      %2236 = vmatpush1.xpose.msra.mxu0 0.0
      %2237 = vmatprep.subr.mxu0 0.0
      %2238 = vmatpush1.xpose.msra.mxu0 0.0
      %2239 = vmatprep.subr.mxu0 0.0
      %2240 = vmatpush1.xpose.msra.mxu0 0.0
      %2241 = vmatprep.subr.mxu0 0.0
      %2242 = vmatpush1.xpose.msra.mxu0 0.0
      %2243 = vmatprep.subr.mxu0 0.0
      %2244 = vmatpush1.xpose.msra.mxu0 0.0
      %2245 = vmatprep.mubr.f32.mxu0 0.0
      %2246 = vmatmul.mubr.f32.gmra.mrb[0].mxu0 %v2177
      %v2247 = vpop.f32.mrb[0].mxu0
      %v2248 = vadd.f32 0.0, %v2247
      %v2249 = vpop.f32.mrb[0].mxu0
      %2250 = vdwg.mxu0
      %2251 = vrot.lane.b32.xlu0 %v2093, 112
      %v2252 = vpop.permute.xlu0 %2251
      %2253 = vrot.lane.b32.xlu0 %v2093, 80
      %v2254 = vpop.permute.xlu0 %2253
      %v2255 = vsel %vm769, %v2252, 0
      %v2257 = vsel %vm769, %v2254, 0
      %2259 = vmatprep.subr.mxu0 0.0
      %2260 = vmatpush1.xpose.msra.mxu0 %v2257
      %2261 = vmatprep.subr.mxu0 0.0
      %2262 = vmatpush1.xpose.msra.mxu0 0.0
      %2263 = vmatprep.subr.mxu0 0.0
      %2264 = vmatpush1.xpose.msra.mxu0 0.0
      %2265 = vmatprep.subr.mxu0 0.0
      %2266 = vmatpush1.xpose.msra.mxu0 0.0
      %2267 = vmatprep.subr.mxu0 0.0
      %2268 = vmatpush1.xpose.msra.mxu0 0.0
      %2269 = vmatprep.subr.mxu0 0.0
      %2270 = vmatpush1.xpose.msra.mxu0 0.0
      %2271 = vmatprep.subr.mxu0 0.0
      %2272 = vmatpush1.xpose.msra.mxu0 0.0
      %2273 = vmatprep.subr.mxu0 0.0
      %2274 = vmatpush1.xpose.msra.mxu0 0.0
      %2275 = vmatprep.subr.mxu0 0.0
      %2276 = vmatpush1.xpose.msra.mxu0 0.0
      %2277 = vmatprep.subr.mxu0 0.0
      %2278 = vmatpush1.xpose.msra.mxu0 0.0
      %2279 = vmatprep.subr.mxu0 0.0
      %2280 = vmatpush1.xpose.msra.mxu0 0.0
      %2281 = vmatprep.subr.mxu0 0.0
      %2282 = vmatpush1.xpose.msra.mxu0 0.0
      %2283 = vmatprep.subr.mxu0 0.0
      %2284 = vmatpush1.xpose.msra.mxu0 0.0
      %2285 = vmatprep.subr.mxu0 0.0
      %2286 = vmatpush1.xpose.msra.mxu0 0.0
      %2287 = vmatprep.subr.mxu0 0.0
      %2288 = vmatpush1.xpose.msra.mxu0 0.0
      %2289 = vmatprep.subr.mxu0 0.0
      %2290 = vmatpush1.xpose.msra.mxu0 0.0
      %2291 = vmatprep.subr.mxu0 0.0
      %2292 = vmatpush1.xpose.msra.mxu0 0.0
      %2293 = vmatprep.subr.mxu0 0.0
      %2294 = vmatpush1.xpose.msra.mxu0 0.0
      %2295 = vmatprep.subr.mxu0 0.0
      %2296 = vmatpush1.xpose.msra.mxu0 0.0
      %2297 = vmatprep.subr.mxu0 0.0
      %2298 = vmatpush1.xpose.msra.mxu0 0.0
      %2299 = vmatprep.subr.mxu0 0.0
      %2300 = vmatpush1.xpose.msra.mxu0 0.0
      %2301 = vmatprep.subr.mxu0 0.0
      %2302 = vmatpush1.xpose.msra.mxu0 0.0
      %2303 = vmatprep.subr.mxu0 0.0
      %2304 = vmatpush1.xpose.msra.mxu0 0.0
      %2305 = vmatprep.subr.mxu0 0.0
      %2306 = vmatpush1.xpose.msra.mxu0 0.0
      %2307 = vmatprep.subr.mxu0 0.0
      %2308 = vmatpush1.xpose.msra.mxu0 0.0
      %2309 = vmatprep.subr.mxu0 0.0
      %2310 = vmatpush1.xpose.msra.mxu0 0.0
      %2311 = vmatprep.subr.mxu0 0.0
      %2312 = vmatpush1.xpose.msra.mxu0 0.0
      %2313 = vmatprep.subr.mxu0 0.0
      %2314 = vmatpush1.xpose.msra.mxu0 0.0
      %2315 = vmatprep.subr.mxu0 0.0
      %2316 = vmatpush1.xpose.msra.mxu0 0.0
      %2317 = vmatprep.subr.mxu0 0.0
      %2318 = vmatpush1.xpose.msra.mxu0 0.0
      %2319 = vmatprep.subr.mxu0 0.0
      %2320 = vmatpush1.xpose.msra.mxu0 0.0
      %2321 = vmatprep.subr.mxu0 0.0
      %2322 = vmatpush1.xpose.msra.mxu0 0.0
      %2323 = vmatprep.mubr.f32.mxu0 0.0
      %2324 = vmatmul.mubr.f32.gmra.mrb[0].mxu0 %v2255
      %v2325 = vpop.f32.mrb[0].mxu0
      %v2326 = vadd.f32 0.0, %v2325
      %v2327 = vpop.f32.mrb[0].mxu0
      %2328 = vdwg.mxu0
      %2329 = vrot.lane.b32.xlu0 %v2093, 104
      %v2330 = vpop.permute.xlu0 %2329
      %2331 = vrot.lane.b32.xlu0 %v2093, 72
      %v2332 = vpop.permute.xlu0 %2331
      %v2333 = vsel %vm769, %v2330, 0
      %v2335 = vsel %vm769, %v2332, 0
      %2337 = vmatprep.subr.mxu0 0.0
      %2338 = vmatpush1.xpose.msra.mxu0 %v2335
      %2339 = vmatprep.subr.mxu0 0.0
      %2340 = vmatpush1.xpose.msra.mxu0 0.0
      %2341 = vmatprep.subr.mxu0 0.0
      %2342 = vmatpush1.xpose.msra.mxu0 0.0
      %2343 = vmatprep.subr.mxu0 0.0
      %2344 = vmatpush1.xpose.msra.mxu0 0.0
      %2345 = vmatprep.subr.mxu0 0.0
      %2346 = vmatpush1.xpose.msra.mxu0 0.0
      %2347 = vmatprep.subr.mxu0 0.0
      %2348 = vmatpush1.xpose.msra.mxu0 0.0
      %2349 = vmatprep.subr.mxu0 0.0
      %2350 = vmatpush1.xpose.msra.mxu0 0.0
      %2351 = vmatprep.subr.mxu0 0.0
      %2352 = vmatpush1.xpose.msra.mxu0 0.0
      %2353 = vmatprep.subr.mxu0 0.0
      %2354 = vmatpush1.xpose.msra.mxu0 0.0
      %2355 = vmatprep.subr.mxu0 0.0
      %2356 = vmatpush1.xpose.msra.mxu0 0.0
      %2357 = vmatprep.subr.mxu0 0.0
      %2358 = vmatpush1.xpose.msra.mxu0 0.0
      %2359 = vmatprep.subr.mxu0 0.0
      %2360 = vmatpush1.xpose.msra.mxu0 0.0
      %2361 = vmatprep.subr.mxu0 0.0
      %2362 = vmatpush1.xpose.msra.mxu0 0.0
      %2363 = vmatprep.subr.mxu0 0.0
      %2364 = vmatpush1.xpose.msra.mxu0 0.0
      %2365 = vmatprep.subr.mxu0 0.0
      %2366 = vmatpush1.xpose.msra.mxu0 0.0
      %2367 = vmatprep.subr.mxu0 0.0
      %2368 = vmatpush1.xpose.msra.mxu0 0.0
      %2369 = vmatprep.subr.mxu0 0.0
      %2370 = vmatpush1.xpose.msra.mxu0 0.0
      %2371 = vmatprep.subr.mxu0 0.0
      %2372 = vmatpush1.xpose.msra.mxu0 0.0
      %2373 = vmatprep.subr.mxu0 0.0
      %2374 = vmatpush1.xpose.msra.mxu0 0.0
      %2375 = vmatprep.subr.mxu0 0.0
      %2376 = vmatpush1.xpose.msra.mxu0 0.0
      %2377 = vmatprep.subr.mxu0 0.0
      %2378 = vmatpush1.xpose.msra.mxu0 0.0
      %2379 = vmatprep.subr.mxu0 0.0
      %2380 = vmatpush1.xpose.msra.mxu0 0.0
      %2381 = vmatprep.subr.mxu0 0.0
      %2382 = vmatpush1.xpose.msra.mxu0 0.0
      %2383 = vmatprep.subr.mxu0 0.0
      %2384 = vmatpush1.xpose.msra.mxu0 0.0
      %2385 = vmatprep.subr.mxu0 0.0
      %2386 = vmatpush1.xpose.msra.mxu0 0.0
      %2387 = vmatprep.subr.mxu0 0.0
      %2388 = vmatpush1.xpose.msra.mxu0 0.0
      %2389 = vmatprep.subr.mxu0 0.0
      %2390 = vmatpush1.xpose.msra.mxu0 0.0
      %2391 = vmatprep.subr.mxu0 0.0
      %2392 = vmatpush1.xpose.msra.mxu0 0.0
      %2393 = vmatprep.subr.mxu0 0.0
      %2394 = vmatpush1.xpose.msra.mxu0 0.0
      %2395 = vmatprep.subr.mxu0 0.0
      %2396 = vmatpush1.xpose.msra.mxu0 0.0
      %2397 = vmatprep.subr.mxu0 0.0
      %2398 = vmatpush1.xpose.msra.mxu0 0.0
      %2399 = vmatprep.subr.mxu0 0.0
      %2400 = vmatpush1.xpose.msra.mxu0 0.0
      %2401 = vmatprep.mubr.f32.mxu0 0.0
      %2402 = vmatmul.mubr.f32.gmra.mrb[0].mxu0 %v2333
      %v2403 = vpop.f32.mrb[0].mxu0
      %v2404 = vadd.f32 0.0, %v2403
      %v2405 = vpop.f32.mrb[0].mxu0
      %2406 = vdwg.mxu0
      %v2407 = vsel %vm1078, %v2170, -inf
      %2408 = vmax.xlane.f32.xlu0 %v2407
      %v2409 = vpop.xlane.xlu0 %2408
      %v2410 = vsel %vm1078, %v2248, -inf
      %2411 = vmax.xlane.f32.xlu0 %v2410
      %v2412 = vpop.xlane.xlu0 %2411
      %v2413 = vsel %vm1078, %v2326, -inf
      %2414 = vmax.xlane.f32.xlu0 %v2413
      %v2415 = vpop.xlane.xlu0 %2414
      %v2416 = vsel %vm1078, %v2404, -inf
      %2417 = vmax.xlane.f32.xlu0 %v2416
      %v2418 = vpop.xlane.xlu0 %2417
      %v2419 = vsub.f32 %v2170, %v2409
      %v2420 = vsub.f32 %v2248, %v2412
      %v2421 = vsub.f32 %v2326, %v2415
      %v2422 = vsub.f32 %v2404, %v2418
      %v2423 = vmul.f32 %v2419, 1.442695
      %v2424 = vpow.pop %v2423
      %v2425 = vmul.f32 %v2420, 1.442695
      %v2426 = vpow.pop %v2425
      %v2427 = vmul.f32 %v2421, 1.442695
      %v2428 = vpow.pop %v2427
      %v2429 = vmul.f32 %v2422, 1.442695
      %v2430 = vpow.pop %v2429
      %v2431 = vsel %vm1078, %v2424, 0.0
      %2432 = vadd.xlane.f32.xlu0 %v2431
      %v2433 = vpop.xlane.xlu0 %2432
      %v2434 = vsel %vm1078, %v2426, 0.0
      %2435 = vadd.xlane.f32.xlu0 %v2434
      %v2436 = vpop.xlane.xlu0 %2435
      %v2437 = vsel %vm1078, %v2428, 0.0
      %2438 = vadd.xlane.f32.xlu0 %v2437
      %v2439 = vpop.xlane.xlu0 %2438
      %v2440 = vsel %vm1078, %v2430, 0.0
      %2441 = vadd.xlane.f32.xlu0 %v2440
      %v2442 = vpop.xlane.xlu0 %2441
      %v2443 = vrcp.pop %v2433
      %v2444 = vrcp.pop %v2436
      %v2445 = vrcp.pop %v2439
      %v2446 = vrcp.pop %v2442
      %v2447 = vmul.f32 %v2424, %v2443
      %v2448 = vmul.f32 %v2426, %v2444
      %v2449 = vmul.f32 %v2428, %v2445
      %v2450 = vmul.f32 %v2430, %v2446
      %s2451 = scalar_lea.vmem %s7, 32
      %v2452 = vld [vmem:[%s2451] sm:$0xff]
      %v2453 = vld [vmem:[%s2451 + $0x8] sm:$0xff]
      %v2454 = vld [vmem:[%s2451 + $0x10] sm:$0xff]
      %v2455 = vld [vmem:[%s2451 + $0x18] sm:$0xff]
      %s2456 = scalar_lea.vmem %s8, 1
      %v2457 = vld [vmem:[%s2456] sm:$0x1]
      %2458 = vrot.lane.b32.xlu0 %v2093, 64
      %v2459 = vpop.permute.xlu0 %2458
      %v2461 = vsel %vm1130, %v2447, 0
      %v2463 = vsel %vm1134, %v2459, 0
      %2465 = vmatprep.subr.mxu0 0.0
      %2466 = vmatpush1.msra.mxu0 %v2463
      %2467 = vmatprep.subr.mxu0 0.0
      %2468 = vmatpush1.msra.mxu0 0.0
      %2469 = vmatprep.subr.mxu0 0.0
      %2470 = vmatpush1.msra.mxu0 0.0
      %2471 = vmatprep.subr.mxu0 0.0
      %2472 = vmatpush1.msra.mxu0 0.0
      %2473 = vmatprep.subr.mxu0 0.0
      %2474 = vmatpush1.msra.mxu0 0.0
      %2475 = vmatprep.subr.mxu0 0.0
      %2476 = vmatpush1.msra.mxu0 0.0
      %2477 = vmatprep.subr.mxu0 0.0
      %2478 = vmatpush1.msra.mxu0 0.0
      %2479 = vmatprep.subr.mxu0 0.0
      %2480 = vmatpush1.msra.mxu0 0.0
      %2481 = vmatprep.subr.mxu0 0.0
      %2482 = vmatpush1.msra.mxu0 0.0
      %2483 = vmatprep.subr.mxu0 0.0
      %2484 = vmatpush1.msra.mxu0 0.0
      %2485 = vmatprep.subr.mxu0 0.0
      %2486 = vmatpush1.msra.mxu0 0.0
      %2487 = vmatprep.subr.mxu0 0.0
      %2488 = vmatpush1.msra.mxu0 0.0
      %2489 = vmatprep.subr.mxu0 0.0
      %2490 = vmatpush1.msra.mxu0 0.0
      %2491 = vmatprep.subr.mxu0 0.0
      %2492 = vmatpush1.msra.mxu0 0.0
      %2493 = vmatprep.subr.mxu0 0.0
      %2494 = vmatpush1.msra.mxu0 0.0
      %2495 = vmatprep.subr.mxu0 0.0
      %2496 = vmatpush1.msra.mxu0 0.0
      %2497 = vmatprep.subr.mxu0 0.0
      %2498 = vmatpush1.msra.mxu0 0.0
      %2499 = vmatprep.subr.mxu0 0.0
      %2500 = vmatpush1.msra.mxu0 0.0
      %2501 = vmatprep.subr.mxu0 0.0
      %2502 = vmatpush1.msra.mxu0 0.0
      %2503 = vmatprep.subr.mxu0 0.0
      %2504 = vmatpush1.msra.mxu0 0.0
      %2505 = vmatprep.subr.mxu0 0.0
      %2506 = vmatpush1.msra.mxu0 0.0
      %2507 = vmatprep.subr.mxu0 0.0
      %2508 = vmatpush1.msra.mxu0 0.0
      %2509 = vmatprep.subr.mxu0 0.0
      %2510 = vmatpush1.msra.mxu0 0.0
      %2511 = vmatprep.subr.mxu0 0.0
      %2512 = vmatpush1.msra.mxu0 0.0
      %2513 = vmatprep.subr.mxu0 0.0
      %2514 = vmatpush1.msra.mxu0 0.0
      %2515 = vmatprep.subr.mxu0 0.0
      %2516 = vmatpush1.msra.mxu0 0.0
      %2517 = vmatprep.subr.mxu0 0.0
      %2518 = vmatpush1.msra.mxu0 0.0
      %2519 = vmatprep.subr.mxu0 0.0
      %2520 = vmatpush1.msra.mxu0 0.0
      %2521 = vmatprep.subr.mxu0 0.0
      %2522 = vmatpush1.msra.mxu0 0.0
      %2523 = vmatprep.subr.mxu0 0.0
      %2524 = vmatpush1.msra.mxu0 0.0
      %2525 = vmatprep.subr.mxu0 0.0
      %2526 = vmatpush1.msra.mxu0 0.0
      %2527 = vmatprep.subr.mxu0 0.0
      %2528 = vmatpush1.msra.mxu0 0.0
      %2529 = vmatprep.mubr.f32.mxu0 0.0
      %2530 = vmatmul.mubr.f32.gmra.mrb[0].mxu0 %v2461
      %v2531 = vpop.f32.mrb[0].mxu0
      %v2532 = vadd.f32 0.0, %v2531
      %v2533 = vpop.f32.mrb[0].mxu0
      %2534 = vdwg.mxu0
      %v2536 = vsel %vm769, %v2532, 0
      %2538 = vmatprep.subr.mxu0 0.0
      %2539 = vmatpush1.msra.mxu0 %v2452
      %2540 = vmatprep.subr.mxu0 0.0
      %2541 = vmatpush1.msra.mxu0 0.0
      %2542 = vmatprep.subr.mxu0 0.0
      %2543 = vmatpush1.msra.mxu0 0.0
      %2544 = vmatprep.subr.mxu0 0.0
      %2545 = vmatpush1.msra.mxu0 0.0
      %2546 = vmatprep.subr.mxu0 0.0
      %2547 = vmatpush1.msra.mxu0 0.0
      %2548 = vmatprep.subr.mxu0 0.0
      %2549 = vmatpush1.msra.mxu0 0.0
      %2550 = vmatprep.subr.mxu0 0.0
      %2551 = vmatpush1.msra.mxu0 0.0
      %2552 = vmatprep.subr.mxu0 0.0
      %2553 = vmatpush1.msra.mxu0 0.0
      %2554 = vmatprep.subr.mxu0 0.0
      %2555 = vmatpush1.msra.mxu0 0.0
      %2556 = vmatprep.subr.mxu0 0.0
      %2557 = vmatpush1.msra.mxu0 0.0
      %2558 = vmatprep.subr.mxu0 0.0
      %2559 = vmatpush1.msra.mxu0 0.0
      %2560 = vmatprep.subr.mxu0 0.0
      %2561 = vmatpush1.msra.mxu0 0.0
      %2562 = vmatprep.subr.mxu0 0.0
      %2563 = vmatpush1.msra.mxu0 0.0
      %2564 = vmatprep.subr.mxu0 0.0
      %2565 = vmatpush1.msra.mxu0 0.0
      %2566 = vmatprep.subr.mxu0 0.0
      %2567 = vmatpush1.msra.mxu0 0.0
      %2568 = vmatprep.subr.mxu0 0.0
      %2569 = vmatpush1.msra.mxu0 0.0
      %2570 = vmatprep.subr.mxu0 0.0
      %2571 = vmatpush1.msra.mxu0 0.0
      %2572 = vmatprep.subr.mxu0 0.0
      %2573 = vmatpush1.msra.mxu0 0.0
      %2574 = vmatprep.subr.mxu0 0.0
      %2575 = vmatpush1.msra.mxu0 0.0
      %2576 = vmatprep.subr.mxu0 0.0
      %2577 = vmatpush1.msra.mxu0 0.0
      %2578 = vmatprep.subr.mxu0 0.0
      %2579 = vmatpush1.msra.mxu0 0.0
      %2580 = vmatprep.subr.mxu0 0.0
      %2581 = vmatpush1.msra.mxu0 0.0
      %2582 = vmatprep.subr.mxu0 0.0
      %2583 = vmatpush1.msra.mxu0 0.0
      %2584 = vmatprep.subr.mxu0 0.0
      %2585 = vmatpush1.msra.mxu0 0.0
      %2586 = vmatprep.subr.mxu0 0.0
      %2587 = vmatpush1.msra.mxu0 0.0
      %2588 = vmatprep.subr.mxu0 0.0
      %2589 = vmatpush1.msra.mxu0 0.0
      %2590 = vmatprep.subr.mxu0 0.0
      %2591 = vmatpush1.msra.mxu0 0.0
      %2592 = vmatprep.subr.mxu0 0.0
      %2593 = vmatpush1.msra.mxu0 0.0
      %2594 = vmatprep.subr.mxu0 0.0
      %2595 = vmatpush1.msra.mxu0 0.0
      %2596 = vmatprep.subr.mxu0 0.0
      %2597 = vmatpush1.msra.mxu0 0.0
      %2598 = vmatprep.subr.mxu0 0.0
      %2599 = vmatpush1.msra.mxu0 0.0
      %2600 = vmatprep.subr.mxu0 0.0
      %2601 = vmatpush1.msra.mxu0 0.0
      %2602 = vmatprep.mubr.f32.mxu0 0.0
      %2603 = vmatmul.mubr.f32.gmra.mrb[0].mxu0 %v2536
      %v2604 = vpop.f32.mrb[0].mxu0
      %v2605 = vadd.f32 0.0, %v2604
      %v2606 = vpop.f32.mrb[0].mxu0
      %2607 = vdwg.mxu0
      %v2609 = vlaneseq
      %v2610 = vshrl.u32 %v2609, 7
      %v2611 = vsub.s32 0, %v2610
      %v2612 = vrot.slane %v2457, %v2611
      %v2614 = vadd.f32 %v2612, %v2605
      %2615 = vrot.lane.b32.xlu0 %v2093, 56
      %v2616 = vpop.permute.xlu0 %2615
      %v2618 = vsel %vm1130, %v2448, 0
      %v2620 = vsel %vm1134, %v2616, 0
      %2622 = vmatprep.subr.mxu0 0.0
      %2623 = vmatpush1.msra.mxu0 %v2620
      %2624 = vmatprep.subr.mxu0 0.0
      %2625 = vmatpush1.msra.mxu0 0.0
      %2626 = vmatprep.subr.mxu0 0.0
      %2627 = vmatpush1.msra.mxu0 0.0
      %2628 = vmatprep.subr.mxu0 0.0
      %2629 = vmatpush1.msra.mxu0 0.0
      %2630 = vmatprep.subr.mxu0 0.0
      %2631 = vmatpush1.msra.mxu0 0.0
      %2632 = vmatprep.subr.mxu0 0.0
      %2633 = vmatpush1.msra.mxu0 0.0
      %2634 = vmatprep.subr.mxu0 0.0
      %2635 = vmatpush1.msra.mxu0 0.0
      %2636 = vmatprep.subr.mxu0 0.0
      %2637 = vmatpush1.msra.mxu0 0.0
      %2638 = vmatprep.subr.mxu0 0.0
      %2639 = vmatpush1.msra.mxu0 0.0
      %2640 = vmatprep.subr.mxu0 0.0
      %2641 = vmatpush1.msra.mxu0 0.0
      %2642 = vmatprep.subr.mxu0 0.0
      %2643 = vmatpush1.msra.mxu0 0.0
      %2644 = vmatprep.subr.mxu0 0.0
      %2645 = vmatpush1.msra.mxu0 0.0
      %2646 = vmatprep.subr.mxu0 0.0
      %2647 = vmatpush1.msra.mxu0 0.0
      %2648 = vmatprep.subr.mxu0 0.0
      %2649 = vmatpush1.msra.mxu0 0.0
      %2650 = vmatprep.subr.mxu0 0.0
      %2651 = vmatpush1.msra.mxu0 0.0
      %2652 = vmatprep.subr.mxu0 0.0
      %2653 = vmatpush1.msra.mxu0 0.0
      %2654 = vmatprep.subr.mxu0 0.0
      %2655 = vmatpush1.msra.mxu0 0.0
      %2656 = vmatprep.subr.mxu0 0.0
      %2657 = vmatpush1.msra.mxu0 0.0
      %2658 = vmatprep.subr.mxu0 0.0
      %2659 = vmatpush1.msra.mxu0 0.0
      %2660 = vmatprep.subr.mxu0 0.0
      %2661 = vmatpush1.msra.mxu0 0.0
      %2662 = vmatprep.subr.mxu0 0.0
      %2663 = vmatpush1.msra.mxu0 0.0
      %2664 = vmatprep.subr.mxu0 0.0
      %2665 = vmatpush1.msra.mxu0 0.0
      %2666 = vmatprep.subr.mxu0 0.0
      %2667 = vmatpush1.msra.mxu0 0.0
      %2668 = vmatprep.subr.mxu0 0.0
      %2669 = vmatpush1.msra.mxu0 0.0
      %2670 = vmatprep.subr.mxu0 0.0
      %2671 = vmatpush1.msra.mxu0 0.0
      %2672 = vmatprep.subr.mxu0 0.0
      %2673 = vmatpush1.msra.mxu0 0.0
      %2674 = vmatprep.subr.mxu0 0.0
      %2675 = vmatpush1.msra.mxu0 0.0
      %2676 = vmatprep.subr.mxu0 0.0
      %2677 = vmatpush1.msra.mxu0 0.0
      %2678 = vmatprep.subr.mxu0 0.0
      %2679 = vmatpush1.msra.mxu0 0.0
      %2680 = vmatprep.subr.mxu0 0.0
      %2681 = vmatpush1.msra.mxu0 0.0
      %2682 = vmatprep.subr.mxu0 0.0
      %2683 = vmatpush1.msra.mxu0 0.0
      %2684 = vmatprep.subr.mxu0 0.0
      %2685 = vmatpush1.msra.mxu0 0.0
      %2686 = vmatprep.mubr.f32.mxu0 0.0
      %2687 = vmatmul.mubr.f32.gmra.mrb[0].mxu0 %v2618
      %v2688 = vpop.f32.mrb[0].mxu0
      %v2689 = vadd.f32 0.0, %v2688
      %v2690 = vpop.f32.mrb[0].mxu0
      %2691 = vdwg.mxu0
      %v2693 = vsel %vm769, %v2689, 0
      %2695 = vmatprep.subr.mxu0 0.0
      %2696 = vmatpush1.msra.mxu0 %v2453
      %2697 = vmatprep.subr.mxu0 0.0
      %2698 = vmatpush1.msra.mxu0 0.0
      %2699 = vmatprep.subr.mxu0 0.0
      %2700 = vmatpush1.msra.mxu0 0.0
      %2701 = vmatprep.subr.mxu0 0.0
      %2702 = vmatpush1.msra.mxu0 0.0
      %2703 = vmatprep.subr.mxu0 0.0
      %2704 = vmatpush1.msra.mxu0 0.0
      %2705 = vmatprep.subr.mxu0 0.0
      %2706 = vmatpush1.msra.mxu0 0.0
      %2707 = vmatprep.subr.mxu0 0.0
      %2708 = vmatpush1.msra.mxu0 0.0
      %2709 = vmatprep.subr.mxu0 0.0
      %2710 = vmatpush1.msra.mxu0 0.0
      %2711 = vmatprep.subr.mxu0 0.0
      %2712 = vmatpush1.msra.mxu0 0.0
      %2713 = vmatprep.subr.mxu0 0.0
      %2714 = vmatpush1.msra.mxu0 0.0
      %2715 = vmatprep.subr.mxu0 0.0
      %2716 = vmatpush1.msra.mxu0 0.0
      %2717 = vmatprep.subr.mxu0 0.0
      %2718 = vmatpush1.msra.mxu0 0.0
      %2719 = vmatprep.subr.mxu0 0.0
      %2720 = vmatpush1.msra.mxu0 0.0
      %2721 = vmatprep.subr.mxu0 0.0
      %2722 = vmatpush1.msra.mxu0 0.0
      %2723 = vmatprep.subr.mxu0 0.0
      %2724 = vmatpush1.msra.mxu0 0.0
      %2725 = vmatprep.subr.mxu0 0.0
      %2726 = vmatpush1.msra.mxu0 0.0
      %2727 = vmatprep.subr.mxu0 0.0
      %2728 = vmatpush1.msra.mxu0 0.0
      %2729 = vmatprep.subr.mxu0 0.0
      %2730 = vmatpush1.msra.mxu0 0.0
      %2731 = vmatprep.subr.mxu0 0.0
      %2732 = vmatpush1.msra.mxu0 0.0
      %2733 = vmatprep.subr.mxu0 0.0
      %2734 = vmatpush1.msra.mxu0 0.0
      %2735 = vmatprep.subr.mxu0 0.0
      %2736 = vmatpush1.msra.mxu0 0.0
      %2737 = vmatprep.subr.mxu0 0.0
      %2738 = vmatpush1.msra.mxu0 0.0
      %2739 = vmatprep.subr.mxu0 0.0
      %2740 = vmatpush1.msra.mxu0 0.0
      %2741 = vmatprep.subr.mxu0 0.0
      %2742 = vmatpush1.msra.mxu0 0.0
      %2743 = vmatprep.subr.mxu0 0.0
      %2744 = vmatpush1.msra.mxu0 0.0
      %2745 = vmatprep.subr.mxu0 0.0
      %2746 = vmatpush1.msra.mxu0 0.0
      %2747 = vmatprep.subr.mxu0 0.0
      %2748 = vmatpush1.msra.mxu0 0.0
      %2749 = vmatprep.subr.mxu0 0.0
      %2750 = vmatpush1.msra.mxu0 0.0
      %2751 = vmatprep.subr.mxu0 0.0
      %2752 = vmatpush1.msra.mxu0 0.0
      %2753 = vmatprep.subr.mxu0 0.0
      %2754 = vmatpush1.msra.mxu0 0.0
      %2755 = vmatprep.subr.mxu0 0.0
      %2756 = vmatpush1.msra.mxu0 0.0
      %2757 = vmatprep.subr.mxu0 0.0
      %2758 = vmatpush1.msra.mxu0 0.0
      %2759 = vmatprep.mubr.f32.mxu0 0.0
      %2760 = vmatmul.mubr.f32.gmra.mrb[0].mxu0 %v2693
      %v2761 = vpop.f32.mrb[0].mxu0
      %v2762 = vadd.f32 0.0, %v2761
      %v2763 = vpop.f32.mrb[0].mxu0
      %2764 = vdwg.mxu0
      %v2765 = vadd.f32 %v2614, %v2762
      %2766 = vrot.lane.b32.xlu0 %v2093, 48
      %v2767 = vpop.permute.xlu0 %2766
      %v2769 = vsel %vm1130, %v2449, 0
      %v2771 = vsel %vm1134, %v2767, 0
      %2773 = vmatprep.subr.mxu0 0.0
      %2774 = vmatpush1.msra.mxu0 %v2771
      %2775 = vmatprep.subr.mxu0 0.0
      %2776 = vmatpush1.msra.mxu0 0.0
      %2777 = vmatprep.subr.mxu0 0.0
      %2778 = vmatpush1.msra.mxu0 0.0
      %2779 = vmatprep.subr.mxu0 0.0
      %2780 = vmatpush1.msra.mxu0 0.0
      %2781 = vmatprep.subr.mxu0 0.0
      %2782 = vmatpush1.msra.mxu0 0.0
      %2783 = vmatprep.subr.mxu0 0.0
      %2784 = vmatpush1.msra.mxu0 0.0
      %2785 = vmatprep.subr.mxu0 0.0
      %2786 = vmatpush1.msra.mxu0 0.0
      %2787 = vmatprep.subr.mxu0 0.0
      %2788 = vmatpush1.msra.mxu0 0.0
      %2789 = vmatprep.subr.mxu0 0.0
      %2790 = vmatpush1.msra.mxu0 0.0
      %2791 = vmatprep.subr.mxu0 0.0
      %2792 = vmatpush1.msra.mxu0 0.0
      %2793 = vmatprep.subr.mxu0 0.0
      %2794 = vmatpush1.msra.mxu0 0.0
      %2795 = vmatprep.subr.mxu0 0.0
      %2796 = vmatpush1.msra.mxu0 0.0
      %2797 = vmatprep.subr.mxu0 0.0
      %2798 = vmatpush1.msra.mxu0 0.0
      %2799 = vmatprep.subr.mxu0 0.0
      %2800 = vmatpush1.msra.mxu0 0.0
      %2801 = vmatprep.subr.mxu0 0.0
      %2802 = vmatpush1.msra.mxu0 0.0
      %2803 = vmatprep.subr.mxu0 0.0
      %2804 = vmatpush1.msra.mxu0 0.0
      %2805 = vmatprep.subr.mxu0 0.0
      %2806 = vmatpush1.msra.mxu0 0.0
      %2807 = vmatprep.subr.mxu0 0.0
      %2808 = vmatpush1.msra.mxu0 0.0
      %2809 = vmatprep.subr.mxu0 0.0
      %2810 = vmatpush1.msra.mxu0 0.0
      %2811 = vmatprep.subr.mxu0 0.0
      %2812 = vmatpush1.msra.mxu0 0.0
      %2813 = vmatprep.subr.mxu0 0.0
      %2814 = vmatpush1.msra.mxu0 0.0
      %2815 = vmatprep.subr.mxu0 0.0
      %2816 = vmatpush1.msra.mxu0 0.0
      %2817 = vmatprep.subr.mxu0 0.0
      %2818 = vmatpush1.msra.mxu0 0.0
      %2819 = vmatprep.subr.mxu0 0.0
      %2820 = vmatpush1.msra.mxu0 0.0
      %2821 = vmatprep.subr.mxu0 0.0
      %2822 = vmatpush1.msra.mxu0 0.0
      %2823 = vmatprep.subr.mxu0 0.0
      %2824 = vmatpush1.msra.mxu0 0.0
      %2825 = vmatprep.subr.mxu0 0.0
      %2826 = vmatpush1.msra.mxu0 0.0
      %2827 = vmatprep.subr.mxu0 0.0
      %2828 = vmatpush1.msra.mxu0 0.0
      %2829 = vmatprep.subr.mxu0 0.0
      %2830 = vmatpush1.msra.mxu0 0.0
      %2831 = vmatprep.subr.mxu0 0.0
      %2832 = vmatpush1.msra.mxu0 0.0
      %2833 = vmatprep.subr.mxu0 0.0
      %2834 = vmatpush1.msra.mxu0 0.0
      %2835 = vmatprep.subr.mxu0 0.0
      %2836 = vmatpush1.msra.mxu0 0.0
      %2837 = vmatprep.mubr.f32.mxu0 0.0
      %2838 = vmatmul.mubr.f32.gmra.mrb[0].mxu0 %v2769
      %v2839 = vpop.f32.mrb[0].mxu0
      %v2840 = vadd.f32 0.0, %v2839
      %v2841 = vpop.f32.mrb[0].mxu0
      %2842 = vdwg.mxu0
      %v2844 = vsel %vm769, %v2840, 0
      %2846 = vmatprep.subr.mxu0 0.0
      %2847 = vmatpush1.msra.mxu0 %v2454
      %2848 = vmatprep.subr.mxu0 0.0
      %2849 = vmatpush1.msra.mxu0 0.0
      %2850 = vmatprep.subr.mxu0 0.0
      %2851 = vmatpush1.msra.mxu0 0.0
      %2852 = vmatprep.subr.mxu0 0.0
      %2853 = vmatpush1.msra.mxu0 0.0
      %2854 = vmatprep.subr.mxu0 0.0
      %2855 = vmatpush1.msra.mxu0 0.0
      %2856 = vmatprep.subr.mxu0 0.0
      %2857 = vmatpush1.msra.mxu0 0.0
      %2858 = vmatprep.subr.mxu0 0.0
      %2859 = vmatpush1.msra.mxu0 0.0
      %2860 = vmatprep.subr.mxu0 0.0
      %2861 = vmatpush1.msra.mxu0 0.0
      %2862 = vmatprep.subr.mxu0 0.0
      %2863 = vmatpush1.msra.mxu0 0.0
      %2864 = vmatprep.subr.mxu0 0.0
      %2865 = vmatpush1.msra.mxu0 0.0
      %2866 = vmatprep.subr.mxu0 0.0
      %2867 = vmatpush1.msra.mxu0 0.0
      %2868 = vmatprep.subr.mxu0 0.0
      %2869 = vmatpush1.msra.mxu0 0.0
      %2870 = vmatprep.subr.mxu0 0.0
      %2871 = vmatpush1.msra.mxu0 0.0
      %2872 = vmatprep.subr.mxu0 0.0
      %2873 = vmatpush1.msra.mxu0 0.0
      %2874 = vmatprep.subr.mxu0 0.0
      %2875 = vmatpush1.msra.mxu0 0.0
      %2876 = vmatprep.subr.mxu0 0.0
      %2877 = vmatpush1.msra.mxu0 0.0
      %2878 = vmatprep.subr.mxu0 0.0
      %2879 = vmatpush1.msra.mxu0 0.0
      %2880 = vmatprep.subr.mxu0 0.0
      %2881 = vmatpush1.msra.mxu0 0.0
      %2882 = vmatprep.subr.mxu0 0.0
      %2883 = vmatpush1.msra.mxu0 0.0
      %2884 = vmatprep.subr.mxu0 0.0
      %2885 = vmatpush1.msra.mxu0 0.0
      %2886 = vmatprep.subr.mxu0 0.0
      %2887 = vmatpush1.msra.mxu0 0.0
      %2888 = vmatprep.subr.mxu0 0.0
      %2889 = vmatpush1.msra.mxu0 0.0
      %2890 = vmatprep.subr.mxu0 0.0
      %2891 = vmatpush1.msra.mxu0 0.0
      %2892 = vmatprep.subr.mxu0 0.0
      %2893 = vmatpush1.msra.mxu0 0.0
      %2894 = vmatprep.subr.mxu0 0.0
      %2895 = vmatpush1.msra.mxu0 0.0
      %2896 = vmatprep.subr.mxu0 0.0
      %2897 = vmatpush1.msra.mxu0 0.0
      %2898 = vmatprep.subr.mxu0 0.0
      %2899 = vmatpush1.msra.mxu0 0.0
      %2900 = vmatprep.subr.mxu0 0.0
      %2901 = vmatpush1.msra.mxu0 0.0
      %2902 = vmatprep.subr.mxu0 0.0
      %2903 = vmatpush1.msra.mxu0 0.0
      %2904 = vmatprep.subr.mxu0 0.0
      %2905 = vmatpush1.msra.mxu0 0.0
      %2906 = vmatprep.subr.mxu0 0.0
      %2907 = vmatpush1.msra.mxu0 0.0
      %2908 = vmatprep.subr.mxu0 0.0
      %2909 = vmatpush1.msra.mxu0 0.0
      %2910 = vmatprep.mubr.f32.mxu0 0.0
      %2911 = vmatmul.mubr.f32.gmra.mrb[0].mxu0 %v2844
      %v2912 = vpop.f32.mrb[0].mxu0
      %v2913 = vadd.f32 0.0, %v2912
      %v2914 = vpop.f32.mrb[0].mxu0
      %2915 = vdwg.mxu0
      %v2916 = vadd.f32 %v2765, %v2913
      %2917 = vrot.lane.b32.xlu0 %v2093, 40
      %v2918 = vpop.permute.xlu0 %2917
      %v2920 = vsel %vm1130, %v2450, 0
      %v2922 = vsel %vm1134, %v2918, 0
      %2924 = vmatprep.subr.mxu0 0.0
      %2925 = vmatpush1.msra.mxu0 %v2922
      %2926 = vmatprep.subr.mxu0 0.0
      %2927 = vmatpush1.msra.mxu0 0.0
      %2928 = vmatprep.subr.mxu0 0.0
      %2929 = vmatpush1.msra.mxu0 0.0
      %2930 = vmatprep.subr.mxu0 0.0
      %2931 = vmatpush1.msra.mxu0 0.0
      %2932 = vmatprep.subr.mxu0 0.0
      %2933 = vmatpush1.msra.mxu0 0.0
      %2934 = vmatprep.subr.mxu0 0.0
      %2935 = vmatpush1.msra.mxu0 0.0
      %2936 = vmatprep.subr.mxu0 0.0
      %2937 = vmatpush1.msra.mxu0 0.0
      %2938 = vmatprep.subr.mxu0 0.0
      %2939 = vmatpush1.msra.mxu0 0.0
      %2940 = vmatprep.subr.mxu0 0.0
      %2941 = vmatpush1.msra.mxu0 0.0
      %2942 = vmatprep.subr.mxu0 0.0
      %2943 = vmatpush1.msra.mxu0 0.0
      %2944 = vmatprep.subr.mxu0 0.0
      %2945 = vmatpush1.msra.mxu0 0.0
      %2946 = vmatprep.subr.mxu0 0.0
      %2947 = vmatpush1.msra.mxu0 0.0
      %2948 = vmatprep.subr.mxu0 0.0
      %2949 = vmatpush1.msra.mxu0 0.0
      %2950 = vmatprep.subr.mxu0 0.0
      %2951 = vmatpush1.msra.mxu0 0.0
      %2952 = vmatprep.subr.mxu0 0.0
      %2953 = vmatpush1.msra.mxu0 0.0
      %2954 = vmatprep.subr.mxu0 0.0
      %2955 = vmatpush1.msra.mxu0 0.0
      %2956 = vmatprep.subr.mxu0 0.0
      %2957 = vmatpush1.msra.mxu0 0.0
      %2958 = vmatprep.subr.mxu0 0.0
      %2959 = vmatpush1.msra.mxu0 0.0
      %2960 = vmatprep.subr.mxu0 0.0
      %2961 = vmatpush1.msra.mxu0 0.0
      %2962 = vmatprep.subr.mxu0 0.0
      %2963 = vmatpush1.msra.mxu0 0.0
      %2964 = vmatprep.subr.mxu0 0.0
      %2965 = vmatpush1.msra.mxu0 0.0
      %2966 = vmatprep.subr.mxu0 0.0
      %2967 = vmatpush1.msra.mxu0 0.0
      %2968 = vmatprep.subr.mxu0 0.0
      %2969 = vmatpush1.msra.mxu0 0.0
      %2970 = vmatprep.subr.mxu0 0.0
      %2971 = vmatpush1.msra.mxu0 0.0
      %2972 = vmatprep.subr.mxu0 0.0
      %2973 = vmatpush1.msra.mxu0 0.0
      %2974 = vmatprep.subr.mxu0 0.0
      %2975 = vmatpush1.msra.mxu0 0.0
      %2976 = vmatprep.subr.mxu0 0.0
      %2977 = vmatpush1.msra.mxu0 0.0
      %2978 = vmatprep.subr.mxu0 0.0
      %2979 = vmatpush1.msra.mxu0 0.0
      %2980 = vmatprep.subr.mxu0 0.0
      %2981 = vmatpush1.msra.mxu0 0.0
      %2982 = vmatprep.subr.mxu0 0.0
      %2983 = vmatpush1.msra.mxu0 0.0
      %2984 = vmatprep.subr.mxu0 0.0
      %2985 = vmatpush1.msra.mxu0 0.0
      %2986 = vmatprep.subr.mxu0 0.0
      %2987 = vmatpush1.msra.mxu0 0.0
      %2988 = vmatprep.mubr.f32.mxu0 0.0
      %2989 = vmatmul.mubr.f32.gmra.mrb[0].mxu0 %v2920
      %v2990 = vpop.f32.mrb[0].mxu0
      %v2991 = vadd.f32 0.0, %v2990
      %v2992 = vpop.f32.mrb[0].mxu0
      %2993 = vdwg.mxu0
      %v2995 = vsel %vm769, %v2991, 0
      %2997 = vmatprep.subr.mxu0 0.0
      %2998 = vmatpush1.msra.mxu0 %v2455
      %2999 = vmatprep.subr.mxu0 0.0
      %3000 = vmatpush1.msra.mxu0 0.0
      %3001 = vmatprep.subr.mxu0 0.0
      %3002 = vmatpush1.msra.mxu0 0.0
      %3003 = vmatprep.subr.mxu0 0.0
      %3004 = vmatpush1.msra.mxu0 0.0
      %3005 = vmatprep.subr.mxu0 0.0
      %3006 = vmatpush1.msra.mxu0 0.0
      %3007 = vmatprep.subr.mxu0 0.0
      %3008 = vmatpush1.msra.mxu0 0.0
      %3009 = vmatprep.subr.mxu0 0.0
      %3010 = vmatpush1.msra.mxu0 0.0
      %3011 = vmatprep.subr.mxu0 0.0
      %3012 = vmatpush1.msra.mxu0 0.0
      %3013 = vmatprep.subr.mxu0 0.0
      %3014 = vmatpush1.msra.mxu0 0.0
      %3015 = vmatprep.subr.mxu0 0.0
      %3016 = vmatpush1.msra.mxu0 0.0
      %3017 = vmatprep.subr.mxu0 0.0
      %3018 = vmatpush1.msra.mxu0 0.0
      %3019 = vmatprep.subr.mxu0 0.0
      %3020 = vmatpush1.msra.mxu0 0.0
      %3021 = vmatprep.subr.mxu0 0.0
      %3022 = vmatpush1.msra.mxu0 0.0
      %3023 = vmatprep.subr.mxu0 0.0
      %3024 = vmatpush1.msra.mxu0 0.0
      %3025 = vmatprep.subr.mxu0 0.0
      %3026 = vmatpush1.msra.mxu0 0.0
      %3027 = vmatprep.subr.mxu0 0.0
      %3028 = vmatpush1.msra.mxu0 0.0
      %3029 = vmatprep.subr.mxu0 0.0
      %3030 = vmatpush1.msra.mxu0 0.0
      %3031 = vmatprep.subr.mxu0 0.0
      %3032 = vmatpush1.msra.mxu0 0.0
      %3033 = vmatprep.subr.mxu0 0.0
      %3034 = vmatpush1.msra.mxu0 0.0
      %3035 = vmatprep.subr.mxu0 0.0
      %3036 = vmatpush1.msra.mxu0 0.0
      %3037 = vmatprep.subr.mxu0 0.0
      %3038 = vmatpush1.msra.mxu0 0.0
      %3039 = vmatprep.subr.mxu0 0.0
      %3040 = vmatpush1.msra.mxu0 0.0
      %3041 = vmatprep.subr.mxu0 0.0
      %3042 = vmatpush1.msra.mxu0 0.0
      %3043 = vmatprep.subr.mxu0 0.0
      %3044 = vmatpush1.msra.mxu0 0.0
      %3045 = vmatprep.subr.mxu0 0.0
      %3046 = vmatpush1.msra.mxu0 0.0
      %3047 = vmatprep.subr.mxu0 0.0
      %3048 = vmatpush1.msra.mxu0 0.0
      %3049 = vmatprep.subr.mxu0 0.0
      %3050 = vmatpush1.msra.mxu0 0.0
      %3051 = vmatprep.subr.mxu0 0.0
      %3052 = vmatpush1.msra.mxu0 0.0
      %3053 = vmatprep.subr.mxu0 0.0
      %3054 = vmatpush1.msra.mxu0 0.0
      %3055 = vmatprep.subr.mxu0 0.0
      %3056 = vmatpush1.msra.mxu0 0.0
      %3057 = vmatprep.subr.mxu0 0.0
      %3058 = vmatpush1.msra.mxu0 0.0
      %3059 = vmatprep.subr.mxu0 0.0
      %3060 = vmatpush1.msra.mxu0 0.0
      %3061 = vmatprep.mubr.f32.mxu0 0.0
      %3062 = vmatmul.mubr.f32.gmra.mrb[0].mxu0 %v2995
      %v3063 = vpop.f32.mrb[0].mxu0
      %v3064 = vadd.f32 0.0, %v3063
      %v3065 = vpop.f32.mrb[0].mxu0
      %3066 = vdwg.mxu0
      %v3067 = vadd.f32 %v2916, %v3064
      %v3068 = vadd.f32 %v1976, %v3067
      %s3069 = scalar_lea.vmem %s9, 1
      %v3070 = vld [vmem:[%s3069] sm:$0x1]
      %s3071 = scalar_lea.vmem %s10, 1
      %v3072 = vld [vmem:[%s3071] sm:$0x1]
      %v3073 = vsel %vm650, %v3068, 0.0
      %3074 = vadd.xlane.f32.xlu0 %v3073
      %v3075 = vpop.xlane.xlu0 %3074
      %v3076 = vmul.f32 %v3075, %v654
      %v3077 = vmul.f32 %v3068, %v3068
      %v3078 = vsel %vm650, %v3077, 0.0
      %3079 = vadd.xlane.f32.xlu0 %v3078
      %v3080 = vpop.xlane.xlu0 %3079
      %v3081 = vmul.f32 %v3080, %v654
      %v3082 = vmul.f32 %v3076, %v3076
      %v3083 = vsub.f32 %v3081, %v3082
      %v3084 = vsub.f32 %v3068, %v3076
      %v3085 = vadd.f32 %v3083, 1e-06
      %v3086 = vrsqrt.pop %v3085
      %v3087 = vmul.f32 %v3084, %v3086
      %v3089 = vlaneseq
      %v3090 = vshrl.u32 %v3089, 7
      %v3091 = vsub.s32 0, %v3090
      %v3092 = vrot.slane %v3070, %v3091
      %v3094 = vmul.f32 %v3087, %v3092
      %v3096 = vlaneseq
      %v3097 = vshrl.u32 %v3096, 7
      %v3098 = vsub.s32 0, %v3097
      %v3099 = vrot.slane %v3072, %v3098
      %v3101 = vadd.f32 %v3094, %v3099
      %s3102 = scalar_lea.vmem %s11, 32
      %v3103 = vld [vmem:[%s3102] sm:$0xff]
      %v3104 = vld [vmem:[%s3102 + $0x8] sm:$0xff]
      %v3105 = vld [vmem:[%s3102 + $0x10] sm:$0xff]
      %v3106 = vld [vmem:[%s3102 + $0x18] sm:$0xff]
      %s3107 = scalar_lea.vmem %s12, 1
      %v3108 = vld [vmem:[%s3107] sm:$0x1]
      %v3110 = vlaneseq
      %v3111 = vshrl.u32 %v3110, 7
      %v3112 = vsub.s32 0, %v3111
      %v3113 = vrot.slane %v3108, %v3112
      %v3116 = vsel %vm692, %v3101, 0
      %3118 = vmatprep.subr.mxu0 0.0
      %3119 = vmatpush1.msra.mxu0 %v3103
      %3120 = vmatprep.subr.mxu0 0.0
      %3121 = vmatpush1.msra.mxu0 %v3104
      %3122 = vmatprep.subr.mxu0 0.0
      %3123 = vmatpush1.msra.mxu0 %v3105
      %3124 = vmatprep.subr.mxu0 0.0
      %3125 = vmatpush1.msra.mxu0 %v3106
      %3126 = vmatprep.subr.mxu0 0.0
      %3127 = vmatpush1.msra.mxu0 0.0
      %3128 = vmatprep.subr.mxu0 0.0
      %3129 = vmatpush1.msra.mxu0 0.0
      %3130 = vmatprep.subr.mxu0 0.0
      %3131 = vmatpush1.msra.mxu0 0.0
      %3132 = vmatprep.subr.mxu0 0.0
      %3133 = vmatpush1.msra.mxu0 0.0
      %3134 = vmatprep.subr.mxu0 0.0
      %3135 = vmatpush1.msra.mxu0 0.0
      %3136 = vmatprep.subr.mxu0 0.0
      %3137 = vmatpush1.msra.mxu0 0.0
      %3138 = vmatprep.subr.mxu0 0.0
      %3139 = vmatpush1.msra.mxu0 0.0
      %3140 = vmatprep.subr.mxu0 0.0
      %3141 = vmatpush1.msra.mxu0 0.0
      %3142 = vmatprep.subr.mxu0 0.0
      %3143 = vmatpush1.msra.mxu0 0.0
      %3144 = vmatprep.subr.mxu0 0.0
      %3145 = vmatpush1.msra.mxu0 0.0
      %3146 = vmatprep.subr.mxu0 0.0
      %3147 = vmatpush1.msra.mxu0 0.0
      %3148 = vmatprep.subr.mxu0 0.0
      %3149 = vmatpush1.msra.mxu0 0.0
      %3150 = vmatprep.subr.mxu0 0.0
      %3151 = vmatpush1.msra.mxu0 0.0
      %3152 = vmatprep.subr.mxu0 0.0
      %3153 = vmatpush1.msra.mxu0 0.0
      %3154 = vmatprep.subr.mxu0 0.0
      %3155 = vmatpush1.msra.mxu0 0.0
      %3156 = vmatprep.subr.mxu0 0.0
      %3157 = vmatpush1.msra.mxu0 0.0
      %3158 = vmatprep.subr.mxu0 0.0
      %3159 = vmatpush1.msra.mxu0 0.0
      %3160 = vmatprep.subr.mxu0 0.0
      %3161 = vmatpush1.msra.mxu0 0.0
      %3162 = vmatprep.subr.mxu0 0.0
      %3163 = vmatpush1.msra.mxu0 0.0
      %3164 = vmatprep.subr.mxu0 0.0
      %3165 = vmatpush1.msra.mxu0 0.0
      %3166 = vmatprep.subr.mxu0 0.0
      %3167 = vmatpush1.msra.mxu0 0.0
      %3168 = vmatprep.subr.mxu0 0.0
      %3169 = vmatpush1.msra.mxu0 0.0
      %3170 = vmatprep.subr.mxu0 0.0
      %3171 = vmatpush1.msra.mxu0 0.0
      %3172 = vmatprep.subr.mxu0 0.0
      %3173 = vmatpush1.msra.mxu0 0.0
      %3174 = vmatprep.subr.mxu0 0.0
      %3175 = vmatpush1.msra.mxu0 0.0
      %3176 = vmatprep.subr.mxu0 0.0
      %3177 = vmatpush1.msra.mxu0 0.0
      %3178 = vmatprep.subr.mxu0 0.0
      %3179 = vmatpush1.msra.mxu0 0.0
      %3180 = vmatprep.subr.mxu0 0.0
      %3181 = vmatpush1.msra.mxu0 0.0
      %3182 = vmatprep.mubr.f32.mxu0 0.0
      %3183 = vmatmul.mubr.f32.gmra.mrb[0].mxu0 %v3116
      %v3184 = vpop.f32.mrb[0].mxu0
      %v3185 = vadd.f32 %v3113, %v3184
      %v3186 = vpop.f32.mrb[0].mxu0
      %3187 = vdwg.mxu0
      %v3188 = vmul.f32 %v3185, 0.5
      %v3189 = vmul.f32 %v3185, 0.70710677
      %vm3190 = vcmp.ge.f32.partialorder %v3189, 0.0
      %v3191 = vsel %vm3190, 1.0, -1.0
      %v3192 = vand.u32 2147483647, %v3189
      %v3193 = vmul.f32 %v3192, 0.3275911
      %v3194 = vadd.f32 %v3193, 1.0
      %v3195 = vrcp.pop %v3194
      %v3196 = vmul.f32 %v3195, 1.0614054
      %v3197 = vadd.f32 %v3196, -1.4531521
      %v3198 = vmul.f32 %v3195, %v3197
      %v3199 = vadd.f32 %v3198, 1.4214138
      %v3200 = vmul.f32 %v3195, %v3199
      %v3201 = vadd.f32 %v3200, -0.28449672
      %v3202 = vmul.f32 %v3195, %v3201
      %v3203 = vadd.f32 %v3202, 0.2548296
      %v3204 = vmul.f32 %v3195, %v3203
      %v3205 = vsub.f32 0.0, %v3192
      %v3206 = vmul.f32 %v3205, %v3192
      %v3207 = vmul.f32 %v3206, 1.442695
      %v3208 = vpow.pop %v3207
      %v3209 = vmul.f32 %v3204, %v3208
      %v3210 = vsub.f32 1.0, %v3209
      %v3211 = vmul.f32 %v3191, %v3210
      %v3212 = vadd.f32 %v3211, 1.0
      %v3213 = vmul.f32 %v3188, %v3212
      %s3214 = scalar_lea.vmem %s13, 128
      %v3215 = vld [vmem:[%s3214] sm:$0xff]
      %v3216 = vld [vmem:[%s3214 + $0x8] sm:$0xff]
      %v3217 = vld [vmem:[%s3214 + $0x10] sm:$0xff]
      %v3218 = vld [vmem:[%s3214 + $0x18] sm:$0xff]
      %v3219 = vld [vmem:[%s3214 + $0x20] sm:$0xff]
      %v3220 = vld [vmem:[%s3214 + $0x28] sm:$0xff]
      %v3221 = vld [vmem:[%s3214 + $0x30] sm:$0xff]
      %v3222 = vld [vmem:[%s3214 + $0x38] sm:$0xff]
      %v3223 = vld [vmem:[%s3214 + $0x40] sm:$0xff]
      %v3224 = vld [vmem:[%s3214 + $0x48] sm:$0xff]
      %v3225 = vld [vmem:[%s3214 + $0x50] sm:$0xff]
      %v3226 = vld [vmem:[%s3214 + $0x58] sm:$0xff]
      %v3227 = vld [vmem:[%s3214 + $0x60] sm:$0xff]
      %v3228 = vld [vmem:[%s3214 + $0x68] sm:$0xff]
      %v3229 = vld [vmem:[%s3214 + $0x70] sm:$0xff]
      %v3230 = vld [vmem:[%s3214 + $0x78] sm:$0xff]
      %3231 = vmatprep.subr.mxu0 0.0
      %3232 = vmatpush1.msra.mxu0 %v3215
      %3233 = vmatprep.subr.mxu0 0.0
      %3234 = vmatpush1.msra.mxu0 %v3216
      %3235 = vmatprep.subr.mxu0 0.0
      %3236 = vmatpush1.msra.mxu0 %v3217
      %3237 = vmatprep.subr.mxu0 0.0
      %3238 = vmatpush1.msra.mxu0 %v3218
      %3239 = vmatprep.subr.mxu0 0.0
      %3240 = vmatpush1.msra.mxu0 %v3219
      %3241 = vmatprep.subr.mxu0 0.0
      %3242 = vmatpush1.msra.mxu0 %v3220
      %3243 = vmatprep.subr.mxu0 0.0
      %3244 = vmatpush1.msra.mxu0 %v3221
      %3245 = vmatprep.subr.mxu0 0.0
      %3246 = vmatpush1.msra.mxu0 %v3222
      %3247 = vmatprep.subr.mxu0 0.0
      %3248 = vmatpush1.msra.mxu0 %v3223
      %3249 = vmatprep.subr.mxu0 0.0
      %3250 = vmatpush1.msra.mxu0 %v3224
      %3251 = vmatprep.subr.mxu0 0.0
      %3252 = vmatpush1.msra.mxu0 %v3225
      %3253 = vmatprep.subr.mxu0 0.0
      %3254 = vmatpush1.msra.mxu0 %v3226
      %3255 = vmatprep.subr.mxu0 0.0
      %3256 = vmatpush1.msra.mxu0 %v3227
      %3257 = vmatprep.subr.mxu0 0.0
      %3258 = vmatpush1.msra.mxu0 %v3228
      %3259 = vmatprep.subr.mxu0 0.0
      %3260 = vmatpush1.msra.mxu0 %v3229
      %3261 = vmatprep.subr.mxu0 0.0
      %3262 = vmatpush1.msra.mxu0 %v3230
      %3263 = vmatprep.subr.mxu0 0.0
      %3264 = vmatpush1.msra.mxu0 0.0
      %3265 = vmatprep.subr.mxu0 0.0
      %3266 = vmatpush1.msra.mxu0 0.0
      %3267 = vmatprep.subr.mxu0 0.0
      %3268 = vmatpush1.msra.mxu0 0.0
      %3269 = vmatprep.subr.mxu0 0.0
      %3270 = vmatpush1.msra.mxu0 0.0
      %3271 = vmatprep.subr.mxu0 0.0
      %3272 = vmatpush1.msra.mxu0 0.0
      %3273 = vmatprep.subr.mxu0 0.0
      %3274 = vmatpush1.msra.mxu0 0.0
      %3275 = vmatprep.subr.mxu0 0.0
      %3276 = vmatpush1.msra.mxu0 0.0
      %3277 = vmatprep.subr.mxu0 0.0
      %3278 = vmatpush1.msra.mxu0 0.0
      %3279 = vmatprep.subr.mxu0 0.0
      %3280 = vmatpush1.msra.mxu0 0.0
      %3281 = vmatprep.subr.mxu0 0.0
      %3282 = vmatpush1.msra.mxu0 0.0
      %3283 = vmatprep.subr.mxu0 0.0
      %3284 = vmatpush1.msra.mxu0 0.0
      %3285 = vmatprep.subr.mxu0 0.0
      %3286 = vmatpush1.msra.mxu0 0.0
      %3287 = vmatprep.subr.mxu0 0.0
      %3288 = vmatpush1.msra.mxu0 0.0
      %3289 = vmatprep.subr.mxu0 0.0
      %3290 = vmatpush1.msra.mxu0 0.0
      %3291 = vmatprep.subr.mxu0 0.0
      %3292 = vmatpush1.msra.mxu0 0.0
      %3293 = vmatprep.subr.mxu0 0.0
      %3294 = vmatpush1.msra.mxu0 0.0
      %3295 = vmatprep.mubr.f32.mxu0 0.0
      %3296 = vmatmul.mubr.f32.gmra.mrb[0].mxu0 %v3213
      %v3297 = vpop.f32.mrb[0].mxu0
      %v3298 = vadd.f32 0.0, %v3297
      %v3299 = vpop.f32.mrb[0].mxu0
      %3300 = vdwg.mxu0
      %v3301 = vadd.f32 %v3068, %v3298
      %s3302 = scalar_lea.vmem %s14, 1
      %v3303 = vld [vmem:[%s3302] sm:$0x1]
      %v3305 = vlaneseq
      %v3306 = vshrl.u32 %v3305, 7
      %v3307 = vsub.s32 0, %v3306
      %v3308 = vrot.slane %v3303, %v3307
      %v3310 = vadd.f32 %v3301, %v3308
      %s3311 = scalar_lea.vmem %s3, 2
      %v3312 = vld [vmem:[%s3311] sm:$0x1]
      %s3313 = scalar_lea.vmem %s4, 2
      %v3314 = vld [vmem:[%s3313] sm:$0x1]
      %v3315 = vsel %vm650, %v3310, 0.0
      %3316 = vadd.xlane.f32.xlu0 %v3315
      %v3317 = vpop.xlane.xlu0 %3316
      %v3318 = vmul.f32 %v3317, %v654
      %v3319 = vmul.f32 %v3310, %v3310
      %v3320 = vsel %vm650, %v3319, 0.0
      %3321 = vadd.xlane.f32.xlu0 %v3320
      %v3322 = vpop.xlane.xlu0 %3321
      %v3323 = vmul.f32 %v3322, %v654
      %v3324 = vmul.f32 %v3318, %v3318
      %v3325 = vsub.f32 %v3323, %v3324
      %v3326 = vsub.f32 %v3310, %v3318
      %v3327 = vadd.f32 %v3325, 1e-06
      %v3328 = vrsqrt.pop %v3327
      %v3329 = vmul.f32 %v3326, %v3328
      %v3331 = vlaneseq
      %v3332 = vshrl.u32 %v3331, 7
      %v3333 = vsub.s32 0, %v3332
      %v3334 = vrot.slane %v3312, %v3333
      %v3336 = vmul.f32 %v3329, %v3334
      %v3338 = vlaneseq
      %v3339 = vshrl.u32 %v3338, 7
      %v3340 = vsub.s32 0, %v3339
      %v3341 = vrot.slane %v3314, %v3340
      %v3343 = vadd.f32 %v3336, %v3341
      %s3344 = scalar_lea.vmem %s5, 64
      %v3345 = vld [vmem:[%s3344] sm:$0xff]
      %v3346 = vld [vmem:[%s3344 + $0x8] sm:$0xff]
      %v3347 = vld [vmem:[%s3344 + $0x10] sm:$0xff]
      %v3348 = vld [vmem:[%s3344 + $0x18] sm:$0xff]
      %s3349 = scalar_lea.vmem %s6, 2
      %v3350 = vld [vmem:[%s3349] sm:$0x1]
      %v3352 = vlaneseq
      %v3353 = vshrl.u32 %v3352, 7
      %v3354 = vsub.s32 0, %v3353
      %v3355 = vrot.slane %v3350, %v3354
      %v3358 = vsel %vm692, %v3343, 0
      %3360 = vmatprep.subr.mxu0 0.0
      %3361 = vmatpush1.msra.mxu0 %v3345
      %3362 = vmatprep.subr.mxu0 0.0
      %3363 = vmatpush1.msra.mxu0 %v3346
      %3364 = vmatprep.subr.mxu0 0.0
      %3365 = vmatpush1.msra.mxu0 %v3347
      %3366 = vmatprep.subr.mxu0 0.0
      %3367 = vmatpush1.msra.mxu0 %v3348
      %3368 = vmatprep.subr.mxu0 0.0
      %3369 = vmatpush1.msra.mxu0 0.0
      %3370 = vmatprep.subr.mxu0 0.0
      %3371 = vmatpush1.msra.mxu0 0.0
      %3372 = vmatprep.subr.mxu0 0.0
      %3373 = vmatpush1.msra.mxu0 0.0
      %3374 = vmatprep.subr.mxu0 0.0
      %3375 = vmatpush1.msra.mxu0 0.0
      %3376 = vmatprep.subr.mxu0 0.0
      %3377 = vmatpush1.msra.mxu0 0.0
      %3378 = vmatprep.subr.mxu0 0.0
      %3379 = vmatpush1.msra.mxu0 0.0
      %3380 = vmatprep.subr.mxu0 0.0
      %3381 = vmatpush1.msra.mxu0 0.0
      %3382 = vmatprep.subr.mxu0 0.0
      %3383 = vmatpush1.msra.mxu0 0.0
      %3384 = vmatprep.subr.mxu0 0.0
      %3385 = vmatpush1.msra.mxu0 0.0
      %3386 = vmatprep.subr.mxu0 0.0
      %3387 = vmatpush1.msra.mxu0 0.0
      %3388 = vmatprep.subr.mxu0 0.0
      %3389 = vmatpush1.msra.mxu0 0.0
      %3390 = vmatprep.subr.mxu0 0.0
      %3391 = vmatpush1.msra.mxu0 0.0
      %3392 = vmatprep.subr.mxu0 0.0
      %3393 = vmatpush1.msra.mxu0 0.0
      %3394 = vmatprep.subr.mxu0 0.0
      %3395 = vmatpush1.msra.mxu0 0.0
      %3396 = vmatprep.subr.mxu0 0.0
      %3397 = vmatpush1.msra.mxu0 0.0
      %3398 = vmatprep.subr.mxu0 0.0
      %3399 = vmatpush1.msra.mxu0 0.0
      %3400 = vmatprep.subr.mxu0 0.0
      %3401 = vmatpush1.msra.mxu0 0.0
      %3402 = vmatprep.subr.mxu0 0.0
      %3403 = vmatpush1.msra.mxu0 0.0
      %3404 = vmatprep.subr.mxu0 0.0
      %3405 = vmatpush1.msra.mxu0 0.0
      %3406 = vmatprep.subr.mxu0 0.0
      %3407 = vmatpush1.msra.mxu0 0.0
      %3408 = vmatprep.subr.mxu0 0.0
      %3409 = vmatpush1.msra.mxu0 0.0
      %3410 = vmatprep.subr.mxu0 0.0
      %3411 = vmatpush1.msra.mxu0 0.0
      %3412 = vmatprep.subr.mxu0 0.0
      %3413 = vmatpush1.msra.mxu0 0.0
      %3414 = vmatprep.subr.mxu0 0.0
      %3415 = vmatpush1.msra.mxu0 0.0
      %3416 = vmatprep.subr.mxu0 0.0
      %3417 = vmatpush1.msra.mxu0 0.0
      %3418 = vmatprep.subr.mxu0 0.0
      %3419 = vmatpush1.msra.mxu0 0.0
      %3420 = vmatprep.subr.mxu0 0.0
      %3421 = vmatpush1.msra.mxu0 0.0
      %3422 = vmatprep.subr.mxu0 0.0
      %3423 = vmatpush1.msra.mxu0 0.0
      %3424 = vmatprep.mubr.f32.mxu0 0.0
      %3425 = vmatmul.mubr.f32.gmra.mrb[0].mxu0 %v3358
      %v3426 = vpop.f32.mrb[0].mxu0
      %v3427 = vadd.f32 %v3355, %v3426
      %v3428 = vpop.f32.mrb[0].mxu0
      %3429 = vdwg.mxu0
      %3431 = vrot.lane.b32.xlu0 %v3427, 96
      %v3432 = vpop.permute.xlu0 %3431
      %v3433 = vsel %vm769, %v3427, 0
      %v3435 = vsel %vm769, %v3432, 0
      %3437 = vmatprep.subr.mxu0 0.0
      %3438 = vmatpush1.xpose.msra.mxu0 %v3435
      %3439 = vmatprep.subr.mxu0 0.0
      %3440 = vmatpush1.xpose.msra.mxu0 0.0
      %3441 = vmatprep.subr.mxu0 0.0
      %3442 = vmatpush1.xpose.msra.mxu0 0.0
      %3443 = vmatprep.subr.mxu0 0.0
      %3444 = vmatpush1.xpose.msra.mxu0 0.0
      %3445 = vmatprep.subr.mxu0 0.0
      %3446 = vmatpush1.xpose.msra.mxu0 0.0
      %3447 = vmatprep.subr.mxu0 0.0
      %3448 = vmatpush1.xpose.msra.mxu0 0.0
      %3449 = vmatprep.subr.mxu0 0.0
      %3450 = vmatpush1.xpose.msra.mxu0 0.0
      %3451 = vmatprep.subr.mxu0 0.0
      %3452 = vmatpush1.xpose.msra.mxu0 0.0
      %3453 = vmatprep.subr.mxu0 0.0
      %3454 = vmatpush1.xpose.msra.mxu0 0.0
      %3455 = vmatprep.subr.mxu0 0.0
      %3456 = vmatpush1.xpose.msra.mxu0 0.0
      %3457 = vmatprep.subr.mxu0 0.0
      %3458 = vmatpush1.xpose.msra.mxu0 0.0
      %3459 = vmatprep.subr.mxu0 0.0
      %3460 = vmatpush1.xpose.msra.mxu0 0.0
      %3461 = vmatprep.subr.mxu0 0.0
      %3462 = vmatpush1.xpose.msra.mxu0 0.0
      %3463 = vmatprep.subr.mxu0 0.0
      %3464 = vmatpush1.xpose.msra.mxu0 0.0
      %3465 = vmatprep.subr.mxu0 0.0
      %3466 = vmatpush1.xpose.msra.mxu0 0.0
      %3467 = vmatprep.subr.mxu0 0.0
      %3468 = vmatpush1.xpose.msra.mxu0 0.0
      %3469 = vmatprep.subr.mxu0 0.0
      %3470 = vmatpush1.xpose.msra.mxu0 0.0
      %3471 = vmatprep.subr.mxu0 0.0
      %3472 = vmatpush1.xpose.msra.mxu0 0.0
      %3473 = vmatprep.subr.mxu0 0.0
      %3474 = vmatpush1.xpose.msra.mxu0 0.0
      %3475 = vmatprep.subr.mxu0 0.0
      %3476 = vmatpush1.xpose.msra.mxu0 0.0
      %3477 = vmatprep.subr.mxu0 0.0
      %3478 = vmatpush1.xpose.msra.mxu0 0.0
      %3479 = vmatprep.subr.mxu0 0.0
      %3480 = vmatpush1.xpose.msra.mxu0 0.0
      %3481 = vmatprep.subr.mxu0 0.0
      %3482 = vmatpush1.xpose.msra.mxu0 0.0
      %3483 = vmatprep.subr.mxu0 0.0
      %3484 = vmatpush1.xpose.msra.mxu0 0.0
      %3485 = vmatprep.subr.mxu0 0.0
      %3486 = vmatpush1.xpose.msra.mxu0 0.0
      %3487 = vmatprep.subr.mxu0 0.0
      %3488 = vmatpush1.xpose.msra.mxu0 0.0
      %3489 = vmatprep.subr.mxu0 0.0
      %3490 = vmatpush1.xpose.msra.mxu0 0.0
      %3491 = vmatprep.subr.mxu0 0.0
      %3492 = vmatpush1.xpose.msra.mxu0 0.0
      %3493 = vmatprep.subr.mxu0 0.0
      %3494 = vmatpush1.xpose.msra.mxu0 0.0
      %3495 = vmatprep.subr.mxu0 0.0
      %3496 = vmatpush1.xpose.msra.mxu0 0.0
      %3497 = vmatprep.subr.mxu0 0.0
      %3498 = vmatpush1.xpose.msra.mxu0 0.0
      %3499 = vmatprep.subr.mxu0 0.0
      %3500 = vmatpush1.xpose.msra.mxu0 0.0
      %3501 = vmatprep.mubr.f32.mxu0 0.0
      %3502 = vmatmul.mubr.f32.gmra.mrb[0].mxu0 %v3433
      %v3503 = vpop.f32.mrb[0].mxu0
      %v3504 = vadd.f32 0.0, %v3503
      %v3505 = vpop.f32.mrb[0].mxu0
      %3506 = vdwg.mxu0
      %3507 = vrot.lane.b32.xlu0 %v3427, 120
      %v3508 = vpop.permute.xlu0 %3507
      %3509 = vrot.lane.b32.xlu0 %v3427, 88
      %v3510 = vpop.permute.xlu0 %3509
      %v3511 = vsel %vm769, %v3508, 0
      %v3513 = vsel %vm769, %v3510, 0
      %3515 = vmatprep.subr.mxu0 0.0
      %3516 = vmatpush1.xpose.msra.mxu0 %v3513
      %3517 = vmatprep.subr.mxu0 0.0
      %3518 = vmatpush1.xpose.msra.mxu0 0.0
      %3519 = vmatprep.subr.mxu0 0.0
      %3520 = vmatpush1.xpose.msra.mxu0 0.0
      %3521 = vmatprep.subr.mxu0 0.0
      %3522 = vmatpush1.xpose.msra.mxu0 0.0
      %3523 = vmatprep.subr.mxu0 0.0
      %3524 = vmatpush1.xpose.msra.mxu0 0.0
      %3525 = vmatprep.subr.mxu0 0.0
      %3526 = vmatpush1.xpose.msra.mxu0 0.0
      %3527 = vmatprep.subr.mxu0 0.0
      %3528 = vmatpush1.xpose.msra.mxu0 0.0
      %3529 = vmatprep.subr.mxu0 0.0
      %3530 = vmatpush1.xpose.msra.mxu0 0.0
      %3531 = vmatprep.subr.mxu0 0.0
      %3532 = vmatpush1.xpose.msra.mxu0 0.0
      %3533 = vmatprep.subr.mxu0 0.0
      %3534 = vmatpush1.xpose.msra.mxu0 0.0
      %3535 = vmatprep.subr.mxu0 0.0
      %3536 = vmatpush1.xpose.msra.mxu0 0.0
      %3537 = vmatprep.subr.mxu0 0.0
      %3538 = vmatpush1.xpose.msra.mxu0 0.0
      %3539 = vmatprep.subr.mxu0 0.0
      %3540 = vmatpush1.xpose.msra.mxu0 0.0
      %3541 = vmatprep.subr.mxu0 0.0
      %3542 = vmatpush1.xpose.msra.mxu0 0.0
      %3543 = vmatprep.subr.mxu0 0.0
      %3544 = vmatpush1.xpose.msra.mxu0 0.0
      %3545 = vmatprep.subr.mxu0 0.0
      %3546 = vmatpush1.xpose.msra.mxu0 0.0
      %3547 = vmatprep.subr.mxu0 0.0
      %3548 = vmatpush1.xpose.msra.mxu0 0.0
      %3549 = vmatprep.subr.mxu0 0.0
      %3550 = vmatpush1.xpose.msra.mxu0 0.0
      %3551 = vmatprep.subr.mxu0 0.0
      %3552 = vmatpush1.xpose.msra.mxu0 0.0
      %3553 = vmatprep.subr.mxu0 0.0
      %3554 = vmatpush1.xpose.msra.mxu0 0.0
      %3555 = vmatprep.subr.mxu0 0.0
      %3556 = vmatpush1.xpose.msra.mxu0 0.0
      %3557 = vmatprep.subr.mxu0 0.0
      %3558 = vmatpush1.xpose.msra.mxu0 0.0
      %3559 = vmatprep.subr.mxu0 0.0
      %3560 = vmatpush1.xpose.msra.mxu0 0.0
      %3561 = vmatprep.subr.mxu0 0.0
      %3562 = vmatpush1.xpose.msra.mxu0 0.0
      %3563 = vmatprep.subr.mxu0 0.0
      %3564 = vmatpush1.xpose.msra.mxu0 0.0
      %3565 = vmatprep.subr.mxu0 0.0
      %3566 = vmatpush1.xpose.msra.mxu0 0.0
      %3567 = vmatprep.subr.mxu0 0.0
      %3568 = vmatpush1.xpose.msra.mxu0 0.0
      %3569 = vmatprep.subr.mxu0 0.0
      %3570 = vmatpush1.xpose.msra.mxu0 0.0
      %3571 = vmatprep.subr.mxu0 0.0
      %3572 = vmatpush1.xpose.msra.mxu0 0.0
      %3573 = vmatprep.subr.mxu0 0.0
      %3574 = vmatpush1.xpose.msra.mxu0 0.0
      %3575 = vmatprep.subr.mxu0 0.0
      %3576 = vmatpush1.xpose.msra.mxu0 0.0
      %3577 = vmatprep.subr.mxu0 0.0
      %3578 = vmatpush1.xpose.msra.mxu0 0.0
      %3579 = vmatprep.mubr.f32.mxu0 0.0
      %3580 = vmatmul.mubr.f32.gmra.mrb[0].mxu0 %v3511
      %v3581 = vpop.f32.mrb[0].mxu0
      %v3582 = vadd.f32 0.0, %v3581
      %v3583 = vpop.f32.mrb[0].mxu0
      %3584 = vdwg.mxu0
      %3585 = vrot.lane.b32.xlu0 %v3427, 112
      %v3586 = vpop.permute.xlu0 %3585
      %3587 = vrot.lane.b32.xlu0 %v3427, 80
      %v3588 = vpop.permute.xlu0 %3587
      %v3589 = vsel %vm769, %v3586, 0
      %v3591 = vsel %vm769, %v3588, 0
      %3593 = vmatprep.subr.mxu0 0.0
      %3594 = vmatpush1.xpose.msra.mxu0 %v3591
      %3595 = vmatprep.subr.mxu0 0.0
      %3596 = vmatpush1.xpose.msra.mxu0 0.0
      %3597 = vmatprep.subr.mxu0 0.0
      %3598 = vmatpush1.xpose.msra.mxu0 0.0
      %3599 = vmatprep.subr.mxu0 0.0
      %3600 = vmatpush1.xpose.msra.mxu0 0.0
      %3601 = vmatprep.subr.mxu0 0.0
      %3602 = vmatpush1.xpose.msra.mxu0 0.0
      %3603 = vmatprep.subr.mxu0 0.0
      %3604 = vmatpush1.xpose.msra.mxu0 0.0
      %3605 = vmatprep.subr.mxu0 0.0
      %3606 = vmatpush1.xpose.msra.mxu0 0.0
      %3607 = vmatprep.subr.mxu0 0.0
      %3608 = vmatpush1.xpose.msra.mxu0 0.0
      %3609 = vmatprep.subr.mxu0 0.0
      %3610 = vmatpush1.xpose.msra.mxu0 0.0
      %3611 = vmatprep.subr.mxu0 0.0
      %3612 = vmatpush1.xpose.msra.mxu0 0.0
      %3613 = vmatprep.subr.mxu0 0.0
      %3614 = vmatpush1.xpose.msra.mxu0 0.0
      %3615 = vmatprep.subr.mxu0 0.0
      %3616 = vmatpush1.xpose.msra.mxu0 0.0
      %3617 = vmatprep.subr.mxu0 0.0
      %3618 = vmatpush1.xpose.msra.mxu0 0.0
      %3619 = vmatprep.subr.mxu0 0.0
      %3620 = vmatpush1.xpose.msra.mxu0 0.0
      %3621 = vmatprep.subr.mxu0 0.0
      %3622 = vmatpush1.xpose.msra.mxu0 0.0
      %3623 = vmatprep.subr.mxu0 0.0
      %3624 = vmatpush1.xpose.msra.mxu0 0.0
      %3625 = vmatprep.subr.mxu0 0.0
      %3626 = vmatpush1.xpose.msra.mxu0 0.0
      %3627 = vmatprep.subr.mxu0 0.0
      %3628 = vmatpush1.xpose.msra.mxu0 0.0
      %3629 = vmatprep.subr.mxu0 0.0
      %3630 = vmatpush1.xpose.msra.mxu0 0.0
      %3631 = vmatprep.subr.mxu0 0.0
      %3632 = vmatpush1.xpose.msra.mxu0 0.0
      %3633 = vmatprep.subr.mxu0 0.0
      %3634 = vmatpush1.xpose.msra.mxu0 0.0
      %3635 = vmatprep.subr.mxu0 0.0
      %3636 = vmatpush1.xpose.msra.mxu0 0.0
      %3637 = vmatprep.subr.mxu0 0.0
      %3638 = vmatpush1.xpose.msra.mxu0 0.0
      %3639 = vmatprep.subr.mxu0 0.0
      %3640 = vmatpush1.xpose.msra.mxu0 0.0
      %3641 = vmatprep.subr.mxu0 0.0
      %3642 = vmatpush1.xpose.msra.mxu0 0.0
      %3643 = vmatprep.subr.mxu0 0.0
      %3644 = vmatpush1.xpose.msra.mxu0 0.0
      %3645 = vmatprep.subr.mxu0 0.0
      %3646 = vmatpush1.xpose.msra.mxu0 0.0
      %3647 = vmatprep.subr.mxu0 0.0
      %3648 = vmatpush1.xpose.msra.mxu0 0.0
      %3649 = vmatprep.subr.mxu0 0.0
      %3650 = vmatpush1.xpose.msra.mxu0 0.0
      %3651 = vmatprep.subr.mxu0 0.0
      %3652 = vmatpush1.xpose.msra.mxu0 0.0
      %3653 = vmatprep.subr.mxu0 0.0
      %3654 = vmatpush1.xpose.msra.mxu0 0.0
      %3655 = vmatprep.subr.mxu0 0.0
      %3656 = vmatpush1.xpose.msra.mxu0 0.0
      %3657 = vmatprep.mubr.f32.mxu0 0.0
      %3658 = vmatmul.mubr.f32.gmra.mrb[0].mxu0 %v3589
      %v3659 = vpop.f32.mrb[0].mxu0
      %v3660 = vadd.f32 0.0, %v3659
      %v3661 = vpop.f32.mrb[0].mxu0
      %3662 = vdwg.mxu0
      %3663 = vrot.lane.b32.xlu0 %v3427, 104
      %v3664 = vpop.permute.xlu0 %3663
      %3665 = vrot.lane.b32.xlu0 %v3427, 72
      %v3666 = vpop.permute.xlu0 %3665
      %v3667 = vsel %vm769, %v3664, 0
      %v3669 = vsel %vm769, %v3666, 0
      %3671 = vmatprep.subr.mxu0 0.0
      %3672 = vmatpush1.xpose.msra.mxu0 %v3669
      %3673 = vmatprep.subr.mxu0 0.0
      %3674 = vmatpush1.xpose.msra.mxu0 0.0
      %3675 = vmatprep.subr.mxu0 0.0
      %3676 = vmatpush1.xpose.msra.mxu0 0.0
      %3677 = vmatprep.subr.mxu0 0.0
      %3678 = vmatpush1.xpose.msra.mxu0 0.0
      %3679 = vmatprep.subr.mxu0 0.0
      %3680 = vmatpush1.xpose.msra.mxu0 0.0
      %3681 = vmatprep.subr.mxu0 0.0
      %3682 = vmatpush1.xpose.msra.mxu0 0.0
      %3683 = vmatprep.subr.mxu0 0.0
      %3684 = vmatpush1.xpose.msra.mxu0 0.0
      %3685 = vmatprep.subr.mxu0 0.0
      %3686 = vmatpush1.xpose.msra.mxu0 0.0
      %3687 = vmatprep.subr.mxu0 0.0
      %3688 = vmatpush1.xpose.msra.mxu0 0.0
      %3689 = vmatprep.subr.mxu0 0.0
      %3690 = vmatpush1.xpose.msra.mxu0 0.0
      %3691 = vmatprep.subr.mxu0 0.0
      %3692 = vmatpush1.xpose.msra.mxu0 0.0
      %3693 = vmatprep.subr.mxu0 0.0
      %3694 = vmatpush1.xpose.msra.mxu0 0.0
      %3695 = vmatprep.subr.mxu0 0.0
      %3696 = vmatpush1.xpose.msra.mxu0 0.0
      %3697 = vmatprep.subr.mxu0 0.0
      %3698 = vmatpush1.xpose.msra.mxu0 0.0
      %3699 = vmatprep.subr.mxu0 0.0
      %3700 = vmatpush1.xpose.msra.mxu0 0.0
      %3701 = vmatprep.subr.mxu0 0.0
      %3702 = vmatpush1.xpose.msra.mxu0 0.0
      %3703 = vmatprep.subr.mxu0 0.0
      %3704 = vmatpush1.xpose.msra.mxu0 0.0
      %3705 = vmatprep.subr.mxu0 0.0
      %3706 = vmatpush1.xpose.msra.mxu0 0.0
      %3707 = vmatprep.subr.mxu0 0.0
      %3708 = vmatpush1.xpose.msra.mxu0 0.0
      %3709 = vmatprep.subr.mxu0 0.0
      %3710 = vmatpush1.xpose.msra.mxu0 0.0
      %3711 = vmatprep.subr.mxu0 0.0
      %3712 = vmatpush1.xpose.msra.mxu0 0.0
      %3713 = vmatprep.subr.mxu0 0.0
      %3714 = vmatpush1.xpose.msra.mxu0 0.0
      %3715 = vmatprep.subr.mxu0 0.0
      %3716 = vmatpush1.xpose.msra.mxu0 0.0
      %3717 = vmatprep.subr.mxu0 0.0
      %3718 = vmatpush1.xpose.msra.mxu0 0.0
      %3719 = vmatprep.subr.mxu0 0.0
      %3720 = vmatpush1.xpose.msra.mxu0 0.0
      %3721 = vmatprep.subr.mxu0 0.0
      %3722 = vmatpush1.xpose.msra.mxu0 0.0
      %3723 = vmatprep.subr.mxu0 0.0
      %3724 = vmatpush1.xpose.msra.mxu0 0.0
      %3725 = vmatprep.subr.mxu0 0.0
      %3726 = vmatpush1.xpose.msra.mxu0 0.0
      %3727 = vmatprep.subr.mxu0 0.0
      %3728 = vmatpush1.xpose.msra.mxu0 0.0
      %3729 = vmatprep.subr.mxu0 0.0
      %3730 = vmatpush1.xpose.msra.mxu0 0.0
      %3731 = vmatprep.subr.mxu0 0.0
      %3732 = vmatpush1.xpose.msra.mxu0 0.0
      %3733 = vmatprep.subr.mxu0 0.0
      %3734 = vmatpush1.xpose.msra.mxu0 0.0
      %3735 = vmatprep.mubr.f32.mxu0 0.0
      %3736 = vmatmul.mubr.f32.gmra.mrb[0].mxu0 %v3667
      %v3737 = vpop.f32.mrb[0].mxu0
      %v3738 = vadd.f32 0.0, %v3737
      %v3739 = vpop.f32.mrb[0].mxu0
      %3740 = vdwg.mxu0
      %v3741 = vsel %vm1078, %v3504, -inf
      %3742 = vmax.xlane.f32.xlu0 %v3741
      %v3743 = vpop.xlane.xlu0 %3742
      %v3744 = vsel %vm1078, %v3582, -inf
      %3745 = vmax.xlane.f32.xlu0 %v3744
      %v3746 = vpop.xlane.xlu0 %3745
      %v3747 = vsel %vm1078, %v3660, -inf
      %3748 = vmax.xlane.f32.xlu0 %v3747
      %v3749 = vpop.xlane.xlu0 %3748
      %v3750 = vsel %vm1078, %v3738, -inf
      %3751 = vmax.xlane.f32.xlu0 %v3750
      %v3752 = vpop.xlane.xlu0 %3751
      %v3753 = vsub.f32 %v3504, %v3743
      %v3754 = vsub.f32 %v3582, %v3746
      %v3755 = vsub.f32 %v3660, %v3749
      %v3756 = vsub.f32 %v3738, %v3752
      %v3757 = vmul.f32 %v3753, 1.442695
      %v3758 = vpow.pop %v3757
      %v3759 = vmul.f32 %v3754, 1.442695
      %v3760 = vpow.pop %v3759
      %v3761 = vmul.f32 %v3755, 1.442695
      %v3762 = vpow.pop %v3761
      %v3763 = vmul.f32 %v3756, 1.442695
      %v3764 = vpow.pop %v3763
      %v3765 = vsel %vm1078, %v3758, 0.0
      %3766 = vadd.xlane.f32.xlu0 %v3765
      %v3767 = vpop.xlane.xlu0 %3766
      %v3768 = vsel %vm1078, %v3760, 0.0
      %3769 = vadd.xlane.f32.xlu0 %v3768
      %v3770 = vpop.xlane.xlu0 %3769
      %v3771 = vsel %vm1078, %v3762, 0.0
      %3772 = vadd.xlane.f32.xlu0 %v3771
      %v3773 = vpop.xlane.xlu0 %3772
      %v3774 = vsel %vm1078, %v3764, 0.0
      %3775 = vadd.xlane.f32.xlu0 %v3774
      %v3776 = vpop.xlane.xlu0 %3775
      %v3777 = vrcp.pop %v3767
      %v3778 = vrcp.pop %v3770
      %v3779 = vrcp.pop %v3773
      %v3780 = vrcp.pop %v3776
      %v3781 = vmul.f32 %v3758, %v3777
      %v3782 = vmul.f32 %v3760, %v3778
      %v3783 = vmul.f32 %v3762, %v3779
      %v3784 = vmul.f32 %v3764, %v3780
      %s3785 = scalar_lea.vmem %s7, 64
      %v3786 = vld [vmem:[%s3785] sm:$0xff]
      %v3787 = vld [vmem:[%s3785 + $0x8] sm:$0xff]
      %v3788 = vld [vmem:[%s3785 + $0x10] sm:$0xff]
      %v3789 = vld [vmem:[%s3785 + $0x18] sm:$0xff]
      %s3790 = scalar_lea.vmem %s8, 2
      %v3791 = vld [vmem:[%s3790] sm:$0x1]
      %3792 = vrot.lane.b32.xlu0 %v3427, 64
      %v3793 = vpop.permute.xlu0 %3792
      %v3795 = vsel %vm1130, %v3781, 0
      %v3797 = vsel %vm1134, %v3793, 0
      %3799 = vmatprep.subr.mxu0 0.0
      %3800 = vmatpush1.msra.mxu0 %v3797
      %3801 = vmatprep.subr.mxu0 0.0
      %3802 = vmatpush1.msra.mxu0 0.0
      %3803 = vmatprep.subr.mxu0 0.0
      %3804 = vmatpush1.msra.mxu0 0.0
      %3805 = vmatprep.subr.mxu0 0.0
      %3806 = vmatpush1.msra.mxu0 0.0
      %3807 = vmatprep.subr.mxu0 0.0
      %3808 = vmatpush1.msra.mxu0 0.0
      %3809 = vmatprep.subr.mxu0 0.0
      %3810 = vmatpush1.msra.mxu0 0.0
      %3811 = vmatprep.subr.mxu0 0.0
      %3812 = vmatpush1.msra.mxu0 0.0
      %3813 = vmatprep.subr.mxu0 0.0
      %3814 = vmatpush1.msra.mxu0 0.0
      %3815 = vmatprep.subr.mxu0 0.0
      %3816 = vmatpush1.msra.mxu0 0.0
      %3817 = vmatprep.subr.mxu0 0.0
      %3818 = vmatpush1.msra.mxu0 0.0
      %3819 = vmatprep.subr.mxu0 0.0
      %3820 = vmatpush1.msra.mxu0 0.0
      %3821 = vmatprep.subr.mxu0 0.0
      %3822 = vmatpush1.msra.mxu0 0.0
      %3823 = vmatprep.subr.mxu0 0.0
      %3824 = vmatpush1.msra.mxu0 0.0
      %3825 = vmatprep.subr.mxu0 0.0
      %3826 = vmatpush1.msra.mxu0 0.0
      %3827 = vmatprep.subr.mxu0 0.0
      %3828 = vmatpush1.msra.mxu0 0.0
      %3829 = vmatprep.subr.mxu0 0.0
      %3830 = vmatpush1.msra.mxu0 0.0
      %3831 = vmatprep.subr.mxu0 0.0
      %3832 = vmatpush1.msra.mxu0 0.0
      %3833 = vmatprep.subr.mxu0 0.0
      %3834 = vmatpush1.msra.mxu0 0.0
      %3835 = vmatprep.subr.mxu0 0.0
      %3836 = vmatpush1.msra.mxu0 0.0
      %3837 = vmatprep.subr.mxu0 0.0
      %3838 = vmatpush1.msra.mxu0 0.0
      %3839 = vmatprep.subr.mxu0 0.0
      %3840 = vmatpush1.msra.mxu0 0.0
      %3841 = vmatprep.subr.mxu0 0.0
      %3842 = vmatpush1.msra.mxu0 0.0
      %3843 = vmatprep.subr.mxu0 0.0
      %3844 = vmatpush1.msra.mxu0 0.0
      %3845 = vmatprep.subr.mxu0 0.0
      %3846 = vmatpush1.msra.mxu0 0.0
      %3847 = vmatprep.subr.mxu0 0.0
      %3848 = vmatpush1.msra.mxu0 0.0
      %3849 = vmatprep.subr.mxu0 0.0
      %3850 = vmatpush1.msra.mxu0 0.0
      %3851 = vmatprep.subr.mxu0 0.0
      %3852 = vmatpush1.msra.mxu0 0.0
      %3853 = vmatprep.subr.mxu0 0.0
      %3854 = vmatpush1.msra.mxu0 0.0
      %3855 = vmatprep.subr.mxu0 0.0
      %3856 = vmatpush1.msra.mxu0 0.0
      %3857 = vmatprep.subr.mxu0 0.0
      %3858 = vmatpush1.msra.mxu0 0.0
      %3859 = vmatprep.subr.mxu0 0.0
      %3860 = vmatpush1.msra.mxu0 0.0
      %3861 = vmatprep.subr.mxu0 0.0
      %3862 = vmatpush1.msra.mxu0 0.0
      %3863 = vmatprep.mubr.f32.mxu0 0.0
      %3864 = vmatmul.mubr.f32.gmra.mrb[0].mxu0 %v3795
      %v3865 = vpop.f32.mrb[0].mxu0
      %v3866 = vadd.f32 0.0, %v3865
      %v3867 = vpop.f32.mrb[0].mxu0
      %3868 = vdwg.mxu0
      %v3870 = vsel %vm769, %v3866, 0
      %3872 = vmatprep.subr.mxu0 0.0
      %3873 = vmatpush1.msra.mxu0 %v3786
      %3874 = vmatprep.subr.mxu0 0.0
      %3875 = vmatpush1.msra.mxu0 0.0
      %3876 = vmatprep.subr.mxu0 0.0
      %3877 = vmatpush1.msra.mxu0 0.0
      %3878 = vmatprep.subr.mxu0 0.0
      %3879 = vmatpush1.msra.mxu0 0.0
      %3880 = vmatprep.subr.mxu0 0.0
      %3881 = vmatpush1.msra.mxu0 0.0
      %3882 = vmatprep.subr.mxu0 0.0
      %3883 = vmatpush1.msra.mxu0 0.0
      %3884 = vmatprep.subr.mxu0 0.0
      %3885 = vmatpush1.msra.mxu0 0.0
      %3886 = vmatprep.subr.mxu0 0.0
      %3887 = vmatpush1.msra.mxu0 0.0
      %3888 = vmatprep.subr.mxu0 0.0
      %3889 = vmatpush1.msra.mxu0 0.0
      %3890 = vmatprep.subr.mxu0 0.0
      %3891 = vmatpush1.msra.mxu0 0.0
      %3892 = vmatprep.subr.mxu0 0.0
      %3893 = vmatpush1.msra.mxu0 0.0
      %3894 = vmatprep.subr.mxu0 0.0
      %3895 = vmatpush1.msra.mxu0 0.0
      %3896 = vmatprep.subr.mxu0 0.0
      %3897 = vmatpush1.msra.mxu0 0.0
      %3898 = vmatprep.subr.mxu0 0.0
      %3899 = vmatpush1.msra.mxu0 0.0
      %3900 = vmatprep.subr.mxu0 0.0
      %3901 = vmatpush1.msra.mxu0 0.0
      %3902 = vmatprep.subr.mxu0 0.0
      %3903 = vmatpush1.msra.mxu0 0.0
      %3904 = vmatprep.subr.mxu0 0.0
      %3905 = vmatpush1.msra.mxu0 0.0
      %3906 = vmatprep.subr.mxu0 0.0
      %3907 = vmatpush1.msra.mxu0 0.0
      %3908 = vmatprep.subr.mxu0 0.0
      %3909 = vmatpush1.msra.mxu0 0.0
      %3910 = vmatprep.subr.mxu0 0.0
      %3911 = vmatpush1.msra.mxu0 0.0
      %3912 = vmatprep.subr.mxu0 0.0
      %3913 = vmatpush1.msra.mxu0 0.0
      %3914 = vmatprep.subr.mxu0 0.0
      %3915 = vmatpush1.msra.mxu0 0.0
      %3916 = vmatprep.subr.mxu0 0.0
      %3917 = vmatpush1.msra.mxu0 0.0
      %3918 = vmatprep.subr.mxu0 0.0
      %3919 = vmatpush1.msra.mxu0 0.0
      %3920 = vmatprep.subr.mxu0 0.0
      %3921 = vmatpush1.msra.mxu0 0.0
      %3922 = vmatprep.subr.mxu0 0.0
      %3923 = vmatpush1.msra.mxu0 0.0
      %3924 = vmatprep.subr.mxu0 0.0
      %3925 = vmatpush1.msra.mxu0 0.0
      %3926 = vmatprep.subr.mxu0 0.0
      %3927 = vmatpush1.msra.mxu0 0.0
      %3928 = vmatprep.subr.mxu0 0.0
      %3929 = vmatpush1.msra.mxu0 0.0
      %3930 = vmatprep.subr.mxu0 0.0
      %3931 = vmatpush1.msra.mxu0 0.0
      %3932 = vmatprep.subr.mxu0 0.0
      %3933 = vmatpush1.msra.mxu0 0.0
      %3934 = vmatprep.subr.mxu0 0.0
      %3935 = vmatpush1.msra.mxu0 0.0
      %3936 = vmatprep.mubr.f32.mxu0 0.0
      %3937 = vmatmul.mubr.f32.gmra.mrb[0].mxu0 %v3870
      %v3938 = vpop.f32.mrb[0].mxu0
      %v3939 = vadd.f32 0.0, %v3938
      %v3940 = vpop.f32.mrb[0].mxu0
      %3941 = vdwg.mxu0
      %v3943 = vlaneseq
      %v3944 = vshrl.u32 %v3943, 7
      %v3945 = vsub.s32 0, %v3944
      %v3946 = vrot.slane %v3791, %v3945
      %v3948 = vadd.f32 %v3946, %v3939
      %3949 = vrot.lane.b32.xlu0 %v3427, 56
      %v3950 = vpop.permute.xlu0 %3949
      %v3952 = vsel %vm1130, %v3782, 0
      %v3954 = vsel %vm1134, %v3950, 0
      %3956 = vmatprep.subr.mxu0 0.0
      %3957 = vmatpush1.msra.mxu0 %v3954
      %3958 = vmatprep.subr.mxu0 0.0
      %3959 = vmatpush1.msra.mxu0 0.0
      %3960 = vmatprep.subr.mxu0 0.0
      %3961 = vmatpush1.msra.mxu0 0.0
      %3962 = vmatprep.subr.mxu0 0.0
      %3963 = vmatpush1.msra.mxu0 0.0
      %3964 = vmatprep.subr.mxu0 0.0
      %3965 = vmatpush1.msra.mxu0 0.0
      %3966 = vmatprep.subr.mxu0 0.0
      %3967 = vmatpush1.msra.mxu0 0.0
      %3968 = vmatprep.subr.mxu0 0.0
      %3969 = vmatpush1.msra.mxu0 0.0
      %3970 = vmatprep.subr.mxu0 0.0
      %3971 = vmatpush1.msra.mxu0 0.0
      %3972 = vmatprep.subr.mxu0 0.0
      %3973 = vmatpush1.msra.mxu0 0.0
      %3974 = vmatprep.subr.mxu0 0.0
      %3975 = vmatpush1.msra.mxu0 0.0
      %3976 = vmatprep.subr.mxu0 0.0
      %3977 = vmatpush1.msra.mxu0 0.0
      %3978 = vmatprep.subr.mxu0 0.0
      %3979 = vmatpush1.msra.mxu0 0.0
      %3980 = vmatprep.subr.mxu0 0.0
      %3981 = vmatpush1.msra.mxu0 0.0
      %3982 = vmatprep.subr.mxu0 0.0
      %3983 = vmatpush1.msra.mxu0 0.0
      %3984 = vmatprep.subr.mxu0 0.0
      %3985 = vmatpush1.msra.mxu0 0.0
      %3986 = vmatprep.subr.mxu0 0.0
      %3987 = vmatpush1.msra.mxu0 0.0
      %3988 = vmatprep.subr.mxu0 0.0
      %3989 = vmatpush1.msra.mxu0 0.0
      %3990 = vmatprep.subr.mxu0 0.0
      %3991 = vmatpush1.msra.mxu0 0.0
      %3992 = vmatprep.subr.mxu0 0.0
      %3993 = vmatpush1.msra.mxu0 0.0
      %3994 = vmatprep.subr.mxu0 0.0
      %3995 = vmatpush1.msra.mxu0 0.0
      %3996 = vmatprep.subr.mxu0 0.0
      %3997 = vmatpush1.msra.mxu0 0.0
      %3998 = vmatprep.subr.mxu0 0.0
      %3999 = vmatpush1.msra.mxu0 0.0
      %4000 = vmatprep.subr.mxu0 0.0
      %4001 = vmatpush1.msra.mxu0 0.0
      %4002 = vmatprep.subr.mxu0 0.0
      %4003 = vmatpush1.msra.mxu0 0.0
      %4004 = vmatprep.subr.mxu0 0.0
      %4005 = vmatpush1.msra.mxu0 0.0
      %4006 = vmatprep.subr.mxu0 0.0
      %4007 = vmatpush1.msra.mxu0 0.0
      %4008 = vmatprep.subr.mxu0 0.0
      %4009 = vmatpush1.msra.mxu0 0.0
      %4010 = vmatprep.subr.mxu0 0.0
      %4011 = vmatpush1.msra.mxu0 0.0
      %4012 = vmatprep.subr.mxu0 0.0
      %4013 = vmatpush1.msra.mxu0 0.0
      %4014 = vmatprep.subr.mxu0 0.0
      %4015 = vmatpush1.msra.mxu0 0.0
      %4016 = vmatprep.subr.mxu0 0.0
      %4017 = vmatpush1.msra.mxu0 0.0
      %4018 = vmatprep.subr.mxu0 0.0
      %4019 = vmatpush1.msra.mxu0 0.0
      %4020 = vmatprep.mubr.f32.mxu0 0.0
      %4021 = vmatmul.mubr.f32.gmra.mrb[0].mxu0 %v3952
      %v4022 = vpop.f32.mrb[0].mxu0
      %v4023 = vadd.f32 0.0, %v4022
      %v4024 = vpop.f32.mrb[0].mxu0
      %4025 = vdwg.mxu0
      %v4027 = vsel %vm769, %v4023, 0
      %4029 = vmatprep.subr.mxu0 0.0
      %4030 = vmatpush1.msra.mxu0 %v3787
      %4031 = vmatprep.subr.mxu0 0.0
      %4032 = vmatpush1.msra.mxu0 0.0
      %4033 = vmatprep.subr.mxu0 0.0
      %4034 = vmatpush1.msra.mxu0 0.0
      %4035 = vmatprep.subr.mxu0 0.0
      %4036 = vmatpush1.msra.mxu0 0.0
      %4037 = vmatprep.subr.mxu0 0.0
      %4038 = vmatpush1.msra.mxu0 0.0
      %4039 = vmatprep.subr.mxu0 0.0
      %4040 = vmatpush1.msra.mxu0 0.0
      %4041 = vmatprep.subr.mxu0 0.0
      %4042 = vmatpush1.msra.mxu0 0.0
      %4043 = vmatprep.subr.mxu0 0.0
      %4044 = vmatpush1.msra.mxu0 0.0
      %4045 = vmatprep.subr.mxu0 0.0
      %4046 = vmatpush1.msra.mxu0 0.0
      %4047 = vmatprep.subr.mxu0 0.0
      %4048 = vmatpush1.msra.mxu0 0.0
      %4049 = vmatprep.subr.mxu0 0.0
      %4050 = vmatpush1.msra.mxu0 0.0
      %4051 = vmatprep.subr.mxu0 0.0
      %4052 = vmatpush1.msra.mxu0 0.0
      %4053 = vmatprep.subr.mxu0 0.0
      %4054 = vmatpush1.msra.mxu0 0.0
      %4055 = vmatprep.subr.mxu0 0.0
      %4056 = vmatpush1.msra.mxu0 0.0
      %4057 = vmatprep.subr.mxu0 0.0
      %4058 = vmatpush1.msra.mxu0 0.0
      %4059 = vmatprep.subr.mxu0 0.0
      %4060 = vmatpush1.msra.mxu0 0.0
      %4061 = vmatprep.subr.mxu0 0.0
      %4062 = vmatpush1.msra.mxu0 0.0
      %4063 = vmatprep.subr.mxu0 0.0
      %4064 = vmatpush1.msra.mxu0 0.0
      %4065 = vmatprep.subr.mxu0 0.0
      %4066 = vmatpush1.msra.mxu0 0.0
      %4067 = vmatprep.subr.mxu0 0.0
      %4068 = vmatpush1.msra.mxu0 0.0
      %4069 = vmatprep.subr.mxu0 0.0
      %4070 = vmatpush1.msra.mxu0 0.0
      %4071 = vmatprep.subr.mxu0 0.0
      %4072 = vmatpush1.msra.mxu0 0.0
      %4073 = vmatprep.subr.mxu0 0.0
      %4074 = vmatpush1.msra.mxu0 0.0
      %4075 = vmatprep.subr.mxu0 0.0
      %4076 = vmatpush1.msra.mxu0 0.0
      %4077 = vmatprep.subr.mxu0 0.0
      %4078 = vmatpush1.msra.mxu0 0.0
      %4079 = vmatprep.subr.mxu0 0.0
      %4080 = vmatpush1.msra.mxu0 0.0
      %4081 = vmatprep.subr.mxu0 0.0
      %4082 = vmatpush1.msra.mxu0 0.0
      %4083 = vmatprep.subr.mxu0 0.0
      %4084 = vmatpush1.msra.mxu0 0.0
      %4085 = vmatprep.subr.mxu0 0.0
      %4086 = vmatpush1.msra.mxu0 0.0
      %4087 = vmatprep.subr.mxu0 0.0
      %4088 = vmatpush1.msra.mxu0 0.0
      %4089 = vmatprep.subr.mxu0 0.0
      %4090 = vmatpush1.msra.mxu0 0.0
      %4091 = vmatprep.subr.mxu0 0.0
      %4092 = vmatpush1.msra.mxu0 0.0
      %4093 = vmatprep.mubr.f32.mxu0 0.0
      %4094 = vmatmul.mubr.f32.gmra.mrb[0].mxu0 %v4027
      %v4095 = vpop.f32.mrb[0].mxu0
      %v4096 = vadd.f32 0.0, %v4095
      %v4097 = vpop.f32.mrb[0].mxu0
      %4098 = vdwg.mxu0
      %v4099 = vadd.f32 %v3948, %v4096
      %4100 = vrot.lane.b32.xlu0 %v3427, 48
      %v4101 = vpop.permute.xlu0 %4100
      %v4103 = vsel %vm1130, %v3783, 0
      %v4105 = vsel %vm1134, %v4101, 0
      %4107 = vmatprep.subr.mxu0 0.0
      %4108 = vmatpush1.msra.mxu0 %v4105
      %4109 = vmatprep.subr.mxu0 0.0
      %4110 = vmatpush1.msra.mxu0 0.0
      %4111 = vmatprep.subr.mxu0 0.0
      %4112 = vmatpush1.msra.mxu0 0.0
      %4113 = vmatprep.subr.mxu0 0.0
      %4114 = vmatpush1.msra.mxu0 0.0
      %4115 = vmatprep.subr.mxu0 0.0
      %4116 = vmatpush1.msra.mxu0 0.0
      %4117 = vmatprep.subr.mxu0 0.0
      %4118 = vmatpush1.msra.mxu0 0.0
      %4119 = vmatprep.subr.mxu0 0.0
      %4120 = vmatpush1.msra.mxu0 0.0
      %4121 = vmatprep.subr.mxu0 0.0
      %4122 = vmatpush1.msra.mxu0 0.0
      %4123 = vmatprep.subr.mxu0 0.0
      %4124 = vmatpush1.msra.mxu0 0.0
      %4125 = vmatprep.subr.mxu0 0.0
      %4126 = vmatpush1.msra.mxu0 0.0
      %4127 = vmatprep.subr.mxu0 0.0
      %4128 = vmatpush1.msra.mxu0 0.0
      %4129 = vmatprep.subr.mxu0 0.0
      %4130 = vmatpush1.msra.mxu0 0.0
      %4131 = vmatprep.subr.mxu0 0.0
      %4132 = vmatpush1.msra.mxu0 0.0
      %4133 = vmatprep.subr.mxu0 0.0
      %4134 = vmatpush1.msra.mxu0 0.0
      %4135 = vmatprep.subr.mxu0 0.0
      %4136 = vmatpush1.msra.mxu0 0.0
      %4137 = vmatprep.subr.mxu0 0.0
      %4138 = vmatpush1.msra.mxu0 0.0
      %4139 = vmatprep.subr.mxu0 0.0
      %4140 = vmatpush1.msra.mxu0 0.0
      %4141 = vmatprep.subr.mxu0 0.0
      %4142 = vmatpush1.msra.mxu0 0.0
      %4143 = vmatprep.subr.mxu0 0.0
      %4144 = vmatpush1.msra.mxu0 0.0
      %4145 = vmatprep.subr.mxu0 0.0
      %4146 = vmatpush1.msra.mxu0 0.0
      %4147 = vmatprep.subr.mxu0 0.0
      %4148 = vmatpush1.msra.mxu0 0.0
      %4149 = vmatprep.subr.mxu0 0.0
      %4150 = vmatpush1.msra.mxu0 0.0
      %4151 = vmatprep.subr.mxu0 0.0
      %4152 = vmatpush1.msra.mxu0 0.0
      %4153 = vmatprep.subr.mxu0 0.0
      %4154 = vmatpush1.msra.mxu0 0.0
      %4155 = vmatprep.subr.mxu0 0.0
      %4156 = vmatpush1.msra.mxu0 0.0
      %4157 = vmatprep.subr.mxu0 0.0
      %4158 = vmatpush1.msra.mxu0 0.0
      %4159 = vmatprep.subr.mxu0 0.0
      %4160 = vmatpush1.msra.mxu0 0.0
      %4161 = vmatprep.subr.mxu0 0.0
      %4162 = vmatpush1.msra.mxu0 0.0
      %4163 = vmatprep.subr.mxu0 0.0
      %4164 = vmatpush1.msra.mxu0 0.0
      %4165 = vmatprep.subr.mxu0 0.0
      %4166 = vmatpush1.msra.mxu0 0.0
      %4167 = vmatprep.subr.mxu0 0.0
      %4168 = vmatpush1.msra.mxu0 0.0
      %4169 = vmatprep.subr.mxu0 0.0
      %4170 = vmatpush1.msra.mxu0 0.0
      %4171 = vmatprep.mubr.f32.mxu0 0.0
      %4172 = vmatmul.mubr.f32.gmra.mrb[0].mxu0 %v4103
      %v4173 = vpop.f32.mrb[0].mxu0
      %v4174 = vadd.f32 0.0, %v4173
      %v4175 = vpop.f32.mrb[0].mxu0
      %4176 = vdwg.mxu0
      %v4178 = vsel %vm769, %v4174, 0
      %4180 = vmatprep.subr.mxu0 0.0
      %4181 = vmatpush1.msra.mxu0 %v3788
      %4182 = vmatprep.subr.mxu0 0.0
      %4183 = vmatpush1.msra.mxu0 0.0
      %4184 = vmatprep.subr.mxu0 0.0
      %4185 = vmatpush1.msra.mxu0 0.0
      %4186 = vmatprep.subr.mxu0 0.0
      %4187 = vmatpush1.msra.mxu0 0.0
      %4188 = vmatprep.subr.mxu0 0.0
      %4189 = vmatpush1.msra.mxu0 0.0
      %4190 = vmatprep.subr.mxu0 0.0
      %4191 = vmatpush1.msra.mxu0 0.0
      %4192 = vmatprep.subr.mxu0 0.0
      %4193 = vmatpush1.msra.mxu0 0.0
      %4194 = vmatprep.subr.mxu0 0.0
      %4195 = vmatpush1.msra.mxu0 0.0
      %4196 = vmatprep.subr.mxu0 0.0
      %4197 = vmatpush1.msra.mxu0 0.0
      %4198 = vmatprep.subr.mxu0 0.0
      %4199 = vmatpush1.msra.mxu0 0.0
      %4200 = vmatprep.subr.mxu0 0.0
      %4201 = vmatpush1.msra.mxu0 0.0
      %4202 = vmatprep.subr.mxu0 0.0
      %4203 = vmatpush1.msra.mxu0 0.0
      %4204 = vmatprep.subr.mxu0 0.0
      %4205 = vmatpush1.msra.mxu0 0.0
      %4206 = vmatprep.subr.mxu0 0.0
      %4207 = vmatpush1.msra.mxu0 0.0
      %4208 = vmatprep.subr.mxu0 0.0
      %4209 = vmatpush1.msra.mxu0 0.0
      %4210 = vmatprep.subr.mxu0 0.0
      %4211 = vmatpush1.msra.mxu0 0.0
      %4212 = vmatprep.subr.mxu0 0.0
      %4213 = vmatpush1.msra.mxu0 0.0
      %4214 = vmatprep.subr.mxu0 0.0
      %4215 = vmatpush1.msra.mxu0 0.0
      %4216 = vmatprep.subr.mxu0 0.0
      %4217 = vmatpush1.msra.mxu0 0.0
      %4218 = vmatprep.subr.mxu0 0.0
      %4219 = vmatpush1.msra.mxu0 0.0
      %4220 = vmatprep.subr.mxu0 0.0
      %4221 = vmatpush1.msra.mxu0 0.0
      %4222 = vmatprep.subr.mxu0 0.0
      %4223 = vmatpush1.msra.mxu0 0.0
      %4224 = vmatprep.subr.mxu0 0.0
      %4225 = vmatpush1.msra.mxu0 0.0
      %4226 = vmatprep.subr.mxu0 0.0
      %4227 = vmatpush1.msra.mxu0 0.0
      %4228 = vmatprep.subr.mxu0 0.0
      %4229 = vmatpush1.msra.mxu0 0.0
      %4230 = vmatprep.subr.mxu0 0.0
      %4231 = vmatpush1.msra.mxu0 0.0
      %4232 = vmatprep.subr.mxu0 0.0
      %4233 = vmatpush1.msra.mxu0 0.0
      %4234 = vmatprep.subr.mxu0 0.0
      %4235 = vmatpush1.msra.mxu0 0.0
      %4236 = vmatprep.subr.mxu0 0.0
      %4237 = vmatpush1.msra.mxu0 0.0
      %4238 = vmatprep.subr.mxu0 0.0
      %4239 = vmatpush1.msra.mxu0 0.0
      %4240 = vmatprep.subr.mxu0 0.0
      %4241 = vmatpush1.msra.mxu0 0.0
      %4242 = vmatprep.subr.mxu0 0.0
      %4243 = vmatpush1.msra.mxu0 0.0
      %4244 = vmatprep.mubr.f32.mxu0 0.0
      %4245 = vmatmul.mubr.f32.gmra.mrb[0].mxu0 %v4178
      %v4246 = vpop.f32.mrb[0].mxu0
      %v4247 = vadd.f32 0.0, %v4246
      %v4248 = vpop.f32.mrb[0].mxu0
      %4249 = vdwg.mxu0
      %v4250 = vadd.f32 %v4099, %v4247
      %4251 = vrot.lane.b32.xlu0 %v3427, 40
      %v4252 = vpop.permute.xlu0 %4251
      %v4254 = vsel %vm1130, %v3784, 0
      %v4256 = vsel %vm1134, %v4252, 0
      %4258 = vmatprep.subr.mxu0 0.0
      %4259 = vmatpush1.msra.mxu0 %v4256
      %4260 = vmatprep.subr.mxu0 0.0
      %4261 = vmatpush1.msra.mxu0 0.0
      %4262 = vmatprep.subr.mxu0 0.0
      %4263 = vmatpush1.msra.mxu0 0.0
      %4264 = vmatprep.subr.mxu0 0.0
      %4265 = vmatpush1.msra.mxu0 0.0
      %4266 = vmatprep.subr.mxu0 0.0
      %4267 = vmatpush1.msra.mxu0 0.0
      %4268 = vmatprep.subr.mxu0 0.0
      %4269 = vmatpush1.msra.mxu0 0.0
      %4270 = vmatprep.subr.mxu0 0.0
      %4271 = vmatpush1.msra.mxu0 0.0
      %4272 = vmatprep.subr.mxu0 0.0
      %4273 = vmatpush1.msra.mxu0 0.0
      %4274 = vmatprep.subr.mxu0 0.0
      %4275 = vmatpush1.msra.mxu0 0.0
      %4276 = vmatprep.subr.mxu0 0.0
      %4277 = vmatpush1.msra.mxu0 0.0
      %4278 = vmatprep.subr.mxu0 0.0
      %4279 = vmatpush1.msra.mxu0 0.0
      %4280 = vmatprep.subr.mxu0 0.0
      %4281 = vmatpush1.msra.mxu0 0.0
      %4282 = vmatprep.subr.mxu0 0.0
      %4283 = vmatpush1.msra.mxu0 0.0
      %4284 = vmatprep.subr.mxu0 0.0
      %4285 = vmatpush1.msra.mxu0 0.0
      %4286 = vmatprep.subr.mxu0 0.0
      %4287 = vmatpush1.msra.mxu0 0.0
      %4288 = vmatprep.subr.mxu0 0.0
      %4289 = vmatpush1.msra.mxu0 0.0
      %4290 = vmatprep.subr.mxu0 0.0
      %4291 = vmatpush1.msra.mxu0 0.0
      %4292 = vmatprep.subr.mxu0 0.0
      %4293 = vmatpush1.msra.mxu0 0.0
      %4294 = vmatprep.subr.mxu0 0.0
      %4295 = vmatpush1.msra.mxu0 0.0
      %4296 = vmatprep.subr.mxu0 0.0
      %4297 = vmatpush1.msra.mxu0 0.0
      %4298 = vmatprep.subr.mxu0 0.0
      %4299 = vmatpush1.msra.mxu0 0.0
      %4300 = vmatprep.subr.mxu0 0.0
      %4301 = vmatpush1.msra.mxu0 0.0
      %4302 = vmatprep.subr.mxu0 0.0
      %4303 = vmatpush1.msra.mxu0 0.0
      %4304 = vmatprep.subr.mxu0 0.0
      %4305 = vmatpush1.msra.mxu0 0.0
      %4306 = vmatprep.subr.mxu0 0.0
      %4307 = vmatpush1.msra.mxu0 0.0
      %4308 = vmatprep.subr.mxu0 0.0
      %4309 = vmatpush1.msra.mxu0 0.0
      %4310 = vmatprep.subr.mxu0 0.0
      %4311 = vmatpush1.msra.mxu0 0.0
      %4312 = vmatprep.subr.mxu0 0.0
      %4313 = vmatpush1.msra.mxu0 0.0
      %4314 = vmatprep.subr.mxu0 0.0
      %4315 = vmatpush1.msra.mxu0 0.0
      %4316 = vmatprep.subr.mxu0 0.0
      %4317 = vmatpush1.msra.mxu0 0.0
      %4318 = vmatprep.subr.mxu0 0.0
      %4319 = vmatpush1.msra.mxu0 0.0
      %4320 = vmatprep.subr.mxu0 0.0
      %4321 = vmatpush1.msra.mxu0 0.0
      %4322 = vmatprep.mubr.f32.mxu0 0.0
      %4323 = vmatmul.mubr.f32.gmra.mrb[0].mxu0 %v4254
      %v4324 = vpop.f32.mrb[0].mxu0
      %v4325 = vadd.f32 0.0, %v4324
      %v4326 = vpop.f32.mrb[0].mxu0
      %4327 = vdwg.mxu0
      %v4329 = vsel %vm769, %v4325, 0
      %4331 = vmatprep.subr.mxu0 0.0
      %4332 = vmatpush1.msra.mxu0 %v3789
      %4333 = vmatprep.subr.mxu0 0.0
      %4334 = vmatpush1.msra.mxu0 0.0
      %4335 = vmatprep.subr.mxu0 0.0
      %4336 = vmatpush1.msra.mxu0 0.0
      %4337 = vmatprep.subr.mxu0 0.0
      %4338 = vmatpush1.msra.mxu0 0.0
      %4339 = vmatprep.subr.mxu0 0.0
      %4340 = vmatpush1.msra.mxu0 0.0
      %4341 = vmatprep.subr.mxu0 0.0
      %4342 = vmatpush1.msra.mxu0 0.0
      %4343 = vmatprep.subr.mxu0 0.0
      %4344 = vmatpush1.msra.mxu0 0.0
      %4345 = vmatprep.subr.mxu0 0.0
      %4346 = vmatpush1.msra.mxu0 0.0
      %4347 = vmatprep.subr.mxu0 0.0
      %4348 = vmatpush1.msra.mxu0 0.0
      %4349 = vmatprep.subr.mxu0 0.0
      %4350 = vmatpush1.msra.mxu0 0.0
      %4351 = vmatprep.subr.mxu0 0.0
      %4352 = vmatpush1.msra.mxu0 0.0
      %4353 = vmatprep.subr.mxu0 0.0
      %4354 = vmatpush1.msra.mxu0 0.0
      %4355 = vmatprep.subr.mxu0 0.0
      %4356 = vmatpush1.msra.mxu0 0.0
      %4357 = vmatprep.subr.mxu0 0.0
      %4358 = vmatpush1.msra.mxu0 0.0
      %4359 = vmatprep.subr.mxu0 0.0
      %4360 = vmatpush1.msra.mxu0 0.0
      %4361 = vmatprep.subr.mxu0 0.0
      %4362 = vmatpush1.msra.mxu0 0.0
      %4363 = vmatprep.subr.mxu0 0.0
      %4364 = vmatpush1.msra.mxu0 0.0
      %4365 = vmatprep.subr.mxu0 0.0
      %4366 = vmatpush1.msra.mxu0 0.0
      %4367 = vmatprep.subr.mxu0 0.0
      %4368 = vmatpush1.msra.mxu0 0.0
      %4369 = vmatprep.subr.mxu0 0.0
      %4370 = vmatpush1.msra.mxu0 0.0
      %4371 = vmatprep.subr.mxu0 0.0
      %4372 = vmatpush1.msra.mxu0 0.0
      %4373 = vmatprep.subr.mxu0 0.0
      %4374 = vmatpush1.msra.mxu0 0.0
      %4375 = vmatprep.subr.mxu0 0.0
      %4376 = vmatpush1.msra.mxu0 0.0
      %4377 = vmatprep.subr.mxu0 0.0
      %4378 = vmatpush1.msra.mxu0 0.0
      %4379 = vmatprep.subr.mxu0 0.0
      %4380 = vmatpush1.msra.mxu0 0.0
      %4381 = vmatprep.subr.mxu0 0.0
      %4382 = vmatpush1.msra.mxu0 0.0
      %4383 = vmatprep.subr.mxu0 0.0
      %4384 = vmatpush1.msra.mxu0 0.0
      %4385 = vmatprep.subr.mxu0 0.0
      %4386 = vmatpush1.msra.mxu0 0.0
      %4387 = vmatprep.subr.mxu0 0.0
      %4388 = vmatpush1.msra.mxu0 0.0
      %4389 = vmatprep.subr.mxu0 0.0
      %4390 = vmatpush1.msra.mxu0 0.0
      %4391 = vmatprep.subr.mxu0 0.0
      %4392 = vmatpush1.msra.mxu0 0.0
      %4393 = vmatprep.subr.mxu0 0.0
      %4394 = vmatpush1.msra.mxu0 0.0
      %4395 = vmatprep.mubr.f32.mxu0 0.0
      %4396 = vmatmul.mubr.f32.gmra.mrb[0].mxu0 %v4329
      %v4397 = vpop.f32.mrb[0].mxu0
      %v4398 = vadd.f32 0.0, %v4397
      %v4399 = vpop.f32.mrb[0].mxu0
      %4400 = vdwg.mxu0
      %v4401 = vadd.f32 %v4250, %v4398
      %v4402 = vadd.f32 %v3310, %v4401
      %s4403 = scalar_lea.vmem %s9, 2
      %v4404 = vld [vmem:[%s4403] sm:$0x1]
      %s4405 = scalar_lea.vmem %s10, 2
      %v4406 = vld [vmem:[%s4405] sm:$0x1]
      %v4407 = vsel %vm650, %v4402, 0.0
      %4408 = vadd.xlane.f32.xlu0 %v4407
      %v4409 = vpop.xlane.xlu0 %4408
      %v4410 = vmul.f32 %v4409, %v654
      %v4411 = vmul.f32 %v4402, %v4402
      %v4412 = vsel %vm650, %v4411, 0.0
      %4413 = vadd.xlane.f32.xlu0 %v4412
      %v4414 = vpop.xlane.xlu0 %4413
      %v4415 = vmul.f32 %v4414, %v654
      %v4416 = vmul.f32 %v4410, %v4410
      %v4417 = vsub.f32 %v4415, %v4416
      %v4418 = vsub.f32 %v4402, %v4410
      %v4419 = vadd.f32 %v4417, 1e-06
      %v4420 = vrsqrt.pop %v4419
      %v4421 = vmul.f32 %v4418, %v4420
      %v4423 = vlaneseq
      %v4424 = vshrl.u32 %v4423, 7
      %v4425 = vsub.s32 0, %v4424
      %v4426 = vrot.slane %v4404, %v4425
      %v4428 = vmul.f32 %v4421, %v4426
      %v4430 = vlaneseq
      %v4431 = vshrl.u32 %v4430, 7
      %v4432 = vsub.s32 0, %v4431
      %v4433 = vrot.slane %v4406, %v4432
      %v4435 = vadd.f32 %v4428, %v4433
      %s4436 = scalar_lea.vmem %s11, 64
      %v4437 = vld [vmem:[%s4436] sm:$0xff]
      %v4438 = vld [vmem:[%s4436 + $0x8] sm:$0xff]
      %v4439 = vld [vmem:[%s4436 + $0x10] sm:$0xff]
      %v4440 = vld [vmem:[%s4436 + $0x18] sm:$0xff]
      %s4441 = scalar_lea.vmem %s12, 2
      %v4442 = vld [vmem:[%s4441] sm:$0x1]
      %v4444 = vlaneseq
      %v4445 = vshrl.u32 %v4444, 7
      %v4446 = vsub.s32 0, %v4445
      %v4447 = vrot.slane %v4442, %v4446
      %v4450 = vsel %vm692, %v4435, 0
      %4452 = vmatprep.subr.mxu0 0.0
      %4453 = vmatpush1.msra.mxu0 %v4437
      %4454 = vmatprep.subr.mxu0 0.0
      %4455 = vmatpush1.msra.mxu0 %v4438
      %4456 = vmatprep.subr.mxu0 0.0
      %4457 = vmatpush1.msra.mxu0 %v4439
      %4458 = vmatprep.subr.mxu0 0.0
      %4459 = vmatpush1.msra.mxu0 %v4440
      %4460 = vmatprep.subr.mxu0 0.0
      %4461 = vmatpush1.msra.mxu0 0.0
      %4462 = vmatprep.subr.mxu0 0.0
      %4463 = vmatpush1.msra.mxu0 0.0
      %4464 = vmatprep.subr.mxu0 0.0
      %4465 = vmatpush1.msra.mxu0 0.0
      %4466 = vmatprep.subr.mxu0 0.0
      %4467 = vmatpush1.msra.mxu0 0.0
      %4468 = vmatprep.subr.mxu0 0.0
      %4469 = vmatpush1.msra.mxu0 0.0
      %4470 = vmatprep.subr.mxu0 0.0
      %4471 = vmatpush1.msra.mxu0 0.0
      %4472 = vmatprep.subr.mxu0 0.0
      %4473 = vmatpush1.msra.mxu0 0.0
      %4474 = vmatprep.subr.mxu0 0.0
      %4475 = vmatpush1.msra.mxu0 0.0
      %4476 = vmatprep.subr.mxu0 0.0
      %4477 = vmatpush1.msra.mxu0 0.0
      %4478 = vmatprep.subr.mxu0 0.0
      %4479 = vmatpush1.msra.mxu0 0.0
      %4480 = vmatprep.subr.mxu0 0.0
      %4481 = vmatpush1.msra.mxu0 0.0
      %4482 = vmatprep.subr.mxu0 0.0
      %4483 = vmatpush1.msra.mxu0 0.0
      %4484 = vmatprep.subr.mxu0 0.0
      %4485 = vmatpush1.msra.mxu0 0.0
      %4486 = vmatprep.subr.mxu0 0.0
      %4487 = vmatpush1.msra.mxu0 0.0
      %4488 = vmatprep.subr.mxu0 0.0
      %4489 = vmatpush1.msra.mxu0 0.0
      %4490 = vmatprep.subr.mxu0 0.0
      %4491 = vmatpush1.msra.mxu0 0.0
      %4492 = vmatprep.subr.mxu0 0.0
      %4493 = vmatpush1.msra.mxu0 0.0
      %4494 = vmatprep.subr.mxu0 0.0
      %4495 = vmatpush1.msra.mxu0 0.0
      %4496 = vmatprep.subr.mxu0 0.0
      %4497 = vmatpush1.msra.mxu0 0.0
      %4498 = vmatprep.subr.mxu0 0.0
      %4499 = vmatpush1.msra.mxu0 0.0
      %4500 = vmatprep.subr.mxu0 0.0
      %4501 = vmatpush1.msra.mxu0 0.0
      %4502 = vmatprep.subr.mxu0 0.0
      %4503 = vmatpush1.msra.mxu0 0.0
      %4504 = vmatprep.subr.mxu0 0.0
      %4505 = vmatpush1.msra.mxu0 0.0
      %4506 = vmatprep.subr.mxu0 0.0
      %4507 = vmatpush1.msra.mxu0 0.0
      %4508 = vmatprep.subr.mxu0 0.0
      %4509 = vmatpush1.msra.mxu0 0.0
      %4510 = vmatprep.subr.mxu0 0.0
      %4511 = vmatpush1.msra.mxu0 0.0
      %4512 = vmatprep.subr.mxu0 0.0
      %4513 = vmatpush1.msra.mxu0 0.0
      %4514 = vmatprep.subr.mxu0 0.0
      %4515 = vmatpush1.msra.mxu0 0.0
      %4516 = vmatprep.mubr.f32.mxu0 0.0
      %4517 = vmatmul.mubr.f32.gmra.mrb[0].mxu0 %v4450
      %v4518 = vpop.f32.mrb[0].mxu0
      %v4519 = vadd.f32 %v4447, %v4518
      %v4520 = vpop.f32.mrb[0].mxu0
      %4521 = vdwg.mxu0
      %v4522 = vmul.f32 %v4519, 0.5
      %v4523 = vmul.f32 %v4519, 0.70710677
      %vm4524 = vcmp.ge.f32.partialorder %v4523, 0.0
      %v4525 = vsel %vm4524, 1.0, -1.0
      %v4526 = vand.u32 2147483647, %v4523
      %v4527 = vmul.f32 %v4526, 0.3275911
      %v4528 = vadd.f32 %v4527, 1.0
      %v4529 = vrcp.pop %v4528
      %v4530 = vmul.f32 %v4529, 1.0614054
      %v4531 = vadd.f32 %v4530, -1.4531521
      %v4532 = vmul.f32 %v4529, %v4531
      %v4533 = vadd.f32 %v4532, 1.4214138
      %v4534 = vmul.f32 %v4529, %v4533
      %v4535 = vadd.f32 %v4534, -0.28449672
      %v4536 = vmul.f32 %v4529, %v4535
      %v4537 = vadd.f32 %v4536, 0.2548296
      %v4538 = vmul.f32 %v4529, %v4537
      %v4539 = vsub.f32 0.0, %v4526
      %v4540 = vmul.f32 %v4539, %v4526
      %v4541 = vmul.f32 %v4540, 1.442695
      %v4542 = vpow.pop %v4541
      %v4543 = vmul.f32 %v4538, %v4542
      %v4544 = vsub.f32 1.0, %v4543
      %v4545 = vmul.f32 %v4525, %v4544
      %v4546 = vadd.f32 %v4545, 1.0
      %v4547 = vmul.f32 %v4522, %v4546
      %s4548 = scalar_lea.vmem %s13, 256
      %v4549 = vld [vmem:[%s4548] sm:$0xff]
      %v4550 = vld [vmem:[%s4548 + $0x8] sm:$0xff]
      %v4551 = vld [vmem:[%s4548 + $0x10] sm:$0xff]
      %v4552 = vld [vmem:[%s4548 + $0x18] sm:$0xff]
      %v4553 = vld [vmem:[%s4548 + $0x20] sm:$0xff]
      %v4554 = vld [vmem:[%s4548 + $0x28] sm:$0xff]
      %v4555 = vld [vmem:[%s4548 + $0x30] sm:$0xff]
      %v4556 = vld [vmem:[%s4548 + $0x38] sm:$0xff]
      %v4557 = vld [vmem:[%s4548 + $0x40] sm:$0xff]
      %v4558 = vld [vmem:[%s4548 + $0x48] sm:$0xff]
      %v4559 = vld [vmem:[%s4548 + $0x50] sm:$0xff]
      %v4560 = vld [vmem:[%s4548 + $0x58] sm:$0xff]
      %v4561 = vld [vmem:[%s4548 + $0x60] sm:$0xff]
      %v4562 = vld [vmem:[%s4548 + $0x68] sm:$0xff]
      %v4563 = vld [vmem:[%s4548 + $0x70] sm:$0xff]
      %v4564 = vld [vmem:[%s4548 + $0x78] sm:$0xff]
      %4565 = vmatprep.subr.mxu0 0.0
      %4566 = vmatpush1.msra.mxu0 %v4549
      %4567 = vmatprep.subr.mxu0 0.0
      %4568 = vmatpush1.msra.mxu0 %v4550
      %4569 = vmatprep.subr.mxu0 0.0
      %4570 = vmatpush1.msra.mxu0 %v4551
      %4571 = vmatprep.subr.mxu0 0.0
      %4572 = vmatpush1.msra.mxu0 %v4552
      %4573 = vmatprep.subr.mxu0 0.0
      %4574 = vmatpush1.msra.mxu0 %v4553
      %4575 = vmatprep.subr.mxu0 0.0
      %4576 = vmatpush1.msra.mxu0 %v4554
      %4577 = vmatprep.subr.mxu0 0.0
      %4578 = vmatpush1.msra.mxu0 %v4555
      %4579 = vmatprep.subr.mxu0 0.0
      %4580 = vmatpush1.msra.mxu0 %v4556
      %4581 = vmatprep.subr.mxu0 0.0
      %4582 = vmatpush1.msra.mxu0 %v4557
      %4583 = vmatprep.subr.mxu0 0.0
      %4584 = vmatpush1.msra.mxu0 %v4558
      %4585 = vmatprep.subr.mxu0 0.0
      %4586 = vmatpush1.msra.mxu0 %v4559
      %4587 = vmatprep.subr.mxu0 0.0
      %4588 = vmatpush1.msra.mxu0 %v4560
      %4589 = vmatprep.subr.mxu0 0.0
      %4590 = vmatpush1.msra.mxu0 %v4561
      %4591 = vmatprep.subr.mxu0 0.0
      %4592 = vmatpush1.msra.mxu0 %v4562
      %4593 = vmatprep.subr.mxu0 0.0
      %4594 = vmatpush1.msra.mxu0 %v4563
      %4595 = vmatprep.subr.mxu0 0.0
      %4596 = vmatpush1.msra.mxu0 %v4564
      %4597 = vmatprep.subr.mxu0 0.0
      %4598 = vmatpush1.msra.mxu0 0.0
      %4599 = vmatprep.subr.mxu0 0.0
      %4600 = vmatpush1.msra.mxu0 0.0
      %4601 = vmatprep.subr.mxu0 0.0
      %4602 = vmatpush1.msra.mxu0 0.0
      %4603 = vmatprep.subr.mxu0 0.0
      %4604 = vmatpush1.msra.mxu0 0.0
      %4605 = vmatprep.subr.mxu0 0.0
      %4606 = vmatpush1.msra.mxu0 0.0
      %4607 = vmatprep.subr.mxu0 0.0
      %4608 = vmatpush1.msra.mxu0 0.0
      %4609 = vmatprep.subr.mxu0 0.0
      %4610 = vmatpush1.msra.mxu0 0.0
      %4611 = vmatprep.subr.mxu0 0.0
      %4612 = vmatpush1.msra.mxu0 0.0
      %4613 = vmatprep.subr.mxu0 0.0
      %4614 = vmatpush1.msra.mxu0 0.0
      %4615 = vmatprep.subr.mxu0 0.0
      %4616 = vmatpush1.msra.mxu0 0.0
      %4617 = vmatprep.subr.mxu0 0.0
      %4618 = vmatpush1.msra.mxu0 0.0
      %4619 = vmatprep.subr.mxu0 0.0
      %4620 = vmatpush1.msra.mxu0 0.0
      %4621 = vmatprep.subr.mxu0 0.0
      %4622 = vmatpush1.msra.mxu0 0.0
      %4623 = vmatprep.subr.mxu0 0.0
      %4624 = vmatpush1.msra.mxu0 0.0
      %4625 = vmatprep.subr.mxu0 0.0
      %4626 = vmatpush1.msra.mxu0 0.0
      %4627 = vmatprep.subr.mxu0 0.0
      %4628 = vmatpush1.msra.mxu0 0.0
      %4629 = vmatprep.mubr.f32.mxu0 0.0
      %4630 = vmatmul.mubr.f32.gmra.mrb[0].mxu0 %v4547
      %v4631 = vpop.f32.mrb[0].mxu0
      %v4632 = vadd.f32 0.0, %v4631
      %v4633 = vpop.f32.mrb[0].mxu0
      %4634 = vdwg.mxu0
      %v4635 = vadd.f32 %v4402, %v4632
      %s4636 = scalar_lea.vmem %s14, 2
      %v4637 = vld [vmem:[%s4636] sm:$0x1]
      %v4639 = vlaneseq
      %v4640 = vshrl.u32 %v4639, 7
      %v4641 = vsub.s32 0, %v4640
      %v4642 = vrot.slane %v4637, %v4641
      %v4644 = vadd.f32 %v4635, %v4642
      %s4645 = scalar_lea.vmem %s3, 3
      %v4646 = vld [vmem:[%s4645] sm:$0x1]
      %s4647 = scalar_lea.vmem %s4, 3
      %v4648 = vld [vmem:[%s4647] sm:$0x1]
      %v4649 = vsel %vm650, %v4644, 0.0
      %4650 = vadd.xlane.f32.xlu0 %v4649
      %v4651 = vpop.xlane.xlu0 %4650
      %v4652 = vmul.f32 %v4651, %v654
      %v4653 = vmul.f32 %v4644, %v4644
      %v4654 = vsel %vm650, %v4653, 0.0
      %4655 = vadd.xlane.f32.xlu0 %v4654
      %v4656 = vpop.xlane.xlu0 %4655
      %v4657 = vmul.f32 %v4656, %v654
      %v4658 = vmul.f32 %v4652, %v4652
      %v4659 = vsub.f32 %v4657, %v4658
      %v4660 = vsub.f32 %v4644, %v4652
      %v4661 = vadd.f32 %v4659, 1e-06
      %v4662 = vrsqrt.pop %v4661
      %v4663 = vmul.f32 %v4660, %v4662
      %v4665 = vlaneseq
      %v4666 = vshrl.u32 %v4665, 7
      %v4667 = vsub.s32 0, %v4666
      %v4668 = vrot.slane %v4646, %v4667
      %v4670 = vmul.f32 %v4663, %v4668
      %v4672 = vlaneseq
      %v4673 = vshrl.u32 %v4672, 7
      %v4674 = vsub.s32 0, %v4673
      %v4675 = vrot.slane %v4648, %v4674
      %v4677 = vadd.f32 %v4670, %v4675
      %s4678 = scalar_lea.vmem %s5, 96
      %v4679 = vld [vmem:[%s4678] sm:$0xff]
      %v4680 = vld [vmem:[%s4678 + $0x8] sm:$0xff]
      %v4681 = vld [vmem:[%s4678 + $0x10] sm:$0xff]
      %v4682 = vld [vmem:[%s4678 + $0x18] sm:$0xff]
      %s4683 = scalar_lea.vmem %s6, 3
      %v4684 = vld [vmem:[%s4683] sm:$0x1]
      %v4686 = vlaneseq
      %v4687 = vshrl.u32 %v4686, 7
      %v4688 = vsub.s32 0, %v4687
      %v4689 = vrot.slane %v4684, %v4688
      %v4692 = vsel %vm692, %v4677, 0
      %4694 = vmatprep.subr.mxu0 0.0
      %4695 = vmatpush1.msra.mxu0 %v4679
      %4696 = vmatprep.subr.mxu0 0.0
      %4697 = vmatpush1.msra.mxu0 %v4680
      %4698 = vmatprep.subr.mxu0 0.0
      %4699 = vmatpush1.msra.mxu0 %v4681
      %4700 = vmatprep.subr.mxu0 0.0
      %4701 = vmatpush1.msra.mxu0 %v4682
      %4702 = vmatprep.subr.mxu0 0.0
      %4703 = vmatpush1.msra.mxu0 0.0
      %4704 = vmatprep.subr.mxu0 0.0
      %4705 = vmatpush1.msra.mxu0 0.0
      %4706 = vmatprep.subr.mxu0 0.0
      %4707 = vmatpush1.msra.mxu0 0.0
      %4708 = vmatprep.subr.mxu0 0.0
      %4709 = vmatpush1.msra.mxu0 0.0
      %4710 = vmatprep.subr.mxu0 0.0
      %4711 = vmatpush1.msra.mxu0 0.0
      %4712 = vmatprep.subr.mxu0 0.0
      %4713 = vmatpush1.msra.mxu0 0.0
      %4714 = vmatprep.subr.mxu0 0.0
      %4715 = vmatpush1.msra.mxu0 0.0
      %4716 = vmatprep.subr.mxu0 0.0
      %4717 = vmatpush1.msra.mxu0 0.0
      %4718 = vmatprep.subr.mxu0 0.0
      %4719 = vmatpush1.msra.mxu0 0.0
      %4720 = vmatprep.subr.mxu0 0.0
      %4721 = vmatpush1.msra.mxu0 0.0
      %4722 = vmatprep.subr.mxu0 0.0
      %4723 = vmatpush1.msra.mxu0 0.0
      %4724 = vmatprep.subr.mxu0 0.0
      %4725 = vmatpush1.msra.mxu0 0.0
      %4726 = vmatprep.subr.mxu0 0.0
      %4727 = vmatpush1.msra.mxu0 0.0
      %4728 = vmatprep.subr.mxu0 0.0
      %4729 = vmatpush1.msra.mxu0 0.0
      %4730 = vmatprep.subr.mxu0 0.0
      %4731 = vmatpush1.msra.mxu0 0.0
      %4732 = vmatprep.subr.mxu0 0.0
      %4733 = vmatpush1.msra.mxu0 0.0
      %4734 = vmatprep.subr.mxu0 0.0
      %4735 = vmatpush1.msra.mxu0 0.0
      %4736 = vmatprep.subr.mxu0 0.0
      %4737 = vmatpush1.msra.mxu0 0.0
      %4738 = vmatprep.subr.mxu0 0.0
      %4739 = vmatpush1.msra.mxu0 0.0
      %4740 = vmatprep.subr.mxu0 0.0
      %4741 = vmatpush1.msra.mxu0 0.0
      %4742 = vmatprep.subr.mxu0 0.0
      %4743 = vmatpush1.msra.mxu0 0.0
      %4744 = vmatprep.subr.mxu0 0.0
      %4745 = vmatpush1.msra.mxu0 0.0
      %4746 = vmatprep.subr.mxu0 0.0
      %4747 = vmatpush1.msra.mxu0 0.0
      %4748 = vmatprep.subr.mxu0 0.0
      %4749 = vmatpush1.msra.mxu0 0.0
      %4750 = vmatprep.subr.mxu0 0.0
      %4751 = vmatpush1.msra.mxu0 0.0
      %4752 = vmatprep.subr.mxu0 0.0
      %4753 = vmatpush1.msra.mxu0 0.0
      %4754 = vmatprep.subr.mxu0 0.0
      %4755 = vmatpush1.msra.mxu0 0.0
      %4756 = vmatprep.subr.mxu0 0.0
      %4757 = vmatpush1.msra.mxu0 0.0
      %4758 = vmatprep.mubr.f32.mxu0 0.0
      %4759 = vmatmul.mubr.f32.gmra.mrb[0].mxu0 %v4692
      %v4760 = vpop.f32.mrb[0].mxu0
      %v4761 = vadd.f32 %v4689, %v4760
      %v4762 = vpop.f32.mrb[0].mxu0
      %4763 = vdwg.mxu0
      %4765 = vrot.lane.b32.xlu0 %v4761, 96
      %v4766 = vpop.permute.xlu0 %4765
      %v4767 = vsel %vm769, %v4761, 0
      %v4769 = vsel %vm769, %v4766, 0
      %4771 = vmatprep.subr.mxu0 0.0
      %4772 = vmatpush1.xpose.msra.mxu0 %v4769
      %4773 = vmatprep.subr.mxu0 0.0
      %4774 = vmatpush1.xpose.msra.mxu0 0.0
      %4775 = vmatprep.subr.mxu0 0.0
      %4776 = vmatpush1.xpose.msra.mxu0 0.0
      %4777 = vmatprep.subr.mxu0 0.0
      %4778 = vmatpush1.xpose.msra.mxu0 0.0
      %4779 = vmatprep.subr.mxu0 0.0
      %4780 = vmatpush1.xpose.msra.mxu0 0.0
      %4781 = vmatprep.subr.mxu0 0.0
      %4782 = vmatpush1.xpose.msra.mxu0 0.0
      %4783 = vmatprep.subr.mxu0 0.0
      %4784 = vmatpush1.xpose.msra.mxu0 0.0
      %4785 = vmatprep.subr.mxu0 0.0
      %4786 = vmatpush1.xpose.msra.mxu0 0.0
      %4787 = vmatprep.subr.mxu0 0.0
      %4788 = vmatpush1.xpose.msra.mxu0 0.0
      %4789 = vmatprep.subr.mxu0 0.0
      %4790 = vmatpush1.xpose.msra.mxu0 0.0
      %4791 = vmatprep.subr.mxu0 0.0
      %4792 = vmatpush1.xpose.msra.mxu0 0.0
      %4793 = vmatprep.subr.mxu0 0.0
      %4794 = vmatpush1.xpose.msra.mxu0 0.0
      %4795 = vmatprep.subr.mxu0 0.0
      %4796 = vmatpush1.xpose.msra.mxu0 0.0
      %4797 = vmatprep.subr.mxu0 0.0
      %4798 = vmatpush1.xpose.msra.mxu0 0.0
      %4799 = vmatprep.subr.mxu0 0.0
      %4800 = vmatpush1.xpose.msra.mxu0 0.0
      %4801 = vmatprep.subr.mxu0 0.0
      %4802 = vmatpush1.xpose.msra.mxu0 0.0
      %4803 = vmatprep.subr.mxu0 0.0
      %4804 = vmatpush1.xpose.msra.mxu0 0.0
      %4805 = vmatprep.subr.mxu0 0.0
      %4806 = vmatpush1.xpose.msra.mxu0 0.0
      %4807 = vmatprep.subr.mxu0 0.0
      %4808 = vmatpush1.xpose.msra.mxu0 0.0
      %4809 = vmatprep.subr.mxu0 0.0
      %4810 = vmatpush1.xpose.msra.mxu0 0.0
      %4811 = vmatprep.subr.mxu0 0.0
      %4812 = vmatpush1.xpose.msra.mxu0 0.0
      %4813 = vmatprep.subr.mxu0 0.0
      %4814 = vmatpush1.xpose.msra.mxu0 0.0
      %4815 = vmatprep.subr.mxu0 0.0
      %4816 = vmatpush1.xpose.msra.mxu0 0.0
      %4817 = vmatprep.subr.mxu0 0.0
      %4818 = vmatpush1.xpose.msra.mxu0 0.0
      %4819 = vmatprep.subr.mxu0 0.0
      %4820 = vmatpush1.xpose.msra.mxu0 0.0
      %4821 = vmatprep.subr.mxu0 0.0
      %4822 = vmatpush1.xpose.msra.mxu0 0.0
      %4823 = vmatprep.subr.mxu0 0.0
      %4824 = vmatpush1.xpose.msra.mxu0 0.0
      %4825 = vmatprep.subr.mxu0 0.0
      %4826 = vmatpush1.xpose.msra.mxu0 0.0
      %4827 = vmatprep.subr.mxu0 0.0
      %4828 = vmatpush1.xpose.msra.mxu0 0.0
      %4829 = vmatprep.subr.mxu0 0.0
      %4830 = vmatpush1.xpose.msra.mxu0 0.0
      %4831 = vmatprep.subr.mxu0 0.0
      %4832 = vmatpush1.xpose.msra.mxu0 0.0
      %4833 = vmatprep.subr.mxu0 0.0
      %4834 = vmatpush1.xpose.msra.mxu0 0.0
      %4835 = vmatprep.mubr.f32.mxu0 0.0
      %4836 = vmatmul.mubr.f32.gmra.mrb[0].mxu0 %v4767
      %v4837 = vpop.f32.mrb[0].mxu0
      %v4838 = vadd.f32 0.0, %v4837
      %v4839 = vpop.f32.mrb[0].mxu0
      %4840 = vdwg.mxu0
      %4841 = vrot.lane.b32.xlu0 %v4761, 120
      %v4842 = vpop.permute.xlu0 %4841
      %4843 = vrot.lane.b32.xlu0 %v4761, 88
      %v4844 = vpop.permute.xlu0 %4843
      %v4845 = vsel %vm769, %v4842, 0
      %v4847 = vsel %vm769, %v4844, 0
      %4849 = vmatprep.subr.mxu0 0.0
      %4850 = vmatpush1.xpose.msra.mxu0 %v4847
      %4851 = vmatprep.subr.mxu0 0.0
      %4852 = vmatpush1.xpose.msra.mxu0 0.0
      %4853 = vmatprep.subr.mxu0 0.0
      %4854 = vmatpush1.xpose.msra.mxu0 0.0
      %4855 = vmatprep.subr.mxu0 0.0
      %4856 = vmatpush1.xpose.msra.mxu0 0.0
      %4857 = vmatprep.subr.mxu0 0.0
      %4858 = vmatpush1.xpose.msra.mxu0 0.0
      %4859 = vmatprep.subr.mxu0 0.0
      %4860 = vmatpush1.xpose.msra.mxu0 0.0
      %4861 = vmatprep.subr.mxu0 0.0
      %4862 = vmatpush1.xpose.msra.mxu0 0.0
      %4863 = vmatprep.subr.mxu0 0.0
      %4864 = vmatpush1.xpose.msra.mxu0 0.0
      %4865 = vmatprep.subr.mxu0 0.0
      %4866 = vmatpush1.xpose.msra.mxu0 0.0
      %4867 = vmatprep.subr.mxu0 0.0
      %4868 = vmatpush1.xpose.msra.mxu0 0.0
      %4869 = vmatprep.subr.mxu0 0.0
      %4870 = vmatpush1.xpose.msra.mxu0 0.0
      %4871 = vmatprep.subr.mxu0 0.0
      %4872 = vmatpush1.xpose.msra.mxu0 0.0
      %4873 = vmatprep.subr.mxu0 0.0
      %4874 = vmatpush1.xpose.msra.mxu0 0.0
      %4875 = vmatprep.subr.mxu0 0.0
      %4876 = vmatpush1.xpose.msra.mxu0 0.0
      %4877 = vmatprep.subr.mxu0 0.0
      %4878 = vmatpush1.xpose.msra.mxu0 0.0
      %4879 = vmatprep.subr.mxu0 0.0
      %4880 = vmatpush1.xpose.msra.mxu0 0.0
      %4881 = vmatprep.subr.mxu0 0.0
      %4882 = vmatpush1.xpose.msra.mxu0 0.0
      %4883 = vmatprep.subr.mxu0 0.0
      %4884 = vmatpush1.xpose.msra.mxu0 0.0
      %4885 = vmatprep.subr.mxu0 0.0
      %4886 = vmatpush1.xpose.msra.mxu0 0.0
      %4887 = vmatprep.subr.mxu0 0.0
      %4888 = vmatpush1.xpose.msra.mxu0 0.0
      %4889 = vmatprep.subr.mxu0 0.0
      %4890 = vmatpush1.xpose.msra.mxu0 0.0
      %4891 = vmatprep.subr.mxu0 0.0
      %4892 = vmatpush1.xpose.msra.mxu0 0.0
      %4893 = vmatprep.subr.mxu0 0.0
      %4894 = vmatpush1.xpose.msra.mxu0 0.0
      %4895 = vmatprep.subr.mxu0 0.0
      %4896 = vmatpush1.xpose.msra.mxu0 0.0
      %4897 = vmatprep.subr.mxu0 0.0
      %4898 = vmatpush1.xpose.msra.mxu0 0.0
      %4899 = vmatprep.subr.mxu0 0.0
      %4900 = vmatpush1.xpose.msra.mxu0 0.0
      %4901 = vmatprep.subr.mxu0 0.0
      %4902 = vmatpush1.xpose.msra.mxu0 0.0
      %4903 = vmatprep.subr.mxu0 0.0
      %4904 = vmatpush1.xpose.msra.mxu0 0.0
      %4905 = vmatprep.subr.mxu0 0.0
      %4906 = vmatpush1.xpose.msra.mxu0 0.0
      %4907 = vmatprep.subr.mxu0 0.0
      %4908 = vmatpush1.xpose.msra.mxu0 0.0
      %4909 = vmatprep.subr.mxu0 0.0
      %4910 = vmatpush1.xpose.msra.mxu0 0.0
      %4911 = vmatprep.subr.mxu0 0.0
      %4912 = vmatpush1.xpose.msra.mxu0 0.0
      %4913 = vmatprep.mubr.f32.mxu0 0.0
      %4914 = vmatmul.mubr.f32.gmra.mrb[0].mxu0 %v4845
      %v4915 = vpop.f32.mrb[0].mxu0
      %v4916 = vadd.f32 0.0, %v4915
      %v4917 = vpop.f32.mrb[0].mxu0
      %4918 = vdwg.mxu0
      %4919 = vrot.lane.b32.xlu0 %v4761, 112
      %v4920 = vpop.permute.xlu0 %4919
      %4921 = vrot.lane.b32.xlu0 %v4761, 80
      %v4922 = vpop.permute.xlu0 %4921
      %v4923 = vsel %vm769, %v4920, 0
      %v4925 = vsel %vm769, %v4922, 0
      %4927 = vmatprep.subr.mxu0 0.0
      %4928 = vmatpush1.xpose.msra.mxu0 %v4925
      %4929 = vmatprep.subr.mxu0 0.0
      %4930 = vmatpush1.xpose.msra.mxu0 0.0
      %4931 = vmatprep.subr.mxu0 0.0
      %4932 = vmatpush1.xpose.msra.mxu0 0.0
      %4933 = vmatprep.subr.mxu0 0.0
      %4934 = vmatpush1.xpose.msra.mxu0 0.0
      %4935 = vmatprep.subr.mxu0 0.0
      %4936 = vmatpush1.xpose.msra.mxu0 0.0
      %4937 = vmatprep.subr.mxu0 0.0
      %4938 = vmatpush1.xpose.msra.mxu0 0.0
      %4939 = vmatprep.subr.mxu0 0.0
      %4940 = vmatpush1.xpose.msra.mxu0 0.0
      %4941 = vmatprep.subr.mxu0 0.0
      %4942 = vmatpush1.xpose.msra.mxu0 0.0
      %4943 = vmatprep.subr.mxu0 0.0
      %4944 = vmatpush1.xpose.msra.mxu0 0.0
      %4945 = vmatprep.subr.mxu0 0.0
      %4946 = vmatpush1.xpose.msra.mxu0 0.0
      %4947 = vmatprep.subr.mxu0 0.0
      %4948 = vmatpush1.xpose.msra.mxu0 0.0
      %4949 = vmatprep.subr.mxu0 0.0
      %4950 = vmatpush1.xpose.msra.mxu0 0.0
      %4951 = vmatprep.subr.mxu0 0.0
      %4952 = vmatpush1.xpose.msra.mxu0 0.0
      %4953 = vmatprep.subr.mxu0 0.0
      %4954 = vmatpush1.xpose.msra.mxu0 0.0
      %4955 = vmatprep.subr.mxu0 0.0
      %4956 = vmatpush1.xpose.msra.mxu0 0.0
      %4957 = vmatprep.subr.mxu0 0.0
      %4958 = vmatpush1.xpose.msra.mxu0 0.0
      %4959 = vmatprep.subr.mxu0 0.0
      %4960 = vmatpush1.xpose.msra.mxu0 0.0
      %4961 = vmatprep.subr.mxu0 0.0
      %4962 = vmatpush1.xpose.msra.mxu0 0.0
      %4963 = vmatprep.subr.mxu0 0.0
      %4964 = vmatpush1.xpose.msra.mxu0 0.0
      %4965 = vmatprep.subr.mxu0 0.0
      %4966 = vmatpush1.xpose.msra.mxu0 0.0
      %4967 = vmatprep.subr.mxu0 0.0
      %4968 = vmatpush1.xpose.msra.mxu0 0.0
      %4969 = vmatprep.subr.mxu0 0.0
      %4970 = vmatpush1.xpose.msra.mxu0 0.0
      %4971 = vmatprep.subr.mxu0 0.0
      %4972 = vmatpush1.xpose.msra.mxu0 0.0
      %4973 = vmatprep.subr.mxu0 0.0
      %4974 = vmatpush1.xpose.msra.mxu0 0.0
      %4975 = vmatprep.subr.mxu0 0.0
      %4976 = vmatpush1.xpose.msra.mxu0 0.0
      %4977 = vmatprep.subr.mxu0 0.0
      %4978 = vmatpush1.xpose.msra.mxu0 0.0
      %4979 = vmatprep.subr.mxu0 0.0
      %4980 = vmatpush1.xpose.msra.mxu0 0.0
      %4981 = vmatprep.subr.mxu0 0.0
      %4982 = vmatpush1.xpose.msra.mxu0 0.0
      %4983 = vmatprep.subr.mxu0 0.0
      %4984 = vmatpush1.xpose.msra.mxu0 0.0
      %4985 = vmatprep.subr.mxu0 0.0
      %4986 = vmatpush1.xpose.msra.mxu0 0.0
      %4987 = vmatprep.subr.mxu0 0.0
      %4988 = vmatpush1.xpose.msra.mxu0 0.0
      %4989 = vmatprep.subr.mxu0 0.0
      %4990 = vmatpush1.xpose.msra.mxu0 0.0
      %4991 = vmatprep.mubr.f32.mxu0 0.0
      %4992 = vmatmul.mubr.f32.gmra.mrb[0].mxu0 %v4923
      %v4993 = vpop.f32.mrb[0].mxu0
      %v4994 = vadd.f32 0.0, %v4993
      %v4995 = vpop.f32.mrb[0].mxu0
      %4996 = vdwg.mxu0
      %4997 = vrot.lane.b32.xlu0 %v4761, 104
      %v4998 = vpop.permute.xlu0 %4997
      %4999 = vrot.lane.b32.xlu0 %v4761, 72
      %v5000 = vpop.permute.xlu0 %4999
      %v5001 = vsel %vm769, %v4998, 0
      %v5003 = vsel %vm769, %v5000, 0
      %5005 = vmatprep.subr.mxu0 0.0
      %5006 = vmatpush1.xpose.msra.mxu0 %v5003
      %5007 = vmatprep.subr.mxu0 0.0
      %5008 = vmatpush1.xpose.msra.mxu0 0.0
      %5009 = vmatprep.subr.mxu0 0.0
      %5010 = vmatpush1.xpose.msra.mxu0 0.0
      %5011 = vmatprep.subr.mxu0 0.0
      %5012 = vmatpush1.xpose.msra.mxu0 0.0
      %5013 = vmatprep.subr.mxu0 0.0
      %5014 = vmatpush1.xpose.msra.mxu0 0.0
      %5015 = vmatprep.subr.mxu0 0.0
      %5016 = vmatpush1.xpose.msra.mxu0 0.0
      %5017 = vmatprep.subr.mxu0 0.0
      %5018 = vmatpush1.xpose.msra.mxu0 0.0
      %5019 = vmatprep.subr.mxu0 0.0
      %5020 = vmatpush1.xpose.msra.mxu0 0.0
      %5021 = vmatprep.subr.mxu0 0.0
      %5022 = vmatpush1.xpose.msra.mxu0 0.0
      %5023 = vmatprep.subr.mxu0 0.0
      %5024 = vmatpush1.xpose.msra.mxu0 0.0
      %5025 = vmatprep.subr.mxu0 0.0
      %5026 = vmatpush1.xpose.msra.mxu0 0.0
      %5027 = vmatprep.subr.mxu0 0.0
      %5028 = vmatpush1.xpose.msra.mxu0 0.0
      %5029 = vmatprep.subr.mxu0 0.0
      %5030 = vmatpush1.xpose.msra.mxu0 0.0
      %5031 = vmatprep.subr.mxu0 0.0
      %5032 = vmatpush1.xpose.msra.mxu0 0.0
      %5033 = vmatprep.subr.mxu0 0.0
      %5034 = vmatpush1.xpose.msra.mxu0 0.0
      %5035 = vmatprep.subr.mxu0 0.0
      %5036 = vmatpush1.xpose.msra.mxu0 0.0
      %5037 = vmatprep.subr.mxu0 0.0
      %5038 = vmatpush1.xpose.msra.mxu0 0.0
      %5039 = vmatprep.subr.mxu0 0.0
      %5040 = vmatpush1.xpose.msra.mxu0 0.0
      %5041 = vmatprep.subr.mxu0 0.0
      %5042 = vmatpush1.xpose.msra.mxu0 0.0
      %5043 = vmatprep.subr.mxu0 0.0
      %5044 = vmatpush1.xpose.msra.mxu0 0.0
      %5045 = vmatprep.subr.mxu0 0.0
      %5046 = vmatpush1.xpose.msra.mxu0 0.0
      %5047 = vmatprep.subr.mxu0 0.0
      %5048 = vmatpush1.xpose.msra.mxu0 0.0
      %5049 = vmatprep.subr.mxu0 0.0
      %5050 = vmatpush1.xpose.msra.mxu0 0.0
      %5051 = vmatprep.subr.mxu0 0.0
      %5052 = vmatpush1.xpose.msra.mxu0 0.0
      %5053 = vmatprep.subr.mxu0 0.0
      %5054 = vmatpush1.xpose.msra.mxu0 0.0
      %5055 = vmatprep.subr.mxu0 0.0
      %5056 = vmatpush1.xpose.msra.mxu0 0.0
      %5057 = vmatprep.subr.mxu0 0.0
      %5058 = vmatpush1.xpose.msra.mxu0 0.0
      %5059 = vmatprep.subr.mxu0 0.0
      %5060 = vmatpush1.xpose.msra.mxu0 0.0
      %5061 = vmatprep.subr.mxu0 0.0
      %5062 = vmatpush1.xpose.msra.mxu0 0.0
      %5063 = vmatprep.subr.mxu0 0.0
      %5064 = vmatpush1.xpose.msra.mxu0 0.0
      %5065 = vmatprep.subr.mxu0 0.0
      %5066 = vmatpush1.xpose.msra.mxu0 0.0
      %5067 = vmatprep.subr.mxu0 0.0
      %5068 = vmatpush1.xpose.msra.mxu0 0.0
      %5069 = vmatprep.mubr.f32.mxu0 0.0
      %5070 = vmatmul.mubr.f32.gmra.mrb[0].mxu0 %v5001
      %v5071 = vpop.f32.mrb[0].mxu0
      %v5072 = vadd.f32 0.0, %v5071
      %v5073 = vpop.f32.mrb[0].mxu0
      %5074 = vdwg.mxu0
      %v5075 = vsel %vm1078, %v4838, -inf
      %5076 = vmax.xlane.f32.xlu0 %v5075
      %v5077 = vpop.xlane.xlu0 %5076
      %v5078 = vsel %vm1078, %v4916, -inf
      %5079 = vmax.xlane.f32.xlu0 %v5078
      %v5080 = vpop.xlane.xlu0 %5079
      %v5081 = vsel %vm1078, %v4994, -inf
      %5082 = vmax.xlane.f32.xlu0 %v5081
      %v5083 = vpop.xlane.xlu0 %5082
      %v5084 = vsel %vm1078, %v5072, -inf
      %5085 = vmax.xlane.f32.xlu0 %v5084
      %v5086 = vpop.xlane.xlu0 %5085
      %v5087 = vsub.f32 %v4838, %v5077
      %v5088 = vsub.f32 %v4916, %v5080
      %v5089 = vsub.f32 %v4994, %v5083
      %v5090 = vsub.f32 %v5072, %v5086
      %v5091 = vmul.f32 %v5087, 1.442695
      %v5092 = vpow.pop %v5091
      %v5093 = vmul.f32 %v5088, 1.442695
      %v5094 = vpow.pop %v5093
      %v5095 = vmul.f32 %v5089, 1.442695
      %v5096 = vpow.pop %v5095
      %v5097 = vmul.f32 %v5090, 1.442695
      %v5098 = vpow.pop %v5097
      %v5099 = vsel %vm1078, %v5092, 0.0
      %5100 = vadd.xlane.f32.xlu0 %v5099
      %v5101 = vpop.xlane.xlu0 %5100
      %v5102 = vsel %vm1078, %v5094, 0.0
      %5103 = vadd.xlane.f32.xlu0 %v5102
      %v5104 = vpop.xlane.xlu0 %5103
      %v5105 = vsel %vm1078, %v5096, 0.0
      %5106 = vadd.xlane.f32.xlu0 %v5105
      %v5107 = vpop.xlane.xlu0 %5106
      %v5108 = vsel %vm1078, %v5098, 0.0
      %5109 = vadd.xlane.f32.xlu0 %v5108
      %v5110 = vpop.xlane.xlu0 %5109
      %v5111 = vrcp.pop %v5101
      %v5112 = vrcp.pop %v5104
      %v5113 = vrcp.pop %v5107
      %v5114 = vrcp.pop %v5110
      %v5115 = vmul.f32 %v5092, %v5111
      %v5116 = vmul.f32 %v5094, %v5112
      %v5117 = vmul.f32 %v5096, %v5113
      %v5118 = vmul.f32 %v5098, %v5114
      %s5119 = scalar_lea.vmem %s7, 96
      %v5120 = vld [vmem:[%s5119] sm:$0xff]
      %v5121 = vld [vmem:[%s5119 + $0x8] sm:$0xff]
      %v5122 = vld [vmem:[%s5119 + $0x10] sm:$0xff]
      %v5123 = vld [vmem:[%s5119 + $0x18] sm:$0xff]
      %s5124 = scalar_lea.vmem %s8, 3
      %v5125 = vld [vmem:[%s5124] sm:$0x1]
      %5126 = vrot.lane.b32.xlu0 %v4761, 64
      %v5127 = vpop.permute.xlu0 %5126
      %v5129 = vsel %vm1130, %v5115, 0
      %v5131 = vsel %vm1134, %v5127, 0
      %5133 = vmatprep.subr.mxu0 0.0
      %5134 = vmatpush1.msra.mxu0 %v5131
      %5135 = vmatprep.subr.mxu0 0.0
      %5136 = vmatpush1.msra.mxu0 0.0
      %5137 = vmatprep.subr.mxu0 0.0
      %5138 = vmatpush1.msra.mxu0 0.0
      %5139 = vmatprep.subr.mxu0 0.0
      %5140 = vmatpush1.msra.mxu0 0.0
      %5141 = vmatprep.subr.mxu0 0.0
      %5142 = vmatpush1.msra.mxu0 0.0
      %5143 = vmatprep.subr.mxu0 0.0
      %5144 = vmatpush1.msra.mxu0 0.0
      %5145 = vmatprep.subr.mxu0 0.0
      %5146 = vmatpush1.msra.mxu0 0.0
      %5147 = vmatprep.subr.mxu0 0.0
      %5148 = vmatpush1.msra.mxu0 0.0
      %5149 = vmatprep.subr.mxu0 0.0
      %5150 = vmatpush1.msra.mxu0 0.0
      %5151 = vmatprep.subr.mxu0 0.0
      %5152 = vmatpush1.msra.mxu0 0.0
      %5153 = vmatprep.subr.mxu0 0.0
      %5154 = vmatpush1.msra.mxu0 0.0
      %5155 = vmatprep.subr.mxu0 0.0
      %5156 = vmatpush1.msra.mxu0 0.0
      %5157 = vmatprep.subr.mxu0 0.0
      %5158 = vmatpush1.msra.mxu0 0.0
      %5159 = vmatprep.subr.mxu0 0.0
      %5160 = vmatpush1.msra.mxu0 0.0
      %5161 = vmatprep.subr.mxu0 0.0
      %5162 = vmatpush1.msra.mxu0 0.0
      %5163 = vmatprep.subr.mxu0 0.0
      %5164 = vmatpush1.msra.mxu0 0.0
      %5165 = vmatprep.subr.mxu0 0.0
      %5166 = vmatpush1.msra.mxu0 0.0
      %5167 = vmatprep.subr.mxu0 0.0
      %5168 = vmatpush1.msra.mxu0 0.0
      %5169 = vmatprep.subr.mxu0 0.0
      %5170 = vmatpush1.msra.mxu0 0.0
      %5171 = vmatprep.subr.mxu0 0.0
      %5172 = vmatpush1.msra.mxu0 0.0
      %5173 = vmatprep.subr.mxu0 0.0
      %5174 = vmatpush1.msra.mxu0 0.0
      %5175 = vmatprep.subr.mxu0 0.0
      %5176 = vmatpush1.msra.mxu0 0.0
      %5177 = vmatprep.subr.mxu0 0.0
      %5178 = vmatpush1.msra.mxu0 0.0
      %5179 = vmatprep.subr.mxu0 0.0
      %5180 = vmatpush1.msra.mxu0 0.0
      %5181 = vmatprep.subr.mxu0 0.0
      %5182 = vmatpush1.msra.mxu0 0.0
      %5183 = vmatprep.subr.mxu0 0.0
      %5184 = vmatpush1.msra.mxu0 0.0
      %5185 = vmatprep.subr.mxu0 0.0
      %5186 = vmatpush1.msra.mxu0 0.0
      %5187 = vmatprep.subr.mxu0 0.0
      %5188 = vmatpush1.msra.mxu0 0.0
      %5189 = vmatprep.subr.mxu0 0.0
      %5190 = vmatpush1.msra.mxu0 0.0
      %5191 = vmatprep.subr.mxu0 0.0
      %5192 = vmatpush1.msra.mxu0 0.0
      %5193 = vmatprep.subr.mxu0 0.0
      %5194 = vmatpush1.msra.mxu0 0.0
      %5195 = vmatprep.subr.mxu0 0.0
      %5196 = vmatpush1.msra.mxu0 0.0
      %5197 = vmatprep.mubr.f32.mxu0 0.0
      %5198 = vmatmul.mubr.f32.gmra.mrb[0].mxu0 %v5129
      %v5199 = vpop.f32.mrb[0].mxu0
      %v5200 = vadd.f32 0.0, %v5199
      %v5201 = vpop.f32.mrb[0].mxu0
      %5202 = vdwg.mxu0
      %v5204 = vsel %vm769, %v5200, 0
      %5206 = vmatprep.subr.mxu0 0.0
      %5207 = vmatpush1.msra.mxu0 %v5120
      %5208 = vmatprep.subr.mxu0 0.0
      %5209 = vmatpush1.msra.mxu0 0.0
      %5210 = vmatprep.subr.mxu0 0.0
      %5211 = vmatpush1.msra.mxu0 0.0
      %5212 = vmatprep.subr.mxu0 0.0
      %5213 = vmatpush1.msra.mxu0 0.0
      %5214 = vmatprep.subr.mxu0 0.0
      %5215 = vmatpush1.msra.mxu0 0.0
      %5216 = vmatprep.subr.mxu0 0.0
      %5217 = vmatpush1.msra.mxu0 0.0
      %5218 = vmatprep.subr.mxu0 0.0
      %5219 = vmatpush1.msra.mxu0 0.0
      %5220 = vmatprep.subr.mxu0 0.0
      %5221 = vmatpush1.msra.mxu0 0.0
      %5222 = vmatprep.subr.mxu0 0.0
      %5223 = vmatpush1.msra.mxu0 0.0
      %5224 = vmatprep.subr.mxu0 0.0
      %5225 = vmatpush1.msra.mxu0 0.0
      %5226 = vmatprep.subr.mxu0 0.0
      %5227 = vmatpush1.msra.mxu0 0.0
      %5228 = vmatprep.subr.mxu0 0.0
      %5229 = vmatpush1.msra.mxu0 0.0
      %5230 = vmatprep.subr.mxu0 0.0
      %5231 = vmatpush1.msra.mxu0 0.0
      %5232 = vmatprep.subr.mxu0 0.0
      %5233 = vmatpush1.msra.mxu0 0.0
      %5234 = vmatprep.subr.mxu0 0.0
      %5235 = vmatpush1.msra.mxu0 0.0
      %5236 = vmatprep.subr.mxu0 0.0
      %5237 = vmatpush1.msra.mxu0 0.0
      %5238 = vmatprep.subr.mxu0 0.0
      %5239 = vmatpush1.msra.mxu0 0.0
      %5240 = vmatprep.subr.mxu0 0.0
      %5241 = vmatpush1.msra.mxu0 0.0
      %5242 = vmatprep.subr.mxu0 0.0
      %5243 = vmatpush1.msra.mxu0 0.0
      %5244 = vmatprep.subr.mxu0 0.0
      %5245 = vmatpush1.msra.mxu0 0.0
      %5246 = vmatprep.subr.mxu0 0.0
      %5247 = vmatpush1.msra.mxu0 0.0
      %5248 = vmatprep.subr.mxu0 0.0
      %5249 = vmatpush1.msra.mxu0 0.0
      %5250 = vmatprep.subr.mxu0 0.0
      %5251 = vmatpush1.msra.mxu0 0.0
      %5252 = vmatprep.subr.mxu0 0.0
      %5253 = vmatpush1.msra.mxu0 0.0
      %5254 = vmatprep.subr.mxu0 0.0
      %5255 = vmatpush1.msra.mxu0 0.0
      %5256 = vmatprep.subr.mxu0 0.0
      %5257 = vmatpush1.msra.mxu0 0.0
      %5258 = vmatprep.subr.mxu0 0.0
      %5259 = vmatpush1.msra.mxu0 0.0
      %5260 = vmatprep.subr.mxu0 0.0
      %5261 = vmatpush1.msra.mxu0 0.0
      %5262 = vmatprep.subr.mxu0 0.0
      %5263 = vmatpush1.msra.mxu0 0.0
      %5264 = vmatprep.subr.mxu0 0.0
      %5265 = vmatpush1.msra.mxu0 0.0
      %5266 = vmatprep.subr.mxu0 0.0
      %5267 = vmatpush1.msra.mxu0 0.0
      %5268 = vmatprep.subr.mxu0 0.0
      %5269 = vmatpush1.msra.mxu0 0.0
      %5270 = vmatprep.mubr.f32.mxu0 0.0
      %5271 = vmatmul.mubr.f32.gmra.mrb[0].mxu0 %v5204
      %v5272 = vpop.f32.mrb[0].mxu0
      %v5273 = vadd.f32 0.0, %v5272
      %v5274 = vpop.f32.mrb[0].mxu0
      %5275 = vdwg.mxu0
      %v5277 = vlaneseq
      %v5278 = vshrl.u32 %v5277, 7
      %v5279 = vsub.s32 0, %v5278
      %v5280 = vrot.slane %v5125, %v5279
      %v5282 = vadd.f32 %v5280, %v5273
      %5283 = vrot.lane.b32.xlu0 %v4761, 56
      %v5284 = vpop.permute.xlu0 %5283
      %v5286 = vsel %vm1130, %v5116, 0
      %v5288 = vsel %vm1134, %v5284, 0
      %5290 = vmatprep.subr.mxu0 0.0
      %5291 = vmatpush1.msra.mxu0 %v5288
      %5292 = vmatprep.subr.mxu0 0.0
      %5293 = vmatpush1.msra.mxu0 0.0
      %5294 = vmatprep.subr.mxu0 0.0
      %5295 = vmatpush1.msra.mxu0 0.0
      %5296 = vmatprep.subr.mxu0 0.0
      %5297 = vmatpush1.msra.mxu0 0.0
      %5298 = vmatprep.subr.mxu0 0.0
      %5299 = vmatpush1.msra.mxu0 0.0
      %5300 = vmatprep.subr.mxu0 0.0
      %5301 = vmatpush1.msra.mxu0 0.0
      %5302 = vmatprep.subr.mxu0 0.0
      %5303 = vmatpush1.msra.mxu0 0.0
      %5304 = vmatprep.subr.mxu0 0.0
      %5305 = vmatpush1.msra.mxu0 0.0
      %5306 = vmatprep.subr.mxu0 0.0
      %5307 = vmatpush1.msra.mxu0 0.0
      %5308 = vmatprep.subr.mxu0 0.0
      %5309 = vmatpush1.msra.mxu0 0.0
      %5310 = vmatprep.subr.mxu0 0.0
      %5311 = vmatpush1.msra.mxu0 0.0
      %5312 = vmatprep.subr.mxu0 0.0
      %5313 = vmatpush1.msra.mxu0 0.0
      %5314 = vmatprep.subr.mxu0 0.0
      %5315 = vmatpush1.msra.mxu0 0.0
      %5316 = vmatprep.subr.mxu0 0.0
      %5317 = vmatpush1.msra.mxu0 0.0
      %5318 = vmatprep.subr.mxu0 0.0
      %5319 = vmatpush1.msra.mxu0 0.0
      %5320 = vmatprep.subr.mxu0 0.0
      %5321 = vmatpush1.msra.mxu0 0.0
      %5322 = vmatprep.subr.mxu0 0.0
      %5323 = vmatpush1.msra.mxu0 0.0
      %5324 = vmatprep.subr.mxu0 0.0
      %5325 = vmatpush1.msra.mxu0 0.0
      %5326 = vmatprep.subr.mxu0 0.0
      %5327 = vmatpush1.msra.mxu0 0.0
      %5328 = vmatprep.subr.mxu0 0.0
      %5329 = vmatpush1.msra.mxu0 0.0
      %5330 = vmatprep.subr.mxu0 0.0
      %5331 = vmatpush1.msra.mxu0 0.0
      %5332 = vmatprep.subr.mxu0 0.0
      %5333 = vmatpush1.msra.mxu0 0.0
      %5334 = vmatprep.subr.mxu0 0.0
      %5335 = vmatpush1.msra.mxu0 0.0
      %5336 = vmatprep.subr.mxu0 0.0
      %5337 = vmatpush1.msra.mxu0 0.0
      %5338 = vmatprep.subr.mxu0 0.0
      %5339 = vmatpush1.msra.mxu0 0.0
      %5340 = vmatprep.subr.mxu0 0.0
      %5341 = vmatpush1.msra.mxu0 0.0
      %5342 = vmatprep.subr.mxu0 0.0
      %5343 = vmatpush1.msra.mxu0 0.0
      %5344 = vmatprep.subr.mxu0 0.0
      %5345 = vmatpush1.msra.mxu0 0.0
      %5346 = vmatprep.subr.mxu0 0.0
      %5347 = vmatpush1.msra.mxu0 0.0
      %5348 = vmatprep.subr.mxu0 0.0
      %5349 = vmatpush1.msra.mxu0 0.0
      %5350 = vmatprep.subr.mxu0 0.0
      %5351 = vmatpush1.msra.mxu0 0.0
      %5352 = vmatprep.subr.mxu0 0.0
      %5353 = vmatpush1.msra.mxu0 0.0
      %5354 = vmatprep.mubr.f32.mxu0 0.0
      %5355 = vmatmul.mubr.f32.gmra.mrb[0].mxu0 %v5286
      %v5356 = vpop.f32.mrb[0].mxu0
      %v5357 = vadd.f32 0.0, %v5356
      %v5358 = vpop.f32.mrb[0].mxu0
      %5359 = vdwg.mxu0
      %v5361 = vsel %vm769, %v5357, 0
      %5363 = vmatprep.subr.mxu0 0.0
      %5364 = vmatpush1.msra.mxu0 %v5121
      %5365 = vmatprep.subr.mxu0 0.0
      %5366 = vmatpush1.msra.mxu0 0.0
      %5367 = vmatprep.subr.mxu0 0.0
      %5368 = vmatpush1.msra.mxu0 0.0
      %5369 = vmatprep.subr.mxu0 0.0
      %5370 = vmatpush1.msra.mxu0 0.0
      %5371 = vmatprep.subr.mxu0 0.0
      %5372 = vmatpush1.msra.mxu0 0.0
      %5373 = vmatprep.subr.mxu0 0.0
      %5374 = vmatpush1.msra.mxu0 0.0
      %5375 = vmatprep.subr.mxu0 0.0
      %5376 = vmatpush1.msra.mxu0 0.0
      %5377 = vmatprep.subr.mxu0 0.0
      %5378 = vmatpush1.msra.mxu0 0.0
      %5379 = vmatprep.subr.mxu0 0.0
      %5380 = vmatpush1.msra.mxu0 0.0
      %5381 = vmatprep.subr.mxu0 0.0
      %5382 = vmatpush1.msra.mxu0 0.0
      %5383 = vmatprep.subr.mxu0 0.0
      %5384 = vmatpush1.msra.mxu0 0.0
      %5385 = vmatprep.subr.mxu0 0.0
      %5386 = vmatpush1.msra.mxu0 0.0
      %5387 = vmatprep.subr.mxu0 0.0
      %5388 = vmatpush1.msra.mxu0 0.0
      %5389 = vmatprep.subr.mxu0 0.0
      %5390 = vmatpush1.msra.mxu0 0.0
      %5391 = vmatprep.subr.mxu0 0.0
      %5392 = vmatpush1.msra.mxu0 0.0
      %5393 = vmatprep.subr.mxu0 0.0
      %5394 = vmatpush1.msra.mxu0 0.0
      %5395 = vmatprep.subr.mxu0 0.0
      %5396 = vmatpush1.msra.mxu0 0.0
      %5397 = vmatprep.subr.mxu0 0.0
      %5398 = vmatpush1.msra.mxu0 0.0
      %5399 = vmatprep.subr.mxu0 0.0
      %5400 = vmatpush1.msra.mxu0 0.0
      %5401 = vmatprep.subr.mxu0 0.0
      %5402 = vmatpush1.msra.mxu0 0.0
      %5403 = vmatprep.subr.mxu0 0.0
      %5404 = vmatpush1.msra.mxu0 0.0
      %5405 = vmatprep.subr.mxu0 0.0
      %5406 = vmatpush1.msra.mxu0 0.0
      %5407 = vmatprep.subr.mxu0 0.0
      %5408 = vmatpush1.msra.mxu0 0.0
      %5409 = vmatprep.subr.mxu0 0.0
      %5410 = vmatpush1.msra.mxu0 0.0
      %5411 = vmatprep.subr.mxu0 0.0
      %5412 = vmatpush1.msra.mxu0 0.0
      %5413 = vmatprep.subr.mxu0 0.0
      %5414 = vmatpush1.msra.mxu0 0.0
      %5415 = vmatprep.subr.mxu0 0.0
      %5416 = vmatpush1.msra.mxu0 0.0
      %5417 = vmatprep.subr.mxu0 0.0
      %5418 = vmatpush1.msra.mxu0 0.0
      %5419 = vmatprep.subr.mxu0 0.0
      %5420 = vmatpush1.msra.mxu0 0.0
      %5421 = vmatprep.subr.mxu0 0.0
      %5422 = vmatpush1.msra.mxu0 0.0
      %5423 = vmatprep.subr.mxu0 0.0
      %5424 = vmatpush1.msra.mxu0 0.0
      %5425 = vmatprep.subr.mxu0 0.0
      %5426 = vmatpush1.msra.mxu0 0.0
      %5427 = vmatprep.mubr.f32.mxu0 0.0
      %5428 = vmatmul.mubr.f32.gmra.mrb[0].mxu0 %v5361
      %v5429 = vpop.f32.mrb[0].mxu0
      %v5430 = vadd.f32 0.0, %v5429
      %v5431 = vpop.f32.mrb[0].mxu0
      %5432 = vdwg.mxu0
      %v5433 = vadd.f32 %v5282, %v5430
      %5434 = vrot.lane.b32.xlu0 %v4761, 48
      %v5435 = vpop.permute.xlu0 %5434
      %v5437 = vsel %vm1130, %v5117, 0
      %v5439 = vsel %vm1134, %v5435, 0
      %5441 = vmatprep.subr.mxu0 0.0
      %5442 = vmatpush1.msra.mxu0 %v5439
      %5443 = vmatprep.subr.mxu0 0.0
      %5444 = vmatpush1.msra.mxu0 0.0
      %5445 = vmatprep.subr.mxu0 0.0
      %5446 = vmatpush1.msra.mxu0 0.0
      %5447 = vmatprep.subr.mxu0 0.0
      %5448 = vmatpush1.msra.mxu0 0.0
      %5449 = vmatprep.subr.mxu0 0.0
      %5450 = vmatpush1.msra.mxu0 0.0
      %5451 = vmatprep.subr.mxu0 0.0
      %5452 = vmatpush1.msra.mxu0 0.0
      %5453 = vmatprep.subr.mxu0 0.0
      %5454 = vmatpush1.msra.mxu0 0.0
      %5455 = vmatprep.subr.mxu0 0.0
      %5456 = vmatpush1.msra.mxu0 0.0
      %5457 = vmatprep.subr.mxu0 0.0
      %5458 = vmatpush1.msra.mxu0 0.0
      %5459 = vmatprep.subr.mxu0 0.0
      %5460 = vmatpush1.msra.mxu0 0.0
      %5461 = vmatprep.subr.mxu0 0.0
      %5462 = vmatpush1.msra.mxu0 0.0
      %5463 = vmatprep.subr.mxu0 0.0
      %5464 = vmatpush1.msra.mxu0 0.0
      %5465 = vmatprep.subr.mxu0 0.0
      %5466 = vmatpush1.msra.mxu0 0.0
      %5467 = vmatprep.subr.mxu0 0.0
      %5468 = vmatpush1.msra.mxu0 0.0
      %5469 = vmatprep.subr.mxu0 0.0
      %5470 = vmatpush1.msra.mxu0 0.0
      %5471 = vmatprep.subr.mxu0 0.0
      %5472 = vmatpush1.msra.mxu0 0.0
      %5473 = vmatprep.subr.mxu0 0.0
      %5474 = vmatpush1.msra.mxu0 0.0
      %5475 = vmatprep.subr.mxu0 0.0
      %5476 = vmatpush1.msra.mxu0 0.0
      %5477 = vmatprep.subr.mxu0 0.0
      %5478 = vmatpush1.msra.mxu0 0.0
      %5479 = vmatprep.subr.mxu0 0.0
      %5480 = vmatpush1.msra.mxu0 0.0
      %5481 = vmatprep.subr.mxu0 0.0
      %5482 = vmatpush1.msra.mxu0 0.0
      %5483 = vmatprep.subr.mxu0 0.0
      %5484 = vmatpush1.msra.mxu0 0.0
      %5485 = vmatprep.subr.mxu0 0.0
      %5486 = vmatpush1.msra.mxu0 0.0
      %5487 = vmatprep.subr.mxu0 0.0
      %5488 = vmatpush1.msra.mxu0 0.0
      %5489 = vmatprep.subr.mxu0 0.0
      %5490 = vmatpush1.msra.mxu0 0.0
      %5491 = vmatprep.subr.mxu0 0.0
      %5492 = vmatpush1.msra.mxu0 0.0
      %5493 = vmatprep.subr.mxu0 0.0
      %5494 = vmatpush1.msra.mxu0 0.0
      %5495 = vmatprep.subr.mxu0 0.0
      %5496 = vmatpush1.msra.mxu0 0.0
      %5497 = vmatprep.subr.mxu0 0.0
      %5498 = vmatpush1.msra.mxu0 0.0
      %5499 = vmatprep.subr.mxu0 0.0
      %5500 = vmatpush1.msra.mxu0 0.0
      %5501 = vmatprep.subr.mxu0 0.0
      %5502 = vmatpush1.msra.mxu0 0.0
      %5503 = vmatprep.subr.mxu0 0.0
      %5504 = vmatpush1.msra.mxu0 0.0
      %5505 = vmatprep.mubr.f32.mxu0 0.0
      %5506 = vmatmul.mubr.f32.gmra.mrb[0].mxu0 %v5437
      %v5507 = vpop.f32.mrb[0].mxu0
      %v5508 = vadd.f32 0.0, %v5507
      %v5509 = vpop.f32.mrb[0].mxu0
      %5510 = vdwg.mxu0
      %v5512 = vsel %vm769, %v5508, 0
      %5514 = vmatprep.subr.mxu0 0.0
      %5515 = vmatpush1.msra.mxu0 %v5122
      %5516 = vmatprep.subr.mxu0 0.0
      %5517 = vmatpush1.msra.mxu0 0.0
      %5518 = vmatprep.subr.mxu0 0.0
      %5519 = vmatpush1.msra.mxu0 0.0
      %5520 = vmatprep.subr.mxu0 0.0
      %5521 = vmatpush1.msra.mxu0 0.0
      %5522 = vmatprep.subr.mxu0 0.0
      %5523 = vmatpush1.msra.mxu0 0.0
      %5524 = vmatprep.subr.mxu0 0.0
      %5525 = vmatpush1.msra.mxu0 0.0
      %5526 = vmatprep.subr.mxu0 0.0
      %5527 = vmatpush1.msra.mxu0 0.0
      %5528 = vmatprep.subr.mxu0 0.0
      %5529 = vmatpush1.msra.mxu0 0.0
      %5530 = vmatprep.subr.mxu0 0.0
      %5531 = vmatpush1.msra.mxu0 0.0
      %5532 = vmatprep.subr.mxu0 0.0
      %5533 = vmatpush1.msra.mxu0 0.0
      %5534 = vmatprep.subr.mxu0 0.0
      %5535 = vmatpush1.msra.mxu0 0.0
      %5536 = vmatprep.subr.mxu0 0.0
      %5537 = vmatpush1.msra.mxu0 0.0
      %5538 = vmatprep.subr.mxu0 0.0
      %5539 = vmatpush1.msra.mxu0 0.0
      %5540 = vmatprep.subr.mxu0 0.0
      %5541 = vmatpush1.msra.mxu0 0.0
      %5542 = vmatprep.subr.mxu0 0.0
      %5543 = vmatpush1.msra.mxu0 0.0
      %5544 = vmatprep.subr.mxu0 0.0
      %5545 = vmatpush1.msra.mxu0 0.0
      %5546 = vmatprep.subr.mxu0 0.0
      %5547 = vmatpush1.msra.mxu0 0.0
      %5548 = vmatprep.subr.mxu0 0.0
      %5549 = vmatpush1.msra.mxu0 0.0
      %5550 = vmatprep.subr.mxu0 0.0
      %5551 = vmatpush1.msra.mxu0 0.0
      %5552 = vmatprep.subr.mxu0 0.0
      %5553 = vmatpush1.msra.mxu0 0.0
      %5554 = vmatprep.subr.mxu0 0.0
      %5555 = vmatpush1.msra.mxu0 0.0
      %5556 = vmatprep.subr.mxu0 0.0
      %5557 = vmatpush1.msra.mxu0 0.0
      %5558 = vmatprep.subr.mxu0 0.0
      %5559 = vmatpush1.msra.mxu0 0.0
      %5560 = vmatprep.subr.mxu0 0.0
      %5561 = vmatpush1.msra.mxu0 0.0
      %5562 = vmatprep.subr.mxu0 0.0
      %5563 = vmatpush1.msra.mxu0 0.0
      %5564 = vmatprep.subr.mxu0 0.0
      %5565 = vmatpush1.msra.mxu0 0.0
      %5566 = vmatprep.subr.mxu0 0.0
      %5567 = vmatpush1.msra.mxu0 0.0
      %5568 = vmatprep.subr.mxu0 0.0
      %5569 = vmatpush1.msra.mxu0 0.0
      %5570 = vmatprep.subr.mxu0 0.0
      %5571 = vmatpush1.msra.mxu0 0.0
      %5572 = vmatprep.subr.mxu0 0.0
      %5573 = vmatpush1.msra.mxu0 0.0
      %5574 = vmatprep.subr.mxu0 0.0
      %5575 = vmatpush1.msra.mxu0 0.0
      %5576 = vmatprep.subr.mxu0 0.0
      %5577 = vmatpush1.msra.mxu0 0.0
      %5578 = vmatprep.mubr.f32.mxu0 0.0
      %5579 = vmatmul.mubr.f32.gmra.mrb[0].mxu0 %v5512
      %v5580 = vpop.f32.mrb[0].mxu0
      %v5581 = vadd.f32 0.0, %v5580
      %v5582 = vpop.f32.mrb[0].mxu0
      %5583 = vdwg.mxu0
      %v5584 = vadd.f32 %v5433, %v5581
      %5585 = vrot.lane.b32.xlu0 %v4761, 40
      %v5586 = vpop.permute.xlu0 %5585
      %v5588 = vsel %vm1130, %v5118, 0
      %v5590 = vsel %vm1134, %v5586, 0
      %5592 = vmatprep.subr.mxu0 0.0
      %5593 = vmatpush1.msra.mxu0 %v5590
      %5594 = vmatprep.subr.mxu0 0.0
      %5595 = vmatpush1.msra.mxu0 0.0
      %5596 = vmatprep.subr.mxu0 0.0
      %5597 = vmatpush1.msra.mxu0 0.0
      %5598 = vmatprep.subr.mxu0 0.0
      %5599 = vmatpush1.msra.mxu0 0.0
      %5600 = vmatprep.subr.mxu0 0.0
      %5601 = vmatpush1.msra.mxu0 0.0
      %5602 = vmatprep.subr.mxu0 0.0
      %5603 = vmatpush1.msra.mxu0 0.0
      %5604 = vmatprep.subr.mxu0 0.0
      %5605 = vmatpush1.msra.mxu0 0.0
      %5606 = vmatprep.subr.mxu0 0.0
      %5607 = vmatpush1.msra.mxu0 0.0
      %5608 = vmatprep.subr.mxu0 0.0
      %5609 = vmatpush1.msra.mxu0 0.0
      %5610 = vmatprep.subr.mxu0 0.0
      %5611 = vmatpush1.msra.mxu0 0.0
      %5612 = vmatprep.subr.mxu0 0.0
      %5613 = vmatpush1.msra.mxu0 0.0
      %5614 = vmatprep.subr.mxu0 0.0
      %5615 = vmatpush1.msra.mxu0 0.0
      %5616 = vmatprep.subr.mxu0 0.0
      %5617 = vmatpush1.msra.mxu0 0.0
      %5618 = vmatprep.subr.mxu0 0.0
      %5619 = vmatpush1.msra.mxu0 0.0
      %5620 = vmatprep.subr.mxu0 0.0
      %5621 = vmatpush1.msra.mxu0 0.0
      %5622 = vmatprep.subr.mxu0 0.0
      %5623 = vmatpush1.msra.mxu0 0.0
      %5624 = vmatprep.subr.mxu0 0.0
      %5625 = vmatpush1.msra.mxu0 0.0
      %5626 = vmatprep.subr.mxu0 0.0
      %5627 = vmatpush1.msra.mxu0 0.0
      %5628 = vmatprep.subr.mxu0 0.0
      %5629 = vmatpush1.msra.mxu0 0.0
      %5630 = vmatprep.subr.mxu0 0.0
      %5631 = vmatpush1.msra.mxu0 0.0
      %5632 = vmatprep.subr.mxu0 0.0
      %5633 = vmatpush1.msra.mxu0 0.0
      %5634 = vmatprep.subr.mxu0 0.0
      %5635 = vmatpush1.msra.mxu0 0.0
      %5636 = vmatprep.subr.mxu0 0.0
      %5637 = vmatpush1.msra.mxu0 0.0
      %5638 = vmatprep.subr.mxu0 0.0
      %5639 = vmatpush1.msra.mxu0 0.0
      %5640 = vmatprep.subr.mxu0 0.0
      %5641 = vmatpush1.msra.mxu0 0.0
      %5642 = vmatprep.subr.mxu0 0.0
      %5643 = vmatpush1.msra.mxu0 0.0
      %5644 = vmatprep.subr.mxu0 0.0
      %5645 = vmatpush1.msra.mxu0 0.0
      %5646 = vmatprep.subr.mxu0 0.0
      %5647 = vmatpush1.msra.mxu0 0.0
      %5648 = vmatprep.subr.mxu0 0.0
      %5649 = vmatpush1.msra.mxu0 0.0
      %5650 = vmatprep.subr.mxu0 0.0
      %5651 = vmatpush1.msra.mxu0 0.0
      %5652 = vmatprep.subr.mxu0 0.0
      %5653 = vmatpush1.msra.mxu0 0.0
      %5654 = vmatprep.subr.mxu0 0.0
      %5655 = vmatpush1.msra.mxu0 0.0
      %5656 = vmatprep.mubr.f32.mxu0 0.0
      %5657 = vmatmul.mubr.f32.gmra.mrb[0].mxu0 %v5588
      %v5658 = vpop.f32.mrb[0].mxu0
      %v5659 = vadd.f32 0.0, %v5658
      %v5660 = vpop.f32.mrb[0].mxu0
      %5661 = vdwg.mxu0
      %v5663 = vsel %vm769, %v5659, 0
      %5665 = vmatprep.subr.mxu0 0.0
      %5666 = vmatpush1.msra.mxu0 %v5123
      %5667 = vmatprep.subr.mxu0 0.0
      %5668 = vmatpush1.msra.mxu0 0.0
      %5669 = vmatprep.subr.mxu0 0.0
      %5670 = vmatpush1.msra.mxu0 0.0
      %5671 = vmatprep.subr.mxu0 0.0
      %5672 = vmatpush1.msra.mxu0 0.0
      %5673 = vmatprep.subr.mxu0 0.0
      %5674 = vmatpush1.msra.mxu0 0.0
      %5675 = vmatprep.subr.mxu0 0.0
      %5676 = vmatpush1.msra.mxu0 0.0
      %5677 = vmatprep.subr.mxu0 0.0
      %5678 = vmatpush1.msra.mxu0 0.0
      %5679 = vmatprep.subr.mxu0 0.0
      %5680 = vmatpush1.msra.mxu0 0.0
      %5681 = vmatprep.subr.mxu0 0.0
      %5682 = vmatpush1.msra.mxu0 0.0
      %5683 = vmatprep.subr.mxu0 0.0
      %5684 = vmatpush1.msra.mxu0 0.0
      %5685 = vmatprep.subr.mxu0 0.0
      %5686 = vmatpush1.msra.mxu0 0.0
      %5687 = vmatprep.subr.mxu0 0.0
      %5688 = vmatpush1.msra.mxu0 0.0
      %5689 = vmatprep.subr.mxu0 0.0
      %5690 = vmatpush1.msra.mxu0 0.0
      %5691 = vmatprep.subr.mxu0 0.0
      %5692 = vmatpush1.msra.mxu0 0.0
      %5693 = vmatprep.subr.mxu0 0.0
      %5694 = vmatpush1.msra.mxu0 0.0
      %5695 = vmatprep.subr.mxu0 0.0
      %5696 = vmatpush1.msra.mxu0 0.0
      %5697 = vmatprep.subr.mxu0 0.0
      %5698 = vmatpush1.msra.mxu0 0.0
      %5699 = vmatprep.subr.mxu0 0.0
      %5700 = vmatpush1.msra.mxu0 0.0
      %5701 = vmatprep.subr.mxu0 0.0
      %5702 = vmatpush1.msra.mxu0 0.0
      %5703 = vmatprep.subr.mxu0 0.0
      %5704 = vmatpush1.msra.mxu0 0.0
      %5705 = vmatprep.subr.mxu0 0.0
      %5706 = vmatpush1.msra.mxu0 0.0
      %5707 = vmatprep.subr.mxu0 0.0
      %5708 = vmatpush1.msra.mxu0 0.0
      %5709 = vmatprep.subr.mxu0 0.0
      %5710 = vmatpush1.msra.mxu0 0.0
      %5711 = vmatprep.subr.mxu0 0.0
      %5712 = vmatpush1.msra.mxu0 0.0
      %5713 = vmatprep.subr.mxu0 0.0
      %5714 = vmatpush1.msra.mxu0 0.0
      %5715 = vmatprep.subr.mxu0 0.0
      %5716 = vmatpush1.msra.mxu0 0.0
      %5717 = vmatprep.subr.mxu0 0.0
      %5718 = vmatpush1.msra.mxu0 0.0
      %5719 = vmatprep.subr.mxu0 0.0
      %5720 = vmatpush1.msra.mxu0 0.0
      %5721 = vmatprep.subr.mxu0 0.0
      %5722 = vmatpush1.msra.mxu0 0.0
      %5723 = vmatprep.subr.mxu0 0.0
      %5724 = vmatpush1.msra.mxu0 0.0
      %5725 = vmatprep.subr.mxu0 0.0
      %5726 = vmatpush1.msra.mxu0 0.0
      %5727 = vmatprep.subr.mxu0 0.0
      %5728 = vmatpush1.msra.mxu0 0.0
      %5729 = vmatprep.mubr.f32.mxu0 0.0
      %5730 = vmatmul.mubr.f32.gmra.mrb[0].mxu0 %v5663
      %v5731 = vpop.f32.mrb[0].mxu0
      %v5732 = vadd.f32 0.0, %v5731
      %v5733 = vpop.f32.mrb[0].mxu0
      %5734 = vdwg.mxu0
      %v5735 = vadd.f32 %v5584, %v5732
      %v5736 = vadd.f32 %v4644, %v5735
      %s5737 = scalar_lea.vmem %s9, 3
      %v5738 = vld [vmem:[%s5737] sm:$0x1]
      %s5739 = scalar_lea.vmem %s10, 3
      %v5740 = vld [vmem:[%s5739] sm:$0x1]
      %v5741 = vsel %vm650, %v5736, 0.0
      %5742 = vadd.xlane.f32.xlu0 %v5741
      %v5743 = vpop.xlane.xlu0 %5742
      %v5744 = vmul.f32 %v5743, %v654
      %v5745 = vmul.f32 %v5736, %v5736
      %v5746 = vsel %vm650, %v5745, 0.0
      %5747 = vadd.xlane.f32.xlu0 %v5746
      %v5748 = vpop.xlane.xlu0 %5747
      %v5749 = vmul.f32 %v5748, %v654
      %v5750 = vmul.f32 %v5744, %v5744
      %v5751 = vsub.f32 %v5749, %v5750
      %v5752 = vsub.f32 %v5736, %v5744
      %v5753 = vadd.f32 %v5751, 1e-06
      %v5754 = vrsqrt.pop %v5753
      %v5755 = vmul.f32 %v5752, %v5754
      %v5757 = vlaneseq
      %v5758 = vshrl.u32 %v5757, 7
      %v5759 = vsub.s32 0, %v5758
      %v5760 = vrot.slane %v5738, %v5759
      %v5762 = vmul.f32 %v5755, %v5760
      %v5764 = vlaneseq
      %v5765 = vshrl.u32 %v5764, 7
      %v5766 = vsub.s32 0, %v5765
      %v5767 = vrot.slane %v5740, %v5766
      %v5769 = vadd.f32 %v5762, %v5767
      %s5770 = scalar_lea.vmem %s11, 96
      %v5771 = vld [vmem:[%s5770] sm:$0xff]
      %v5772 = vld [vmem:[%s5770 + $0x8] sm:$0xff]
      %v5773 = vld [vmem:[%s5770 + $0x10] sm:$0xff]
      %v5774 = vld [vmem:[%s5770 + $0x18] sm:$0xff]
      %s5775 = scalar_lea.vmem %s12, 3
      %v5776 = vld [vmem:[%s5775] sm:$0x1]
      %v5778 = vlaneseq
      %v5779 = vshrl.u32 %v5778, 7
      %v5780 = vsub.s32 0, %v5779
      %v5781 = vrot.slane %v5776, %v5780
      %v5784 = vsel %vm692, %v5769, 0
      %5786 = vmatprep.subr.mxu0 0.0
      %5787 = vmatpush1.msra.mxu0 %v5771
      %5788 = vmatprep.subr.mxu0 0.0
      %5789 = vmatpush1.msra.mxu0 %v5772
      %5790 = vmatprep.subr.mxu0 0.0
      %5791 = vmatpush1.msra.mxu0 %v5773
      %5792 = vmatprep.subr.mxu0 0.0
      %5793 = vmatpush1.msra.mxu0 %v5774
      %5794 = vmatprep.subr.mxu0 0.0
      %5795 = vmatpush1.msra.mxu0 0.0
      %5796 = vmatprep.subr.mxu0 0.0
      %5797 = vmatpush1.msra.mxu0 0.0
      %5798 = vmatprep.subr.mxu0 0.0
      %5799 = vmatpush1.msra.mxu0 0.0
      %5800 = vmatprep.subr.mxu0 0.0
      %5801 = vmatpush1.msra.mxu0 0.0
      %5802 = vmatprep.subr.mxu0 0.0
      %5803 = vmatpush1.msra.mxu0 0.0
      %5804 = vmatprep.subr.mxu0 0.0
      %5805 = vmatpush1.msra.mxu0 0.0
      %5806 = vmatprep.subr.mxu0 0.0
      %5807 = vmatpush1.msra.mxu0 0.0
      %5808 = vmatprep.subr.mxu0 0.0
      %5809 = vmatpush1.msra.mxu0 0.0
      %5810 = vmatprep.subr.mxu0 0.0
      %5811 = vmatpush1.msra.mxu0 0.0
      %5812 = vmatprep.subr.mxu0 0.0
      %5813 = vmatpush1.msra.mxu0 0.0
      %5814 = vmatprep.subr.mxu0 0.0
      %5815 = vmatpush1.msra.mxu0 0.0
      %5816 = vmatprep.subr.mxu0 0.0
      %5817 = vmatpush1.msra.mxu0 0.0
      %5818 = vmatprep.subr.mxu0 0.0
      %5819 = vmatpush1.msra.mxu0 0.0
      %5820 = vmatprep.subr.mxu0 0.0
      %5821 = vmatpush1.msra.mxu0 0.0
      %5822 = vmatprep.subr.mxu0 0.0
      %5823 = vmatpush1.msra.mxu0 0.0
      %5824 = vmatprep.subr.mxu0 0.0
      %5825 = vmatpush1.msra.mxu0 0.0
      %5826 = vmatprep.subr.mxu0 0.0
      %5827 = vmatpush1.msra.mxu0 0.0
      %5828 = vmatprep.subr.mxu0 0.0
      %5829 = vmatpush1.msra.mxu0 0.0
      %5830 = vmatprep.subr.mxu0 0.0
      %5831 = vmatpush1.msra.mxu0 0.0
      %5832 = vmatprep.subr.mxu0 0.0
      %5833 = vmatpush1.msra.mxu0 0.0
      %5834 = vmatprep.subr.mxu0 0.0
      %5835 = vmatpush1.msra.mxu0 0.0
      %5836 = vmatprep.subr.mxu0 0.0
      %5837 = vmatpush1.msra.mxu0 0.0
      %5838 = vmatprep.subr.mxu0 0.0
      %5839 = vmatpush1.msra.mxu0 0.0
      %5840 = vmatprep.subr.mxu0 0.0
      %5841 = vmatpush1.msra.mxu0 0.0
      %5842 = vmatprep.subr.mxu0 0.0
      %5843 = vmatpush1.msra.mxu0 0.0
      %5844 = vmatprep.subr.mxu0 0.0
      %5845 = vmatpush1.msra.mxu0 0.0
      %5846 = vmatprep.subr.mxu0 0.0
      %5847 = vmatpush1.msra.mxu0 0.0
      %5848 = vmatprep.subr.mxu0 0.0
      %5849 = vmatpush1.msra.mxu0 0.0
      %5850 = vmatprep.mubr.f32.mxu0 0.0
      %5851 = vmatmul.mubr.f32.gmra.mrb[0].mxu0 %v5784
      %v5852 = vpop.f32.mrb[0].mxu0
      %v5853 = vadd.f32 %v5781, %v5852
      %v5854 = vpop.f32.mrb[0].mxu0
      %5855 = vdwg.mxu0
      %v5856 = vmul.f32 %v5853, 0.5
      %v5857 = vmul.f32 %v5853, 0.70710677
      %vm5858 = vcmp.ge.f32.partialorder %v5857, 0.0
      %v5859 = vsel %vm5858, 1.0, -1.0
      %v5860 = vand.u32 2147483647, %v5857
      %v5861 = vmul.f32 %v5860, 0.3275911
      %v5862 = vadd.f32 %v5861, 1.0
      %v5863 = vrcp.pop %v5862
      %v5864 = vmul.f32 %v5863, 1.0614054
      %v5865 = vadd.f32 %v5864, -1.4531521
      %v5866 = vmul.f32 %v5863, %v5865
      %v5867 = vadd.f32 %v5866, 1.4214138
      %v5868 = vmul.f32 %v5863, %v5867
      %v5869 = vadd.f32 %v5868, -0.28449672
      %v5870 = vmul.f32 %v5863, %v5869
      %v5871 = vadd.f32 %v5870, 0.2548296
      %v5872 = vmul.f32 %v5863, %v5871
      %v5873 = vsub.f32 0.0, %v5860
      %v5874 = vmul.f32 %v5873, %v5860
      %v5875 = vmul.f32 %v5874, 1.442695
      %v5876 = vpow.pop %v5875
      %v5877 = vmul.f32 %v5872, %v5876
      %v5878 = vsub.f32 1.0, %v5877
      %v5879 = vmul.f32 %v5859, %v5878
      %v5880 = vadd.f32 %v5879, 1.0
      %v5881 = vmul.f32 %v5856, %v5880
      %s5882 = scalar_lea.vmem %s13, 384
      %v5883 = vld [vmem:[%s5882] sm:$0xff]
      %v5884 = vld [vmem:[%s5882 + $0x8] sm:$0xff]
      %v5885 = vld [vmem:[%s5882 + $0x10] sm:$0xff]
      %v5886 = vld [vmem:[%s5882 + $0x18] sm:$0xff]
      %v5887 = vld [vmem:[%s5882 + $0x20] sm:$0xff]
      %v5888 = vld [vmem:[%s5882 + $0x28] sm:$0xff]
      %v5889 = vld [vmem:[%s5882 + $0x30] sm:$0xff]
      %v5890 = vld [vmem:[%s5882 + $0x38] sm:$0xff]
      %v5891 = vld [vmem:[%s5882 + $0x40] sm:$0xff]
      %v5892 = vld [vmem:[%s5882 + $0x48] sm:$0xff]
      %v5893 = vld [vmem:[%s5882 + $0x50] sm:$0xff]
      %v5894 = vld [vmem:[%s5882 + $0x58] sm:$0xff]
      %v5895 = vld [vmem:[%s5882 + $0x60] sm:$0xff]
      %v5896 = vld [vmem:[%s5882 + $0x68] sm:$0xff]
      %v5897 = vld [vmem:[%s5882 + $0x70] sm:$0xff]
      %v5898 = vld [vmem:[%s5882 + $0x78] sm:$0xff]
      %5899 = vmatprep.subr.mxu0 0.0
      %5900 = vmatpush1.msra.mxu0 %v5883
      %5901 = vmatprep.subr.mxu0 0.0
      %5902 = vmatpush1.msra.mxu0 %v5884
      %5903 = vmatprep.subr.mxu0 0.0
      %5904 = vmatpush1.msra.mxu0 %v5885
      %5905 = vmatprep.subr.mxu0 0.0
      %5906 = vmatpush1.msra.mxu0 %v5886
      %5907 = vmatprep.subr.mxu0 0.0
      %5908 = vmatpush1.msra.mxu0 %v5887
      %5909 = vmatprep.subr.mxu0 0.0
      %5910 = vmatpush1.msra.mxu0 %v5888
      %5911 = vmatprep.subr.mxu0 0.0
      %5912 = vmatpush1.msra.mxu0 %v5889
      %5913 = vmatprep.subr.mxu0 0.0
      %5914 = vmatpush1.msra.mxu0 %v5890
      %5915 = vmatprep.subr.mxu0 0.0
      %5916 = vmatpush1.msra.mxu0 %v5891
      %5917 = vmatprep.subr.mxu0 0.0
      %5918 = vmatpush1.msra.mxu0 %v5892
      %5919 = vmatprep.subr.mxu0 0.0
      %5920 = vmatpush1.msra.mxu0 %v5893
      %5921 = vmatprep.subr.mxu0 0.0
      %5922 = vmatpush1.msra.mxu0 %v5894
      %5923 = vmatprep.subr.mxu0 0.0
      %5924 = vmatpush1.msra.mxu0 %v5895
      %5925 = vmatprep.subr.mxu0 0.0
      %5926 = vmatpush1.msra.mxu0 %v5896
      %5927 = vmatprep.subr.mxu0 0.0
      %5928 = vmatpush1.msra.mxu0 %v5897
      %5929 = vmatprep.subr.mxu0 0.0
      %5930 = vmatpush1.msra.mxu0 %v5898
      %5931 = vmatprep.subr.mxu0 0.0
      %5932 = vmatpush1.msra.mxu0 0.0
      %5933 = vmatprep.subr.mxu0 0.0
      %5934 = vmatpush1.msra.mxu0 0.0
      %5935 = vmatprep.subr.mxu0 0.0
      %5936 = vmatpush1.msra.mxu0 0.0
      %5937 = vmatprep.subr.mxu0 0.0
      %5938 = vmatpush1.msra.mxu0 0.0
      %5939 = vmatprep.subr.mxu0 0.0
      %5940 = vmatpush1.msra.mxu0 0.0
      %5941 = vmatprep.subr.mxu0 0.0
      %5942 = vmatpush1.msra.mxu0 0.0
      %5943 = vmatprep.subr.mxu0 0.0
      %5944 = vmatpush1.msra.mxu0 0.0
      %5945 = vmatprep.subr.mxu0 0.0
      %5946 = vmatpush1.msra.mxu0 0.0
      %5947 = vmatprep.subr.mxu0 0.0
      %5948 = vmatpush1.msra.mxu0 0.0
      %5949 = vmatprep.subr.mxu0 0.0
      %5950 = vmatpush1.msra.mxu0 0.0
      %5951 = vmatprep.subr.mxu0 0.0
      %5952 = vmatpush1.msra.mxu0 0.0
      %5953 = vmatprep.subr.mxu0 0.0
      %5954 = vmatpush1.msra.mxu0 0.0
      %5955 = vmatprep.subr.mxu0 0.0
      %5956 = vmatpush1.msra.mxu0 0.0
      %5957 = vmatprep.subr.mxu0 0.0
      %5958 = vmatpush1.msra.mxu0 0.0
      %5959 = vmatprep.subr.mxu0 0.0
      %5960 = vmatpush1.msra.mxu0 0.0
      %5961 = vmatprep.subr.mxu0 0.0
      %5962 = vmatpush1.msra.mxu0 0.0
      %5963 = vmatprep.mubr.f32.mxu0 0.0
      %5964 = vmatmul.mubr.f32.gmra.mrb[0].mxu0 %v5881
      %v5965 = vpop.f32.mrb[0].mxu0
      %v5966 = vadd.f32 0.0, %v5965
      %v5967 = vpop.f32.mrb[0].mxu0
      %5968 = vdwg.mxu0
      %v5969 = vadd.f32 %v5736, %v5966
      %s5970 = scalar_lea.vmem %s14, 3
      %v5971 = vld [vmem:[%s5970] sm:$0x1]
      %v5973 = vlaneseq
      %v5974 = vshrl.u32 %v5973, 7
      %v5975 = vsub.s32 0, %v5974
      %v5976 = vrot.slane %v5971, %v5975
      %v5978 = vadd.f32 %v5969, %v5976
      %s5979 = scalar_lea.vmem %s3, 4
      %v5980 = vld [vmem:[%s5979] sm:$0x1]
      %s5981 = scalar_lea.vmem %s4, 4
      %v5982 = vld [vmem:[%s5981] sm:$0x1]
      %v5983 = vsel %vm650, %v5978, 0.0
      %5984 = vadd.xlane.f32.xlu0 %v5983
      %v5985 = vpop.xlane.xlu0 %5984
      %v5986 = vmul.f32 %v5985, %v654
      %v5987 = vmul.f32 %v5978, %v5978
      %v5988 = vsel %vm650, %v5987, 0.0
      %5989 = vadd.xlane.f32.xlu0 %v5988
      %v5990 = vpop.xlane.xlu0 %5989
      %v5991 = vmul.f32 %v5990, %v654
      %v5992 = vmul.f32 %v5986, %v5986
      %v5993 = vsub.f32 %v5991, %v5992
      %v5994 = vsub.f32 %v5978, %v5986
      %v5995 = vadd.f32 %v5993, 1e-06
      %v5996 = vrsqrt.pop %v5995
      %v5997 = vmul.f32 %v5994, %v5996
      %v5999 = vlaneseq
      %v6000 = vshrl.u32 %v5999, 7
      %v6001 = vsub.s32 0, %v6000
      %v6002 = vrot.slane %v5980, %v6001
      %v6004 = vmul.f32 %v5997, %v6002
      %v6006 = vlaneseq
      %v6007 = vshrl.u32 %v6006, 7
      %v6008 = vsub.s32 0, %v6007
      %v6009 = vrot.slane %v5982, %v6008
      %v6011 = vadd.f32 %v6004, %v6009
      %s6012 = scalar_lea.vmem %s5, 128
      %v6013 = vld [vmem:[%s6012] sm:$0xff]
      %v6014 = vld [vmem:[%s6012 + $0x8] sm:$0xff]
      %v6015 = vld [vmem:[%s6012 + $0x10] sm:$0xff]
      %v6016 = vld [vmem:[%s6012 + $0x18] sm:$0xff]
      %s6017 = scalar_lea.vmem %s6, 4
      %v6018 = vld [vmem:[%s6017] sm:$0x1]
      %v6020 = vlaneseq
      %v6021 = vshrl.u32 %v6020, 7
      %v6022 = vsub.s32 0, %v6021
      %v6023 = vrot.slane %v6018, %v6022
      %v6026 = vsel %vm692, %v6011, 0
      %6028 = vmatprep.subr.mxu0 0.0
      %6029 = vmatpush1.msra.mxu0 %v6013
      %6030 = vmatprep.subr.mxu0 0.0
      %6031 = vmatpush1.msra.mxu0 %v6014
      %6032 = vmatprep.subr.mxu0 0.0
      %6033 = vmatpush1.msra.mxu0 %v6015
      %6034 = vmatprep.subr.mxu0 0.0
      %6035 = vmatpush1.msra.mxu0 %v6016
      %6036 = vmatprep.subr.mxu0 0.0
      %6037 = vmatpush1.msra.mxu0 0.0
      %6038 = vmatprep.subr.mxu0 0.0
      %6039 = vmatpush1.msra.mxu0 0.0
      %6040 = vmatprep.subr.mxu0 0.0
      %6041 = vmatpush1.msra.mxu0 0.0
      %6042 = vmatprep.subr.mxu0 0.0
      %6043 = vmatpush1.msra.mxu0 0.0
      %6044 = vmatprep.subr.mxu0 0.0
      %6045 = vmatpush1.msra.mxu0 0.0
      %6046 = vmatprep.subr.mxu0 0.0
      %6047 = vmatpush1.msra.mxu0 0.0
      %6048 = vmatprep.subr.mxu0 0.0
      %6049 = vmatpush1.msra.mxu0 0.0
      %6050 = vmatprep.subr.mxu0 0.0
      %6051 = vmatpush1.msra.mxu0 0.0
      %6052 = vmatprep.subr.mxu0 0.0
      %6053 = vmatpush1.msra.mxu0 0.0
      %6054 = vmatprep.subr.mxu0 0.0
      %6055 = vmatpush1.msra.mxu0 0.0
      %6056 = vmatprep.subr.mxu0 0.0
      %6057 = vmatpush1.msra.mxu0 0.0
      %6058 = vmatprep.subr.mxu0 0.0
      %6059 = vmatpush1.msra.mxu0 0.0
      %6060 = vmatprep.subr.mxu0 0.0
      %6061 = vmatpush1.msra.mxu0 0.0
      %6062 = vmatprep.subr.mxu0 0.0
      %6063 = vmatpush1.msra.mxu0 0.0
      %6064 = vmatprep.subr.mxu0 0.0
      %6065 = vmatpush1.msra.mxu0 0.0
      %6066 = vmatprep.subr.mxu0 0.0
      %6067 = vmatpush1.msra.mxu0 0.0
      %6068 = vmatprep.subr.mxu0 0.0
      %6069 = vmatpush1.msra.mxu0 0.0
      %6070 = vmatprep.subr.mxu0 0.0
      %6071 = vmatpush1.msra.mxu0 0.0
      %6072 = vmatprep.subr.mxu0 0.0
      %6073 = vmatpush1.msra.mxu0 0.0
      %6074 = vmatprep.subr.mxu0 0.0
      %6075 = vmatpush1.msra.mxu0 0.0
      %6076 = vmatprep.subr.mxu0 0.0
      %6077 = vmatpush1.msra.mxu0 0.0
      %6078 = vmatprep.subr.mxu0 0.0
      %6079 = vmatpush1.msra.mxu0 0.0
      %6080 = vmatprep.subr.mxu0 0.0
      %6081 = vmatpush1.msra.mxu0 0.0
      %6082 = vmatprep.subr.mxu0 0.0
      %6083 = vmatpush1.msra.mxu0 0.0
      %6084 = vmatprep.subr.mxu0 0.0
      %6085 = vmatpush1.msra.mxu0 0.0
      %6086 = vmatprep.subr.mxu0 0.0
      %6087 = vmatpush1.msra.mxu0 0.0
      %6088 = vmatprep.subr.mxu0 0.0
      %6089 = vmatpush1.msra.mxu0 0.0
      %6090 = vmatprep.subr.mxu0 0.0
      %6091 = vmatpush1.msra.mxu0 0.0
      %6092 = vmatprep.mubr.f32.mxu0 0.0
      %6093 = vmatmul.mubr.f32.gmra.mrb[0].mxu0 %v6026
      %v6094 = vpop.f32.mrb[0].mxu0
      %v6095 = vadd.f32 %v6023, %v6094
      %v6096 = vpop.f32.mrb[0].mxu0
      %6097 = vdwg.mxu0
      %6099 = vrot.lane.b32.xlu0 %v6095, 96
      %v6100 = vpop.permute.xlu0 %6099
      %v6101 = vsel %vm769, %v6095, 0
      %v6103 = vsel %vm769, %v6100, 0
      %6105 = vmatprep.subr.mxu0 0.0
      %6106 = vmatpush1.xpose.msra.mxu0 %v6103
      %6107 = vmatprep.subr.mxu0 0.0
      %6108 = vmatpush1.xpose.msra.mxu0 0.0
      %6109 = vmatprep.subr.mxu0 0.0
      %6110 = vmatpush1.xpose.msra.mxu0 0.0
      %6111 = vmatprep.subr.mxu0 0.0
      %6112 = vmatpush1.xpose.msra.mxu0 0.0
      %6113 = vmatprep.subr.mxu0 0.0
      %6114 = vmatpush1.xpose.msra.mxu0 0.0
      %6115 = vmatprep.subr.mxu0 0.0
      %6116 = vmatpush1.xpose.msra.mxu0 0.0
      %6117 = vmatprep.subr.mxu0 0.0
      %6118 = vmatpush1.xpose.msra.mxu0 0.0
      %6119 = vmatprep.subr.mxu0 0.0
      %6120 = vmatpush1.xpose.msra.mxu0 0.0
      %6121 = vmatprep.subr.mxu0 0.0
      %6122 = vmatpush1.xpose.msra.mxu0 0.0
      %6123 = vmatprep.subr.mxu0 0.0
      %6124 = vmatpush1.xpose.msra.mxu0 0.0
      %6125 = vmatprep.subr.mxu0 0.0
      %6126 = vmatpush1.xpose.msra.mxu0 0.0
      %6127 = vmatprep.subr.mxu0 0.0
      %6128 = vmatpush1.xpose.msra.mxu0 0.0
      %6129 = vmatprep.subr.mxu0 0.0
      %6130 = vmatpush1.xpose.msra.mxu0 0.0
      %6131 = vmatprep.subr.mxu0 0.0
      %6132 = vmatpush1.xpose.msra.mxu0 0.0
      %6133 = vmatprep.subr.mxu0 0.0
      %6134 = vmatpush1.xpose.msra.mxu0 0.0
      %6135 = vmatprep.subr.mxu0 0.0
      %6136 = vmatpush1.xpose.msra.mxu0 0.0
      %6137 = vmatprep.subr.mxu0 0.0
      %6138 = vmatpush1.xpose.msra.mxu0 0.0
      %6139 = vmatprep.subr.mxu0 0.0
      %6140 = vmatpush1.xpose.msra.mxu0 0.0
      %6141 = vmatprep.subr.mxu0 0.0
      %6142 = vmatpush1.xpose.msra.mxu0 0.0
      %6143 = vmatprep.subr.mxu0 0.0
      %6144 = vmatpush1.xpose.msra.mxu0 0.0
      %6145 = vmatprep.subr.mxu0 0.0
      %6146 = vmatpush1.xpose.msra.mxu0 0.0
      %6147 = vmatprep.subr.mxu0 0.0
      %6148 = vmatpush1.xpose.msra.mxu0 0.0
      %6149 = vmatprep.subr.mxu0 0.0
      %6150 = vmatpush1.xpose.msra.mxu0 0.0
      %6151 = vmatprep.subr.mxu0 0.0
      %6152 = vmatpush1.xpose.msra.mxu0 0.0
      %6153 = vmatprep.subr.mxu0 0.0
      %6154 = vmatpush1.xpose.msra.mxu0 0.0
      %6155 = vmatprep.subr.mxu0 0.0
      %6156 = vmatpush1.xpose.msra.mxu0 0.0
      %6157 = vmatprep.subr.mxu0 0.0
      %6158 = vmatpush1.xpose.msra.mxu0 0.0
      %6159 = vmatprep.subr.mxu0 0.0
      %6160 = vmatpush1.xpose.msra.mxu0 0.0
      %6161 = vmatprep.subr.mxu0 0.0
      %6162 = vmatpush1.xpose.msra.mxu0 0.0
      %6163 = vmatprep.subr.mxu0 0.0
      %6164 = vmatpush1.xpose.msra.mxu0 0.0
      %6165 = vmatprep.subr.mxu0 0.0
      %6166 = vmatpush1.xpose.msra.mxu0 0.0
      %6167 = vmatprep.subr.mxu0 0.0
      %6168 = vmatpush1.xpose.msra.mxu0 0.0
      %6169 = vmatprep.mubr.f32.mxu0 0.0
      %6170 = vmatmul.mubr.f32.gmra.mrb[0].mxu0 %v6101
      %v6171 = vpop.f32.mrb[0].mxu0
      %v6172 = vadd.f32 0.0, %v6171
      %v6173 = vpop.f32.mrb[0].mxu0
      %6174 = vdwg.mxu0
      %6175 = vrot.lane.b32.xlu0 %v6095, 120
      %v6176 = vpop.permute.xlu0 %6175
      %6177 = vrot.lane.b32.xlu0 %v6095, 88
      %v6178 = vpop.permute.xlu0 %6177
      %v6179 = vsel %vm769, %v6176, 0
      %v6181 = vsel %vm769, %v6178, 0
      %6183 = vmatprep.subr.mxu0 0.0
      %6184 = vmatpush1.xpose.msra.mxu0 %v6181
      %6185 = vmatprep.subr.mxu0 0.0
      %6186 = vmatpush1.xpose.msra.mxu0 0.0
      %6187 = vmatprep.subr.mxu0 0.0
      %6188 = vmatpush1.xpose.msra.mxu0 0.0
      %6189 = vmatprep.subr.mxu0 0.0
      %6190 = vmatpush1.xpose.msra.mxu0 0.0
      %6191 = vmatprep.subr.mxu0 0.0
      %6192 = vmatpush1.xpose.msra.mxu0 0.0
      %6193 = vmatprep.subr.mxu0 0.0
      %6194 = vmatpush1.xpose.msra.mxu0 0.0
      %6195 = vmatprep.subr.mxu0 0.0
      %6196 = vmatpush1.xpose.msra.mxu0 0.0
      %6197 = vmatprep.subr.mxu0 0.0
      %6198 = vmatpush1.xpose.msra.mxu0 0.0
      %6199 = vmatprep.subr.mxu0 0.0
      %6200 = vmatpush1.xpose.msra.mxu0 0.0
      %6201 = vmatprep.subr.mxu0 0.0
      %6202 = vmatpush1.xpose.msra.mxu0 0.0
      %6203 = vmatprep.subr.mxu0 0.0
      %6204 = vmatpush1.xpose.msra.mxu0 0.0
      %6205 = vmatprep.subr.mxu0 0.0
      %6206 = vmatpush1.xpose.msra.mxu0 0.0
      %6207 = vmatprep.subr.mxu0 0.0
      %6208 = vmatpush1.xpose.msra.mxu0 0.0
      %6209 = vmatprep.subr.mxu0 0.0
      %6210 = vmatpush1.xpose.msra.mxu0 0.0
      %6211 = vmatprep.subr.mxu0 0.0
      %6212 = vmatpush1.xpose.msra.mxu0 0.0
      %6213 = vmatprep.subr.mxu0 0.0
      %6214 = vmatpush1.xpose.msra.mxu0 0.0
      %6215 = vmatprep.subr.mxu0 0.0
      %6216 = vmatpush1.xpose.msra.mxu0 0.0
      %6217 = vmatprep.subr.mxu0 0.0
      %6218 = vmatpush1.xpose.msra.mxu0 0.0
      %6219 = vmatprep.subr.mxu0 0.0
      %6220 = vmatpush1.xpose.msra.mxu0 0.0
      %6221 = vmatprep.subr.mxu0 0.0
      %6222 = vmatpush1.xpose.msra.mxu0 0.0
      %6223 = vmatprep.subr.mxu0 0.0
      %6224 = vmatpush1.xpose.msra.mxu0 0.0
      %6225 = vmatprep.subr.mxu0 0.0
      %6226 = vmatpush1.xpose.msra.mxu0 0.0
      %6227 = vmatprep.subr.mxu0 0.0
      %6228 = vmatpush1.xpose.msra.mxu0 0.0
      %6229 = vmatprep.subr.mxu0 0.0
      %6230 = vmatpush1.xpose.msra.mxu0 0.0
      %6231 = vmatprep.subr.mxu0 0.0
      %6232 = vmatpush1.xpose.msra.mxu0 0.0
      %6233 = vmatprep.subr.mxu0 0.0
      %6234 = vmatpush1.xpose.msra.mxu0 0.0
      %6235 = vmatprep.subr.mxu0 0.0
      %6236 = vmatpush1.xpose.msra.mxu0 0.0
      %6237 = vmatprep.subr.mxu0 0.0
      %6238 = vmatpush1.xpose.msra.mxu0 0.0
      %6239 = vmatprep.subr.mxu0 0.0
      %6240 = vmatpush1.xpose.msra.mxu0 0.0
      %6241 = vmatprep.subr.mxu0 0.0
      %6242 = vmatpush1.xpose.msra.mxu0 0.0
      %6243 = vmatprep.subr.mxu0 0.0
      %6244 = vmatpush1.xpose.msra.mxu0 0.0
      %6245 = vmatprep.subr.mxu0 0.0
      %6246 = vmatpush1.xpose.msra.mxu0 0.0
      %6247 = vmatprep.mubr.f32.mxu0 0.0
      %6248 = vmatmul.mubr.f32.gmra.mrb[0].mxu0 %v6179
      %v6249 = vpop.f32.mrb[0].mxu0
      %v6250 = vadd.f32 0.0, %v6249
      %v6251 = vpop.f32.mrb[0].mxu0
      %6252 = vdwg.mxu0
      %6253 = vrot.lane.b32.xlu0 %v6095, 112
      %v6254 = vpop.permute.xlu0 %6253
      %6255 = vrot.lane.b32.xlu0 %v6095, 80
      %v6256 = vpop.permute.xlu0 %6255
      %v6257 = vsel %vm769, %v6254, 0
      %v6259 = vsel %vm769, %v6256, 0
      %6261 = vmatprep.subr.mxu0 0.0
      %6262 = vmatpush1.xpose.msra.mxu0 %v6259
      %6263 = vmatprep.subr.mxu0 0.0
      %6264 = vmatpush1.xpose.msra.mxu0 0.0
      %6265 = vmatprep.subr.mxu0 0.0
      %6266 = vmatpush1.xpose.msra.mxu0 0.0
      %6267 = vmatprep.subr.mxu0 0.0
      %6268 = vmatpush1.xpose.msra.mxu0 0.0
      %6269 = vmatprep.subr.mxu0 0.0
      %6270 = vmatpush1.xpose.msra.mxu0 0.0
      %6271 = vmatprep.subr.mxu0 0.0
      %6272 = vmatpush1.xpose.msra.mxu0 0.0
      %6273 = vmatprep.subr.mxu0 0.0
      %6274 = vmatpush1.xpose.msra.mxu0 0.0
      %6275 = vmatprep.subr.mxu0 0.0
      %6276 = vmatpush1.xpose.msra.mxu0 0.0
      %6277 = vmatprep.subr.mxu0 0.0
      %6278 = vmatpush1.xpose.msra.mxu0 0.0
      %6279 = vmatprep.subr.mxu0 0.0
      %6280 = vmatpush1.xpose.msra.mxu0 0.0
      %6281 = vmatprep.subr.mxu0 0.0
      %6282 = vmatpush1.xpose.msra.mxu0 0.0
      %6283 = vmatprep.subr.mxu0 0.0
      %6284 = vmatpush1.xpose.msra.mxu0 0.0
      %6285 = vmatprep.subr.mxu0 0.0
      %6286 = vmatpush1.xpose.msra.mxu0 0.0
      %6287 = vmatprep.subr.mxu0 0.0
      %6288 = vmatpush1.xpose.msra.mxu0 0.0
      %6289 = vmatprep.subr.mxu0 0.0
      %6290 = vmatpush1.xpose.msra.mxu0 0.0
      %6291 = vmatprep.subr.mxu0 0.0
      %6292 = vmatpush1.xpose.msra.mxu0 0.0
      %6293 = vmatprep.subr.mxu0 0.0
      %6294 = vmatpush1.xpose.msra.mxu0 0.0
      %6295 = vmatprep.subr.mxu0 0.0
      %6296 = vmatpush1.xpose.msra.mxu0 0.0
      %6297 = vmatprep.subr.mxu0 0.0
      %6298 = vmatpush1.xpose.msra.mxu0 0.0
      %6299 = vmatprep.subr.mxu0 0.0
      %6300 = vmatpush1.xpose.msra.mxu0 0.0
      %6301 = vmatprep.subr.mxu0 0.0
      %6302 = vmatpush1.xpose.msra.mxu0 0.0
      %6303 = vmatprep.subr.mxu0 0.0
      %6304 = vmatpush1.xpose.msra.mxu0 0.0
      %6305 = vmatprep.subr.mxu0 0.0
      %6306 = vmatpush1.xpose.msra.mxu0 0.0
      %6307 = vmatprep.subr.mxu0 0.0
      %6308 = vmatpush1.xpose.msra.mxu0 0.0
      %6309 = vmatprep.subr.mxu0 0.0
      %6310 = vmatpush1.xpose.msra.mxu0 0.0
      %6311 = vmatprep.subr.mxu0 0.0
      %6312 = vmatpush1.xpose.msra.mxu0 0.0
      %6313 = vmatprep.subr.mxu0 0.0
      %6314 = vmatpush1.xpose.msra.mxu0 0.0
      %6315 = vmatprep.subr.mxu0 0.0
      %6316 = vmatpush1.xpose.msra.mxu0 0.0
      %6317 = vmatprep.subr.mxu0 0.0
      %6318 = vmatpush1.xpose.msra.mxu0 0.0
      %6319 = vmatprep.subr.mxu0 0.0
      %6320 = vmatpush1.xpose.msra.mxu0 0.0
      %6321 = vmatprep.subr.mxu0 0.0
      %6322 = vmatpush1.xpose.msra.mxu0 0.0
      %6323 = vmatprep.subr.mxu0 0.0
      %6324 = vmatpush1.xpose.msra.mxu0 0.0
      %6325 = vmatprep.mubr.f32.mxu0 0.0
      %6326 = vmatmul.mubr.f32.gmra.mrb[0].mxu0 %v6257
      %v6327 = vpop.f32.mrb[0].mxu0
      %v6328 = vadd.f32 0.0, %v6327
      %v6329 = vpop.f32.mrb[0].mxu0
      %6330 = vdwg.mxu0
      %6331 = vrot.lane.b32.xlu0 %v6095, 104
      %v6332 = vpop.permute.xlu0 %6331
      %6333 = vrot.lane.b32.xlu0 %v6095, 72
      %v6334 = vpop.permute.xlu0 %6333
      %v6335 = vsel %vm769, %v6332, 0
      %v6337 = vsel %vm769, %v6334, 0
      %6339 = vmatprep.subr.mxu0 0.0
      %6340 = vmatpush1.xpose.msra.mxu0 %v6337
      %6341 = vmatprep.subr.mxu0 0.0
      %6342 = vmatpush1.xpose.msra.mxu0 0.0
      %6343 = vmatprep.subr.mxu0 0.0
      %6344 = vmatpush1.xpose.msra.mxu0 0.0
      %6345 = vmatprep.subr.mxu0 0.0
      %6346 = vmatpush1.xpose.msra.mxu0 0.0
      %6347 = vmatprep.subr.mxu0 0.0
      %6348 = vmatpush1.xpose.msra.mxu0 0.0
      %6349 = vmatprep.subr.mxu0 0.0
      %6350 = vmatpush1.xpose.msra.mxu0 0.0
      %6351 = vmatprep.subr.mxu0 0.0
      %6352 = vmatpush1.xpose.msra.mxu0 0.0
      %6353 = vmatprep.subr.mxu0 0.0
      %6354 = vmatpush1.xpose.msra.mxu0 0.0
      %6355 = vmatprep.subr.mxu0 0.0
      %6356 = vmatpush1.xpose.msra.mxu0 0.0
      %6357 = vmatprep.subr.mxu0 0.0
      %6358 = vmatpush1.xpose.msra.mxu0 0.0
      %6359 = vmatprep.subr.mxu0 0.0
      %6360 = vmatpush1.xpose.msra.mxu0 0.0
      %6361 = vmatprep.subr.mxu0 0.0
      %6362 = vmatpush1.xpose.msra.mxu0 0.0
      %6363 = vmatprep.subr.mxu0 0.0
      %6364 = vmatpush1.xpose.msra.mxu0 0.0
      %6365 = vmatprep.subr.mxu0 0.0
      %6366 = vmatpush1.xpose.msra.mxu0 0.0
      %6367 = vmatprep.subr.mxu0 0.0
      %6368 = vmatpush1.xpose.msra.mxu0 0.0
      %6369 = vmatprep.subr.mxu0 0.0
      %6370 = vmatpush1.xpose.msra.mxu0 0.0
      %6371 = vmatprep.subr.mxu0 0.0
      %6372 = vmatpush1.xpose.msra.mxu0 0.0
      %6373 = vmatprep.subr.mxu0 0.0
      %6374 = vmatpush1.xpose.msra.mxu0 0.0
      %6375 = vmatprep.subr.mxu0 0.0
      %6376 = vmatpush1.xpose.msra.mxu0 0.0
      %6377 = vmatprep.subr.mxu0 0.0
      %6378 = vmatpush1.xpose.msra.mxu0 0.0
      %6379 = vmatprep.subr.mxu0 0.0
      %6380 = vmatpush1.xpose.msra.mxu0 0.0
      %6381 = vmatprep.subr.mxu0 0.0
      %6382 = vmatpush1.xpose.msra.mxu0 0.0
      %6383 = vmatprep.subr.mxu0 0.0
      %6384 = vmatpush1.xpose.msra.mxu0 0.0
      %6385 = vmatprep.subr.mxu0 0.0
      %6386 = vmatpush1.xpose.msra.mxu0 0.0
      %6387 = vmatprep.subr.mxu0 0.0
      %6388 = vmatpush1.xpose.msra.mxu0 0.0
      %6389 = vmatprep.subr.mxu0 0.0
      %6390 = vmatpush1.xpose.msra.mxu0 0.0
      %6391 = vmatprep.subr.mxu0 0.0
      %6392 = vmatpush1.xpose.msra.mxu0 0.0
      %6393 = vmatprep.subr.mxu0 0.0
      %6394 = vmatpush1.xpose.msra.mxu0 0.0
      %6395 = vmatprep.subr.mxu0 0.0
      %6396 = vmatpush1.xpose.msra.mxu0 0.0
      %6397 = vmatprep.subr.mxu0 0.0
      %6398 = vmatpush1.xpose.msra.mxu0 0.0
      %6399 = vmatprep.subr.mxu0 0.0
      %6400 = vmatpush1.xpose.msra.mxu0 0.0
      %6401 = vmatprep.subr.mxu0 0.0
      %6402 = vmatpush1.xpose.msra.mxu0 0.0
      %6403 = vmatprep.mubr.f32.mxu0 0.0
      %6404 = vmatmul.mubr.f32.gmra.mrb[0].mxu0 %v6335
      %v6405 = vpop.f32.mrb[0].mxu0
      %v6406 = vadd.f32 0.0, %v6405
      %v6407 = vpop.f32.mrb[0].mxu0
      %6408 = vdwg.mxu0
      %v6409 = vsel %vm1078, %v6172, -inf
      %6410 = vmax.xlane.f32.xlu0 %v6409
      %v6411 = vpop.xlane.xlu0 %6410
      %v6412 = vsel %vm1078, %v6250, -inf
      %6413 = vmax.xlane.f32.xlu0 %v6412
      %v6414 = vpop.xlane.xlu0 %6413
      %v6415 = vsel %vm1078, %v6328, -inf
      %6416 = vmax.xlane.f32.xlu0 %v6415
      %v6417 = vpop.xlane.xlu0 %6416
      %v6418 = vsel %vm1078, %v6406, -inf
      %6419 = vmax.xlane.f32.xlu0 %v6418
      %v6420 = vpop.xlane.xlu0 %6419
      %v6421 = vsub.f32 %v6172, %v6411
      %v6422 = vsub.f32 %v6250, %v6414
      %v6423 = vsub.f32 %v6328, %v6417
      %v6424 = vsub.f32 %v6406, %v6420
      %v6425 = vmul.f32 %v6421, 1.442695
      %v6426 = vpow.pop %v6425
      %v6427 = vmul.f32 %v6422, 1.442695
      %v6428 = vpow.pop %v6427
      %v6429 = vmul.f32 %v6423, 1.442695
      %v6430 = vpow.pop %v6429
      %v6431 = vmul.f32 %v6424, 1.442695
      %v6432 = vpow.pop %v6431
      %v6433 = vsel %vm1078, %v6426, 0.0
      %6434 = vadd.xlane.f32.xlu0 %v6433
      %v6435 = vpop.xlane.xlu0 %6434
      %v6436 = vsel %vm1078, %v6428, 0.0
      %6437 = vadd.xlane.f32.xlu0 %v6436
      %v6438 = vpop.xlane.xlu0 %6437
      %v6439 = vsel %vm1078, %v6430, 0.0
      %6440 = vadd.xlane.f32.xlu0 %v6439
      %v6441 = vpop.xlane.xlu0 %6440
      %v6442 = vsel %vm1078, %v6432, 0.0
      %6443 = vadd.xlane.f32.xlu0 %v6442
      %v6444 = vpop.xlane.xlu0 %6443
      %v6445 = vrcp.pop %v6435
      %v6446 = vrcp.pop %v6438
      %v6447 = vrcp.pop %v6441
      %v6448 = vrcp.pop %v6444
      %v6449 = vmul.f32 %v6426, %v6445
      %v6450 = vmul.f32 %v6428, %v6446
      %v6451 = vmul.f32 %v6430, %v6447
      %v6452 = vmul.f32 %v6432, %v6448
      %s6453 = scalar_lea.vmem %s7, 128
      %v6454 = vld [vmem:[%s6453] sm:$0xff]
      %v6455 = vld [vmem:[%s6453 + $0x8] sm:$0xff]
      %v6456 = vld [vmem:[%s6453 + $0x10] sm:$0xff]
      %v6457 = vld [vmem:[%s6453 + $0x18] sm:$0xff]
      %s6458 = scalar_lea.vmem %s8, 4
      %v6459 = vld [vmem:[%s6458] sm:$0x1]
      %6460 = vrot.lane.b32.xlu0 %v6095, 64
      %v6461 = vpop.permute.xlu0 %6460
      %v6463 = vsel %vm1130, %v6449, 0
      %v6465 = vsel %vm1134, %v6461, 0
      %6467 = vmatprep.subr.mxu0 0.0
      %6468 = vmatpush1.msra.mxu0 %v6465
      %6469 = vmatprep.subr.mxu0 0.0
      %6470 = vmatpush1.msra.mxu0 0.0
      %6471 = vmatprep.subr.mxu0 0.0
      %6472 = vmatpush1.msra.mxu0 0.0
      %6473 = vmatprep.subr.mxu0 0.0
      %6474 = vmatpush1.msra.mxu0 0.0
      %6475 = vmatprep.subr.mxu0 0.0
      %6476 = vmatpush1.msra.mxu0 0.0
      %6477 = vmatprep.subr.mxu0 0.0
      %6478 = vmatpush1.msra.mxu0 0.0
      %6479 = vmatprep.subr.mxu0 0.0
      %6480 = vmatpush1.msra.mxu0 0.0
      %6481 = vmatprep.subr.mxu0 0.0
      %6482 = vmatpush1.msra.mxu0 0.0
      %6483 = vmatprep.subr.mxu0 0.0
      %6484 = vmatpush1.msra.mxu0 0.0
      %6485 = vmatprep.subr.mxu0 0.0
      %6486 = vmatpush1.msra.mxu0 0.0
      %6487 = vmatprep.subr.mxu0 0.0
      %6488 = vmatpush1.msra.mxu0 0.0
      %6489 = vmatprep.subr.mxu0 0.0
      %6490 = vmatpush1.msra.mxu0 0.0
      %6491 = vmatprep.subr.mxu0 0.0
      %6492 = vmatpush1.msra.mxu0 0.0
      %6493 = vmatprep.subr.mxu0 0.0
      %6494 = vmatpush1.msra.mxu0 0.0
      %6495 = vmatprep.subr.mxu0 0.0
      %6496 = vmatpush1.msra.mxu0 0.0
      %6497 = vmatprep.subr.mxu0 0.0
      %6498 = vmatpush1.msra.mxu0 0.0
      %6499 = vmatprep.subr.mxu0 0.0
      %6500 = vmatpush1.msra.mxu0 0.0
      %6501 = vmatprep.subr.mxu0 0.0
      %6502 = vmatpush1.msra.mxu0 0.0
      %6503 = vmatprep.subr.mxu0 0.0
      %6504 = vmatpush1.msra.mxu0 0.0
      %6505 = vmatprep.subr.mxu0 0.0
      %6506 = vmatpush1.msra.mxu0 0.0
      %6507 = vmatprep.subr.mxu0 0.0
      %6508 = vmatpush1.msra.mxu0 0.0
      %6509 = vmatprep.subr.mxu0 0.0
      %6510 = vmatpush1.msra.mxu0 0.0
      %6511 = vmatprep.subr.mxu0 0.0
      %6512 = vmatpush1.msra.mxu0 0.0
      %6513 = vmatprep.subr.mxu0 0.0
      %6514 = vmatpush1.msra.mxu0 0.0
      %6515 = vmatprep.subr.mxu0 0.0
      %6516 = vmatpush1.msra.mxu0 0.0
      %6517 = vmatprep.subr.mxu0 0.0
      %6518 = vmatpush1.msra.mxu0 0.0
      %6519 = vmatprep.subr.mxu0 0.0
      %6520 = vmatpush1.msra.mxu0 0.0
      %6521 = vmatprep.subr.mxu0 0.0
      %6522 = vmatpush1.msra.mxu0 0.0
      %6523 = vmatprep.subr.mxu0 0.0
      %6524 = vmatpush1.msra.mxu0 0.0
      %6525 = vmatprep.subr.mxu0 0.0
      %6526 = vmatpush1.msra.mxu0 0.0
      %6527 = vmatprep.subr.mxu0 0.0
      %6528 = vmatpush1.msra.mxu0 0.0
      %6529 = vmatprep.subr.mxu0 0.0
      %6530 = vmatpush1.msra.mxu0 0.0
      %6531 = vmatprep.mubr.f32.mxu0 0.0
      %6532 = vmatmul.mubr.f32.gmra.mrb[0].mxu0 %v6463
      %v6533 = vpop.f32.mrb[0].mxu0
      %v6534 = vadd.f32 0.0, %v6533
      %v6535 = vpop.f32.mrb[0].mxu0
      %6536 = vdwg.mxu0
      %v6538 = vsel %vm769, %v6534, 0
      %6540 = vmatprep.subr.mxu0 0.0
      %6541 = vmatpush1.msra.mxu0 %v6454
      %6542 = vmatprep.subr.mxu0 0.0
      %6543 = vmatpush1.msra.mxu0 0.0
      %6544 = vmatprep.subr.mxu0 0.0
      %6545 = vmatpush1.msra.mxu0 0.0
      %6546 = vmatprep.subr.mxu0 0.0
      %6547 = vmatpush1.msra.mxu0 0.0
      %6548 = vmatprep.subr.mxu0 0.0
      %6549 = vmatpush1.msra.mxu0 0.0
      %6550 = vmatprep.subr.mxu0 0.0
      %6551 = vmatpush1.msra.mxu0 0.0
      %6552 = vmatprep.subr.mxu0 0.0
      %6553 = vmatpush1.msra.mxu0 0.0
      %6554 = vmatprep.subr.mxu0 0.0
      %6555 = vmatpush1.msra.mxu0 0.0
      %6556 = vmatprep.subr.mxu0 0.0
      %6557 = vmatpush1.msra.mxu0 0.0
      %6558 = vmatprep.subr.mxu0 0.0
      %6559 = vmatpush1.msra.mxu0 0.0
      %6560 = vmatprep.subr.mxu0 0.0
      %6561 = vmatpush1.msra.mxu0 0.0
      %6562 = vmatprep.subr.mxu0 0.0
      %6563 = vmatpush1.msra.mxu0 0.0
      %6564 = vmatprep.subr.mxu0 0.0
      %6565 = vmatpush1.msra.mxu0 0.0
      %6566 = vmatprep.subr.mxu0 0.0
      %6567 = vmatpush1.msra.mxu0 0.0
      %6568 = vmatprep.subr.mxu0 0.0
      %6569 = vmatpush1.msra.mxu0 0.0
      %6570 = vmatprep.subr.mxu0 0.0
      %6571 = vmatpush1.msra.mxu0 0.0
      %6572 = vmatprep.subr.mxu0 0.0
      %6573 = vmatpush1.msra.mxu0 0.0
      %6574 = vmatprep.subr.mxu0 0.0
      %6575 = vmatpush1.msra.mxu0 0.0
      %6576 = vmatprep.subr.mxu0 0.0
      %6577 = vmatpush1.msra.mxu0 0.0
      %6578 = vmatprep.subr.mxu0 0.0
      %6579 = vmatpush1.msra.mxu0 0.0
      %6580 = vmatprep.subr.mxu0 0.0
      %6581 = vmatpush1.msra.mxu0 0.0
      %6582 = vmatprep.subr.mxu0 0.0
      %6583 = vmatpush1.msra.mxu0 0.0
      %6584 = vmatprep.subr.mxu0 0.0
      %6585 = vmatpush1.msra.mxu0 0.0
      %6586 = vmatprep.subr.mxu0 0.0
      %6587 = vmatpush1.msra.mxu0 0.0
      %6588 = vmatprep.subr.mxu0 0.0
      %6589 = vmatpush1.msra.mxu0 0.0
      %6590 = vmatprep.subr.mxu0 0.0
      %6591 = vmatpush1.msra.mxu0 0.0
      %6592 = vmatprep.subr.mxu0 0.0
      %6593 = vmatpush1.msra.mxu0 0.0
      %6594 = vmatprep.subr.mxu0 0.0
      %6595 = vmatpush1.msra.mxu0 0.0
      %6596 = vmatprep.subr.mxu0 0.0
      %6597 = vmatpush1.msra.mxu0 0.0
      %6598 = vmatprep.subr.mxu0 0.0
      %6599 = vmatpush1.msra.mxu0 0.0
      %6600 = vmatprep.subr.mxu0 0.0
      %6601 = vmatpush1.msra.mxu0 0.0
      %6602 = vmatprep.subr.mxu0 0.0
      %6603 = vmatpush1.msra.mxu0 0.0
      %6604 = vmatprep.mubr.f32.mxu0 0.0
      %6605 = vmatmul.mubr.f32.gmra.mrb[0].mxu0 %v6538
      %v6606 = vpop.f32.mrb[0].mxu0
      %v6607 = vadd.f32 0.0, %v6606
      %v6608 = vpop.f32.mrb[0].mxu0
      %6609 = vdwg.mxu0
      %v6611 = vlaneseq
      %v6612 = vshrl.u32 %v6611, 7
      %v6613 = vsub.s32 0, %v6612
      %v6614 = vrot.slane %v6459, %v6613
      %v6616 = vadd.f32 %v6614, %v6607
      %6617 = vrot.lane.b32.xlu0 %v6095, 56
      %v6618 = vpop.permute.xlu0 %6617
      %v6620 = vsel %vm1130, %v6450, 0
      %v6622 = vsel %vm1134, %v6618, 0
      %6624 = vmatprep.subr.mxu0 0.0
      %6625 = vmatpush1.msra.mxu0 %v6622
      %6626 = vmatprep.subr.mxu0 0.0
      %6627 = vmatpush1.msra.mxu0 0.0
      %6628 = vmatprep.subr.mxu0 0.0
      %6629 = vmatpush1.msra.mxu0 0.0
      %6630 = vmatprep.subr.mxu0 0.0
      %6631 = vmatpush1.msra.mxu0 0.0
      %6632 = vmatprep.subr.mxu0 0.0
      %6633 = vmatpush1.msra.mxu0 0.0
      %6634 = vmatprep.subr.mxu0 0.0
      %6635 = vmatpush1.msra.mxu0 0.0
      %6636 = vmatprep.subr.mxu0 0.0
      %6637 = vmatpush1.msra.mxu0 0.0
      %6638 = vmatprep.subr.mxu0 0.0
      %6639 = vmatpush1.msra.mxu0 0.0
      %6640 = vmatprep.subr.mxu0 0.0
      %6641 = vmatpush1.msra.mxu0 0.0
      %6642 = vmatprep.subr.mxu0 0.0
      %6643 = vmatpush1.msra.mxu0 0.0
      %6644 = vmatprep.subr.mxu0 0.0
      %6645 = vmatpush1.msra.mxu0 0.0
      %6646 = vmatprep.subr.mxu0 0.0
      %6647 = vmatpush1.msra.mxu0 0.0
      %6648 = vmatprep.subr.mxu0 0.0
      %6649 = vmatpush1.msra.mxu0 0.0
      %6650 = vmatprep.subr.mxu0 0.0
      %6651 = vmatpush1.msra.mxu0 0.0
      %6652 = vmatprep.subr.mxu0 0.0
      %6653 = vmatpush1.msra.mxu0 0.0
      %6654 = vmatprep.subr.mxu0 0.0
      %6655 = vmatpush1.msra.mxu0 0.0
      %6656 = vmatprep.subr.mxu0 0.0
      %6657 = vmatpush1.msra.mxu0 0.0
      %6658 = vmatprep.subr.mxu0 0.0
      %6659 = vmatpush1.msra.mxu0 0.0
      %6660 = vmatprep.subr.mxu0 0.0
      %6661 = vmatpush1.msra.mxu0 0.0
      %6662 = vmatprep.subr.mxu0 0.0
      %6663 = vmatpush1.msra.mxu0 0.0
      %6664 = vmatprep.subr.mxu0 0.0
      %6665 = vmatpush1.msra.mxu0 0.0
      %6666 = vmatprep.subr.mxu0 0.0
      %6667 = vmatpush1.msra.mxu0 0.0
      %6668 = vmatprep.subr.mxu0 0.0
      %6669 = vmatpush1.msra.mxu0 0.0
      %6670 = vmatprep.subr.mxu0 0.0
      %6671 = vmatpush1.msra.mxu0 0.0
      %6672 = vmatprep.subr.mxu0 0.0
      %6673 = vmatpush1.msra.mxu0 0.0
      %6674 = vmatprep.subr.mxu0 0.0
      %6675 = vmatpush1.msra.mxu0 0.0
      %6676 = vmatprep.subr.mxu0 0.0
      %6677 = vmatpush1.msra.mxu0 0.0
      %6678 = vmatprep.subr.mxu0 0.0
      %6679 = vmatpush1.msra.mxu0 0.0
      %6680 = vmatprep.subr.mxu0 0.0
      %6681 = vmatpush1.msra.mxu0 0.0
      %6682 = vmatprep.subr.mxu0 0.0
      %6683 = vmatpush1.msra.mxu0 0.0
      %6684 = vmatprep.subr.mxu0 0.0
      %6685 = vmatpush1.msra.mxu0 0.0
      %6686 = vmatprep.subr.mxu0 0.0
      %6687 = vmatpush1.msra.mxu0 0.0
      %6688 = vmatprep.mubr.f32.mxu0 0.0
      %6689 = vmatmul.mubr.f32.gmra.mrb[0].mxu0 %v6620
      %v6690 = vpop.f32.mrb[0].mxu0
      %v6691 = vadd.f32 0.0, %v6690
      %v6692 = vpop.f32.mrb[0].mxu0
      %6693 = vdwg.mxu0
      %v6695 = vsel %vm769, %v6691, 0
      %6697 = vmatprep.subr.mxu0 0.0
      %6698 = vmatpush1.msra.mxu0 %v6455
      %6699 = vmatprep.subr.mxu0 0.0
      %6700 = vmatpush1.msra.mxu0 0.0
      %6701 = vmatprep.subr.mxu0 0.0
      %6702 = vmatpush1.msra.mxu0 0.0
      %6703 = vmatprep.subr.mxu0 0.0
      %6704 = vmatpush1.msra.mxu0 0.0
      %6705 = vmatprep.subr.mxu0 0.0
      %6706 = vmatpush1.msra.mxu0 0.0
      %6707 = vmatprep.subr.mxu0 0.0
      %6708 = vmatpush1.msra.mxu0 0.0
      %6709 = vmatprep.subr.mxu0 0.0
      %6710 = vmatpush1.msra.mxu0 0.0
      %6711 = vmatprep.subr.mxu0 0.0
      %6712 = vmatpush1.msra.mxu0 0.0
      %6713 = vmatprep.subr.mxu0 0.0
      %6714 = vmatpush1.msra.mxu0 0.0
      %6715 = vmatprep.subr.mxu0 0.0
      %6716 = vmatpush1.msra.mxu0 0.0
      %6717 = vmatprep.subr.mxu0 0.0
      %6718 = vmatpush1.msra.mxu0 0.0
      %6719 = vmatprep.subr.mxu0 0.0
      %6720 = vmatpush1.msra.mxu0 0.0
      %6721 = vmatprep.subr.mxu0 0.0
      %6722 = vmatpush1.msra.mxu0 0.0
      %6723 = vmatprep.subr.mxu0 0.0
      %6724 = vmatpush1.msra.mxu0 0.0
      %6725 = vmatprep.subr.mxu0 0.0
      %6726 = vmatpush1.msra.mxu0 0.0
      %6727 = vmatprep.subr.mxu0 0.0
      %6728 = vmatpush1.msra.mxu0 0.0
      %6729 = vmatprep.subr.mxu0 0.0
      %6730 = vmatpush1.msra.mxu0 0.0
      %6731 = vmatprep.subr.mxu0 0.0
      %6732 = vmatpush1.msra.mxu0 0.0
      %6733 = vmatprep.subr.mxu0 0.0
      %6734 = vmatpush1.msra.mxu0 0.0
      %6735 = vmatprep.subr.mxu0 0.0
      %6736 = vmatpush1.msra.mxu0 0.0
      %6737 = vmatprep.subr.mxu0 0.0
      %6738 = vmatpush1.msra.mxu0 0.0
      %6739 = vmatprep.subr.mxu0 0.0
      %6740 = vmatpush1.msra.mxu0 0.0
      %6741 = vmatprep.subr.mxu0 0.0
      %6742 = vmatpush1.msra.mxu0 0.0
      %6743 = vmatprep.subr.mxu0 0.0
      %6744 = vmatpush1.msra.mxu0 0.0
      %6745 = vmatprep.subr.mxu0 0.0
      %6746 = vmatpush1.msra.mxu0 0.0
      %6747 = vmatprep.subr.mxu0 0.0
      %6748 = vmatpush1.msra.mxu0 0.0
      %6749 = vmatprep.subr.mxu0 0.0
      %6750 = vmatpush1.msra.mxu0 0.0
      %6751 = vmatprep.subr.mxu0 0.0
      %6752 = vmatpush1.msra.mxu0 0.0
      %6753 = vmatprep.subr.mxu0 0.0
      %6754 = vmatpush1.msra.mxu0 0.0
      %6755 = vmatprep.subr.mxu0 0.0
      %6756 = vmatpush1.msra.mxu0 0.0
      %6757 = vmatprep.subr.mxu0 0.0
      %6758 = vmatpush1.msra.mxu0 0.0
      %6759 = vmatprep.subr.mxu0 0.0
      %6760 = vmatpush1.msra.mxu0 0.0
      %6761 = vmatprep.mubr.f32.mxu0 0.0
      %6762 = vmatmul.mubr.f32.gmra.mrb[0].mxu0 %v6695
      %v6763 = vpop.f32.mrb[0].mxu0
      %v6764 = vadd.f32 0.0, %v6763
      %v6765 = vpop.f32.mrb[0].mxu0
      %6766 = vdwg.mxu0
      %v6767 = vadd.f32 %v6616, %v6764
      %6768 = vrot.lane.b32.xlu0 %v6095, 48
      %v6769 = vpop.permute.xlu0 %6768
      %v6771 = vsel %vm1130, %v6451, 0
      %v6773 = vsel %vm1134, %v6769, 0
      %6775 = vmatprep.subr.mxu0 0.0
      %6776 = vmatpush1.msra.mxu0 %v6773
      %6777 = vmatprep.subr.mxu0 0.0
      %6778 = vmatpush1.msra.mxu0 0.0
      %6779 = vmatprep.subr.mxu0 0.0
      %6780 = vmatpush1.msra.mxu0 0.0
      %6781 = vmatprep.subr.mxu0 0.0
      %6782 = vmatpush1.msra.mxu0 0.0
      %6783 = vmatprep.subr.mxu0 0.0
      %6784 = vmatpush1.msra.mxu0 0.0
      %6785 = vmatprep.subr.mxu0 0.0
      %6786 = vmatpush1.msra.mxu0 0.0
      %6787 = vmatprep.subr.mxu0 0.0
      %6788 = vmatpush1.msra.mxu0 0.0
      %6789 = vmatprep.subr.mxu0 0.0
      %6790 = vmatpush1.msra.mxu0 0.0
      %6791 = vmatprep.subr.mxu0 0.0
      %6792 = vmatpush1.msra.mxu0 0.0
      %6793 = vmatprep.subr.mxu0 0.0
      %6794 = vmatpush1.msra.mxu0 0.0
      %6795 = vmatprep.subr.mxu0 0.0
      %6796 = vmatpush1.msra.mxu0 0.0
      %6797 = vmatprep.subr.mxu0 0.0
      %6798 = vmatpush1.msra.mxu0 0.0
      %6799 = vmatprep.subr.mxu0 0.0
      %6800 = vmatpush1.msra.mxu0 0.0
      %6801 = vmatprep.subr.mxu0 0.0
      %6802 = vmatpush1.msra.mxu0 0.0
      %6803 = vmatprep.subr.mxu0 0.0
      %6804 = vmatpush1.msra.mxu0 0.0
      %6805 = vmatprep.subr.mxu0 0.0
      %6806 = vmatpush1.msra.mxu0 0.0
      %6807 = vmatprep.subr.mxu0 0.0
      %6808 = vmatpush1.msra.mxu0 0.0
      %6809 = vmatprep.subr.mxu0 0.0
      %6810 = vmatpush1.msra.mxu0 0.0
      %6811 = vmatprep.subr.mxu0 0.0
      %6812 = vmatpush1.msra.mxu0 0.0
      %6813 = vmatprep.subr.mxu0 0.0
      %6814 = vmatpush1.msra.mxu0 0.0
      %6815 = vmatprep.subr.mxu0 0.0
      %6816 = vmatpush1.msra.mxu0 0.0
      %6817 = vmatprep.subr.mxu0 0.0
      %6818 = vmatpush1.msra.mxu0 0.0
      %6819 = vmatprep.subr.mxu0 0.0
      %6820 = vmatpush1.msra.mxu0 0.0
      %6821 = vmatprep.subr.mxu0 0.0
      %6822 = vmatpush1.msra.mxu0 0.0
      %6823 = vmatprep.subr.mxu0 0.0
      %6824 = vmatpush1.msra.mxu0 0.0
      %6825 = vmatprep.subr.mxu0 0.0
      %6826 = vmatpush1.msra.mxu0 0.0
      %6827 = vmatprep.subr.mxu0 0.0
      %6828 = vmatpush1.msra.mxu0 0.0
      %6829 = vmatprep.subr.mxu0 0.0
      %6830 = vmatpush1.msra.mxu0 0.0
      %6831 = vmatprep.subr.mxu0 0.0
      %6832 = vmatpush1.msra.mxu0 0.0
      %6833 = vmatprep.subr.mxu0 0.0
      %6834 = vmatpush1.msra.mxu0 0.0
      %6835 = vmatprep.subr.mxu0 0.0
      %6836 = vmatpush1.msra.mxu0 0.0
      %6837 = vmatprep.subr.mxu0 0.0
      %6838 = vmatpush1.msra.mxu0 0.0
      %6839 = vmatprep.mubr.f32.mxu0 0.0
      %6840 = vmatmul.mubr.f32.gmra.mrb[0].mxu0 %v6771
      %v6841 = vpop.f32.mrb[0].mxu0
      %v6842 = vadd.f32 0.0, %v6841
      %v6843 = vpop.f32.mrb[0].mxu0
      %6844 = vdwg.mxu0
      %v6846 = vsel %vm769, %v6842, 0
      %6848 = vmatprep.subr.mxu0 0.0
      %6849 = vmatpush1.msra.mxu0 %v6456
      %6850 = vmatprep.subr.mxu0 0.0
      %6851 = vmatpush1.msra.mxu0 0.0
      %6852 = vmatprep.subr.mxu0 0.0
      %6853 = vmatpush1.msra.mxu0 0.0
      %6854 = vmatprep.subr.mxu0 0.0
      %6855 = vmatpush1.msra.mxu0 0.0
      %6856 = vmatprep.subr.mxu0 0.0
      %6857 = vmatpush1.msra.mxu0 0.0
      %6858 = vmatprep.subr.mxu0 0.0
      %6859 = vmatpush1.msra.mxu0 0.0
      %6860 = vmatprep.subr.mxu0 0.0
      %6861 = vmatpush1.msra.mxu0 0.0
      %6862 = vmatprep.subr.mxu0 0.0
      %6863 = vmatpush1.msra.mxu0 0.0
      %6864 = vmatprep.subr.mxu0 0.0
      %6865 = vmatpush1.msra.mxu0 0.0
      %6866 = vmatprep.subr.mxu0 0.0
      %6867 = vmatpush1.msra.mxu0 0.0
      %6868 = vmatprep.subr.mxu0 0.0
      %6869 = vmatpush1.msra.mxu0 0.0
      %6870 = vmatprep.subr.mxu0 0.0
      %6871 = vmatpush1.msra.mxu0 0.0
      %6872 = vmatprep.subr.mxu0 0.0
      %6873 = vmatpush1.msra.mxu0 0.0
      %6874 = vmatprep.subr.mxu0 0.0
      %6875 = vmatpush1.msra.mxu0 0.0
      %6876 = vmatprep.subr.mxu0 0.0
      %6877 = vmatpush1.msra.mxu0 0.0
      %6878 = vmatprep.subr.mxu0 0.0
      %6879 = vmatpush1.msra.mxu0 0.0
      %6880 = vmatprep.subr.mxu0 0.0
      %6881 = vmatpush1.msra.mxu0 0.0
      %6882 = vmatprep.subr.mxu0 0.0
      %6883 = vmatpush1.msra.mxu0 0.0
      %6884 = vmatprep.subr.mxu0 0.0
      %6885 = vmatpush1.msra.mxu0 0.0
      %6886 = vmatprep.subr.mxu0 0.0
      %6887 = vmatpush1.msra.mxu0 0.0
      %6888 = vmatprep.subr.mxu0 0.0
      %6889 = vmatpush1.msra.mxu0 0.0
      %6890 = vmatprep.subr.mxu0 0.0
      %6891 = vmatpush1.msra.mxu0 0.0
      %6892 = vmatprep.subr.mxu0 0.0
      %6893 = vmatpush1.msra.mxu0 0.0
      %6894 = vmatprep.subr.mxu0 0.0
      %6895 = vmatpush1.msra.mxu0 0.0
      %6896 = vmatprep.subr.mxu0 0.0
      %6897 = vmatpush1.msra.mxu0 0.0
      %6898 = vmatprep.subr.mxu0 0.0
      %6899 = vmatpush1.msra.mxu0 0.0
      %6900 = vmatprep.subr.mxu0 0.0
      %6901 = vmatpush1.msra.mxu0 0.0
      %6902 = vmatprep.subr.mxu0 0.0
      %6903 = vmatpush1.msra.mxu0 0.0
      %6904 = vmatprep.subr.mxu0 0.0
      %6905 = vmatpush1.msra.mxu0 0.0
      %6906 = vmatprep.subr.mxu0 0.0
      %6907 = vmatpush1.msra.mxu0 0.0
      %6908 = vmatprep.subr.mxu0 0.0
      %6909 = vmatpush1.msra.mxu0 0.0
      %6910 = vmatprep.subr.mxu0 0.0
      %6911 = vmatpush1.msra.mxu0 0.0
      %6912 = vmatprep.mubr.f32.mxu0 0.0
      %6913 = vmatmul.mubr.f32.gmra.mrb[0].mxu0 %v6846
      %v6914 = vpop.f32.mrb[0].mxu0
      %v6915 = vadd.f32 0.0, %v6914
      %v6916 = vpop.f32.mrb[0].mxu0
      %6917 = vdwg.mxu0
      %v6918 = vadd.f32 %v6767, %v6915
      %6919 = vrot.lane.b32.xlu0 %v6095, 40
      %v6920 = vpop.permute.xlu0 %6919
      %v6922 = vsel %vm1130, %v6452, 0
      %v6924 = vsel %vm1134, %v6920, 0
      %6926 = vmatprep.subr.mxu0 0.0
      %6927 = vmatpush1.msra.mxu0 %v6924
      %6928 = vmatprep.subr.mxu0 0.0
      %6929 = vmatpush1.msra.mxu0 0.0
      %6930 = vmatprep.subr.mxu0 0.0
      %6931 = vmatpush1.msra.mxu0 0.0
      %6932 = vmatprep.subr.mxu0 0.0
      %6933 = vmatpush1.msra.mxu0 0.0
      %6934 = vmatprep.subr.mxu0 0.0
      %6935 = vmatpush1.msra.mxu0 0.0
      %6936 = vmatprep.subr.mxu0 0.0
      %6937 = vmatpush1.msra.mxu0 0.0
      %6938 = vmatprep.subr.mxu0 0.0
      %6939 = vmatpush1.msra.mxu0 0.0
      %6940 = vmatprep.subr.mxu0 0.0
      %6941 = vmatpush1.msra.mxu0 0.0
      %6942 = vmatprep.subr.mxu0 0.0
      %6943 = vmatpush1.msra.mxu0 0.0
      %6944 = vmatprep.subr.mxu0 0.0
      %6945 = vmatpush1.msra.mxu0 0.0
      %6946 = vmatprep.subr.mxu0 0.0
      %6947 = vmatpush1.msra.mxu0 0.0
      %6948 = vmatprep.subr.mxu0 0.0
      %6949 = vmatpush1.msra.mxu0 0.0
      %6950 = vmatprep.subr.mxu0 0.0
      %6951 = vmatpush1.msra.mxu0 0.0
      %6952 = vmatprep.subr.mxu0 0.0
      %6953 = vmatpush1.msra.mxu0 0.0
      %6954 = vmatprep.subr.mxu0 0.0
      %6955 = vmatpush1.msra.mxu0 0.0
      %6956 = vmatprep.subr.mxu0 0.0
      %6957 = vmatpush1.msra.mxu0 0.0
      %6958 = vmatprep.subr.mxu0 0.0
      %6959 = vmatpush1.msra.mxu0 0.0
      %6960 = vmatprep.subr.mxu0 0.0
      %6961 = vmatpush1.msra.mxu0 0.0
      %6962 = vmatprep.subr.mxu0 0.0
      %6963 = vmatpush1.msra.mxu0 0.0
      %6964 = vmatprep.subr.mxu0 0.0
      %6965 = vmatpush1.msra.mxu0 0.0
      %6966 = vmatprep.subr.mxu0 0.0
      %6967 = vmatpush1.msra.mxu0 0.0
      %6968 = vmatprep.subr.mxu0 0.0
      %6969 = vmatpush1.msra.mxu0 0.0
      %6970 = vmatprep.subr.mxu0 0.0
      %6971 = vmatpush1.msra.mxu0 0.0
      %6972 = vmatprep.subr.mxu0 0.0
      %6973 = vmatpush1.msra.mxu0 0.0
      %6974 = vmatprep.subr.mxu0 0.0
      %6975 = vmatpush1.msra.mxu0 0.0
      %6976 = vmatprep.subr.mxu0 0.0
      %6977 = vmatpush1.msra.mxu0 0.0
      %6978 = vmatprep.subr.mxu0 0.0
      %6979 = vmatpush1.msra.mxu0 0.0
      %6980 = vmatprep.subr.mxu0 0.0
      %6981 = vmatpush1.msra.mxu0 0.0
      %6982 = vmatprep.subr.mxu0 0.0
      %6983 = vmatpush1.msra.mxu0 0.0
      %6984 = vmatprep.subr.mxu0 0.0
      %6985 = vmatpush1.msra.mxu0 0.0
      %6986 = vmatprep.subr.mxu0 0.0
      %6987 = vmatpush1.msra.mxu0 0.0
      %6988 = vmatprep.subr.mxu0 0.0
      %6989 = vmatpush1.msra.mxu0 0.0
      %6990 = vmatprep.mubr.f32.mxu0 0.0
      %6991 = vmatmul.mubr.f32.gmra.mrb[0].mxu0 %v6922
      %v6992 = vpop.f32.mrb[0].mxu0
      %v6993 = vadd.f32 0.0, %v6992
      %v6994 = vpop.f32.mrb[0].mxu0
      %6995 = vdwg.mxu0
      %v6997 = vsel %vm769, %v6993, 0
      %6999 = vmatprep.subr.mxu0 0.0
      %7000 = vmatpush1.msra.mxu0 %v6457
      %7001 = vmatprep.subr.mxu0 0.0
      %7002 = vmatpush1.msra.mxu0 0.0
      %7003 = vmatprep.subr.mxu0 0.0
      %7004 = vmatpush1.msra.mxu0 0.0
      %7005 = vmatprep.subr.mxu0 0.0
      %7006 = vmatpush1.msra.mxu0 0.0
      %7007 = vmatprep.subr.mxu0 0.0
      %7008 = vmatpush1.msra.mxu0 0.0
      %7009 = vmatprep.subr.mxu0 0.0
      %7010 = vmatpush1.msra.mxu0 0.0
      %7011 = vmatprep.subr.mxu0 0.0
      %7012 = vmatpush1.msra.mxu0 0.0
      %7013 = vmatprep.subr.mxu0 0.0
      %7014 = vmatpush1.msra.mxu0 0.0
      %7015 = vmatprep.subr.mxu0 0.0
      %7016 = vmatpush1.msra.mxu0 0.0
      %7017 = vmatprep.subr.mxu0 0.0
      %7018 = vmatpush1.msra.mxu0 0.0
      %7019 = vmatprep.subr.mxu0 0.0
      %7020 = vmatpush1.msra.mxu0 0.0
      %7021 = vmatprep.subr.mxu0 0.0
      %7022 = vmatpush1.msra.mxu0 0.0
      %7023 = vmatprep.subr.mxu0 0.0
      %7024 = vmatpush1.msra.mxu0 0.0
      %7025 = vmatprep.subr.mxu0 0.0
      %7026 = vmatpush1.msra.mxu0 0.0
      %7027 = vmatprep.subr.mxu0 0.0
      %7028 = vmatpush1.msra.mxu0 0.0
      %7029 = vmatprep.subr.mxu0 0.0
      %7030 = vmatpush1.msra.mxu0 0.0
      %7031 = vmatprep.subr.mxu0 0.0
      %7032 = vmatpush1.msra.mxu0 0.0
      %7033 = vmatprep.subr.mxu0 0.0
      %7034 = vmatpush1.msra.mxu0 0.0
      %7035 = vmatprep.subr.mxu0 0.0
      %7036 = vmatpush1.msra.mxu0 0.0
      %7037 = vmatprep.subr.mxu0 0.0
      %7038 = vmatpush1.msra.mxu0 0.0
      %7039 = vmatprep.subr.mxu0 0.0
      %7040 = vmatpush1.msra.mxu0 0.0
      %7041 = vmatprep.subr.mxu0 0.0
      %7042 = vmatpush1.msra.mxu0 0.0
      %7043 = vmatprep.subr.mxu0 0.0
      %7044 = vmatpush1.msra.mxu0 0.0
      %7045 = vmatprep.subr.mxu0 0.0
      %7046 = vmatpush1.msra.mxu0 0.0
      %7047 = vmatprep.subr.mxu0 0.0
      %7048 = vmatpush1.msra.mxu0 0.0
      %7049 = vmatprep.subr.mxu0 0.0
      %7050 = vmatpush1.msra.mxu0 0.0
      %7051 = vmatprep.subr.mxu0 0.0
      %7052 = vmatpush1.msra.mxu0 0.0
      %7053 = vmatprep.subr.mxu0 0.0
      %7054 = vmatpush1.msra.mxu0 0.0
      %7055 = vmatprep.subr.mxu0 0.0
      %7056 = vmatpush1.msra.mxu0 0.0
      %7057 = vmatprep.subr.mxu0 0.0
      %7058 = vmatpush1.msra.mxu0 0.0
      %7059 = vmatprep.subr.mxu0 0.0
      %7060 = vmatpush1.msra.mxu0 0.0
      %7061 = vmatprep.subr.mxu0 0.0
      %7062 = vmatpush1.msra.mxu0 0.0
      %7063 = vmatprep.mubr.f32.mxu0 0.0
      %7064 = vmatmul.mubr.f32.gmra.mrb[0].mxu0 %v6997
      %v7065 = vpop.f32.mrb[0].mxu0
      %v7066 = vadd.f32 0.0, %v7065
      %v7067 = vpop.f32.mrb[0].mxu0
      %7068 = vdwg.mxu0
      %v7069 = vadd.f32 %v6918, %v7066
      %v7070 = vadd.f32 %v5978, %v7069
      %s7071 = scalar_lea.vmem %s9, 4
      %v7072 = vld [vmem:[%s7071] sm:$0x1]
      %s7073 = scalar_lea.vmem %s10, 4
      %v7074 = vld [vmem:[%s7073] sm:$0x1]
      %v7075 = vsel %vm650, %v7070, 0.0
      %7076 = vadd.xlane.f32.xlu0 %v7075
      %v7077 = vpop.xlane.xlu0 %7076
      %v7078 = vmul.f32 %v7077, %v654
      %v7079 = vmul.f32 %v7070, %v7070
      %v7080 = vsel %vm650, %v7079, 0.0
      %7081 = vadd.xlane.f32.xlu0 %v7080
      %v7082 = vpop.xlane.xlu0 %7081
      %v7083 = vmul.f32 %v7082, %v654
      %v7084 = vmul.f32 %v7078, %v7078
      %v7085 = vsub.f32 %v7083, %v7084
      %v7086 = vsub.f32 %v7070, %v7078
      %v7087 = vadd.f32 %v7085, 1e-06
      %v7088 = vrsqrt.pop %v7087
      %v7089 = vmul.f32 %v7086, %v7088
      %v7091 = vlaneseq
      %v7092 = vshrl.u32 %v7091, 7
      %v7093 = vsub.s32 0, %v7092
      %v7094 = vrot.slane %v7072, %v7093
      %v7096 = vmul.f32 %v7089, %v7094
      %v7098 = vlaneseq
      %v7099 = vshrl.u32 %v7098, 7
      %v7100 = vsub.s32 0, %v7099
      %v7101 = vrot.slane %v7074, %v7100
      %v7103 = vadd.f32 %v7096, %v7101
      %s7104 = scalar_lea.vmem %s11, 128
      %v7105 = vld [vmem:[%s7104] sm:$0xff]
      %v7106 = vld [vmem:[%s7104 + $0x8] sm:$0xff]
      %v7107 = vld [vmem:[%s7104 + $0x10] sm:$0xff]
      %v7108 = vld [vmem:[%s7104 + $0x18] sm:$0xff]
      %s7109 = scalar_lea.vmem %s12, 4
      %v7110 = vld [vmem:[%s7109] sm:$0x1]
      %v7112 = vlaneseq
      %v7113 = vshrl.u32 %v7112, 7
      %v7114 = vsub.s32 0, %v7113
      %v7115 = vrot.slane %v7110, %v7114
      %v7118 = vsel %vm692, %v7103, 0
      %7120 = vmatprep.subr.mxu0 0.0
      %7121 = vmatpush1.msra.mxu0 %v7105
      %7122 = vmatprep.subr.mxu0 0.0
      %7123 = vmatpush1.msra.mxu0 %v7106
      %7124 = vmatprep.subr.mxu0 0.0
      %7125 = vmatpush1.msra.mxu0 %v7107
      %7126 = vmatprep.subr.mxu0 0.0
      %7127 = vmatpush1.msra.mxu0 %v7108
      %7128 = vmatprep.subr.mxu0 0.0
      %7129 = vmatpush1.msra.mxu0 0.0
      %7130 = vmatprep.subr.mxu0 0.0
      %7131 = vmatpush1.msra.mxu0 0.0
      %7132 = vmatprep.subr.mxu0 0.0
      %7133 = vmatpush1.msra.mxu0 0.0
      %7134 = vmatprep.subr.mxu0 0.0
      %7135 = vmatpush1.msra.mxu0 0.0
      %7136 = vmatprep.subr.mxu0 0.0
      %7137 = vmatpush1.msra.mxu0 0.0
      %7138 = vmatprep.subr.mxu0 0.0
      %7139 = vmatpush1.msra.mxu0 0.0
      %7140 = vmatprep.subr.mxu0 0.0
      %7141 = vmatpush1.msra.mxu0 0.0
      %7142 = vmatprep.subr.mxu0 0.0
      %7143 = vmatpush1.msra.mxu0 0.0
      %7144 = vmatprep.subr.mxu0 0.0
      %7145 = vmatpush1.msra.mxu0 0.0
      %7146 = vmatprep.subr.mxu0 0.0
      %7147 = vmatpush1.msra.mxu0 0.0
      %7148 = vmatprep.subr.mxu0 0.0
      %7149 = vmatpush1.msra.mxu0 0.0
      %7150 = vmatprep.subr.mxu0 0.0
      %7151 = vmatpush1.msra.mxu0 0.0
      %7152 = vmatprep.subr.mxu0 0.0
      %7153 = vmatpush1.msra.mxu0 0.0
      %7154 = vmatprep.subr.mxu0 0.0
      %7155 = vmatpush1.msra.mxu0 0.0
      %7156 = vmatprep.subr.mxu0 0.0
      %7157 = vmatpush1.msra.mxu0 0.0
      %7158 = vmatprep.subr.mxu0 0.0
      %7159 = vmatpush1.msra.mxu0 0.0
      %7160 = vmatprep.subr.mxu0 0.0
      %7161 = vmatpush1.msra.mxu0 0.0
      %7162 = vmatprep.subr.mxu0 0.0
      %7163 = vmatpush1.msra.mxu0 0.0
      %7164 = vmatprep.subr.mxu0 0.0
      %7165 = vmatpush1.msra.mxu0 0.0
      %7166 = vmatprep.subr.mxu0 0.0
      %7167 = vmatpush1.msra.mxu0 0.0
      %7168 = vmatprep.subr.mxu0 0.0
      %7169 = vmatpush1.msra.mxu0 0.0
      %7170 = vmatprep.subr.mxu0 0.0
      %7171 = vmatpush1.msra.mxu0 0.0
      %7172 = vmatprep.subr.mxu0 0.0
      %7173 = vmatpush1.msra.mxu0 0.0
      %7174 = vmatprep.subr.mxu0 0.0
      %7175 = vmatpush1.msra.mxu0 0.0
      %7176 = vmatprep.subr.mxu0 0.0
      %7177 = vmatpush1.msra.mxu0 0.0
      %7178 = vmatprep.subr.mxu0 0.0
      %7179 = vmatpush1.msra.mxu0 0.0
      %7180 = vmatprep.subr.mxu0 0.0
      %7181 = vmatpush1.msra.mxu0 0.0
      %7182 = vmatprep.subr.mxu0 0.0
      %7183 = vmatpush1.msra.mxu0 0.0
      %7184 = vmatprep.mubr.f32.mxu0 0.0
      %7185 = vmatmul.mubr.f32.gmra.mrb[0].mxu0 %v7118
      %v7186 = vpop.f32.mrb[0].mxu0
      %v7187 = vadd.f32 %v7115, %v7186
      %v7188 = vpop.f32.mrb[0].mxu0
      %7189 = vdwg.mxu0
      %v7190 = vmul.f32 %v7187, 0.5
      %v7191 = vmul.f32 %v7187, 0.70710677
      %vm7192 = vcmp.ge.f32.partialorder %v7191, 0.0
      %v7193 = vsel %vm7192, 1.0, -1.0
      %v7194 = vand.u32 2147483647, %v7191
      %v7195 = vmul.f32 %v7194, 0.3275911
      %v7196 = vadd.f32 %v7195, 1.0
      %v7197 = vrcp.pop %v7196
      %v7198 = vmul.f32 %v7197, 1.0614054
      %v7199 = vadd.f32 %v7198, -1.4531521
      %v7200 = vmul.f32 %v7197, %v7199
      %v7201 = vadd.f32 %v7200, 1.4214138
      %v7202 = vmul.f32 %v7197, %v7201
      %v7203 = vadd.f32 %v7202, -0.28449672
      %v7204 = vmul.f32 %v7197, %v7203
      %v7205 = vadd.f32 %v7204, 0.2548296
      %v7206 = vmul.f32 %v7197, %v7205
      %v7207 = vsub.f32 0.0, %v7194
      %v7208 = vmul.f32 %v7207, %v7194
      %v7209 = vmul.f32 %v7208, 1.442695
      %v7210 = vpow.pop %v7209
      %v7211 = vmul.f32 %v7206, %v7210
      %v7212 = vsub.f32 1.0, %v7211
      %v7213 = vmul.f32 %v7193, %v7212
      %v7214 = vadd.f32 %v7213, 1.0
      %v7215 = vmul.f32 %v7190, %v7214
      %s7216 = scalar_lea.vmem %s13, 512
      %v7217 = vld [vmem:[%s7216] sm:$0xff]
      %v7218 = vld [vmem:[%s7216 + $0x8] sm:$0xff]
      %v7219 = vld [vmem:[%s7216 + $0x10] sm:$0xff]
      %v7220 = vld [vmem:[%s7216 + $0x18] sm:$0xff]
      %v7221 = vld [vmem:[%s7216 + $0x20] sm:$0xff]
      %v7222 = vld [vmem:[%s7216 + $0x28] sm:$0xff]
      %v7223 = vld [vmem:[%s7216 + $0x30] sm:$0xff]
      %v7224 = vld [vmem:[%s7216 + $0x38] sm:$0xff]
      %v7225 = vld [vmem:[%s7216 + $0x40] sm:$0xff]
      %v7226 = vld [vmem:[%s7216 + $0x48] sm:$0xff]
      %v7227 = vld [vmem:[%s7216 + $0x50] sm:$0xff]
      %v7228 = vld [vmem:[%s7216 + $0x58] sm:$0xff]
      %v7229 = vld [vmem:[%s7216 + $0x60] sm:$0xff]
      %v7230 = vld [vmem:[%s7216 + $0x68] sm:$0xff]
      %v7231 = vld [vmem:[%s7216 + $0x70] sm:$0xff]
      %v7232 = vld [vmem:[%s7216 + $0x78] sm:$0xff]
      %7233 = vmatprep.subr.mxu0 0.0
      %7234 = vmatpush1.msra.mxu0 %v7217
      %7235 = vmatprep.subr.mxu0 0.0
      %7236 = vmatpush1.msra.mxu0 %v7218
      %7237 = vmatprep.subr.mxu0 0.0
      %7238 = vmatpush1.msra.mxu0 %v7219
      %7239 = vmatprep.subr.mxu0 0.0
      %7240 = vmatpush1.msra.mxu0 %v7220
      %7241 = vmatprep.subr.mxu0 0.0
      %7242 = vmatpush1.msra.mxu0 %v7221
      %7243 = vmatprep.subr.mxu0 0.0
      %7244 = vmatpush1.msra.mxu0 %v7222
      %7245 = vmatprep.subr.mxu0 0.0
      %7246 = vmatpush1.msra.mxu0 %v7223
      %7247 = vmatprep.subr.mxu0 0.0
      %7248 = vmatpush1.msra.mxu0 %v7224
      %7249 = vmatprep.subr.mxu0 0.0
      %7250 = vmatpush1.msra.mxu0 %v7225
      %7251 = vmatprep.subr.mxu0 0.0
      %7252 = vmatpush1.msra.mxu0 %v7226
      %7253 = vmatprep.subr.mxu0 0.0
      %7254 = vmatpush1.msra.mxu0 %v7227
      %7255 = vmatprep.subr.mxu0 0.0
      %7256 = vmatpush1.msra.mxu0 %v7228
      %7257 = vmatprep.subr.mxu0 0.0
      %7258 = vmatpush1.msra.mxu0 %v7229
      %7259 = vmatprep.subr.mxu0 0.0
      %7260 = vmatpush1.msra.mxu0 %v7230
      %7261 = vmatprep.subr.mxu0 0.0
      %7262 = vmatpush1.msra.mxu0 %v7231
      %7263 = vmatprep.subr.mxu0 0.0
      %7264 = vmatpush1.msra.mxu0 %v7232
      %7265 = vmatprep.subr.mxu0 0.0
      %7266 = vmatpush1.msra.mxu0 0.0
      %7267 = vmatprep.subr.mxu0 0.0
      %7268 = vmatpush1.msra.mxu0 0.0
      %7269 = vmatprep.subr.mxu0 0.0
      %7270 = vmatpush1.msra.mxu0 0.0
      %7271 = vmatprep.subr.mxu0 0.0
      %7272 = vmatpush1.msra.mxu0 0.0
      %7273 = vmatprep.subr.mxu0 0.0
      %7274 = vmatpush1.msra.mxu0 0.0
      %7275 = vmatprep.subr.mxu0 0.0
      %7276 = vmatpush1.msra.mxu0 0.0
      %7277 = vmatprep.subr.mxu0 0.0
      %7278 = vmatpush1.msra.mxu0 0.0
      %7279 = vmatprep.subr.mxu0 0.0
      %7280 = vmatpush1.msra.mxu0 0.0
      %7281 = vmatprep.subr.mxu0 0.0
      %7282 = vmatpush1.msra.mxu0 0.0
      %7283 = vmatprep.subr.mxu0 0.0
      %7284 = vmatpush1.msra.mxu0 0.0
      %7285 = vmatprep.subr.mxu0 0.0
      %7286 = vmatpush1.msra.mxu0 0.0
      %7287 = vmatprep.subr.mxu0 0.0
      %7288 = vmatpush1.msra.mxu0 0.0
      %7289 = vmatprep.subr.mxu0 0.0
      %7290 = vmatpush1.msra.mxu0 0.0
      %7291 = vmatprep.subr.mxu0 0.0
      %7292 = vmatpush1.msra.mxu0 0.0
      %7293 = vmatprep.subr.mxu0 0.0
      %7294 = vmatpush1.msra.mxu0 0.0
      %7295 = vmatprep.subr.mxu0 0.0
      %7296 = vmatpush1.msra.mxu0 0.0
      %7297 = vmatprep.mubr.f32.mxu0 0.0
      %7298 = vmatmul.mubr.f32.gmra.mrb[0].mxu0 %v7215
      %v7299 = vpop.f32.mrb[0].mxu0
      %v7300 = vadd.f32 0.0, %v7299
      %v7301 = vpop.f32.mrb[0].mxu0
      %7302 = vdwg.mxu0
      %v7303 = vadd.f32 %v7070, %v7300
      %s7304 = scalar_lea.vmem %s14, 4
      %v7305 = vld [vmem:[%s7304] sm:$0x1]
      %v7307 = vlaneseq
      %v7308 = vshrl.u32 %v7307, 7
      %v7309 = vsub.s32 0, %v7308
      %v7310 = vrot.slane %v7305, %v7309
      %v7312 = vadd.f32 %v7303, %v7310
      %s7313 = scalar_lea.vmem %s3, 5
      %v7314 = vld [vmem:[%s7313] sm:$0x1]
      %s7315 = scalar_lea.vmem %s4, 5
      %v7316 = vld [vmem:[%s7315] sm:$0x1]
      %v7317 = vsel %vm650, %v7312, 0.0
      %7318 = vadd.xlane.f32.xlu0 %v7317
      %v7319 = vpop.xlane.xlu0 %7318
      %v7320 = vmul.f32 %v7319, %v654
      %v7321 = vmul.f32 %v7312, %v7312
      %v7322 = vsel %vm650, %v7321, 0.0
      %7323 = vadd.xlane.f32.xlu0 %v7322
      %v7324 = vpop.xlane.xlu0 %7323
      %v7325 = vmul.f32 %v7324, %v654
      %v7326 = vmul.f32 %v7320, %v7320
      %v7327 = vsub.f32 %v7325, %v7326
      %v7328 = vsub.f32 %v7312, %v7320
      %v7329 = vadd.f32 %v7327, 1e-06
      %v7330 = vrsqrt.pop %v7329
      %v7331 = vmul.f32 %v7328, %v7330
      %v7333 = vlaneseq
      %v7334 = vshrl.u32 %v7333, 7
      %v7335 = vsub.s32 0, %v7334
      %v7336 = vrot.slane %v7314, %v7335
      %v7338 = vmul.f32 %v7331, %v7336
      %v7340 = vlaneseq
      %v7341 = vshrl.u32 %v7340, 7
      %v7342 = vsub.s32 0, %v7341
      %v7343 = vrot.slane %v7316, %v7342
      %v7345 = vadd.f32 %v7338, %v7343
      %s7346 = scalar_lea.vmem %s5, 160
      %v7347 = vld [vmem:[%s7346] sm:$0xff]
      %v7348 = vld [vmem:[%s7346 + $0x8] sm:$0xff]
      %v7349 = vld [vmem:[%s7346 + $0x10] sm:$0xff]
      %v7350 = vld [vmem:[%s7346 + $0x18] sm:$0xff]
      %s7351 = scalar_lea.vmem %s6, 5
      %v7352 = vld [vmem:[%s7351] sm:$0x1]
      %v7354 = vlaneseq
      %v7355 = vshrl.u32 %v7354, 7
      %v7356 = vsub.s32 0, %v7355
      %v7357 = vrot.slane %v7352, %v7356
      %v7360 = vsel %vm692, %v7345, 0
      %7362 = vmatprep.subr.mxu0 0.0
      %7363 = vmatpush1.msra.mxu0 %v7347
      %7364 = vmatprep.subr.mxu0 0.0
      %7365 = vmatpush1.msra.mxu0 %v7348
      %7366 = vmatprep.subr.mxu0 0.0
      %7367 = vmatpush1.msra.mxu0 %v7349
      %7368 = vmatprep.subr.mxu0 0.0
      %7369 = vmatpush1.msra.mxu0 %v7350
      %7370 = vmatprep.subr.mxu0 0.0
      %7371 = vmatpush1.msra.mxu0 0.0
      %7372 = vmatprep.subr.mxu0 0.0
      %7373 = vmatpush1.msra.mxu0 0.0
      %7374 = vmatprep.subr.mxu0 0.0
      %7375 = vmatpush1.msra.mxu0 0.0
      %7376 = vmatprep.subr.mxu0 0.0
      %7377 = vmatpush1.msra.mxu0 0.0
      %7378 = vmatprep.subr.mxu0 0.0
      %7379 = vmatpush1.msra.mxu0 0.0
      %7380 = vmatprep.subr.mxu0 0.0
      %7381 = vmatpush1.msra.mxu0 0.0
      %7382 = vmatprep.subr.mxu0 0.0
      %7383 = vmatpush1.msra.mxu0 0.0
      %7384 = vmatprep.subr.mxu0 0.0
      %7385 = vmatpush1.msra.mxu0 0.0
      %7386 = vmatprep.subr.mxu0 0.0
      %7387 = vmatpush1.msra.mxu0 0.0
      %7388 = vmatprep.subr.mxu0 0.0
      %7389 = vmatpush1.msra.mxu0 0.0
      %7390 = vmatprep.subr.mxu0 0.0
      %7391 = vmatpush1.msra.mxu0 0.0
      %7392 = vmatprep.subr.mxu0 0.0
      %7393 = vmatpush1.msra.mxu0 0.0
      %7394 = vmatprep.subr.mxu0 0.0
      %7395 = vmatpush1.msra.mxu0 0.0
      %7396 = vmatprep.subr.mxu0 0.0
      %7397 = vmatpush1.msra.mxu0 0.0
      %7398 = vmatprep.subr.mxu0 0.0
      %7399 = vmatpush1.msra.mxu0 0.0
      %7400 = vmatprep.subr.mxu0 0.0
      %7401 = vmatpush1.msra.mxu0 0.0
      %7402 = vmatprep.subr.mxu0 0.0
      %7403 = vmatpush1.msra.mxu0 0.0
      %7404 = vmatprep.subr.mxu0 0.0
      %7405 = vmatpush1.msra.mxu0 0.0
      %7406 = vmatprep.subr.mxu0 0.0
      %7407 = vmatpush1.msra.mxu0 0.0
      %7408 = vmatprep.subr.mxu0 0.0
      %7409 = vmatpush1.msra.mxu0 0.0
      %7410 = vmatprep.subr.mxu0 0.0
      %7411 = vmatpush1.msra.mxu0 0.0
      %7412 = vmatprep.subr.mxu0 0.0
      %7413 = vmatpush1.msra.mxu0 0.0
      %7414 = vmatprep.subr.mxu0 0.0
      %7415 = vmatpush1.msra.mxu0 0.0
      %7416 = vmatprep.subr.mxu0 0.0
      %7417 = vmatpush1.msra.mxu0 0.0
      %7418 = vmatprep.subr.mxu0 0.0
      %7419 = vmatpush1.msra.mxu0 0.0
      %7420 = vmatprep.subr.mxu0 0.0
      %7421 = vmatpush1.msra.mxu0 0.0
      %7422 = vmatprep.subr.mxu0 0.0
      %7423 = vmatpush1.msra.mxu0 0.0
      %7424 = vmatprep.subr.mxu0 0.0
      %7425 = vmatpush1.msra.mxu0 0.0
      %7426 = vmatprep.mubr.f32.mxu0 0.0
      %7427 = vmatmul.mubr.f32.gmra.mrb[0].mxu0 %v7360
      %v7428 = vpop.f32.mrb[0].mxu0
      %v7429 = vadd.f32 %v7357, %v7428
      %v7430 = vpop.f32.mrb[0].mxu0
      %7431 = vdwg.mxu0
      %7433 = vrot.lane.b32.xlu0 %v7429, 96
      %v7434 = vpop.permute.xlu0 %7433
      %v7435 = vsel %vm769, %v7429, 0
      %v7437 = vsel %vm769, %v7434, 0
      %7439 = vmatprep.subr.mxu0 0.0
      %7440 = vmatpush1.xpose.msra.mxu0 %v7437
      %7441 = vmatprep.subr.mxu0 0.0
      %7442 = vmatpush1.xpose.msra.mxu0 0.0
      %7443 = vmatprep.subr.mxu0 0.0
      %7444 = vmatpush1.xpose.msra.mxu0 0.0
      %7445 = vmatprep.subr.mxu0 0.0
      %7446 = vmatpush1.xpose.msra.mxu0 0.0
      %7447 = vmatprep.subr.mxu0 0.0
      %7448 = vmatpush1.xpose.msra.mxu0 0.0
      %7449 = vmatprep.subr.mxu0 0.0
      %7450 = vmatpush1.xpose.msra.mxu0 0.0
      %7451 = vmatprep.subr.mxu0 0.0
      %7452 = vmatpush1.xpose.msra.mxu0 0.0
      %7453 = vmatprep.subr.mxu0 0.0
      %7454 = vmatpush1.xpose.msra.mxu0 0.0
      %7455 = vmatprep.subr.mxu0 0.0
      %7456 = vmatpush1.xpose.msra.mxu0 0.0
      %7457 = vmatprep.subr.mxu0 0.0
      %7458 = vmatpush1.xpose.msra.mxu0 0.0
      %7459 = vmatprep.subr.mxu0 0.0
      %7460 = vmatpush1.xpose.msra.mxu0 0.0
      %7461 = vmatprep.subr.mxu0 0.0
      %7462 = vmatpush1.xpose.msra.mxu0 0.0
      %7463 = vmatprep.subr.mxu0 0.0
      %7464 = vmatpush1.xpose.msra.mxu0 0.0
      %7465 = vmatprep.subr.mxu0 0.0
      %7466 = vmatpush1.xpose.msra.mxu0 0.0
      %7467 = vmatprep.subr.mxu0 0.0
      %7468 = vmatpush1.xpose.msra.mxu0 0.0
      %7469 = vmatprep.subr.mxu0 0.0
      %7470 = vmatpush1.xpose.msra.mxu0 0.0
      %7471 = vmatprep.subr.mxu0 0.0
      %7472 = vmatpush1.xpose.msra.mxu0 0.0
      %7473 = vmatprep.subr.mxu0 0.0
      %7474 = vmatpush1.xpose.msra.mxu0 0.0
      %7475 = vmatprep.subr.mxu0 0.0
      %7476 = vmatpush1.xpose.msra.mxu0 0.0
      %7477 = vmatprep.subr.mxu0 0.0
      %7478 = vmatpush1.xpose.msra.mxu0 0.0
      %7479 = vmatprep.subr.mxu0 0.0
      %7480 = vmatpush1.xpose.msra.mxu0 0.0
      %7481 = vmatprep.subr.mxu0 0.0
      %7482 = vmatpush1.xpose.msra.mxu0 0.0
      %7483 = vmatprep.subr.mxu0 0.0
      %7484 = vmatpush1.xpose.msra.mxu0 0.0
      %7485 = vmatprep.subr.mxu0 0.0
      %7486 = vmatpush1.xpose.msra.mxu0 0.0
      %7487 = vmatprep.subr.mxu0 0.0
      %7488 = vmatpush1.xpose.msra.mxu0 0.0
      %7489 = vmatprep.subr.mxu0 0.0
      %7490 = vmatpush1.xpose.msra.mxu0 0.0
      %7491 = vmatprep.subr.mxu0 0.0
      %7492 = vmatpush1.xpose.msra.mxu0 0.0
      %7493 = vmatprep.subr.mxu0 0.0
      %7494 = vmatpush1.xpose.msra.mxu0 0.0
      %7495 = vmatprep.subr.mxu0 0.0
      %7496 = vmatpush1.xpose.msra.mxu0 0.0
      %7497 = vmatprep.subr.mxu0 0.0
      %7498 = vmatpush1.xpose.msra.mxu0 0.0
      %7499 = vmatprep.subr.mxu0 0.0
      %7500 = vmatpush1.xpose.msra.mxu0 0.0
      %7501 = vmatprep.subr.mxu0 0.0
      %7502 = vmatpush1.xpose.msra.mxu0 0.0
      %7503 = vmatprep.mubr.f32.mxu0 0.0
      %7504 = vmatmul.mubr.f32.gmra.mrb[0].mxu0 %v7435
      %v7505 = vpop.f32.mrb[0].mxu0
      %v7506 = vadd.f32 0.0, %v7505
      %v7507 = vpop.f32.mrb[0].mxu0
      %7508 = vdwg.mxu0
      %7509 = vrot.lane.b32.xlu0 %v7429, 120
      %v7510 = vpop.permute.xlu0 %7509
      %7511 = vrot.lane.b32.xlu0 %v7429, 88
      %v7512 = vpop.permute.xlu0 %7511
      %v7513 = vsel %vm769, %v7510, 0
      %v7515 = vsel %vm769, %v7512, 0
      %7517 = vmatprep.subr.mxu0 0.0
      %7518 = vmatpush1.xpose.msra.mxu0 %v7515
      %7519 = vmatprep.subr.mxu0 0.0
      %7520 = vmatpush1.xpose.msra.mxu0 0.0
      %7521 = vmatprep.subr.mxu0 0.0
      %7522 = vmatpush1.xpose.msra.mxu0 0.0
      %7523 = vmatprep.subr.mxu0 0.0
      %7524 = vmatpush1.xpose.msra.mxu0 0.0
      %7525 = vmatprep.subr.mxu0 0.0
      %7526 = vmatpush1.xpose.msra.mxu0 0.0
      %7527 = vmatprep.subr.mxu0 0.0
      %7528 = vmatpush1.xpose.msra.mxu0 0.0
      %7529 = vmatprep.subr.mxu0 0.0
      %7530 = vmatpush1.xpose.msra.mxu0 0.0
      %7531 = vmatprep.subr.mxu0 0.0
      %7532 = vmatpush1.xpose.msra.mxu0 0.0
      %7533 = vmatprep.subr.mxu0 0.0
      %7534 = vmatpush1.xpose.msra.mxu0 0.0
      %7535 = vmatprep.subr.mxu0 0.0
      %7536 = vmatpush1.xpose.msra.mxu0 0.0
      %7537 = vmatprep.subr.mxu0 0.0
      %7538 = vmatpush1.xpose.msra.mxu0 0.0
      %7539 = vmatprep.subr.mxu0 0.0
      %7540 = vmatpush1.xpose.msra.mxu0 0.0
      %7541 = vmatprep.subr.mxu0 0.0
      %7542 = vmatpush1.xpose.msra.mxu0 0.0
      %7543 = vmatprep.subr.mxu0 0.0
      %7544 = vmatpush1.xpose.msra.mxu0 0.0
      %7545 = vmatprep.subr.mxu0 0.0
      %7546 = vmatpush1.xpose.msra.mxu0 0.0
      %7547 = vmatprep.subr.mxu0 0.0
      %7548 = vmatpush1.xpose.msra.mxu0 0.0
      %7549 = vmatprep.subr.mxu0 0.0
      %7550 = vmatpush1.xpose.msra.mxu0 0.0
      %7551 = vmatprep.subr.mxu0 0.0
      %7552 = vmatpush1.xpose.msra.mxu0 0.0
      %7553 = vmatprep.subr.mxu0 0.0
      %7554 = vmatpush1.xpose.msra.mxu0 0.0
      %7555 = vmatprep.subr.mxu0 0.0
      %7556 = vmatpush1.xpose.msra.mxu0 0.0
      %7557 = vmatprep.subr.mxu0 0.0
      %7558 = vmatpush1.xpose.msra.mxu0 0.0
      %7559 = vmatprep.subr.mxu0 0.0
      %7560 = vmatpush1.xpose.msra.mxu0 0.0
      %7561 = vmatprep.subr.mxu0 0.0
      %7562 = vmatpush1.xpose.msra.mxu0 0.0
      %7563 = vmatprep.subr.mxu0 0.0
      %7564 = vmatpush1.xpose.msra.mxu0 0.0
      %7565 = vmatprep.subr.mxu0 0.0
      %7566 = vmatpush1.xpose.msra.mxu0 0.0
      %7567 = vmatprep.subr.mxu0 0.0
      %7568 = vmatpush1.xpose.msra.mxu0 0.0
      %7569 = vmatprep.subr.mxu0 0.0
      %7570 = vmatpush1.xpose.msra.mxu0 0.0
      %7571 = vmatprep.subr.mxu0 0.0
      %7572 = vmatpush1.xpose.msra.mxu0 0.0
      %7573 = vmatprep.subr.mxu0 0.0
      %7574 = vmatpush1.xpose.msra.mxu0 0.0
      %7575 = vmatprep.subr.mxu0 0.0
      %7576 = vmatpush1.xpose.msra.mxu0 0.0
      %7577 = vmatprep.subr.mxu0 0.0
      %7578 = vmatpush1.xpose.msra.mxu0 0.0
      %7579 = vmatprep.subr.mxu0 0.0
      %7580 = vmatpush1.xpose.msra.mxu0 0.0
      %7581 = vmatprep.mubr.f32.mxu0 0.0
      %7582 = vmatmul.mubr.f32.gmra.mrb[0].mxu0 %v7513
      %v7583 = vpop.f32.mrb[0].mxu0
      %v7584 = vadd.f32 0.0, %v7583
      %v7585 = vpop.f32.mrb[0].mxu0
      %7586 = vdwg.mxu0
      %7587 = vrot.lane.b32.xlu0 %v7429, 112
      %v7588 = vpop.permute.xlu0 %7587
      %7589 = vrot.lane.b32.xlu0 %v7429, 80
      %v7590 = vpop.permute.xlu0 %7589
      %v7591 = vsel %vm769, %v7588, 0
      %v7593 = vsel %vm769, %v7590, 0
      %7595 = vmatprep.subr.mxu0 0.0
      %7596 = vmatpush1.xpose.msra.mxu0 %v7593
      %7597 = vmatprep.subr.mxu0 0.0
      %7598 = vmatpush1.xpose.msra.mxu0 0.0
      %7599 = vmatprep.subr.mxu0 0.0
      %7600 = vmatpush1.xpose.msra.mxu0 0.0
      %7601 = vmatprep.subr.mxu0 0.0
      %7602 = vmatpush1.xpose.msra.mxu0 0.0
      %7603 = vmatprep.subr.mxu0 0.0
      %7604 = vmatpush1.xpose.msra.mxu0 0.0
      %7605 = vmatprep.subr.mxu0 0.0
      %7606 = vmatpush1.xpose.msra.mxu0 0.0
      %7607 = vmatprep.subr.mxu0 0.0
      %7608 = vmatpush1.xpose.msra.mxu0 0.0
      %7609 = vmatprep.subr.mxu0 0.0
      %7610 = vmatpush1.xpose.msra.mxu0 0.0
      %7611 = vmatprep.subr.mxu0 0.0
      %7612 = vmatpush1.xpose.msra.mxu0 0.0
      %7613 = vmatprep.subr.mxu0 0.0
      %7614 = vmatpush1.xpose.msra.mxu0 0.0
      %7615 = vmatprep.subr.mxu0 0.0
      %7616 = vmatpush1.xpose.msra.mxu0 0.0
      %7617 = vmatprep.subr.mxu0 0.0
      %7618 = vmatpush1.xpose.msra.mxu0 0.0
      %7619 = vmatprep.subr.mxu0 0.0
      %7620 = vmatpush1.xpose.msra.mxu0 0.0
      %7621 = vmatprep.subr.mxu0 0.0
      %7622 = vmatpush1.xpose.msra.mxu0 0.0
      %7623 = vmatprep.subr.mxu0 0.0
      %7624 = vmatpush1.xpose.msra.mxu0 0.0
      %7625 = vmatprep.subr.mxu0 0.0
      %7626 = vmatpush1.xpose.msra.mxu0 0.0
      %7627 = vmatprep.subr.mxu0 0.0
      %7628 = vmatpush1.xpose.msra.mxu0 0.0
      %7629 = vmatprep.subr.mxu0 0.0
      %7630 = vmatpush1.xpose.msra.mxu0 0.0
      %7631 = vmatprep.subr.mxu0 0.0
      %7632 = vmatpush1.xpose.msra.mxu0 0.0
      %7633 = vmatprep.subr.mxu0 0.0
      %7634 = vmatpush1.xpose.msra.mxu0 0.0
      %7635 = vmatprep.subr.mxu0 0.0
      %7636 = vmatpush1.xpose.msra.mxu0 0.0
      %7637 = vmatprep.subr.mxu0 0.0
      %7638 = vmatpush1.xpose.msra.mxu0 0.0
      %7639 = vmatprep.subr.mxu0 0.0
      %7640 = vmatpush1.xpose.msra.mxu0 0.0
      %7641 = vmatprep.subr.mxu0 0.0
      %7642 = vmatpush1.xpose.msra.mxu0 0.0
      %7643 = vmatprep.subr.mxu0 0.0
      %7644 = vmatpush1.xpose.msra.mxu0 0.0
      %7645 = vmatprep.subr.mxu0 0.0
      %7646 = vmatpush1.xpose.msra.mxu0 0.0
      %7647 = vmatprep.subr.mxu0 0.0
      %7648 = vmatpush1.xpose.msra.mxu0 0.0
      %7649 = vmatprep.subr.mxu0 0.0
      %7650 = vmatpush1.xpose.msra.mxu0 0.0
      %7651 = vmatprep.subr.mxu0 0.0
      %7652 = vmatpush1.xpose.msra.mxu0 0.0
      %7653 = vmatprep.subr.mxu0 0.0
      %7654 = vmatpush1.xpose.msra.mxu0 0.0
      %7655 = vmatprep.subr.mxu0 0.0
      %7656 = vmatpush1.xpose.msra.mxu0 0.0
      %7657 = vmatprep.subr.mxu0 0.0
      %7658 = vmatpush1.xpose.msra.mxu0 0.0
      %7659 = vmatprep.mubr.f32.mxu0 0.0
      %7660 = vmatmul.mubr.f32.gmra.mrb[0].mxu0 %v7591
      %v7661 = vpop.f32.mrb[0].mxu0
      %v7662 = vadd.f32 0.0, %v7661
      %v7663 = vpop.f32.mrb[0].mxu0
      %7664 = vdwg.mxu0
      %7665 = vrot.lane.b32.xlu0 %v7429, 104
      %v7666 = vpop.permute.xlu0 %7665
      %7667 = vrot.lane.b32.xlu0 %v7429, 72
      %v7668 = vpop.permute.xlu0 %7667
      %v7669 = vsel %vm769, %v7666, 0
      %v7671 = vsel %vm769, %v7668, 0
      %7673 = vmatprep.subr.mxu0 0.0
      %7674 = vmatpush1.xpose.msra.mxu0 %v7671
      %7675 = vmatprep.subr.mxu0 0.0
      %7676 = vmatpush1.xpose.msra.mxu0 0.0
      %7677 = vmatprep.subr.mxu0 0.0
      %7678 = vmatpush1.xpose.msra.mxu0 0.0
      %7679 = vmatprep.subr.mxu0 0.0
      %7680 = vmatpush1.xpose.msra.mxu0 0.0
      %7681 = vmatprep.subr.mxu0 0.0
      %7682 = vmatpush1.xpose.msra.mxu0 0.0
      %7683 = vmatprep.subr.mxu0 0.0
      %7684 = vmatpush1.xpose.msra.mxu0 0.0
      %7685 = vmatprep.subr.mxu0 0.0
      %7686 = vmatpush1.xpose.msra.mxu0 0.0
      %7687 = vmatprep.subr.mxu0 0.0
      %7688 = vmatpush1.xpose.msra.mxu0 0.0
      %7689 = vmatprep.subr.mxu0 0.0
      %7690 = vmatpush1.xpose.msra.mxu0 0.0
      %7691 = vmatprep.subr.mxu0 0.0
      %7692 = vmatpush1.xpose.msra.mxu0 0.0
      %7693 = vmatprep.subr.mxu0 0.0
      %7694 = vmatpush1.xpose.msra.mxu0 0.0
      %7695 = vmatprep.subr.mxu0 0.0
      %7696 = vmatpush1.xpose.msra.mxu0 0.0
      %7697 = vmatprep.subr.mxu0 0.0
      %7698 = vmatpush1.xpose.msra.mxu0 0.0
      %7699 = vmatprep.subr.mxu0 0.0
      %7700 = vmatpush1.xpose.msra.mxu0 0.0
      %7701 = vmatprep.subr.mxu0 0.0
      %7702 = vmatpush1.xpose.msra.mxu0 0.0
      %7703 = vmatprep.subr.mxu0 0.0
      %7704 = vmatpush1.xpose.msra.mxu0 0.0
      %7705 = vmatprep.subr.mxu0 0.0
      %7706 = vmatpush1.xpose.msra.mxu0 0.0
      %7707 = vmatprep.subr.mxu0 0.0
      %7708 = vmatpush1.xpose.msra.mxu0 0.0
      %7709 = vmatprep.subr.mxu0 0.0
      %7710 = vmatpush1.xpose.msra.mxu0 0.0
      %7711 = vmatprep.subr.mxu0 0.0
      %7712 = vmatpush1.xpose.msra.mxu0 0.0
      %7713 = vmatprep.subr.mxu0 0.0
      %7714 = vmatpush1.xpose.msra.mxu0 0.0
      %7715 = vmatprep.subr.mxu0 0.0
      %7716 = vmatpush1.xpose.msra.mxu0 0.0
      %7717 = vmatprep.subr.mxu0 0.0
      %7718 = vmatpush1.xpose.msra.mxu0 0.0
      %7719 = vmatprep.subr.mxu0 0.0
      %7720 = vmatpush1.xpose.msra.mxu0 0.0
      %7721 = vmatprep.subr.mxu0 0.0
      %7722 = vmatpush1.xpose.msra.mxu0 0.0
      %7723 = vmatprep.subr.mxu0 0.0
      %7724 = vmatpush1.xpose.msra.mxu0 0.0
      %7725 = vmatprep.subr.mxu0 0.0
      %7726 = vmatpush1.xpose.msra.mxu0 0.0
      %7727 = vmatprep.subr.mxu0 0.0
      %7728 = vmatpush1.xpose.msra.mxu0 0.0
      %7729 = vmatprep.subr.mxu0 0.0
      %7730 = vmatpush1.xpose.msra.mxu0 0.0
      %7731 = vmatprep.subr.mxu0 0.0
      %7732 = vmatpush1.xpose.msra.mxu0 0.0
      %7733 = vmatprep.subr.mxu0 0.0
      %7734 = vmatpush1.xpose.msra.mxu0 0.0
      %7735 = vmatprep.subr.mxu0 0.0
      %7736 = vmatpush1.xpose.msra.mxu0 0.0
      %7737 = vmatprep.mubr.f32.mxu0 0.0
      %7738 = vmatmul.mubr.f32.gmra.mrb[0].mxu0 %v7669
      %v7739 = vpop.f32.mrb[0].mxu0
      %v7740 = vadd.f32 0.0, %v7739
      %v7741 = vpop.f32.mrb[0].mxu0
      %7742 = vdwg.mxu0
      %v7743 = vsel %vm1078, %v7506, -inf
      %7744 = vmax.xlane.f32.xlu0 %v7743
      %v7745 = vpop.xlane.xlu0 %7744
      %v7746 = vsel %vm1078, %v7584, -inf
      %7747 = vmax.xlane.f32.xlu0 %v7746
      %v7748 = vpop.xlane.xlu0 %7747
      %v7749 = vsel %vm1078, %v7662, -inf
      %7750 = vmax.xlane.f32.xlu0 %v7749
      %v7751 = vpop.xlane.xlu0 %7750
      %v7752 = vsel %vm1078, %v7740, -inf
      %7753 = vmax.xlane.f32.xlu0 %v7752
      %v7754 = vpop.xlane.xlu0 %7753
      %v7755 = vsub.f32 %v7506, %v7745
      %v7756 = vsub.f32 %v7584, %v7748
      %v7757 = vsub.f32 %v7662, %v7751
      %v7758 = vsub.f32 %v7740, %v7754
      %v7759 = vmul.f32 %v7755, 1.442695
      %v7760 = vpow.pop %v7759
      %v7761 = vmul.f32 %v7756, 1.442695
      %v7762 = vpow.pop %v7761
      %v7763 = vmul.f32 %v7757, 1.442695
      %v7764 = vpow.pop %v7763
      %v7765 = vmul.f32 %v7758, 1.442695
      %v7766 = vpow.pop %v7765
      %v7767 = vsel %vm1078, %v7760, 0.0
      %7768 = vadd.xlane.f32.xlu0 %v7767
      %v7769 = vpop.xlane.xlu0 %7768
      %v7770 = vsel %vm1078, %v7762, 0.0
      %7771 = vadd.xlane.f32.xlu0 %v7770
      %v7772 = vpop.xlane.xlu0 %7771
      %v7773 = vsel %vm1078, %v7764, 0.0
      %7774 = vadd.xlane.f32.xlu0 %v7773
      %v7775 = vpop.xlane.xlu0 %7774
      %v7776 = vsel %vm1078, %v7766, 0.0
      %7777 = vadd.xlane.f32.xlu0 %v7776
      %v7778 = vpop.xlane.xlu0 %7777
      %v7779 = vrcp.pop %v7769
      %v7780 = vrcp.pop %v7772
      %v7781 = vrcp.pop %v7775
      %v7782 = vrcp.pop %v7778
      %v7783 = vmul.f32 %v7760, %v7779
      %v7784 = vmul.f32 %v7762, %v7780
      %v7785 = vmul.f32 %v7764, %v7781
      %v7786 = vmul.f32 %v7766, %v7782
      %s7787 = scalar_lea.vmem %s7, 160
      %v7788 = vld [vmem:[%s7787] sm:$0xff]
      %v7789 = vld [vmem:[%s7787 + $0x8] sm:$0xff]
      %v7790 = vld [vmem:[%s7787 + $0x10] sm:$0xff]
      %v7791 = vld [vmem:[%s7787 + $0x18] sm:$0xff]
      %s7792 = scalar_lea.vmem %s8, 5
      %v7793 = vld [vmem:[%s7792] sm:$0x1]
      %7794 = vrot.lane.b32.xlu0 %v7429, 64
      %v7795 = vpop.permute.xlu0 %7794
      %v7797 = vsel %vm1130, %v7783, 0
      %v7799 = vsel %vm1134, %v7795, 0
      %7801 = vmatprep.subr.mxu0 0.0
      %7802 = vmatpush1.msra.mxu0 %v7799
      %7803 = vmatprep.subr.mxu0 0.0
      %7804 = vmatpush1.msra.mxu0 0.0
      %7805 = vmatprep.subr.mxu0 0.0
      %7806 = vmatpush1.msra.mxu0 0.0
      %7807 = vmatprep.subr.mxu0 0.0
      %7808 = vmatpush1.msra.mxu0 0.0
      %7809 = vmatprep.subr.mxu0 0.0
      %7810 = vmatpush1.msra.mxu0 0.0
      %7811 = vmatprep.subr.mxu0 0.0
      %7812 = vmatpush1.msra.mxu0 0.0
      %7813 = vmatprep.subr.mxu0 0.0
      %7814 = vmatpush1.msra.mxu0 0.0
      %7815 = vmatprep.subr.mxu0 0.0
      %7816 = vmatpush1.msra.mxu0 0.0
      %7817 = vmatprep.subr.mxu0 0.0
      %7818 = vmatpush1.msra.mxu0 0.0
      %7819 = vmatprep.subr.mxu0 0.0
      %7820 = vmatpush1.msra.mxu0 0.0
      %7821 = vmatprep.subr.mxu0 0.0
      %7822 = vmatpush1.msra.mxu0 0.0
      %7823 = vmatprep.subr.mxu0 0.0
      %7824 = vmatpush1.msra.mxu0 0.0
      %7825 = vmatprep.subr.mxu0 0.0
      %7826 = vmatpush1.msra.mxu0 0.0
      %7827 = vmatprep.subr.mxu0 0.0
      %7828 = vmatpush1.msra.mxu0 0.0
      %7829 = vmatprep.subr.mxu0 0.0
      %7830 = vmatpush1.msra.mxu0 0.0
      %7831 = vmatprep.subr.mxu0 0.0
      %7832 = vmatpush1.msra.mxu0 0.0
      %7833 = vmatprep.subr.mxu0 0.0
      %7834 = vmatpush1.msra.mxu0 0.0
      %7835 = vmatprep.subr.mxu0 0.0
      %7836 = vmatpush1.msra.mxu0 0.0
      %7837 = vmatprep.subr.mxu0 0.0
      %7838 = vmatpush1.msra.mxu0 0.0
      %7839 = vmatprep.subr.mxu0 0.0
      %7840 = vmatpush1.msra.mxu0 0.0
      %7841 = vmatprep.subr.mxu0 0.0
      %7842 = vmatpush1.msra.mxu0 0.0
      %7843 = vmatprep.subr.mxu0 0.0
      %7844 = vmatpush1.msra.mxu0 0.0
      %7845 = vmatprep.subr.mxu0 0.0
      %7846 = vmatpush1.msra.mxu0 0.0
      %7847 = vmatprep.subr.mxu0 0.0
      %7848 = vmatpush1.msra.mxu0 0.0
      %7849 = vmatprep.subr.mxu0 0.0
      %7850 = vmatpush1.msra.mxu0 0.0
      %7851 = vmatprep.subr.mxu0 0.0
      %7852 = vmatpush1.msra.mxu0 0.0
      %7853 = vmatprep.subr.mxu0 0.0
      %7854 = vmatpush1.msra.mxu0 0.0
      %7855 = vmatprep.subr.mxu0 0.0
      %7856 = vmatpush1.msra.mxu0 0.0
      %7857 = vmatprep.subr.mxu0 0.0
      %7858 = vmatpush1.msra.mxu0 0.0
      %7859 = vmatprep.subr.mxu0 0.0
      %7860 = vmatpush1.msra.mxu0 0.0
      %7861 = vmatprep.subr.mxu0 0.0
      %7862 = vmatpush1.msra.mxu0 0.0
      %7863 = vmatprep.subr.mxu0 0.0
      %7864 = vmatpush1.msra.mxu0 0.0
      %7865 = vmatprep.mubr.f32.mxu0 0.0
      %7866 = vmatmul.mubr.f32.gmra.mrb[0].mxu0 %v7797
      %v7867 = vpop.f32.mrb[0].mxu0
      %v7868 = vadd.f32 0.0, %v7867
      %v7869 = vpop.f32.mrb[0].mxu0
      %7870 = vdwg.mxu0
      %v7872 = vsel %vm769, %v7868, 0
      %7874 = vmatprep.subr.mxu0 0.0
      %7875 = vmatpush1.msra.mxu0 %v7788
      %7876 = vmatprep.subr.mxu0 0.0
      %7877 = vmatpush1.msra.mxu0 0.0
      %7878 = vmatprep.subr.mxu0 0.0
      %7879 = vmatpush1.msra.mxu0 0.0
      %7880 = vmatprep.subr.mxu0 0.0
      %7881 = vmatpush1.msra.mxu0 0.0
      %7882 = vmatprep.subr.mxu0 0.0
      %7883 = vmatpush1.msra.mxu0 0.0
      %7884 = vmatprep.subr.mxu0 0.0
      %7885 = vmatpush1.msra.mxu0 0.0
      %7886 = vmatprep.subr.mxu0 0.0
      %7887 = vmatpush1.msra.mxu0 0.0
      %7888 = vmatprep.subr.mxu0 0.0
      %7889 = vmatpush1.msra.mxu0 0.0
      %7890 = vmatprep.subr.mxu0 0.0
      %7891 = vmatpush1.msra.mxu0 0.0
      %7892 = vmatprep.subr.mxu0 0.0
      %7893 = vmatpush1.msra.mxu0 0.0
      %7894 = vmatprep.subr.mxu0 0.0
      %7895 = vmatpush1.msra.mxu0 0.0
      %7896 = vmatprep.subr.mxu0 0.0
      %7897 = vmatpush1.msra.mxu0 0.0
      %7898 = vmatprep.subr.mxu0 0.0
      %7899 = vmatpush1.msra.mxu0 0.0
      %7900 = vmatprep.subr.mxu0 0.0
      %7901 = vmatpush1.msra.mxu0 0.0
      %7902 = vmatprep.subr.mxu0 0.0
      %7903 = vmatpush1.msra.mxu0 0.0
      %7904 = vmatprep.subr.mxu0 0.0
      %7905 = vmatpush1.msra.mxu0 0.0
      %7906 = vmatprep.subr.mxu0 0.0
      %7907 = vmatpush1.msra.mxu0 0.0
      %7908 = vmatprep.subr.mxu0 0.0
      %7909 = vmatpush1.msra.mxu0 0.0
      %7910 = vmatprep.subr.mxu0 0.0
      %7911 = vmatpush1.msra.mxu0 0.0
      %7912 = vmatprep.subr.mxu0 0.0
      %7913 = vmatpush1.msra.mxu0 0.0
      %7914 = vmatprep.subr.mxu0 0.0
      %7915 = vmatpush1.msra.mxu0 0.0
      %7916 = vmatprep.subr.mxu0 0.0
      %7917 = vmatpush1.msra.mxu0 0.0
      %7918 = vmatprep.subr.mxu0 0.0
      %7919 = vmatpush1.msra.mxu0 0.0
      %7920 = vmatprep.subr.mxu0 0.0
      %7921 = vmatpush1.msra.mxu0 0.0
      %7922 = vmatprep.subr.mxu0 0.0
      %7923 = vmatpush1.msra.mxu0 0.0
      %7924 = vmatprep.subr.mxu0 0.0
      %7925 = vmatpush1.msra.mxu0 0.0
      %7926 = vmatprep.subr.mxu0 0.0
      %7927 = vmatpush1.msra.mxu0 0.0
      %7928 = vmatprep.subr.mxu0 0.0
      %7929 = vmatpush1.msra.mxu0 0.0
      %7930 = vmatprep.subr.mxu0 0.0
      %7931 = vmatpush1.msra.mxu0 0.0
      %7932 = vmatprep.subr.mxu0 0.0
      %7933 = vmatpush1.msra.mxu0 0.0
      %7934 = vmatprep.subr.mxu0 0.0
      %7935 = vmatpush1.msra.mxu0 0.0
      %7936 = vmatprep.subr.mxu0 0.0
      %7937 = vmatpush1.msra.mxu0 0.0
      %7938 = vmatprep.mubr.f32.mxu0 0.0
      %7939 = vmatmul.mubr.f32.gmra.mrb[0].mxu0 %v7872
      %v7940 = vpop.f32.mrb[0].mxu0
      %v7941 = vadd.f32 0.0, %v7940
      %v7942 = vpop.f32.mrb[0].mxu0
      %7943 = vdwg.mxu0
      %v7945 = vlaneseq
      %v7946 = vshrl.u32 %v7945, 7
      %v7947 = vsub.s32 0, %v7946
      %v7948 = vrot.slane %v7793, %v7947
      %v7950 = vadd.f32 %v7948, %v7941
      %7951 = vrot.lane.b32.xlu0 %v7429, 56
      %v7952 = vpop.permute.xlu0 %7951
      %v7954 = vsel %vm1130, %v7784, 0
      %v7956 = vsel %vm1134, %v7952, 0
      %7958 = vmatprep.subr.mxu0 0.0
      %7959 = vmatpush1.msra.mxu0 %v7956
      %7960 = vmatprep.subr.mxu0 0.0
      %7961 = vmatpush1.msra.mxu0 0.0
      %7962 = vmatprep.subr.mxu0 0.0
      %7963 = vmatpush1.msra.mxu0 0.0
      %7964 = vmatprep.subr.mxu0 0.0
      %7965 = vmatpush1.msra.mxu0 0.0
      %7966 = vmatprep.subr.mxu0 0.0
      %7967 = vmatpush1.msra.mxu0 0.0
      %7968 = vmatprep.subr.mxu0 0.0
      %7969 = vmatpush1.msra.mxu0 0.0
      %7970 = vmatprep.subr.mxu0 0.0
      %7971 = vmatpush1.msra.mxu0 0.0
      %7972 = vmatprep.subr.mxu0 0.0
      %7973 = vmatpush1.msra.mxu0 0.0
      %7974 = vmatprep.subr.mxu0 0.0
      %7975 = vmatpush1.msra.mxu0 0.0
      %7976 = vmatprep.subr.mxu0 0.0
      %7977 = vmatpush1.msra.mxu0 0.0
      %7978 = vmatprep.subr.mxu0 0.0
      %7979 = vmatpush1.msra.mxu0 0.0
      %7980 = vmatprep.subr.mxu0 0.0
      %7981 = vmatpush1.msra.mxu0 0.0
      %7982 = vmatprep.subr.mxu0 0.0
      %7983 = vmatpush1.msra.mxu0 0.0
      %7984 = vmatprep.subr.mxu0 0.0
      %7985 = vmatpush1.msra.mxu0 0.0
      %7986 = vmatprep.subr.mxu0 0.0
      %7987 = vmatpush1.msra.mxu0 0.0
      %7988 = vmatprep.subr.mxu0 0.0
      %7989 = vmatpush1.msra.mxu0 0.0
      %7990 = vmatprep.subr.mxu0 0.0
      %7991 = vmatpush1.msra.mxu0 0.0
      %7992 = vmatprep.subr.mxu0 0.0
      %7993 = vmatpush1.msra.mxu0 0.0
      %7994 = vmatprep.subr.mxu0 0.0
      %7995 = vmatpush1.msra.mxu0 0.0
      %7996 = vmatprep.subr.mxu0 0.0
      %7997 = vmatpush1.msra.mxu0 0.0
      %7998 = vmatprep.subr.mxu0 0.0
      %7999 = vmatpush1.msra.mxu0 0.0
      %8000 = vmatprep.subr.mxu0 0.0
      %8001 = vmatpush1.msra.mxu0 0.0
      %8002 = vmatprep.subr.mxu0 0.0
      %8003 = vmatpush1.msra.mxu0 0.0
      %8004 = vmatprep.subr.mxu0 0.0
      %8005 = vmatpush1.msra.mxu0 0.0
      %8006 = vmatprep.subr.mxu0 0.0
      %8007 = vmatpush1.msra.mxu0 0.0
      %8008 = vmatprep.subr.mxu0 0.0
      %8009 = vmatpush1.msra.mxu0 0.0
      %8010 = vmatprep.subr.mxu0 0.0
      %8011 = vmatpush1.msra.mxu0 0.0
      %8012 = vmatprep.subr.mxu0 0.0
      %8013 = vmatpush1.msra.mxu0 0.0
      %8014 = vmatprep.subr.mxu0 0.0
      %8015 = vmatpush1.msra.mxu0 0.0
      %8016 = vmatprep.subr.mxu0 0.0
      %8017 = vmatpush1.msra.mxu0 0.0
      %8018 = vmatprep.subr.mxu0 0.0
      %8019 = vmatpush1.msra.mxu0 0.0
      %8020 = vmatprep.subr.mxu0 0.0
      %8021 = vmatpush1.msra.mxu0 0.0
      %8022 = vmatprep.mubr.f32.mxu0 0.0
      %8023 = vmatmul.mubr.f32.gmra.mrb[0].mxu0 %v7954
      %v8024 = vpop.f32.mrb[0].mxu0
      %v8025 = vadd.f32 0.0, %v8024
      %v8026 = vpop.f32.mrb[0].mxu0
      %8027 = vdwg.mxu0
      %v8029 = vsel %vm769, %v8025, 0
      %8031 = vmatprep.subr.mxu0 0.0
      %8032 = vmatpush1.msra.mxu0 %v7789
      %8033 = vmatprep.subr.mxu0 0.0
      %8034 = vmatpush1.msra.mxu0 0.0
      %8035 = vmatprep.subr.mxu0 0.0
      %8036 = vmatpush1.msra.mxu0 0.0
      %8037 = vmatprep.subr.mxu0 0.0
      %8038 = vmatpush1.msra.mxu0 0.0
      %8039 = vmatprep.subr.mxu0 0.0
      %8040 = vmatpush1.msra.mxu0 0.0
      %8041 = vmatprep.subr.mxu0 0.0
      %8042 = vmatpush1.msra.mxu0 0.0
      %8043 = vmatprep.subr.mxu0 0.0
      %8044 = vmatpush1.msra.mxu0 0.0
      %8045 = vmatprep.subr.mxu0 0.0
      %8046 = vmatpush1.msra.mxu0 0.0
      %8047 = vmatprep.subr.mxu0 0.0
      %8048 = vmatpush1.msra.mxu0 0.0
      %8049 = vmatprep.subr.mxu0 0.0
      %8050 = vmatpush1.msra.mxu0 0.0
      %8051 = vmatprep.subr.mxu0 0.0
      %8052 = vmatpush1.msra.mxu0 0.0
      %8053 = vmatprep.subr.mxu0 0.0
      %8054 = vmatpush1.msra.mxu0 0.0
      %8055 = vmatprep.subr.mxu0 0.0
      %8056 = vmatpush1.msra.mxu0 0.0
      %8057 = vmatprep.subr.mxu0 0.0
      %8058 = vmatpush1.msra.mxu0 0.0
      %8059 = vmatprep.subr.mxu0 0.0
      %8060 = vmatpush1.msra.mxu0 0.0
      %8061 = vmatprep.subr.mxu0 0.0
      %8062 = vmatpush1.msra.mxu0 0.0
      %8063 = vmatprep.subr.mxu0 0.0
      %8064 = vmatpush1.msra.mxu0 0.0
      %8065 = vmatprep.subr.mxu0 0.0
      %8066 = vmatpush1.msra.mxu0 0.0
      %8067 = vmatprep.subr.mxu0 0.0
      %8068 = vmatpush1.msra.mxu0 0.0
      %8069 = vmatprep.subr.mxu0 0.0
      %8070 = vmatpush1.msra.mxu0 0.0
      %8071 = vmatprep.subr.mxu0 0.0
      %8072 = vmatpush1.msra.mxu0 0.0
      %8073 = vmatprep.subr.mxu0 0.0
      %8074 = vmatpush1.msra.mxu0 0.0
      %8075 = vmatprep.subr.mxu0 0.0
      %8076 = vmatpush1.msra.mxu0 0.0
      %8077 = vmatprep.subr.mxu0 0.0
      %8078 = vmatpush1.msra.mxu0 0.0
      %8079 = vmatprep.subr.mxu0 0.0
      %8080 = vmatpush1.msra.mxu0 0.0
      %8081 = vmatprep.subr.mxu0 0.0
      %8082 = vmatpush1.msra.mxu0 0.0
      %8083 = vmatprep.subr.mxu0 0.0
      %8084 = vmatpush1.msra.mxu0 0.0
      %8085 = vmatprep.subr.mxu0 0.0
      %8086 = vmatpush1.msra.mxu0 0.0
      %8087 = vmatprep.subr.mxu0 0.0
      %8088 = vmatpush1.msra.mxu0 0.0
      %8089 = vmatprep.subr.mxu0 0.0
      %8090 = vmatpush1.msra.mxu0 0.0
      %8091 = vmatprep.subr.mxu0 0.0
      %8092 = vmatpush1.msra.mxu0 0.0
      %8093 = vmatprep.subr.mxu0 0.0
      %8094 = vmatpush1.msra.mxu0 0.0
      %8095 = vmatprep.mubr.f32.mxu0 0.0
      %8096 = vmatmul.mubr.f32.gmra.mrb[0].mxu0 %v8029
      %v8097 = vpop.f32.mrb[0].mxu0
      %v8098 = vadd.f32 0.0, %v8097
      %v8099 = vpop.f32.mrb[0].mxu0
      %8100 = vdwg.mxu0
      %v8101 = vadd.f32 %v7950, %v8098
      %8102 = vrot.lane.b32.xlu0 %v7429, 48
      %v8103 = vpop.permute.xlu0 %8102
      %v8105 = vsel %vm1130, %v7785, 0
      %v8107 = vsel %vm1134, %v8103, 0
      %8109 = vmatprep.subr.mxu0 0.0
      %8110 = vmatpush1.msra.mxu0 %v8107
      %8111 = vmatprep.subr.mxu0 0.0
      %8112 = vmatpush1.msra.mxu0 0.0
      %8113 = vmatprep.subr.mxu0 0.0
      %8114 = vmatpush1.msra.mxu0 0.0
      %8115 = vmatprep.subr.mxu0 0.0
      %8116 = vmatpush1.msra.mxu0 0.0
      %8117 = vmatprep.subr.mxu0 0.0
      %8118 = vmatpush1.msra.mxu0 0.0
      %8119 = vmatprep.subr.mxu0 0.0
      %8120 = vmatpush1.msra.mxu0 0.0
      %8121 = vmatprep.subr.mxu0 0.0
      %8122 = vmatpush1.msra.mxu0 0.0
      %8123 = vmatprep.subr.mxu0 0.0
      %8124 = vmatpush1.msra.mxu0 0.0
      %8125 = vmatprep.subr.mxu0 0.0
      %8126 = vmatpush1.msra.mxu0 0.0
      %8127 = vmatprep.subr.mxu0 0.0
      %8128 = vmatpush1.msra.mxu0 0.0
      %8129 = vmatprep.subr.mxu0 0.0
      %8130 = vmatpush1.msra.mxu0 0.0
      %8131 = vmatprep.subr.mxu0 0.0
      %8132 = vmatpush1.msra.mxu0 0.0
      %8133 = vmatprep.subr.mxu0 0.0
      %8134 = vmatpush1.msra.mxu0 0.0
      %8135 = vmatprep.subr.mxu0 0.0
      %8136 = vmatpush1.msra.mxu0 0.0
      %8137 = vmatprep.subr.mxu0 0.0
      %8138 = vmatpush1.msra.mxu0 0.0
      %8139 = vmatprep.subr.mxu0 0.0
      %8140 = vmatpush1.msra.mxu0 0.0
      %8141 = vmatprep.subr.mxu0 0.0
      %8142 = vmatpush1.msra.mxu0 0.0
      %8143 = vmatprep.subr.mxu0 0.0
      %8144 = vmatpush1.msra.mxu0 0.0
      %8145 = vmatprep.subr.mxu0 0.0
      %8146 = vmatpush1.msra.mxu0 0.0
      %8147 = vmatprep.subr.mxu0 0.0
      %8148 = vmatpush1.msra.mxu0 0.0
      %8149 = vmatprep.subr.mxu0 0.0
      %8150 = vmatpush1.msra.mxu0 0.0
      %8151 = vmatprep.subr.mxu0 0.0
      %8152 = vmatpush1.msra.mxu0 0.0
      %8153 = vmatprep.subr.mxu0 0.0
      %8154 = vmatpush1.msra.mxu0 0.0
      %8155 = vmatprep.subr.mxu0 0.0
      %8156 = vmatpush1.msra.mxu0 0.0
      %8157 = vmatprep.subr.mxu0 0.0
      %8158 = vmatpush1.msra.mxu0 0.0
      %8159 = vmatprep.subr.mxu0 0.0
      %8160 = vmatpush1.msra.mxu0 0.0
      %8161 = vmatprep.subr.mxu0 0.0
      %8162 = vmatpush1.msra.mxu0 0.0
      %8163 = vmatprep.subr.mxu0 0.0
      %8164 = vmatpush1.msra.mxu0 0.0
      %8165 = vmatprep.subr.mxu0 0.0
      %8166 = vmatpush1.msra.mxu0 0.0
      %8167 = vmatprep.subr.mxu0 0.0
      %8168 = vmatpush1.msra.mxu0 0.0
      %8169 = vmatprep.subr.mxu0 0.0
      %8170 = vmatpush1.msra.mxu0 0.0
      %8171 = vmatprep.subr.mxu0 0.0
      %8172 = vmatpush1.msra.mxu0 0.0
      %8173 = vmatprep.mubr.f32.mxu0 0.0
      %8174 = vmatmul.mubr.f32.gmra.mrb[0].mxu0 %v8105
      %v8175 = vpop.f32.mrb[0].mxu0
      %v8176 = vadd.f32 0.0, %v8175
      %v8177 = vpop.f32.mrb[0].mxu0
      %8178 = vdwg.mxu0
      %v8180 = vsel %vm769, %v8176, 0
      %8182 = vmatprep.subr.mxu0 0.0
      %8183 = vmatpush1.msra.mxu0 %v7790
      %8184 = vmatprep.subr.mxu0 0.0
      %8185 = vmatpush1.msra.mxu0 0.0
      %8186 = vmatprep.subr.mxu0 0.0
      %8187 = vmatpush1.msra.mxu0 0.0
      %8188 = vmatprep.subr.mxu0 0.0
      %8189 = vmatpush1.msra.mxu0 0.0
      %8190 = vmatprep.subr.mxu0 0.0
      %8191 = vmatpush1.msra.mxu0 0.0
      %8192 = vmatprep.subr.mxu0 0.0
      %8193 = vmatpush1.msra.mxu0 0.0
      %8194 = vmatprep.subr.mxu0 0.0
      %8195 = vmatpush1.msra.mxu0 0.0
      %8196 = vmatprep.subr.mxu0 0.0
      %8197 = vmatpush1.msra.mxu0 0.0
      %8198 = vmatprep.subr.mxu0 0.0
      %8199 = vmatpush1.msra.mxu0 0.0
      %8200 = vmatprep.subr.mxu0 0.0
      %8201 = vmatpush1.msra.mxu0 0.0
      %8202 = vmatprep.subr.mxu0 0.0
      %8203 = vmatpush1.msra.mxu0 0.0
      %8204 = vmatprep.subr.mxu0 0.0
      %8205 = vmatpush1.msra.mxu0 0.0
      %8206 = vmatprep.subr.mxu0 0.0
      %8207 = vmatpush1.msra.mxu0 0.0
      %8208 = vmatprep.subr.mxu0 0.0
      %8209 = vmatpush1.msra.mxu0 0.0
      %8210 = vmatprep.subr.mxu0 0.0
      %8211 = vmatpush1.msra.mxu0 0.0
      %8212 = vmatprep.subr.mxu0 0.0
      %8213 = vmatpush1.msra.mxu0 0.0
      %8214 = vmatprep.subr.mxu0 0.0
      %8215 = vmatpush1.msra.mxu0 0.0
      %8216 = vmatprep.subr.mxu0 0.0
      %8217 = vmatpush1.msra.mxu0 0.0
      %8218 = vmatprep.subr.mxu0 0.0
      %8219 = vmatpush1.msra.mxu0 0.0
      %8220 = vmatprep.subr.mxu0 0.0
      %8221 = vmatpush1.msra.mxu0 0.0
      %8222 = vmatprep.subr.mxu0 0.0
      %8223 = vmatpush1.msra.mxu0 0.0
      %8224 = vmatprep.subr.mxu0 0.0
      %8225 = vmatpush1.msra.mxu0 0.0
      %8226 = vmatprep.subr.mxu0 0.0
      %8227 = vmatpush1.msra.mxu0 0.0
      %8228 = vmatprep.subr.mxu0 0.0
      %8229 = vmatpush1.msra.mxu0 0.0
      %8230 = vmatprep.subr.mxu0 0.0
      %8231 = vmatpush1.msra.mxu0 0.0
      %8232 = vmatprep.subr.mxu0 0.0
      %8233 = vmatpush1.msra.mxu0 0.0
      %8234 = vmatprep.subr.mxu0 0.0
      %8235 = vmatpush1.msra.mxu0 0.0
      %8236 = vmatprep.subr.mxu0 0.0
      %8237 = vmatpush1.msra.mxu0 0.0
      %8238 = vmatprep.subr.mxu0 0.0
      %8239 = vmatpush1.msra.mxu0 0.0
      %8240 = vmatprep.subr.mxu0 0.0
      %8241 = vmatpush1.msra.mxu0 0.0
      %8242 = vmatprep.subr.mxu0 0.0
      %8243 = vmatpush1.msra.mxu0 0.0
      %8244 = vmatprep.subr.mxu0 0.0
      %8245 = vmatpush1.msra.mxu0 0.0
      %8246 = vmatprep.mubr.f32.mxu0 0.0
      %8247 = vmatmul.mubr.f32.gmra.mrb[0].mxu0 %v8180
      %v8248 = vpop.f32.mrb[0].mxu0
      %v8249 = vadd.f32 0.0, %v8248
      %v8250 = vpop.f32.mrb[0].mxu0
      %8251 = vdwg.mxu0
      %v8252 = vadd.f32 %v8101, %v8249
      %8253 = vrot.lane.b32.xlu0 %v7429, 40
      %v8254 = vpop.permute.xlu0 %8253
      %v8256 = vsel %vm1130, %v7786, 0
      %v8258 = vsel %vm1134, %v8254, 0
      %8260 = vmatprep.subr.mxu0 0.0
      %8261 = vmatpush1.msra.mxu0 %v8258
      %8262 = vmatprep.subr.mxu0 0.0
      %8263 = vmatpush1.msra.mxu0 0.0
      %8264 = vmatprep.subr.mxu0 0.0
      %8265 = vmatpush1.msra.mxu0 0.0
      %8266 = vmatprep.subr.mxu0 0.0
      %8267 = vmatpush1.msra.mxu0 0.0
      %8268 = vmatprep.subr.mxu0 0.0
      %8269 = vmatpush1.msra.mxu0 0.0
      %8270 = vmatprep.subr.mxu0 0.0
      %8271 = vmatpush1.msra.mxu0 0.0
      %8272 = vmatprep.subr.mxu0 0.0
      %8273 = vmatpush1.msra.mxu0 0.0
      %8274 = vmatprep.subr.mxu0 0.0
      %8275 = vmatpush1.msra.mxu0 0.0
      %8276 = vmatprep.subr.mxu0 0.0
      %8277 = vmatpush1.msra.mxu0 0.0
      %8278 = vmatprep.subr.mxu0 0.0
      %8279 = vmatpush1.msra.mxu0 0.0
      %8280 = vmatprep.subr.mxu0 0.0
      %8281 = vmatpush1.msra.mxu0 0.0
      %8282 = vmatprep.subr.mxu0 0.0
      %8283 = vmatpush1.msra.mxu0 0.0
      %8284 = vmatprep.subr.mxu0 0.0
      %8285 = vmatpush1.msra.mxu0 0.0
      %8286 = vmatprep.subr.mxu0 0.0
      %8287 = vmatpush1.msra.mxu0 0.0
      %8288 = vmatprep.subr.mxu0 0.0
      %8289 = vmatpush1.msra.mxu0 0.0
      %8290 = vmatprep.subr.mxu0 0.0
      %8291 = vmatpush1.msra.mxu0 0.0
      %8292 = vmatprep.subr.mxu0 0.0
      %8293 = vmatpush1.msra.mxu0 0.0
      %8294 = vmatprep.subr.mxu0 0.0
      %8295 = vmatpush1.msra.mxu0 0.0
      %8296 = vmatprep.subr.mxu0 0.0
      %8297 = vmatpush1.msra.mxu0 0.0
      %8298 = vmatprep.subr.mxu0 0.0
      %8299 = vmatpush1.msra.mxu0 0.0
      %8300 = vmatprep.subr.mxu0 0.0
      %8301 = vmatpush1.msra.mxu0 0.0
      %8302 = vmatprep.subr.mxu0 0.0
      %8303 = vmatpush1.msra.mxu0 0.0
      %8304 = vmatprep.subr.mxu0 0.0
      %8305 = vmatpush1.msra.mxu0 0.0
      %8306 = vmatprep.subr.mxu0 0.0
      %8307 = vmatpush1.msra.mxu0 0.0
      %8308 = vmatprep.subr.mxu0 0.0
      %8309 = vmatpush1.msra.mxu0 0.0
      %8310 = vmatprep.subr.mxu0 0.0
      %8311 = vmatpush1.msra.mxu0 0.0
      %8312 = vmatprep.subr.mxu0 0.0
      %8313 = vmatpush1.msra.mxu0 0.0
      %8314 = vmatprep.subr.mxu0 0.0
      %8315 = vmatpush1.msra.mxu0 0.0
      %8316 = vmatprep.subr.mxu0 0.0
      %8317 = vmatpush1.msra.mxu0 0.0
      %8318 = vmatprep.subr.mxu0 0.0
      %8319 = vmatpush1.msra.mxu0 0.0
      %8320 = vmatprep.subr.mxu0 0.0
      %8321 = vmatpush1.msra.mxu0 0.0
      %8322 = vmatprep.subr.mxu0 0.0
      %8323 = vmatpush1.msra.mxu0 0.0
      %8324 = vmatprep.mubr.f32.mxu0 0.0
      %8325 = vmatmul.mubr.f32.gmra.mrb[0].mxu0 %v8256
      %v8326 = vpop.f32.mrb[0].mxu0
      %v8327 = vadd.f32 0.0, %v8326
      %v8328 = vpop.f32.mrb[0].mxu0
      %8329 = vdwg.mxu0
      %v8331 = vsel %vm769, %v8327, 0
      %8333 = vmatprep.subr.mxu0 0.0
      %8334 = vmatpush1.msra.mxu0 %v7791
      %8335 = vmatprep.subr.mxu0 0.0
      %8336 = vmatpush1.msra.mxu0 0.0
      %8337 = vmatprep.subr.mxu0 0.0
      %8338 = vmatpush1.msra.mxu0 0.0
      %8339 = vmatprep.subr.mxu0 0.0
      %8340 = vmatpush1.msra.mxu0 0.0
      %8341 = vmatprep.subr.mxu0 0.0
      %8342 = vmatpush1.msra.mxu0 0.0
      %8343 = vmatprep.subr.mxu0 0.0
      %8344 = vmatpush1.msra.mxu0 0.0
      %8345 = vmatprep.subr.mxu0 0.0
      %8346 = vmatpush1.msra.mxu0 0.0
      %8347 = vmatprep.subr.mxu0 0.0
      %8348 = vmatpush1.msra.mxu0 0.0
      %8349 = vmatprep.subr.mxu0 0.0
      %8350 = vmatpush1.msra.mxu0 0.0
      %8351 = vmatprep.subr.mxu0 0.0
      %8352 = vmatpush1.msra.mxu0 0.0
      %8353 = vmatprep.subr.mxu0 0.0
      %8354 = vmatpush1.msra.mxu0 0.0
      %8355 = vmatprep.subr.mxu0 0.0
      %8356 = vmatpush1.msra.mxu0 0.0
      %8357 = vmatprep.subr.mxu0 0.0
      %8358 = vmatpush1.msra.mxu0 0.0
      %8359 = vmatprep.subr.mxu0 0.0
      %8360 = vmatpush1.msra.mxu0 0.0
      %8361 = vmatprep.subr.mxu0 0.0
      %8362 = vmatpush1.msra.mxu0 0.0
      %8363 = vmatprep.subr.mxu0 0.0
      %8364 = vmatpush1.msra.mxu0 0.0
      %8365 = vmatprep.subr.mxu0 0.0
      %8366 = vmatpush1.msra.mxu0 0.0
      %8367 = vmatprep.subr.mxu0 0.0
      %8368 = vmatpush1.msra.mxu0 0.0
      %8369 = vmatprep.subr.mxu0 0.0
      %8370 = vmatpush1.msra.mxu0 0.0
      %8371 = vmatprep.subr.mxu0 0.0
      %8372 = vmatpush1.msra.mxu0 0.0
      %8373 = vmatprep.subr.mxu0 0.0
      %8374 = vmatpush1.msra.mxu0 0.0
      %8375 = vmatprep.subr.mxu0 0.0
      %8376 = vmatpush1.msra.mxu0 0.0
      %8377 = vmatprep.subr.mxu0 0.0
      %8378 = vmatpush1.msra.mxu0 0.0
      %8379 = vmatprep.subr.mxu0 0.0
      %8380 = vmatpush1.msra.mxu0 0.0
      %8381 = vmatprep.subr.mxu0 0.0
      %8382 = vmatpush1.msra.mxu0 0.0
      %8383 = vmatprep.subr.mxu0 0.0
      %8384 = vmatpush1.msra.mxu0 0.0
      %8385 = vmatprep.subr.mxu0 0.0
      %8386 = vmatpush1.msra.mxu0 0.0
      %8387 = vmatprep.subr.mxu0 0.0
      %8388 = vmatpush1.msra.mxu0 0.0
      %8389 = vmatprep.subr.mxu0 0.0
      %8390 = vmatpush1.msra.mxu0 0.0
      %8391 = vmatprep.subr.mxu0 0.0
      %8392 = vmatpush1.msra.mxu0 0.0
      %8393 = vmatprep.subr.mxu0 0.0
      %8394 = vmatpush1.msra.mxu0 0.0
      %8395 = vmatprep.subr.mxu0 0.0
      %8396 = vmatpush1.msra.mxu0 0.0
      %8397 = vmatprep.mubr.f32.mxu0 0.0
      %8398 = vmatmul.mubr.f32.gmra.mrb[0].mxu0 %v8331
      %v8399 = vpop.f32.mrb[0].mxu0
      %v8400 = vadd.f32 0.0, %v8399
      %v8401 = vpop.f32.mrb[0].mxu0
      %8402 = vdwg.mxu0
      %v8403 = vadd.f32 %v8252, %v8400
      %v8404 = vadd.f32 %v7312, %v8403
      %s8405 = scalar_lea.vmem %s9, 5
      %v8406 = vld [vmem:[%s8405] sm:$0x1]
      %s8407 = scalar_lea.vmem %s10, 5
      %v8408 = vld [vmem:[%s8407] sm:$0x1]
      %v8409 = vsel %vm650, %v8404, 0.0
      %8410 = vadd.xlane.f32.xlu0 %v8409
      %v8411 = vpop.xlane.xlu0 %8410
      %v8412 = vmul.f32 %v8411, %v654
      %v8413 = vmul.f32 %v8404, %v8404
      %v8414 = vsel %vm650, %v8413, 0.0
      %8415 = vadd.xlane.f32.xlu0 %v8414
      %v8416 = vpop.xlane.xlu0 %8415
      %v8417 = vmul.f32 %v8416, %v654
      %v8418 = vmul.f32 %v8412, %v8412
      %v8419 = vsub.f32 %v8417, %v8418
      %v8420 = vsub.f32 %v8404, %v8412
      %v8421 = vadd.f32 %v8419, 1e-06
      %v8422 = vrsqrt.pop %v8421
      %v8423 = vmul.f32 %v8420, %v8422
      %v8425 = vlaneseq
      %v8426 = vshrl.u32 %v8425, 7
      %v8427 = vsub.s32 0, %v8426
      %v8428 = vrot.slane %v8406, %v8427
      %v8430 = vmul.f32 %v8423, %v8428
      %v8432 = vlaneseq
      %v8433 = vshrl.u32 %v8432, 7
      %v8434 = vsub.s32 0, %v8433
      %v8435 = vrot.slane %v8408, %v8434
      %v8437 = vadd.f32 %v8430, %v8435
      %s8438 = scalar_lea.vmem %s11, 160
      %v8439 = vld [vmem:[%s8438] sm:$0xff]
      %v8440 = vld [vmem:[%s8438 + $0x8] sm:$0xff]
      %v8441 = vld [vmem:[%s8438 + $0x10] sm:$0xff]
      %v8442 = vld [vmem:[%s8438 + $0x18] sm:$0xff]
      %s8443 = scalar_lea.vmem %s12, 5
      %v8444 = vld [vmem:[%s8443] sm:$0x1]
      %v8446 = vlaneseq
      %v8447 = vshrl.u32 %v8446, 7
      %v8448 = vsub.s32 0, %v8447
      %v8449 = vrot.slane %v8444, %v8448
      %v8452 = vsel %vm692, %v8437, 0
      %8454 = vmatprep.subr.mxu0 0.0
      %8455 = vmatpush1.msra.mxu0 %v8439
      %8456 = vmatprep.subr.mxu0 0.0
      %8457 = vmatpush1.msra.mxu0 %v8440
      %8458 = vmatprep.subr.mxu0 0.0
      %8459 = vmatpush1.msra.mxu0 %v8441
      %8460 = vmatprep.subr.mxu0 0.0
      %8461 = vmatpush1.msra.mxu0 %v8442
      %8462 = vmatprep.subr.mxu0 0.0
      %8463 = vmatpush1.msra.mxu0 0.0
      %8464 = vmatprep.subr.mxu0 0.0
      %8465 = vmatpush1.msra.mxu0 0.0
      %8466 = vmatprep.subr.mxu0 0.0
      %8467 = vmatpush1.msra.mxu0 0.0
      %8468 = vmatprep.subr.mxu0 0.0
      %8469 = vmatpush1.msra.mxu0 0.0
      %8470 = vmatprep.subr.mxu0 0.0
      %8471 = vmatpush1.msra.mxu0 0.0
      %8472 = vmatprep.subr.mxu0 0.0
      %8473 = vmatpush1.msra.mxu0 0.0
      %8474 = vmatprep.subr.mxu0 0.0
      %8475 = vmatpush1.msra.mxu0 0.0
      %8476 = vmatprep.subr.mxu0 0.0
      %8477 = vmatpush1.msra.mxu0 0.0
      %8478 = vmatprep.subr.mxu0 0.0
      %8479 = vmatpush1.msra.mxu0 0.0
      %8480 = vmatprep.subr.mxu0 0.0
      %8481 = vmatpush1.msra.mxu0 0.0
      %8482 = vmatprep.subr.mxu0 0.0
      %8483 = vmatpush1.msra.mxu0 0.0
      %8484 = vmatprep.subr.mxu0 0.0
      %8485 = vmatpush1.msra.mxu0 0.0
      %8486 = vmatprep.subr.mxu0 0.0
      %8487 = vmatpush1.msra.mxu0 0.0
      %8488 = vmatprep.subr.mxu0 0.0
      %8489 = vmatpush1.msra.mxu0 0.0
      %8490 = vmatprep.subr.mxu0 0.0
      %8491 = vmatpush1.msra.mxu0 0.0
      %8492 = vmatprep.subr.mxu0 0.0
      %8493 = vmatpush1.msra.mxu0 0.0
      %8494 = vmatprep.subr.mxu0 0.0
      %8495 = vmatpush1.msra.mxu0 0.0
      %8496 = vmatprep.subr.mxu0 0.0
      %8497 = vmatpush1.msra.mxu0 0.0
      %8498 = vmatprep.subr.mxu0 0.0
      %8499 = vmatpush1.msra.mxu0 0.0
      %8500 = vmatprep.subr.mxu0 0.0
      %8501 = vmatpush1.msra.mxu0 0.0
      %8502 = vmatprep.subr.mxu0 0.0
      %8503 = vmatpush1.msra.mxu0 0.0
      %8504 = vmatprep.subr.mxu0 0.0
      %8505 = vmatpush1.msra.mxu0 0.0
      %8506 = vmatprep.subr.mxu0 0.0
      %8507 = vmatpush1.msra.mxu0 0.0
      %8508 = vmatprep.subr.mxu0 0.0
      %8509 = vmatpush1.msra.mxu0 0.0
      %8510 = vmatprep.subr.mxu0 0.0
      %8511 = vmatpush1.msra.mxu0 0.0
      %8512 = vmatprep.subr.mxu0 0.0
      %8513 = vmatpush1.msra.mxu0 0.0
      %8514 = vmatprep.subr.mxu0 0.0
      %8515 = vmatpush1.msra.mxu0 0.0
      %8516 = vmatprep.subr.mxu0 0.0
      %8517 = vmatpush1.msra.mxu0 0.0
      %8518 = vmatprep.mubr.f32.mxu0 0.0
      %8519 = vmatmul.mubr.f32.gmra.mrb[0].mxu0 %v8452
      %v8520 = vpop.f32.mrb[0].mxu0
      %v8521 = vadd.f32 %v8449, %v8520
      %v8522 = vpop.f32.mrb[0].mxu0
      %8523 = vdwg.mxu0
      %v8524 = vmul.f32 %v8521, 0.5
      %v8525 = vmul.f32 %v8521, 0.70710677
      %vm8526 = vcmp.ge.f32.partialorder %v8525, 0.0
      %v8527 = vsel %vm8526, 1.0, -1.0
      %v8528 = vand.u32 2147483647, %v8525
      %v8529 = vmul.f32 %v8528, 0.3275911
      %v8530 = vadd.f32 %v8529, 1.0
      %v8531 = vrcp.pop %v8530
      %v8532 = vmul.f32 %v8531, 1.0614054
      %v8533 = vadd.f32 %v8532, -1.4531521
      %v8534 = vmul.f32 %v8531, %v8533
      %v8535 = vadd.f32 %v8534, 1.4214138
      %v8536 = vmul.f32 %v8531, %v8535
      %v8537 = vadd.f32 %v8536, -0.28449672
      %v8538 = vmul.f32 %v8531, %v8537
      %v8539 = vadd.f32 %v8538, 0.2548296
      %v8540 = vmul.f32 %v8531, %v8539
      %v8541 = vsub.f32 0.0, %v8528
      %v8542 = vmul.f32 %v8541, %v8528
      %v8543 = vmul.f32 %v8542, 1.442695
      %v8544 = vpow.pop %v8543
      %v8545 = vmul.f32 %v8540, %v8544
      %v8546 = vsub.f32 1.0, %v8545
      %v8547 = vmul.f32 %v8527, %v8546
      %v8548 = vadd.f32 %v8547, 1.0
      %v8549 = vmul.f32 %v8524, %v8548
      %s8550 = scalar_lea.vmem %s13, 640
      %v8551 = vld [vmem:[%s8550] sm:$0xff]
      %v8552 = vld [vmem:[%s8550 + $0x8] sm:$0xff]
      %v8553 = vld [vmem:[%s8550 + $0x10] sm:$0xff]
      %v8554 = vld [vmem:[%s8550 + $0x18] sm:$0xff]
      %v8555 = vld [vmem:[%s8550 + $0x20] sm:$0xff]
      %v8556 = vld [vmem:[%s8550 + $0x28] sm:$0xff]
      %v8557 = vld [vmem:[%s8550 + $0x30] sm:$0xff]
      %v8558 = vld [vmem:[%s8550 + $0x38] sm:$0xff]
      %v8559 = vld [vmem:[%s8550 + $0x40] sm:$0xff]
      %v8560 = vld [vmem:[%s8550 + $0x48] sm:$0xff]
      %v8561 = vld [vmem:[%s8550 + $0x50] sm:$0xff]
      %v8562 = vld [vmem:[%s8550 + $0x58] sm:$0xff]
      %v8563 = vld [vmem:[%s8550 + $0x60] sm:$0xff]
      %v8564 = vld [vmem:[%s8550 + $0x68] sm:$0xff]
      %v8565 = vld [vmem:[%s8550 + $0x70] sm:$0xff]
      %v8566 = vld [vmem:[%s8550 + $0x78] sm:$0xff]
      %8567 = vmatprep.subr.mxu0 0.0
      %8568 = vmatpush1.msra.mxu0 %v8551
      %8569 = vmatprep.subr.mxu0 0.0
      %8570 = vmatpush1.msra.mxu0 %v8552
      %8571 = vmatprep.subr.mxu0 0.0
      %8572 = vmatpush1.msra.mxu0 %v8553
      %8573 = vmatprep.subr.mxu0 0.0
      %8574 = vmatpush1.msra.mxu0 %v8554
      %8575 = vmatprep.subr.mxu0 0.0
      %8576 = vmatpush1.msra.mxu0 %v8555
      %8577 = vmatprep.subr.mxu0 0.0
      %8578 = vmatpush1.msra.mxu0 %v8556
      %8579 = vmatprep.subr.mxu0 0.0
      %8580 = vmatpush1.msra.mxu0 %v8557
      %8581 = vmatprep.subr.mxu0 0.0
      %8582 = vmatpush1.msra.mxu0 %v8558
      %8583 = vmatprep.subr.mxu0 0.0
      %8584 = vmatpush1.msra.mxu0 %v8559
      %8585 = vmatprep.subr.mxu0 0.0
      %8586 = vmatpush1.msra.mxu0 %v8560
      %8587 = vmatprep.subr.mxu0 0.0
      %8588 = vmatpush1.msra.mxu0 %v8561
      %8589 = vmatprep.subr.mxu0 0.0
      %8590 = vmatpush1.msra.mxu0 %v8562
      %8591 = vmatprep.subr.mxu0 0.0
      %8592 = vmatpush1.msra.mxu0 %v8563
      %8593 = vmatprep.subr.mxu0 0.0
      %8594 = vmatpush1.msra.mxu0 %v8564
      %8595 = vmatprep.subr.mxu0 0.0
      %8596 = vmatpush1.msra.mxu0 %v8565
      %8597 = vmatprep.subr.mxu0 0.0
      %8598 = vmatpush1.msra.mxu0 %v8566
      %8599 = vmatprep.subr.mxu0 0.0
      %8600 = vmatpush1.msra.mxu0 0.0
      %8601 = vmatprep.subr.mxu0 0.0
      %8602 = vmatpush1.msra.mxu0 0.0
      %8603 = vmatprep.subr.mxu0 0.0
      %8604 = vmatpush1.msra.mxu0 0.0
      %8605 = vmatprep.subr.mxu0 0.0
      %8606 = vmatpush1.msra.mxu0 0.0
      %8607 = vmatprep.subr.mxu0 0.0
      %8608 = vmatpush1.msra.mxu0 0.0
      %8609 = vmatprep.subr.mxu0 0.0
      %8610 = vmatpush1.msra.mxu0 0.0
      %8611 = vmatprep.subr.mxu0 0.0
      %8612 = vmatpush1.msra.mxu0 0.0
      %8613 = vmatprep.subr.mxu0 0.0
      %8614 = vmatpush1.msra.mxu0 0.0
      %8615 = vmatprep.subr.mxu0 0.0
      %8616 = vmatpush1.msra.mxu0 0.0
      %8617 = vmatprep.subr.mxu0 0.0
      %8618 = vmatpush1.msra.mxu0 0.0
      %8619 = vmatprep.subr.mxu0 0.0
      %8620 = vmatpush1.msra.mxu0 0.0
      %8621 = vmatprep.subr.mxu0 0.0
      %8622 = vmatpush1.msra.mxu0 0.0
      %8623 = vmatprep.subr.mxu0 0.0
      %8624 = vmatpush1.msra.mxu0 0.0
      %8625 = vmatprep.subr.mxu0 0.0
      %8626 = vmatpush1.msra.mxu0 0.0
      %8627 = vmatprep.subr.mxu0 0.0
      %8628 = vmatpush1.msra.mxu0 0.0
      %8629 = vmatprep.subr.mxu0 0.0
      %8630 = vmatpush1.msra.mxu0 0.0
      %8631 = vmatprep.mubr.f32.mxu0 0.0
      %8632 = vmatmul.mubr.f32.gmra.mrb[0].mxu0 %v8549
      %v8633 = vpop.f32.mrb[0].mxu0
      %v8634 = vadd.f32 0.0, %v8633
      %v8635 = vpop.f32.mrb[0].mxu0
      %8636 = vdwg.mxu0
      %v8637 = vadd.f32 %v8404, %v8634
      %s8638 = scalar_lea.vmem %s14, 5
      %v8639 = vld [vmem:[%s8638] sm:$0x1]
      %v8641 = vlaneseq
      %v8642 = vshrl.u32 %v8641, 7
      %v8643 = vsub.s32 0, %v8642
      %v8644 = vrot.slane %v8639, %v8643
      %v8646 = vadd.f32 %v8637, %v8644
      %v8647 = vld [vmem:[%s15] sm:$0x1]
      %v8648 = vld [vmem:[%s16] sm:$0x1]
      %v8649 = vsel %vm650, %v8646, 0.0
      %8650 = vadd.xlane.f32.xlu0 %v8649
      %v8651 = vpop.xlane.xlu0 %8650
      %v8652 = vmul.f32 %v8651, %v654
      %v8653 = vmul.f32 %v8646, %v8646
      %v8654 = vsel %vm650, %v8653, 0.0
      %8655 = vadd.xlane.f32.xlu0 %v8654
      %v8656 = vpop.xlane.xlu0 %8655
      %v8657 = vmul.f32 %v8656, %v654
      %v8658 = vmul.f32 %v8652, %v8652
      %v8659 = vsub.f32 %v8657, %v8658
      %v8660 = vsub.f32 %v8646, %v8652
      %v8661 = vadd.f32 %v8659, 1e-06
      %v8662 = vrsqrt.pop %v8661
      %v8663 = vmul.f32 %v8660, %v8662
      %v8665 = vlaneseq
      %v8666 = vshrl.u32 %v8665, 7
      %v8667 = vsub.s32 0, %v8666
      %v8668 = vrot.slane %v8647, %v8667
      %v8670 = vmul.f32 %v8663, %v8668
      %v8672 = vlaneseq
      %v8673 = vshrl.u32 %v8672, 7
      %v8674 = vsub.s32 0, %v8673
      %v8675 = vrot.slane %v8648, %v8674
      %v8677 = vadd.f32 %v8670, %v8675
      %8678 = vst.msk [vmem:[%s546] sm:$0x1f] %vm650, %v8677
      %p8679 = scmp.lt.s32.totalorder %s28, 1
      %s8680 = scalar_select %p8679, %s28, 1
      %s8681 = smul.addr %s8680, 8
      %s8682 = scalar_lea.vmem %s17, %s8681
      // Predicated region
      $region89: #{image_kd_forward.1} parent=87 // pred_check
        %p8683 = pneg %p408
      $region90: #{image_kd_forward.1} parent=87 // pred_check_branch
        %8685 = sbr.rel (%p8683) target = $region92
      $region91: #{image_kd_forward.1} parent=87 // pred_region
        _
      $region92: #{image_kd_forward.1} parent=87 // pred_fallthru
        _
    $region88: #{image_kd_forward.1} parent=5 // pred_fallthru
      _
    %p8686 = scmp.le.s32.totalorder 2, %s23
    // Predicated region
    $region93: #{image_kd_forward.1} parent=5 // pred_check
      %p8687 = pneg %p8686
    $region94: #{image_kd_forward.1} parent=5 // pred_check_branch
      %8689 = sbr.rel (%p8687) target = $region96
    $region95: #{image_kd_forward.1} parent=5 // pred_region
      %s8690 = ssub.s32 %s23, 2
      // Predicated region
      $region97: #{image_kd_forward.1} parent=95 // pred_check
        %p8691 = pneg %p414
      $region98: #{image_kd_forward.1} parent=95 // pred_check_branch
        %8693 = sbr.rel (%p8691) target = $region100
      $region99: #{image_kd_forward.1} parent=95 // pred_region
        %p8694 = scmp.lt.s32.totalorder %s29, 1
        %s8695 = scalar_select %p8694, %s29, 1
        %s8696 = smul.addr %s8695, 8
        %s8697 = scalar_lea.vmem %s17, %s8696
      $region100: #{image_kd_forward.1} parent=95 // pred_fallthru
        _
    $region96: #{image_kd_forward.1} parent=5 // pred_fallthru
      _
  $region6: #{image_kd_forward.1} parent=0 // loop_footer
    %s27 = sadd.s32 1, %s23
  $region7: #{image_kd_forward.1} parent=0 // loop_footer_branch
    %22 = sbr.rel target = $region3
  $region8: #{image_kd_forward.1} parent=0 // loop_exit
    _

</llo_original>
